<compile_context>
chip_gen: v7x
topology: tpu7x:2x2x1
jax: 0.10.0
libtpu: 0.0.40
codegen_flags: <defaults>
</compile_context>

<pallas_src>
import functools

import jax
import jax.numpy as jnp
from jax.experimental import pallas as pl
from jax.experimental.pallas import tpu as pltpu

BN_EPS = 1e-5
LEAKY_SLOPE = 0.2                      # TalkSHOW's ConvNormRelu uses LeakyReLU(0.2)
VMEM_LIMIT_BYTES = 64 * 1024 * 1024    # cap only; per-chain usage here is far smaller


# ---------------------------------------------------------------------------
# In-kernel helpers (trace-time Python, VMEM values only)
# ---------------------------------------------------------------------------
def _act(y, act):
    if act == "leaky":
        return jnp.where(y > 0, y, LEAKY_SLOPE * y)
    if act == "relu":
        return jnp.maximum(y, 0.0)
    return y


def _taps3(h):
    # [x[t-1] | x[t] | x[t+1]] with zero boundary rows (k=3, s=1, p=1).
    l, c = h.shape
    zero = jnp.zeros((1, c), h.dtype)
    prev = jnp.concatenate([zero, h[:l - 1]], axis=0)
    nxt = jnp.concatenate([h[1:], zero], axis=0)
    return jnp.concatenate([prev, h, nxt], axis=1)


def _taps_down(h):
    # Phase-packed input: row t = [x[2t] | x[2t+1]].
    # Builds [x[2t-1] | x[2t] | x[2t+1] | x[2t+2]]  (k=4, s=2, p=1 conv taps).
    lh, c2 = h.shape
    c = c2 // 2
    xe = h[:, :c]
    xo = h[:, c:]
    zero = jnp.zeros((1, c), h.dtype)
    xo_prev = jnp.concatenate([zero, xo[:lh - 1]], axis=0)
    xe_next = jnp.concatenate([xe[1:], zero], axis=0)
    return jnp.concatenate([xo_prev, xe, xo, xe_next], axis=1)


def _vq_lookup(z, codebook, e_sq):
    # Nearest-codebook lookup; returns exact (f32) codebook rows.
    ze = jax.lax.dot_general(
        z.astype(jnp.bfloat16), codebook.astype(jnp.bfloat16),
        (((1,), (1,)), ((), ())), preferred_element_type=jnp.float32)   # (L, K)
    d = e_sq - 2.0 * ze                  # ||z||^2 dropped: argmin-invariant
    nk = d.shape[1]
    lane = jax.lax.broadcasted_iota(jnp.int32, d.shape, 1)
    d_min = jnp.min(d, axis=1, keepdims=True)
    idx = jnp.min(jnp.where(d == d_min, lane, nk), axis=1, keepdims=True)
    onehot = (lane == idx).astype(jnp.float32)
    return jnp.dot(onehot, codebook, preferred_element_type=jnp.float32)


def _chain_kernel(*refs, steps, has_vq):
    # refs = (x, w0, shift0, w1, shift1, ..., [codebook, codebook_sq], out)
    x_ref, out_ref = refs[0], refs[-1]
    wrefs = refs[1:-1]
    if has_vq:
        cb_ref, esq_ref = wrefs[-2], wrefs[-1]
        wrefs = wrefs[:-2]

    h = x_ref[0].astype(jnp.float32)              # (L, Cin), VMEM resident
    stack = None
    for i, st in enumerate(steps):
        w = wrefs[2 * i][...]                     # (K, N)  bf16
        shift = wrefs[2 * i + 1][...]             # (1, N)  f32
        if st["mark"]:
            stack = h                             # res-stack skip input
        hb = h.astype(jnp.bfloat16)
        kind = st["kind"]
        if kind == "conv3" or kind == "up":
            cols = _taps3(hb)
        elif kind == "down":
            cols = _taps_down(hb)
        else:                                     # 1x1 conv
            cols = hb
        y = jnp.dot(cols, w, preferred_element_type=jnp.float32) + shift
        if st["res"] == "self":
            y = y + h
        elif st["res"] == "stack":
            y = y + stack
        h = _act(y, st["act"])
    if has_vq:
        h = _vq_lookup(h, cb_ref[...], esq_ref[...])
    out_ref[0] = h.astype(out_ref.dtype)


# ---------------------------------------------------------------------------
# pallas_call wrapper: one grid step per batch element, weights resident
# ---------------------------------------------------------------------------
def _run_chain(x, chain):
    b, l, cin = x.shape
    weights = chain["weights"]
    cout = chain["out_ch"]
    in_specs = [pl.BlockSpec((1, l, cin), lambda i: (i, 0, 0))]
    # Full-array blocks with a constant index_map -> each weight DMAed once.
    in_specs += [pl.BlockSpec(w.shape, lambda i: (0, 0)) for w in weights]
    kern = functools.partial(_chain_kernel, steps=chain["steps"],
                             has_vq=chain["vq"])
    return pl.pallas_call(
        kern,
        grid=(b,),
        in_specs=in_specs,
        out_specs=pl.BlockSpec((1, l, cout), lambda i: (i, 0, 0)),
        out_shape=jax.ShapeDtypeStruct((b, l, cout), chain["out_dtype"]),
        compiler_params=pltpu.CompilerParams(
            dimension_semantics=("parallel",),
            vmem_limit_bytes=VMEM_LIMIT_BYTES),
    )(x, *weights)


# ---------------------------------------------------------------------------
# Deterministic synthetic parameter init (PyTorch-layout weights; no checkpoint)
# ---------------------------------------------------------------------------
def _normal(key, shape, scale=0.2):
    return scale * jax.random.normal(key, shape, jnp.float32)


def _init_bn(key, c):
    k1, k2, k3, k4 = jax.random.split(key, 4)
    return dict(gamma=1.0 + 0.1 * jax.random.normal(k1, (c,), jnp.float32),
                beta=0.05 * jax.random.normal(k2, (c,), jnp.float32),
                mean=0.05 * jax.random.normal(k3, (c,), jnp.float32),
                var=0.9 + 0.2 * jax.random.uniform(k4, (c,), jnp.float32))


def _init_conv(key, cout, cin, k):
    k1, k2 = jax.random.split(key)
    return _normal(k1, (cout, cin, k)), _normal(k2, (cout,), 0.05)


def _init_convT(key, cin, cout, k):
    k1, k2 = jax.random.split(key)
    return _normal(k1, (cin, cout, k)), _normal(k2, (cout,), 0.05)


def init_cnr(key, cin, cout, sample="none", residual=False):
    ks = jax.random.split(key, 3)
    p = dict(sample=sample, residual=residual)
    if sample == "up":
        p["W"], p["b"] = _init_convT(ks[0], cin, cout, 4)
    elif sample == "down":
        p["W"], p["b"] = _init_conv(ks[0], cout, cin, 4)
    else:
        p["W"], p["b"] = _init_conv(ks[0], cout, cin, 3)
    p["bn"] = _init_bn(ks[1], cout)
    if residual:
        if sample == "up":
            p["Wr"], p["br"] = _init_convT(ks[2], cin, cout, 4)
        elif sample == "down":
            p["Wr"], p["br"] = _init_conv(ks[2], cout, cin, 4)
        elif cin != cout:
            p["Wr"], p["br"] = _init_conv(ks[2], cout, cin, 3)
        # else: identity residual (in_channels == out_channels, sample == 'none')
    return p


def init_res_stack(key, c, n_layers):
    ks = jax.random.split(key, n_layers + 2)
    layers = [init_cnr(ks[i], c, c, sample="none", residual=True)
              for i in range(n_layers)]
    wc, bc = _init_conv(ks[n_layers], c, c, 3)
    bn = _init_bn(ks[n_layers + 1], c)
    return dict(layers=layers, Wc=wc, bc=bc, bn=bn)


def init_vqvae(key, in_dim, embedding_dim, num_embeddings, num_hiddens, num_res_layers):
    ks = jax.random.split(key, 16)
    h4, h2 = num_hiddens // 4, num_hiddens // 2
    enc = dict(
        project=init_cnr(ks[0], in_dim, h4),
        enc1=init_res_stack(ks[1], h4, num_res_layers),
        down1=init_cnr(ks[2], h4, h2, sample="down", residual=True),
        enc2=init_res_stack(ks[3], h2, num_res_layers),
        down2=init_cnr(ks[4], h2, num_hiddens, sample="down", residual=True),
        enc3=init_res_stack(ks[5], num_hiddens, num_res_layers),
    )
    enc["pre_vq_W"], enc["pre_vq_b"] = _init_conv(ks[6], embedding_dim, num_hiddens, 1)
    dec = dict(
        dec1=init_res_stack(ks[8], num_hiddens, num_res_layers),
        up2=init_cnr(ks[9], num_hiddens, h2, sample="up", residual=True),
        dec2=init_res_stack(ks[10], h2, num_res_layers),
        up3=init_cnr(ks[11], h2, h4, sample="up", residual=True),
        dec3=init_res_stack(ks[12], h4, num_res_layers),
    )
    dec["aft_vq_W"], dec["aft_vq_b"] = _init_conv(ks[7], num_hiddens, embedding_dim, 1)
    dec["proj_W"], dec["proj_b"] = _init_conv(ks[13], in_dim, h4, 1)
    codebook = jax.random.normal(ks[14], (num_embeddings, embedding_dim), jnp.float32)
    return dict(enc=enc, dec=dec, codebook=codebook)


# ---------------------------------------------------------------------------
# One-time parameter preprocessing: fold BN / bias / residual-conv branches,
# build polyphase ConvT weights, cast weights to bf16, assemble fused chains.
# ---------------------------------------------------------------------------
def _bn_scale_shift(bias, bn):
    s = bn["gamma"] / jnp.sqrt(bn["var"] + BN_EPS)
    return s, (bias - bn["mean"]) * s + bn["beta"]


def _conv_wmat(w, scale=None):
    # PyTorch Conv1d weight (Cout, Cin, K) -> (K*Cin, Cout), tap-major rows.
    cout, cin, k = w.shape
    w = w.astype(jnp.float32)
    if scale is not None:
        w = w * scale[:, None, None]
    return jnp.transpose(w, (2, 1, 0)).reshape(k * cin, cout)


def _up_wmat(wt, scale=None):
    # ConvTranspose1d(k=4, s=2, p=1) weight (Cin, Cout, 4) -> polyphase
    # (3*Cin, 2*Cout) acting on taps [x[t-1] | x[t] | x[t+1]]:
    #   even phase y[2t]   = x[t-1] w3 + x[t] w1
    #   odd  phase y[2t+1] = x[t]   w2 + x[t+1] w0
    cin, cout, k = wt.shape
    assert k == 4
    wt = wt.astype(jnp.float32)
    if scale is not None:
        wt = wt * scale[None, :, None]
    m = jnp.zeros((3, cin, 2, cout), jnp.float32)
    m = m.at[0, :, 0, :].set(wt[:, :, 3])
    m = m.at[1, :, 0, :].set(wt[:, :, 1])
    m = m.at[1, :, 1, :].set(wt[:, :, 2])
    m = m.at[2, :, 1, :].set(wt[:, :, 0])
    return m.reshape(3 * cin, 2 * cout)


def _step(kind, act, res=None, mark=False):
    return dict(kind=kind, act=act, res=res, mark=mark)


def _prep_cnr_step(p, leaky=True):
    act = "leaky" if leaky else "relu"
    sample, residual = p["sample"], p["residual"]
    scale, shift = _bn_scale_shift(p["b"], p["bn"])
    if sample == "up":
        wmat = _up_wmat(p["W"], scale)
        if residual:                      # residual convT folded into the same matmul
            wmat = wmat + _up_wmat(p["Wr"])
            shift = shift + p["br"]
        sh = jnp.concatenate([shift, shift]).reshape(1, -1)   # [even | odd]
        return (_step("up", act),
                wmat.astype(jnp.bfloat16), sh.astype(jnp.float32))
    kind = "down" if sample == "down" else "conv3"
    wmat = _conv_wmat(p["W"], scale)
    res = None
    if residual:
        if "Wr" in p:                     # residual conv (same k/s/p) folded
            wmat = wmat + _conv_wmat(p["Wr"])
            shift = shift + p["br"]
        else:
            res = "self"                  # identity skip, added post-matmul in f32
    return (_step(kind, act, res=res),
            wmat.astype(jnp.bfloat16),
            shift.reshape(1, -1).astype(jnp.float32))


def _part_cnr(p, leaky=True):
    st, w, s = _prep_cnr_step(p, leaky)
    return [st], [w, s]


def _part_res_stack(p, leaky=True):
    # Res_CNR_Stack: h = layers(x);  ReLU(BN(conv3(h)) + x)
    steps, weights = [], []
    for j, lp in enumerate(p["layers"]):
        st, w, s = _prep_cnr_step(lp, leaky)
        if j == 0:
            st["mark"] = True             # remember the stack input for the skip
        steps.append(st)
        weights += [w, s]
    scale, shift = _bn_scale_shift(p["bc"], p["bn"])
    steps.append(_step("conv3", "relu", res="stack", mark=not p["layers"]))
    weights += [_conv_wmat(p["Wc"], scale).astype(jnp.bfloat16),
                shift.reshape(1, -1).astype(jnp.float32)]
    return steps, weights


def _part_1x1(w, b):
    wmat = jnp.transpose(w.astype(jnp.float32)[:, :, 0])      # (Cin, Cout)
    return ([_step("conv1", "linear")],
            [wmat.astype(jnp.bfloat16), b.astype(jnp.float32).reshape(1, -1)])


def _make_chain(parts, vq_codebook=None, out_dtype=jnp.bfloat16):
    steps, weights = [], []
    for s, w in parts:
        steps += s
        weights += w
    # 'down' reads a phase-packed input -> only valid as the first step of a chain;
    # 'up' emits un-interleaved [even|odd] phases -> only valid as a lone step.
    assert all(st["kind"] != "down" for st in steps[1:])
    assert all(st["kind"] != "up" for st in steps) or len(steps) == 1
    out_ch = weights[-1].shape[-1]
    chain = dict(steps=steps, weights=weights, vq=vq_codebook is not None,
                 out_ch=out_ch, out_dtype=out_dtype)
    if vq_codebook is not None:
        cb = vq_codebook.astype(jnp.float32)
        e_sq = jnp.sum(cb * cb, axis=1).reshape(1, -1)
        chain["weights"] = weights + [cb, e_sq]
        chain["out_ch"] = cb.shape[1]
    return chain


def preprocess_vqvae(params):
    enc, dec, cb = params["enc"], params["dec"], params["codebook"]
    return dict(
        enc1=_make_chain([_part_cnr(enc["project"]), _part_res_stack(enc["enc1"])]),
        enc2=_make_chain([_part_cnr(enc["down1"]), _part_res_stack(enc["enc2"])]),
        enc3=_make_chain([_part_cnr(enc["down2"]), _part_res_stack(enc["enc3"]),
                          _part_1x1(enc["pre_vq_W"], enc["pre_vq_b"])],
                         vq_codebook=cb, out_dtype=jnp.float32),
        dec1=_make_chain([_part_1x1(dec["aft_vq_W"], dec["aft_vq_b"]),
                          _part_res_stack(dec["dec1"])]),
        up2=_make_chain([_part_cnr(dec["up2"])]),
        dec2=_make_chain([_part_res_stack(dec["dec2"])]),
        up3=_make_chain([_part_cnr(dec["up3"])]),
        dec3=_make_chain([_part_res_stack(dec["dec3"]),
                          _part_1x1(dec["proj_W"], dec["proj_b"])],
                         out_dtype=jnp.float32),
    )


# ---------------------------------------------------------------------------
# VQVAE forward (inference path of the PyTorch module): returns (e, x_recon)
# ---------------------------------------------------------------------------
def vqvae_forward(pp, gt_poses):
    # gt_poses: (B, C_in, L), PyTorch NCW at the boundary; L divisible by 4.
    b, _, l = gt_poses.shape
    x = jnp.transpose(gt_poses, (0, 2, 1))                  # (B, L, C) channels-last
    # Encoder.  Row-major reshapes phase-pack the input of each stride-2 chain.
    h = _run_chain(x, pp["enc1"])                           # (B, L,   H/4)
    h = _run_chain(h.reshape(b, l // 2, -1), pp["enc2"])    # (B, L/2, H/2)
    e = _run_chain(h.reshape(b, l // 4, -1), pp["enc3"])    # (B, L/4, D) quantized f32
    # Decoder.  Row-major reshapes interleave the polyphase ConvT outputs.
    h = _run_chain(e, pp["dec1"])                           # (B, L/4, H)
    h = _run_chain(h, pp["up2"])                            # (B, L/4, 2*(H/2))
    h = _run_chain(h.reshape(b, l // 2, -1), pp["dec2"])    # (B, L/2, H/2)
    h = _run_chain(h, pp["up3"])                            # (B, L/2, 2*(H/4))
    h = _run_chain(h.reshape(b, l, -1), pp["dec3"])         # (B, L, C_in) f32
    e_out = jnp.transpose(e, (0, 2, 1))                     # (B, D, L/4)
    recon_out = jnp.transpose(h, (0, 2, 1))                 # (B, C_in, L)
    return e_out, recon_out


if __name__ == "__main__":
    B, IN_DIM, L = 2, 6, 16
    EMB_DIM, NUM_EMB, NUM_HIDDENS, NUM_RES = 16, 32, 32, 2

    key = jax.random.PRNGKey(0)
    k_params, k_x = jax.random.split(key)
    params = init_vqvae(k_params, in_dim=IN_DIM, embedding_dim=EMB_DIM,
                        num_embeddings=NUM_EMB, num_hiddens=NUM_HIDDENS,
                        num_res_layers=NUM_RES)
    prepped = preprocess_vqvae(params)
    gt_poses = jax.random.normal(k_x, (B, IN_DIM, L), jnp.float32)

    fwd = jax.jit(lambda g: vqvae_forward(prepped, g))
    e, recon = fwd(gt_poses)
    jax.block_until_ready((e, recon))

    assert e.shape == (B, EMB_DIM, L // 4), e.shape
    assert recon.shape == (B, IN_DIM, L), recon.shape
    assert bool(jnp.all(jnp.isfinite(e))) and bool(jnp.all(jnp.isfinite(recon)))
    print("KERNEL_OK")
</pallas_src>

<mosaic_0001>
module attributes {stable_mosaic.version = 11 : i64} {
  func.func @_chain_kernel(%arg0: i32, %arg1: memref<1x16x6xf32, #tpu.memory_space<vmem>>, %arg2: memref<18x8xbf16, #tpu.memory_space<vmem>>, %arg3: memref<1x8xf32, #tpu.memory_space<vmem>>, %arg4: memref<24x8xbf16, #tpu.memory_space<vmem>>, %arg5: memref<1x8xf32, #tpu.memory_space<vmem>>, %arg6: memref<24x8xbf16, #tpu.memory_space<vmem>>, %arg7: memref<1x8xf32, #tpu.memory_space<vmem>>, %arg8: memref<24x8xbf16, #tpu.memory_space<vmem>>, %arg9: memref<1x8xf32, #tpu.memory_space<vmem>>, %arg10: memref<1x16x8xbf16, #tpu.memory_space<vmem>>) attributes {dimension_semantics = [#tpu.dimension_semantics<parallel>], iteration_bounds = array<i64: 2>, scalar_prefetch = 0 : i64, scratch_operands = 0 : i64, tpu.core_type = #tpu.core_type<tc>, window_params = [{transform_indices = @transform_0, window_bounds = array<i64: 1, 16, 6>}, {pipeline_mode = #tpu.pipeline_mode<synchronous>, transform_indices = @transform_1, window_bounds = array<i64: 18, 8>}, {pipeline_mode = #tpu.pipeline_mode<synchronous>, transform_indices = @transform_2, window_bounds = array<i64: 1, 8>}, {pipeline_mode = #tpu.pipeline_mode<synchronous>, transform_indices = @transform_3, window_bounds = array<i64: 24, 8>}, {pipeline_mode = #tpu.pipeline_mode<synchronous>, transform_indices = @transform_4, window_bounds = array<i64: 1, 8>}, {pipeline_mode = #tpu.pipeline_mode<synchronous>, transform_indices = @transform_5, window_bounds = array<i64: 24, 8>}, {pipeline_mode = #tpu.pipeline_mode<synchronous>, transform_indices = @transform_6, window_bounds = array<i64: 1, 8>}, {pipeline_mode = #tpu.pipeline_mode<synchronous>, transform_indices = @transform_7, window_bounds = array<i64: 24, 8>}, {pipeline_mode = #tpu.pipeline_mode<synchronous>, transform_indices = @transform_8, window_bounds = array<i64: 1, 8>}, {transform_indices = @transform_9, window_bounds = array<i64: 1, 16, 8>}]} {
    %c0 = arith.constant 0 : index
    %c0_0 = arith.constant 0 : index
    %c0_1 = arith.constant 0 : index
    %0 = vector.load %arg1[%c0, %c0_0, %c0_1] : memref<1x16x6xf32, #tpu.memory_space<vmem>>, vector<1x16x6xf32>
    %1 = vector.shape_cast %0 : vector<1x16x6xf32> to vector<16x6xf32>
    %c0_2 = arith.constant 0 : index
    %c0_3 = arith.constant 0 : index
    %2 = vector.load %arg2[%c0_2, %c0_3] : memref<18x8xbf16, #tpu.memory_space<vmem>>, vector<18x8xbf16>
    %c0_4 = arith.constant 0 : index
    %c0_5 = arith.constant 0 : index
    %3 = vector.load %arg3[%c0_4, %c0_5] : memref<1x8xf32, #tpu.memory_space<vmem>>, vector<1x8xf32>
    %4 = arith.truncf %1 : vector<16x6xf32> to vector<16x6xbf16>
    %cst = arith.constant 0.000000e+00 : bf16
    %5 = vector.broadcast %cst : bf16 to vector<1x6xbf16>
    %6 = vector.extract_strided_slice %4 {offsets = [0, 0], sizes = [15, 6], strides = [1, 1]} : vector<16x6xbf16> to vector<15x6xbf16>
    %7 = tpu.concatenate %5, %6 in 0 : vector<1x6xbf16>, vector<15x6xbf16> -> vector<16x6xbf16>
    %8 = vector.extract_strided_slice %4 {offsets = [1, 0], sizes = [15, 6], strides = [1, 1]} : vector<16x6xbf16> to vector<15x6xbf16>
    %9 = tpu.concatenate %8, %5 in 0 : vector<15x6xbf16>, vector<1x6xbf16> -> vector<16x6xbf16>
    %10 = tpu.concatenate %7, %4, %9 in 1 : vector<16x6xbf16>, vector<16x6xbf16>, vector<16x6xbf16> -> vector<16x18xbf16>
    %cst_6 = arith.constant dense<0.000000e+00> : vector<16x8xf32>
    %11 = tpu.matmul %10, %2, %cst_6 {dimension_numbers = #tpu.dot_dimension_numbers<[1], [0], [0], [1], [0, 0, 1, 1], [], []>} : vector<16x18xbf16>, vector<18x8xbf16>, vector<16x8xf32> -> vector<16x8xf32>
    %12 = vector.broadcast %3 : vector<1x8xf32> to vector<16x8xf32>
    %13 = arith.addf %11, %12 : vector<16x8xf32>
    %cst_7 = arith.constant 0.000000e+00 : f32
    %14 = vector.broadcast %cst_7 : f32 to vector<16x8xf32>
    %15 = arith.cmpf ogt, %13, %14 : vector<16x8xf32>
    %cst_8 = arith.constant 2.000000e-01 : f32
    %16 = vector.broadcast %cst_8 : f32 to vector<16x8xf32>
    %17 = arith.mulf %16, %13 : vector<16x8xf32>
    %18 = arith.select %15, %13, %17 : vector<16x8xi1>, vector<16x8xf32>
    %c0_9 = arith.constant 0 : index
    %c0_10 = arith.constant 0 : index
    %19 = vector.load %arg4[%c0_9, %c0_10] : memref<24x8xbf16, #tpu.memory_space<vmem>>, vector<24x8xbf16>
    %c0_11 = arith.constant 0 : index
    %c0_12 = arith.constant 0 : index
    %20 = vector.load %arg5[%c0_11, %c0_12] : memref<1x8xf32, #tpu.memory_space<vmem>>, vector<1x8xf32>
    %21 = arith.truncf %18 : vector<16x8xf32> to vector<16x8xbf16>
    %cst_13 = arith.constant 0.000000e+00 : bf16
    %22 = vector.broadcast %cst_13 : bf16 to vector<1x8xbf16>
    %23 = vector.extract_strided_slice %21 {offsets = [0, 0], sizes = [15, 8], strides = [1, 1]} : vector<16x8xbf16> to vector<15x8xbf16>
    %24 = tpu.concatenate %22, %23 in 0 : vector<1x8xbf16>, vector<15x8xbf16> -> vector<16x8xbf16>
    %25 = vector.extract_strided_slice %21 {offsets = [1, 0], sizes = [15, 8], strides = [1, 1]} : vector<16x8xbf16> to vector<15x8xbf16>
    %26 = tpu.concatenate %25, %22 in 0 : vector<15x8xbf16>, vector<1x8xbf16> -> vector<16x8xbf16>
    %27 = tpu.concatenate %24, %21, %26 in 1 : vector<16x8xbf16>, vector<16x8xbf16>, vector<16x8xbf16> -> vector<16x24xbf16>
    %cst_14 = arith.constant dense<0.000000e+00> : vector<16x8xf32>
    %28 = tpu.matmul %27, %19, %cst_14 {dimension_numbers = #tpu.dot_dimension_numbers<[1], [0], [0], [1], [0, 0, 1, 1], [], []>} : vector<16x24xbf16>, vector<24x8xbf16>, vector<16x8xf32> -> vector<16x8xf32>
    %29 = vector.broadcast %20 : vector<1x8xf32> to vector<16x8xf32>
    %30 = arith.addf %28, %29 : vector<16x8xf32>
    %31 = arith.addf %30, %18 : vector<16x8xf32>
    %cst_15 = arith.constant 0.000000e+00 : f32
    %32 = vector.broadcast %cst_15 : f32 to vector<16x8xf32>
    %33 = arith.cmpf ogt, %31, %32 : vector<16x8xf32>
    %cst_16 = arith.constant 2.000000e-01 : f32
    %34 = vector.broadcast %cst_16 : f32 to vector<16x8xf32>
    %35 = arith.mulf %34, %31 : vector<16x8xf32>
    %36 = arith.select %33, %31, %35 : vector<16x8xi1>, vector<16x8xf32>
    %c0_17 = arith.constant 0 : index
    %c0_18 = arith.constant 0 : index
    %37 = vector.load %arg6[%c0_17, %c0_18] : memref<24x8xbf16, #tpu.memory_space<vmem>>, vector<24x8xbf16>
    %c0_19 = arith.constant 0 : index
    %c0_20 = arith.constant 0 : index
    %38 = vector.load %arg7[%c0_19, %c0_20] : memref<1x8xf32, #tpu.memory_space<vmem>>, vector<1x8xf32>
    %39 = arith.truncf %36 : vector<16x8xf32> to vector<16x8xbf16>
    %cst_21 = arith.constant 0.000000e+00 : bf16
    %40 = vector.broadcast %cst_21 : bf16 to vector<1x8xbf16>
    %41 = vector.extract_strided_slice %39 {offsets = [0, 0], sizes = [15, 8], strides = [1, 1]} : vector<16x8xbf16> to vector<15x8xbf16>
    %42 = tpu.concatenate %40, %41 in 0 : vector<1x8xbf16>, vector<15x8xbf16> -> vector<16x8xbf16>
    %43 = vector.extract_strided_slice %39 {offsets = [1, 0], sizes = [15, 8], strides = [1, 1]} : vector<16x8xbf16> to vector<15x8xbf16>
    %44 = tpu.concatenate %43, %40 in 0 : vector<15x8xbf16>, vector<1x8xbf16> -> vector<16x8xbf16>
    %45 = tpu.concatenate %42, %39, %44 in 1 : vector<16x8xbf16>, vector<16x8xbf16>, vector<16x8xbf16> -> vector<16x24xbf16>
    %cst_22 = arith.constant dense<0.000000e+00> : vector<16x8xf32>
    %46 = tpu.matmul %45, %37, %cst_22 {dimension_numbers = #tpu.dot_dimension_numbers<[1], [0], [0], [1], [0, 0, 1, 1], [], []>} : vector<16x24xbf16>, vector<24x8xbf16>, vector<16x8xf32> -> vector<16x8xf32>
    %47 = vector.broadcast %38 : vector<1x8xf32> to vector<16x8xf32>
    %48 = arith.addf %46, %47 : vector<16x8xf32>
    %49 = arith.addf %48, %36 : vector<16x8xf32>
    %cst_23 = arith.constant 0.000000e+00 : f32
    %50 = vector.broadcast %cst_23 : f32 to vector<16x8xf32>
    %51 = arith.cmpf ogt, %49, %50 : vector<16x8xf32>
    %cst_24 = arith.constant 2.000000e-01 : f32
    %52 = vector.broadcast %cst_24 : f32 to vector<16x8xf32>
    %53 = arith.mulf %52, %49 : vector<16x8xf32>
    %54 = arith.select %51, %49, %53 : vector<16x8xi1>, vector<16x8xf32>
    %c0_25 = arith.constant 0 : index
    %c0_26 = arith.constant 0 : index
    %55 = vector.load %arg8[%c0_25, %c0_26] : memref<24x8xbf16, #tpu.memory_space<vmem>>, vector<24x8xbf16>
    %c0_27 = arith.constant 0 : index
    %c0_28 = arith.constant 0 : index
    %56 = vector.load %arg9[%c0_27, %c0_28] : memref<1x8xf32, #tpu.memory_space<vmem>>, vector<1x8xf32>
    %57 = arith.truncf %54 : vector<16x8xf32> to vector<16x8xbf16>
    %cst_29 = arith.constant 0.000000e+00 : bf16
    %58 = vector.broadcast %cst_29 : bf16 to vector<1x8xbf16>
    %59 = vector.extract_strided_slice %57 {offsets = [0, 0], sizes = [15, 8], strides = [1, 1]} : vector<16x8xbf16> to vector<15x8xbf16>
    %60 = tpu.concatenate %58, %59 in 0 : vector<1x8xbf16>, vector<15x8xbf16> -> vector<16x8xbf16>
    %61 = vector.extract_strided_slice %57 {offsets = [1, 0], sizes = [15, 8], strides = [1, 1]} : vector<16x8xbf16> to vector<15x8xbf16>
    %62 = tpu.concatenate %61, %58 in 0 : vector<15x8xbf16>, vector<1x8xbf16> -> vector<16x8xbf16>
    %63 = tpu.concatenate %60, %57, %62 in 1 : vector<16x8xbf16>, vector<16x8xbf16>, vector<16x8xbf16> -> vector<16x24xbf16>
    %cst_30 = arith.constant dense<0.000000e+00> : vector<16x8xf32>
    %64 = tpu.matmul %63, %55, %cst_30 {dimension_numbers = #tpu.dot_dimension_numbers<[1], [0], [0], [1], [0, 0, 1, 1], [], []>} : vector<16x24xbf16>, vector<24x8xbf16>, vector<16x8xf32> -> vector<16x8xf32>
    %65 = vector.broadcast %56 : vector<1x8xf32> to vector<16x8xf32>
    %66 = arith.addf %64, %65 : vector<16x8xf32>
    %67 = arith.addf %66, %18 : vector<16x8xf32>
    %cst_31 = arith.constant 0.000000e+00 : f32
    %68 = vector.broadcast %cst_31 : f32 to vector<16x8xf32>
    %69 = arith.maximumf %67, %68 : vector<16x8xf32>
    %70 = arith.truncf %69 : vector<16x8xf32> to vector<16x8xbf16>
    %c0_32 = arith.constant 0 : index
    %c0_33 = arith.constant 0 : index
    %c0_34 = arith.constant 0 : index
    %71 = vector.load %arg10[%c0_32, %c0_33, %c0_34] : memref<1x16x8xbf16, #tpu.memory_space<vmem>>, vector<1x16x8xbf16>
    %72 = vector.shape_cast %71 : vector<1x16x8xbf16> to vector<16x8xbf16>
    %73 = vector.shape_cast %70 : vector<16x8xbf16> to vector<1x16x8xbf16>
    tpu.vector_store %arg10[%c0_32, %c0_33, %c0_34], %73 {strides = array<i32>} : memref<1x16x8xbf16, #tpu.memory_space<vmem>>, vector<1x16x8xbf16>,
    return
  }
  func.func @transform_0(%arg0: i32) -> (i32, i32, i32) {
    %c0_i32 = arith.constant 0 : i32
    %c0_i32_0 = arith.constant 0 : i32
    %c0_i32_1 = arith.constant 0 : i32
    return %arg0, %c0_i32, %c0_i32_0 : i32, i32, i32
  }
  func.func @transform_1(%arg0: i32) -> (i32, i32) {
    %c0_i32 = arith.constant 0 : i32
    %c0_i32_0 = arith.constant 0 : i32
    %c0_i32_1 = arith.constant 0 : i32
    return %c0_i32, %c0_i32_0 : i32, i32
  }
  func.func @transform_2(%arg0: i32) -> (i32, i32) {
    %c0_i32 = arith.constant 0 : i32
    %c0_i32_0 = arith.constant 0 : i32
    %c0_i32_1 = arith.constant 0 : i32
    return %c0_i32, %c0_i32_0 : i32, i32
  }
  func.func @transform_3(%arg0: i32) -> (i32, i32) {
    %c0_i32 = arith.constant 0 : i32
    %c0_i32_0 = arith.constant 0 : i32
    %c0_i32_1 = arith.constant 0 : i32
    return %c0_i32, %c0_i32_0 : i32, i32
  }
  func.func @transform_4(%arg0: i32) -> (i32, i32) {
    %c0_i32 = arith.constant 0 : i32
    %c0_i32_0 = arith.constant 0 : i32
    %c0_i32_1 = arith.constant 0 : i32
    return %c0_i32, %c0_i32_0 : i32, i32
  }
  func.func @transform_5(%arg0: i32) -> (i32, i32) {
    %c0_i32 = arith.constant 0 : i32
    %c0_i32_0 = arith.constant 0 : i32
    %c0_i32_1 = arith.constant 0 : i32
    return %c0_i32, %c0_i32_0 : i32, i32
  }
  func.func @transform_6(%arg0: i32) -> (i32, i32) {
    %c0_i32 = arith.constant 0 : i32
    %c0_i32_0 = arith.constant 0 : i32
    %c0_i32_1 = arith.constant 0 : i32
    return %c0_i32, %c0_i32_0 : i32, i32
  }
  func.func @transform_7(%arg0: i32) -> (i32, i32) {
    %c0_i32 = arith.constant 0 : i32
    %c0_i32_0 = arith.constant 0 : i32
    %c0_i32_1 = arith.constant 0 : i32
    return %c0_i32, %c0_i32_0 : i32, i32
  }
  func.func @transform_8(%arg0: i32) -> (i32, i32) {
    %c0_i32 = arith.constant 0 : i32
    %c0_i32_0 = arith.constant 0 : i32
    %c0_i32_1 = arith.constant 0 : i32
    return %c0_i32, %c0_i32_0 : i32, i32
  }
  func.func @transform_9(%arg0: i32) -> (i32, i32, i32) {
    %c0_i32 = arith.constant 0 : i32
    %c0_i32_0 = arith.constant 0 : i32
    %c0_i32_1 = arith.constant 0 : i32
    return %arg0, %c0_i32, %c0_i32_0 : i32, i32, i32
  }
}

module attributes {stable_mosaic.version = 11 : i64} {
  func.func @_chain_kernel(%arg0: i32, %arg1: memref<1x8x16xbf16, #tpu.memory_space<vmem>>, %arg2: memref<32x16xbf16, #tpu.memory_space<vmem>>, %arg3: memref<1x16xf32, #tpu.memory_space<vmem>>, %arg4: memref<48x16xbf16, #tpu.memory_space<vmem>>, %arg5: memref<1x16xf32, #tpu.memory_space<vmem>>, %arg6: memref<48x16xbf16, #tpu.memory_space<vmem>>, %arg7: memref<1x16xf32, #tpu.memory_space<vmem>>, %arg8: memref<48x16xbf16, #tpu.memory_space<vmem>>, %arg9: memref<1x16xf32, #tpu.memory_space<vmem>>, %arg10: memref<1x8x16xbf16, #tpu.memory_space<vmem>>) attributes {dimension_semantics = [#tpu.dimension_semantics<parallel>], iteration_bounds = array<i64: 2>, scalar_prefetch = 0 : i64, scratch_operands = 0 : i64, tpu.core_type = #tpu.core_type<tc>, window_params = [{transform_indices = @transform_0, window_bounds = array<i64: 1, 8, 16>}, {pipeline_mode = #tpu.pipeline_mode<synchronous>, transform_indices = @transform_1, window_bounds = array<i64: 32, 16>}, {pipeline_mode = #tpu.pipeline_mode<synchronous>, transform_indices = @transform_2, window_bounds = array<i64: 1, 16>}, {pipeline_mode = #tpu.pipeline_mode<synchronous>, transform_indices = @transform_3, window_bounds = array<i64: 48, 16>}, {pipeline_mode = #tpu.pipeline_mode<synchronous>, transform_indices = @transform_4, window_bounds = array<i64: 1, 16>}, {pipeline_mode = #tpu.pipeline_mode<synchronous>, transform_indices = @transform_5, window_bounds = array<i64: 48, 16>}, {pipeline_mode = #tpu.pipeline_mode<synchronous>, transform_indices = @transform_6, window_bounds = array<i64: 1, 16>}, {pipeline_mode = #tpu.pipeline_mode<synchronous>, transform_indices = @transform_7, window_bounds = array<i64: 48, 16>}, {pipeline_mode = #tpu.pipeline_mode<synchronous>, transform_indices = @transform_8, window_bounds = array<i64: 1, 16>}, {transform_indices = @transform_9, window_bounds = array<i64: 1, 8, 16>}]} {
    %c0 = arith.constant 0 : index
    %c0_0 = arith.constant 0 : index
    %c0_1 = arith.constant 0 : index
    %0 = vector.load %arg1[%c0, %c0_0, %c0_1] : memref<1x8x16xbf16, #tpu.memory_space<vmem>>, vector<1x8x16xbf16>
    %1 = vector.shape_cast %0 : vector<1x8x16xbf16> to vector<8x16xbf16>
    %2 = arith.extf %1 : vector<8x16xbf16> to vector<8x16xf32>
    %c0_2 = arith.constant 0 : index
    %c0_3 = arith.constant 0 : index
    %3 = vector.load %arg2[%c0_2, %c0_3] : memref<32x16xbf16, #tpu.memory_space<vmem>>, vector<32x16xbf16>
    %c0_4 = arith.constant 0 : index
    %c0_5 = arith.constant 0 : index
    %4 = vector.load %arg3[%c0_4, %c0_5] : memref<1x16xf32, #tpu.memory_space<vmem>>, vector<1x16xf32>
    %5 = arith.truncf %2 : vector<8x16xf32> to vector<8x16xbf16>
    %6 = vector.extract_strided_slice %5 {offsets = [0, 0], sizes = [8, 8], strides = [1, 1]} : vector<8x16xbf16> to vector<8x8xbf16>
    %7 = vector.extract_strided_slice %5 {offsets = [0, 8], sizes = [8, 8], strides = [1, 1]} : vector<8x16xbf16> to vector<8x8xbf16>
    %cst = arith.constant 0.000000e+00 : bf16
    %8 = vector.broadcast %cst : bf16 to vector<1x8xbf16>
    %9 = vector.extract_strided_slice %7 {offsets = [0, 0], sizes = [7, 8], strides = [1, 1]} : vector<8x8xbf16> to vector<7x8xbf16>
    %10 = tpu.concatenate %8, %9 in 0 : vector<1x8xbf16>, vector<7x8xbf16> -> vector<8x8xbf16>
    %11 = vector.extract_strided_slice %6 {offsets = [1, 0], sizes = [7, 8], strides = [1, 1]} : vector<8x8xbf16> to vector<7x8xbf16>
    %12 = tpu.concatenate %11, %8 in 0 : vector<7x8xbf16>, vector<1x8xbf16> -> vector<8x8xbf16>
    %13 = tpu.concatenate %10, %6, %7, %12 in 1 : vector<8x8xbf16>, vector<8x8xbf16>, vector<8x8xbf16>, vector<8x8xbf16> -> vector<8x32xbf16>
    %cst_6 = arith.constant dense<0.000000e+00> : vector<8x16xf32>
    %14 = tpu.matmul %13, %3, %cst_6 {dimension_numbers = #tpu.dot_dimension_numbers<[1], [0], [0], [1], [0, 0, 1, 1], [], []>} : vector<8x32xbf16>, vector<32x16xbf16>, vector<8x16xf32> -> vector<8x16xf32>
    %15 = vector.broadcast %4 : vector<1x16xf32> to vector<8x16xf32>
    %16 = arith.addf %14, %15 : vector<8x16xf32>
    %cst_7 = arith.constant 0.000000e+00 : f32
    %17 = vector.broadcast %cst_7 : f32 to vector<8x16xf32>
    %18 = arith.cmpf ogt, %16, %17 : vector<8x16xf32>
    %cst_8 = arith.constant 2.000000e-01 : f32
    %19 = vector.broadcast %cst_8 : f32 to vector<8x16xf32>
    %20 = arith.mulf %19, %16 : vector<8x16xf32>
    %21 = arith.select %18, %16, %20 : vector<8x16xi1>, vector<8x16xf32>
    %c0_9 = arith.constant 0 : index
    %c0_10 = arith.constant 0 : index
    %22 = vector.load %arg4[%c0_9, %c0_10] : memref<48x16xbf16, #tpu.memory_space<vmem>>, vector<48x16xbf16>
    %c0_11 = arith.constant 0 : index
    %c0_12 = arith.constant 0 : index
    %23 = vector.load %arg5[%c0_11, %c0_12] : memref<1x16xf32, #tpu.memory_space<vmem>>, vector<1x16xf32>
    %24 = arith.truncf %21 : vector<8x16xf32> to vector<8x16xbf16>
    %cst_13 = arith.constant 0.000000e+00 : bf16
    %25 = vector.broadcast %cst_13 : bf16 to vector<1x16xbf16>
    %26 = vector.extract_strided_slice %24 {offsets = [0, 0], sizes = [7, 16], strides = [1, 1]} : vector<8x16xbf16> to vector<7x16xbf16>
    %27 = tpu.concatenate %25, %26 in 0 : vector<1x16xbf16>, vector<7x16xbf16> -> vector<8x16xbf16>
    %28 = vector.extract_strided_slice %24 {offsets = [1, 0], sizes = [7, 16], strides = [1, 1]} : vector<8x16xbf16> to vector<7x16xbf16>
    %29 = tpu.concatenate %28, %25 in 0 : vector<7x16xbf16>, vector<1x16xbf16> -> vector<8x16xbf16>
    %30 = tpu.concatenate %27, %24, %29 in 1 : vector<8x16xbf16>, vector<8x16xbf16>, vector<8x16xbf16> -> vector<8x48xbf16>
    %cst_14 = arith.constant dense<0.000000e+00> : vector<8x16xf32>
    %31 = tpu.matmul %30, %22, %cst_14 {dimension_numbers = #tpu.dot_dimension_numbers<[1], [0], [0], [1], [0, 0, 1, 1], [], []>} : vector<8x48xbf16>, vector<48x16xbf16>, vector<8x16xf32> -> vector<8x16xf32>
    %32 = vector.broadcast %23 : vector<1x16xf32> to vector<8x16xf32>
    %33 = arith.addf %31, %32 : vector<8x16xf32>
    %34 = arith.addf %33, %21 : vector<8x16xf32>
    %cst_15 = arith.constant 0.000000e+00 : f32
    %35 = vector.broadcast %cst_15 : f32 to vector<8x16xf32>
    %36 = arith.cmpf ogt, %34, %35 : vector<8x16xf32>
    %cst_16 = arith.constant 2.000000e-01 : f32
    %37 = vector.broadcast %cst_16 : f32 to vector<8x16xf32>
    %38 = arith.mulf %37, %34 : vector<8x16xf32>
    %39 = arith.select %36, %34, %38 : vector<8x16xi1>, vector<8x16xf32>
    %c0_17 = arith.constant 0 : index
    %c0_18 = arith.constant 0 : index
    %40 = vector.load %arg6[%c0_17, %c0_18] : memref<48x16xbf16, #tpu.memory_space<vmem>>, vector<48x16xbf16>
    %c0_19 = arith.constant 0 : index
    %c0_20 = arith.constant 0 : index
    %41 = vector.load %arg7[%c0_19, %c0_20] : memref<1x16xf32, #tpu.memory_space<vmem>>, vector<1x16xf32>
    %42 = arith.truncf %39 : vector<8x16xf32> to vector<8x16xbf16>
    %cst_21 = arith.constant 0.000000e+00 : bf16
    %43 = vector.broadcast %cst_21 : bf16 to vector<1x16xbf16>
    %44 = vector.extract_strided_slice %42 {offsets = [0, 0], sizes = [7, 16], strides = [1, 1]} : vector<8x16xbf16> to vector<7x16xbf16>
    %45 = tpu.concatenate %43, %44 in 0 : vector<1x16xbf16>, vector<7x16xbf16> -> vector<8x16xbf16>
    %46 = vector.extract_strided_slice %42 {offsets = [1, 0], sizes = [7, 16], strides = [1, 1]} : vector<8x16xbf16> to vector<7x16xbf16>
    %47 = tpu.concatenate %46, %43 in 0 : vector<7x16xbf16>, vector<1x16xbf16> -> vector<8x16xbf16>
    %48 = tpu.concatenate %45, %42, %47 in 1 : vector<8x16xbf16>, vector<8x16xbf16>, vector<8x16xbf16> -> vector<8x48xbf16>
    %cst_22 = arith.constant dense<0.000000e+00> : vector<8x16xf32>
    %49 = tpu.matmul %48, %40, %cst_22 {dimension_numbers = #tpu.dot_dimension_numbers<[1], [0], [0], [1], [0, 0, 1, 1], [], []>} : vector<8x48xbf16>, vector<48x16xbf16>, vector<8x16xf32> -> vector<8x16xf32>
    %50 = vector.broadcast %41 : vector<1x16xf32> to vector<8x16xf32>
    %51 = arith.addf %49, %50 : vector<8x16xf32>
    %52 = arith.addf %51, %39 : vector<8x16xf32>
    %cst_23 = arith.constant 0.000000e+00 : f32
    %53 = vector.broadcast %cst_23 : f32 to vector<8x16xf32>
    %54 = arith.cmpf ogt, %52, %53 : vector<8x16xf32>
    %cst_24 = arith.constant 2.000000e-01 : f32
    %55 = vector.broadcast %cst_24 : f32 to vector<8x16xf32>
    %56 = arith.mulf %55, %52 : vector<8x16xf32>
    %57 = arith.select %54, %52, %56 : vector<8x16xi1>, vector<8x16xf32>
    %c0_25 = arith.constant 0 : index
    %c0_26 = arith.constant 0 : index
    %58 = vector.load %arg8[%c0_25, %c0_26] : memref<48x16xbf16, #tpu.memory_space<vmem>>, vector<48x16xbf16>
    %c0_27 = arith.constant 0 : index
    %c0_28 = arith.constant 0 : index
    %59 = vector.load %arg9[%c0_27, %c0_28] : memref<1x16xf32, #tpu.memory_space<vmem>>, vector<1x16xf32>
    %60 = arith.truncf %57 : vector<8x16xf32> to vector<8x16xbf16>
    %cst_29 = arith.constant 0.000000e+00 : bf16
    %61 = vector.broadcast %cst_29 : bf16 to vector<1x16xbf16>
    %62 = vector.extract_strided_slice %60 {offsets = [0, 0], sizes = [7, 16], strides = [1, 1]} : vector<8x16xbf16> to vector<7x16xbf16>
    %63 = tpu.concatenate %61, %62 in 0 : vector<1x16xbf16>, vector<7x16xbf16> -> vector<8x16xbf16>
    %64 = vector.extract_strided_slice %60 {offsets = [1, 0], sizes = [7, 16], strides = [1, 1]} : vector<8x16xbf16> to vector<7x16xbf16>
    %65 = tpu.concatenate %64, %61 in 0 : vector<7x16xbf16>, vector<1x16xbf16> -> vector<8x16xbf16>
    %66 = tpu.concatenate %63, %60, %65 in 1 : vector<8x16xbf16>, vector<8x16xbf16>, vector<8x16xbf16> -> vector<8x48xbf16>
    %cst_30 = arith.constant dense<0.000000e+00> : vector<8x16xf32>
    %67 = tpu.matmul %66, %58, %cst_30 {dimension_numbers = #tpu.dot_dimension_numbers<[1], [0], [0], [1], [0, 0, 1, 1], [], []>} : vector<8x48xbf16>, vector<48x16xbf16>, vector<8x16xf32> -> vector<8x16xf32>
    %68 = vector.broadcast %59 : vector<1x16xf32> to vector<8x16xf32>
    %69 = arith.addf %67, %68 : vector<8x16xf32>
    %70 = arith.addf %69, %21 : vector<8x16xf32>
    %cst_31 = arith.constant 0.000000e+00 : f32
    %71 = vector.broadcast %cst_31 : f32 to vector<8x16xf32>
    %72 = arith.maximumf %70, %71 : vector<8x16xf32>
    %73 = arith.truncf %72 : vector<8x16xf32> to vector<8x16xbf16>
    %c0_32 = arith.constant 0 : index
    %c0_33 = arith.constant 0 : index
    %c0_34 = arith.constant 0 : index
    %74 = vector.load %arg10[%c0_32, %c0_33, %c0_34] : memref<1x8x16xbf16, #tpu.memory_space<vmem>>, vector<1x8x16xbf16>
    %75 = vector.shape_cast %74 : vector<1x8x16xbf16> to vector<8x16xbf16>
    %76 = vector.shape_cast %73 : vector<8x16xbf16> to vector<1x8x16xbf16>
    tpu.vector_store %arg10[%c0_32, %c0_33, %c0_34], %76 {strides = array<i32>} : memref<1x8x16xbf16, #tpu.memory_space<vmem>>, vector<1x8x16xbf16>,
    return
  }
  func.func @transform_0(%arg0: i32) -> (i32, i32, i32) {
    %c0_i32 = arith.constant 0 : i32
    %c0_i32_0 = arith.constant 0 : i32
    %c0_i32_1 = arith.constant 0 : i32
    return %arg0, %c0_i32, %c0_i32_0 : i32, i32, i32
  }
  func.func @transform_1(%arg0: i32) -> (i32, i32) {
    %c0_i32 = arith.constant 0 : i32
    %c0_i32_0 = arith.constant 0 : i32
    %c0_i32_1 = arith.constant 0 : i32
    return %c0_i32, %c0_i32_0 : i32, i32
  }
  func.func @transform_2(%arg0: i32) -> (i32, i32) {
    %c0_i32 = arith.constant 0 : i32
    %c0_i32_0 = arith.constant 0 : i32
    %c0_i32_1 = arith.constant 0 : i32
    return %c0_i32, %c0_i32_0 : i32, i32
  }
  func.func @transform_3(%arg0: i32) -> (i32, i32) {
    %c0_i32 = arith.constant 0 : i32
    %c0_i32_0 = arith.constant 0 : i32
    %c0_i32_1 = arith.constant 0 : i32
    return %c0_i32, %c0_i32_0 : i32, i32
  }
  func.func @transform_4(%arg0: i32) -> (i32, i32) {
    %c0_i32 = arith.constant 0 : i32
    %c0_i32_0 = arith.constant 0 : i32
    %c0_i32_1 = arith.constant 0 : i32
    return %c0_i32, %c0_i32_0 : i32, i32
  }
  func.func @transform_5(%arg0: i32) -> (i32, i32) {
    %c0_i32 = arith.constant 0 : i32
    %c0_i32_0 = arith.constant 0 : i32
    %c0_i32_1 = arith.constant 0 : i32
    return %c0_i32, %c0_i32_0 : i32, i32
  }
  func.func @transform_6(%arg0: i32) -> (i32, i32) {
    %c0_i32 = arith.constant 0 : i32
    %c0_i32_0 = arith.constant 0 : i32
    %c0_i32_1 = arith.constant 0 : i32
    return %c0_i32, %c0_i32_0 : i32, i32
  }
  func.func @transform_7(%arg0: i32) -> (i32, i32) {
    %c0_i32 = arith.constant 0 : i32
    %c0_i32_0 = arith.constant 0 : i32
    %c0_i32_1 = arith.constant 0 : i32
    return %c0_i32, %c0_i32_0 : i32, i32
  }
  func.func @transform_8(%arg0: i32) -> (i32, i32) {
    %c0_i32 = arith.constant 0 : i32
    %c0_i32_0 = arith.constant 0 : i32
    %c0_i32_1 = arith.constant 0 : i32
    return %c0_i32, %c0_i32_0 : i32, i32
  }
  func.func @transform_9(%arg0: i32) -> (i32, i32, i32) {
    %c0_i32 = arith.constant 0 : i32
    %c0_i32_0 = arith.constant 0 : i32
    %c0_i32_1 = arith.constant 0 : i32
    return %arg0, %c0_i32, %c0_i32_0 : i32, i32, i32
  }
}

module attributes {stable_mosaic.version = 11 : i64} {
  func.func @_chain_kernel(%arg0: i32, %arg1: memref<1x4x16xf32, #tpu.memory_space<vmem>>, %arg2: memref<16x32xbf16, #tpu.memory_space<vmem>>, %arg3: memref<1x32xf32, #tpu.memory_space<vmem>>, %arg4: memref<96x32xbf16, #tpu.memory_space<vmem>>, %arg5: memref<1x32xf32, #tpu.memory_space<vmem>>, %arg6: memref<96x32xbf16, #tpu.memory_space<vmem>>, %arg7: memref<1x32xf32, #tpu.memory_space<vmem>>, %arg8: memref<96x32xbf16, #tpu.memory_space<vmem>>, %arg9: memref<1x32xf32, #tpu.memory_space<vmem>>, %arg10: memref<1x4x32xbf16, #tpu.memory_space<vmem>>) attributes {dimension_semantics = [#tpu.dimension_semantics<parallel>], iteration_bounds = array<i64: 2>, scalar_prefetch = 0 : i64, scratch_operands = 0 : i64, tpu.core_type = #tpu.core_type<tc>, window_params = [{transform_indices = @transform_0, window_bounds = array<i64: 1, 4, 16>}, {pipeline_mode = #tpu.pipeline_mode<synchronous>, transform_indices = @transform_1, window_bounds = array<i64: 16, 32>}, {pipeline_mode = #tpu.pipeline_mode<synchronous>, transform_indices = @transform_2, window_bounds = array<i64: 1, 32>}, {pipeline_mode = #tpu.pipeline_mode<synchronous>, transform_indices = @transform_3, window_bounds = array<i64: 96, 32>}, {pipeline_mode = #tpu.pipeline_mode<synchronous>, transform_indices = @transform_4, window_bounds = array<i64: 1, 32>}, {pipeline_mode = #tpu.pipeline_mode<synchronous>, transform_indices = @transform_5, window_bounds = array<i64: 96, 32>}, {pipeline_mode = #tpu.pipeline_mode<synchronous>, transform_indices = @transform_6, window_bounds = array<i64: 1, 32>}, {pipeline_mode = #tpu.pipeline_mode<synchronous>, transform_indices = @transform_7, window_bounds = array<i64: 96, 32>}, {pipeline_mode = #tpu.pipeline_mode<synchronous>, transform_indices = @transform_8, window_bounds = array<i64: 1, 32>}, {transform_indices = @transform_9, window_bounds = array<i64: 1, 4, 32>}]} {
    %c0 = arith.constant 0 : index
    %c0_0 = arith.constant 0 : index
    %c0_1 = arith.constant 0 : index
    %0 = vector.load %arg1[%c0, %c0_0, %c0_1] : memref<1x4x16xf32, #tpu.memory_space<vmem>>, vector<1x4x16xf32>
    %1 = vector.shape_cast %0 : vector<1x4x16xf32> to vector<4x16xf32>
    %c0_2 = arith.constant 0 : index
    %c0_3 = arith.constant 0 : index
    %2 = vector.load %arg2[%c0_2, %c0_3] : memref<16x32xbf16, #tpu.memory_space<vmem>>, vector<16x32xbf16>
    %c0_4 = arith.constant 0 : index
    %c0_5 = arith.constant 0 : index
    %3 = vector.load %arg3[%c0_4, %c0_5] : memref<1x32xf32, #tpu.memory_space<vmem>>, vector<1x32xf32>
    %4 = arith.truncf %1 : vector<4x16xf32> to vector<4x16xbf16>
    %cst = arith.constant dense<0.000000e+00> : vector<4x32xf32>
    %5 = tpu.matmul %4, %2, %cst {dimension_numbers = #tpu.dot_dimension_numbers<[1], [0], [0], [1], [0, 0, 1, 1], [], []>} : vector<4x16xbf16>, vector<16x32xbf16>, vector<4x32xf32> -> vector<4x32xf32>
    %6 = vector.broadcast %3 : vector<1x32xf32> to vector<4x32xf32>
    %7 = arith.addf %5, %6 : vector<4x32xf32>
    %c0_6 = arith.constant 0 : index
    %c0_7 = arith.constant 0 : index
    %8 = vector.load %arg4[%c0_6, %c0_7] : memref<96x32xbf16, #tpu.memory_space<vmem>>, vector<96x32xbf16>
    %c0_8 = arith.constant 0 : index
    %c0_9 = arith.constant 0 : index
    %9 = vector.load %arg5[%c0_8, %c0_9] : memref<1x32xf32, #tpu.memory_space<vmem>>, vector<1x32xf32>
    %10 = arith.truncf %7 : vector<4x32xf32> to vector<4x32xbf16>
    %cst_10 = arith.constant 0.000000e+00 : bf16
    %11 = vector.broadcast %cst_10 : bf16 to vector<1x32xbf16>
    %12 = vector.extract_strided_slice %10 {offsets = [0, 0], sizes = [3, 32], strides = [1, 1]} : vector<4x32xbf16> to vector<3x32xbf16>
    %13 = tpu.concatenate %11, %12 in 0 : vector<1x32xbf16>, vector<3x32xbf16> -> vector<4x32xbf16>
    %14 = vector.extract_strided_slice %10 {offsets = [1, 0], sizes = [3, 32], strides = [1, 1]} : vector<4x32xbf16> to vector<3x32xbf16>
    %15 = tpu.concatenate %14, %11 in 0 : vector<3x32xbf16>, vector<1x32xbf16> -> vector<4x32xbf16>
    %16 = tpu.concatenate %13, %10, %15 in 1 : vector<4x32xbf16>, vector<4x32xbf16>, vector<4x32xbf16> -> vector<4x96xbf16>
    %cst_11 = arith.constant dense<0.000000e+00> : vector<4x32xf32>
    %17 = tpu.matmul %16, %8, %cst_11 {dimension_numbers = #tpu.dot_dimension_numbers<[1], [0], [0], [1], [0, 0, 1, 1], [], []>} : vector<4x96xbf16>, vector<96x32xbf16>, vector<4x32xf32> -> vector<4x32xf32>
    %18 = vector.broadcast %9 : vector<1x32xf32> to vector<4x32xf32>
    %19 = arith.addf %17, %18 : vector<4x32xf32>
    %20 = arith.addf %19, %7 : vector<4x32xf32>
    %cst_12 = arith.constant 0.000000e+00 : f32
    %21 = vector.broadcast %cst_12 : f32 to vector<4x32xf32>
    %22 = arith.cmpf ogt, %20, %21 : vector<4x32xf32>
    %cst_13 = arith.constant 2.000000e-01 : f32
    %23 = vector.broadcast %cst_13 : f32 to vector<4x32xf32>
    %24 = arith.mulf %23, %20 : vector<4x32xf32>
    %25 = arith.select %22, %20, %24 : vector<4x32xi1>, vector<4x32xf32>
    %c0_14 = arith.constant 0 : index
    %c0_15 = arith.constant 0 : index
    %26 = vector.load %arg6[%c0_14, %c0_15] : memref<96x32xbf16, #tpu.memory_space<vmem>>, vector<96x32xbf16>
    %c0_16 = arith.constant 0 : index
    %c0_17 = arith.constant 0 : index
    %27 = vector.load %arg7[%c0_16, %c0_17] : memref<1x32xf32, #tpu.memory_space<vmem>>, vector<1x32xf32>
    %28 = arith.truncf %25 : vector<4x32xf32> to vector<4x32xbf16>
    %cst_18 = arith.constant 0.000000e+00 : bf16
    %29 = vector.broadcast %cst_18 : bf16 to vector<1x32xbf16>
    %30 = vector.extract_strided_slice %28 {offsets = [0, 0], sizes = [3, 32], strides = [1, 1]} : vector<4x32xbf16> to vector<3x32xbf16>
    %31 = tpu.concatenate %29, %30 in 0 : vector<1x32xbf16>, vector<3x32xbf16> -> vector<4x32xbf16>
    %32 = vector.extract_strided_slice %28 {offsets = [1, 0], sizes = [3, 32], strides = [1, 1]} : vector<4x32xbf16> to vector<3x32xbf16>
    %33 = tpu.concatenate %32, %29 in 0 : vector<3x32xbf16>, vector<1x32xbf16> -> vector<4x32xbf16>
    %34 = tpu.concatenate %31, %28, %33 in 1 : vector<4x32xbf16>, vector<4x32xbf16>, vector<4x32xbf16> -> vector<4x96xbf16>
    %cst_19 = arith.constant dense<0.000000e+00> : vector<4x32xf32>
    %35 = tpu.matmul %34, %26, %cst_19 {dimension_numbers = #tpu.dot_dimension_numbers<[1], [0], [0], [1], [0, 0, 1, 1], [], []>} : vector<4x96xbf16>, vector<96x32xbf16>, vector<4x32xf32> -> vector<4x32xf32>
    %36 = vector.broadcast %27 : vector<1x32xf32> to vector<4x32xf32>
    %37 = arith.addf %35, %36 : vector<4x32xf32>
    %38 = arith.addf %37, %25 : vector<4x32xf32>
    %cst_20 = arith.constant 0.000000e+00 : f32
    %39 = vector.broadcast %cst_20 : f32 to vector<4x32xf32>
    %40 = arith.cmpf ogt, %38, %39 : vector<4x32xf32>
    %cst_21 = arith.constant 2.000000e-01 : f32
    %41 = vector.broadcast %cst_21 : f32 to vector<4x32xf32>
    %42 = arith.mulf %41, %38 : vector<4x32xf32>
    %43 = arith.select %40, %38, %42 : vector<4x32xi1>, vector<4x32xf32>
    %c0_22 = arith.constant 0 : index
    %c0_23 = arith.constant 0 : index
    %44 = vector.load %arg8[%c0_22, %c0_23] : memref<96x32xbf16, #tpu.memory_space<vmem>>, vector<96x32xbf16>
    %c0_24 = arith.constant 0 : index
    %c0_25 = arith.constant 0 : index
    %45 = vector.load %arg9[%c0_24, %c0_25] : memref<1x32xf32, #tpu.memory_space<vmem>>, vector<1x32xf32>
    %46 = arith.truncf %43 : vector<4x32xf32> to vector<4x32xbf16>
    %cst_26 = arith.constant 0.000000e+00 : bf16
    %47 = vector.broadcast %cst_26 : bf16 to vector<1x32xbf16>
    %48 = vector.extract_strided_slice %46 {offsets = [0, 0], sizes = [3, 32], strides = [1, 1]} : vector<4x32xbf16> to vector<3x32xbf16>
    %49 = tpu.concatenate %47, %48 in 0 : vector<1x32xbf16>, vector<3x32xbf16> -> vector<4x32xbf16>
    %50 = vector.extract_strided_slice %46 {offsets = [1, 0], sizes = [3, 32], strides = [1, 1]} : vector<4x32xbf16> to vector<3x32xbf16>
    %51 = tpu.concatenate %50, %47 in 0 : vector<3x32xbf16>, vector<1x32xbf16> -> vector<4x32xbf16>
    %52 = tpu.concatenate %49, %46, %51 in 1 : vector<4x32xbf16>, vector<4x32xbf16>, vector<4x32xbf16> -> vector<4x96xbf16>
    %cst_27 = arith.constant dense<0.000000e+00> : vector<4x32xf32>
    %53 = tpu.matmul %52, %44, %cst_27 {dimension_numbers = #tpu.dot_dimension_numbers<[1], [0], [0], [1], [0, 0, 1, 1], [], []>} : vector<4x96xbf16>, vector<96x32xbf16>, vector<4x32xf32> -> vector<4x32xf32>
    %54 = vector.broadcast %45 : vector<1x32xf32> to vector<4x32xf32>
    %55 = arith.addf %53, %54 : vector<4x32xf32>
    %56 = arith.addf %55, %7 : vector<4x32xf32>
    %cst_28 = arith.constant 0.000000e+00 : f32
    %57 = vector.broadcast %cst_28 : f32 to vector<4x32xf32>
    %58 = arith.maximumf %56, %57 : vector<4x32xf32>
    %59 = arith.truncf %58 : vector<4x32xf32> to vector<4x32xbf16>
    %c0_29 = arith.constant 0 : index
    %c0_30 = arith.constant 0 : index
    %c0_31 = arith.constant 0 : index
    %60 = vector.load %arg10[%c0_29, %c0_30, %c0_31] : memref<1x4x32xbf16, #tpu.memory_space<vmem>>, vector<1x4x32xbf16>
    %61 = vector.shape_cast %60 : vector<1x4x32xbf16> to vector<4x32xbf16>
    %62 = vector.shape_cast %59 : vector<4x32xbf16> to vector<1x4x32xbf16>
    tpu.vector_store %arg10[%c0_29, %c0_30, %c0_31], %62 {strides = array<i32>} : memref<1x4x32xbf16, #tpu.memory_space<vmem>>, vector<1x4x32xbf16>,
    return
  }
  func.func @transform_0(%arg0: i32) -> (i32, i32, i32) {
    %c0_i32 = arith.constant 0 : i32
    %c0_i32_0 = arith.constant 0 : i32
    %c0_i32_1 = arith.constant 0 : i32
    return %arg0, %c0_i32, %c0_i32_0 : i32, i32, i32
  }
  func.func @transform_1(%arg0: i32) -> (i32, i32) {
    %c0_i32 = arith.constant 0 : i32
    %c0_i32_0 = arith.constant 0 : i32
    %c0_i32_1 = arith.constant 0 : i32
    return %c0_i32, %c0_i32_0 : i32, i32
  }
  func.func @transform_2(%arg0: i32) -> (i32, i32) {
    %c0_i32 = arith.constant 0 : i32
    %c0_i32_0 = arith.constant 0 : i32
    %c0_i32_1 = arith.constant 0 : i32
    return %c0_i32, %c0_i32_0 : i32, i32
  }
  func.func @transform_3(%arg0: i32) -> (i32, i32) {
    %c0_i32 = arith.constant 0 : i32
    %c0_i32_0 = arith.constant 0 : i32
    %c0_i32_1 = arith.constant 0 : i32
    return %c0_i32, %c0_i32_0 : i32, i32
  }
  func.func @transform_4(%arg0: i32) -> (i32, i32) {
    %c0_i32 = arith.constant 0 : i32
    %c0_i32_0 = arith.constant 0 : i32
    %c0_i32_1 = arith.constant 0 : i32
    return %c0_i32, %c0_i32_0 : i32, i32
  }
  func.func @transform_5(%arg0: i32) -> (i32, i32) {
    %c0_i32 = arith.constant 0 : i32
    %c0_i32_0 = arith.constant 0 : i32
    %c0_i32_1 = arith.constant 0 : i32
    return %c0_i32, %c0_i32_0 : i32, i32
  }
  func.func @transform_6(%arg0: i32) -> (i32, i32) {
    %c0_i32 = arith.constant 0 : i32
    %c0_i32_0 = arith.constant 0 : i32
    %c0_i32_1 = arith.constant 0 : i32
    return %c0_i32, %c0_i32_0 : i32, i32
  }
  func.func @transform_7(%arg0: i32) -> (i32, i32) {
    %c0_i32 = arith.constant 0 : i32
    %c0_i32_0 = arith.constant 0 : i32
    %c0_i32_1 = arith.constant 0 : i32
    return %c0_i32, %c0_i32_0 : i32, i32
  }
  func.func @transform_8(%arg0: i32) -> (i32, i32) {
    %c0_i32 = arith.constant 0 : i32
    %c0_i32_0 = arith.constant 0 : i32
    %c0_i32_1 = arith.constant 0 : i32
    return %c0_i32, %c0_i32_0 : i32, i32
  }
  func.func @transform_9(%arg0: i32) -> (i32, i32, i32) {
    %c0_i32 = arith.constant 0 : i32
    %c0_i32_0 = arith.constant 0 : i32
    %c0_i32_1 = arith.constant 0 : i32
    return %arg0, %c0_i32, %c0_i32_0 : i32, i32, i32
  }
}

module attributes {stable_mosaic.version = 11 : i64} {
  func.func @_chain_kernel(%arg0: i32, %arg1: memref<1x4x32xbf16, #tpu.memory_space<vmem>>, %arg2: memref<64x32xbf16, #tpu.memory_space<vmem>>, %arg3: memref<1x32xf32, #tpu.memory_space<vmem>>, %arg4: memref<96x32xbf16, #tpu.memory_space<vmem>>, %arg5: memref<1x32xf32, #tpu.memory_space<vmem>>, %arg6: memref<96x32xbf16, #tpu.memory_space<vmem>>, %arg7: memref<1x32xf32, #tpu.memory_space<vmem>>, %arg8: memref<96x32xbf16, #tpu.memory_space<vmem>>, %arg9: memref<1x32xf32, #tpu.memory_space<vmem>>, %arg10: memref<32x16xbf16, #tpu.memory_space<vmem>>, %arg11: memref<1x16xf32, #tpu.memory_space<vmem>>, %arg12: memref<32x16xf32, #tpu.memory_space<vmem>>, %arg13: memref<1x32xf32, #tpu.memory_space<vmem>>, %arg14: memref<1x4x16xf32, #tpu.memory_space<vmem>>) attributes {dimension_semantics = [#tpu.dimension_semantics<parallel>], iteration_bounds = array<i64: 2>, scalar_prefetch = 0 : i64, scratch_operands = 0 : i64, tpu.core_type = #tpu.core_type<tc>, window_params = [{transform_indices = @transform_0, window_bounds = array<i64: 1, 4, 32>}, {pipeline_mode = #tpu.pipeline_mode<synchronous>, transform_indices = @transform_1, window_bounds = array<i64: 64, 32>}, {pipeline_mode = #tpu.pipeline_mode<synchronous>, transform_indices = @transform_2, window_bounds = array<i64: 1, 32>}, {pipeline_mode = #tpu.pipeline_mode<synchronous>, transform_indices = @transform_3, window_bounds = array<i64: 96, 32>}, {pipeline_mode = #tpu.pipeline_mode<synchronous>, transform_indices = @transform_4, window_bounds = array<i64: 1, 32>}, {pipeline_mode = #tpu.pipeline_mode<synchronous>, transform_indices = @transform_5, window_bounds = array<i64: 96, 32>}, {pipeline_mode = #tpu.pipeline_mode<synchronous>, transform_indices = @transform_6, window_bounds = array<i64: 1, 32>}, {pipeline_mode = #tpu.pipeline_mode<synchronous>, transform_indices = @transform_7, window_bounds = array<i64: 96, 32>}, {pipeline_mode = #tpu.pipeline_mode<synchronous>, transform_indices = @transform_8, window_bounds = array<i64: 1, 32>}, {pipeline_mode = #tpu.pipeline_mode<synchronous>, transform_indices = @transform_9, window_bounds = array<i64: 32, 16>}, {pipeline_mode = #tpu.pipeline_mode<synchronous>, transform_indices = @transform_10, window_bounds = array<i64: 1, 16>}, {pipeline_mode = #tpu.pipeline_mode<synchronous>, transform_indices = @transform_11, window_bounds = array<i64: 32, 16>}, {pipeline_mode = #tpu.pipeline_mode<synchronous>, transform_indices = @transform_12, window_bounds = array<i64: 1, 32>}, {transform_indices = @transform_13, window_bounds = array<i64: 1, 4, 16>}]} {
    %c0 = arith.constant 0 : index
    %c0_0 = arith.constant 0 : index
    %c0_1 = arith.constant 0 : index
    %0 = vector.load %arg1[%c0, %c0_0, %c0_1] : memref<1x4x32xbf16, #tpu.memory_space<vmem>>, vector<1x4x32xbf16>
    %1 = vector.shape_cast %0 : vector<1x4x32xbf16> to vector<4x32xbf16>
    %2 = arith.extf %1 : vector<4x32xbf16> to vector<4x32xf32>
    %c0_2 = arith.constant 0 : index
    %c0_3 = arith.constant 0 : index
    %3 = vector.load %arg2[%c0_2, %c0_3] : memref<64x32xbf16, #tpu.memory_space<vmem>>, vector<64x32xbf16>
    %c0_4 = arith.constant 0 : index
    %c0_5 = arith.constant 0 : index
    %4 = vector.load %arg3[%c0_4, %c0_5] : memref<1x32xf32, #tpu.memory_space<vmem>>, vector<1x32xf32>
    %5 = arith.truncf %2 : vector<4x32xf32> to vector<4x32xbf16>
    %6 = vector.extract_strided_slice %5 {offsets = [0, 0], sizes = [4, 16], strides = [1, 1]} : vector<4x32xbf16> to vector<4x16xbf16>
    %7 = vector.extract_strided_slice %5 {offsets = [0, 16], sizes = [4, 16], strides = [1, 1]} : vector<4x32xbf16> to vector<4x16xbf16>
    %cst = arith.constant 0.000000e+00 : bf16
    %8 = vector.broadcast %cst : bf16 to vector<1x16xbf16>
    %9 = vector.extract_strided_slice %7 {offsets = [0, 0], sizes = [3, 16], strides = [1, 1]} : vector<4x16xbf16> to vector<3x16xbf16>
    %10 = tpu.concatenate %8, %9 in 0 : vector<1x16xbf16>, vector<3x16xbf16> -> vector<4x16xbf16>
    %11 = vector.extract_strided_slice %6 {offsets = [1, 0], sizes = [3, 16], strides = [1, 1]} : vector<4x16xbf16> to vector<3x16xbf16>
    %12 = tpu.concatenate %11, %8 in 0 : vector<3x16xbf16>, vector<1x16xbf16> -> vector<4x16xbf16>
    %13 = tpu.concatenate %10, %6, %7, %12 in 1 : vector<4x16xbf16>, vector<4x16xbf16>, vector<4x16xbf16>, vector<4x16xbf16> -> vector<4x64xbf16>
    %cst_6 = arith.constant dense<0.000000e+00> : vector<4x32xf32>
    %14 = tpu.matmul %13, %3, %cst_6 {dimension_numbers = #tpu.dot_dimension_numbers<[1], [0], [0], [1], [0, 0, 1, 1], [], []>} : vector<4x64xbf16>, vector<64x32xbf16>, vector<4x32xf32> -> vector<4x32xf32>
    %15 = vector.broadcast %4 : vector<1x32xf32> to vector<4x32xf32>
    %16 = arith.addf %14, %15 : vector<4x32xf32>
    %cst_7 = arith.constant 0.000000e+00 : f32
    %17 = vector.broadcast %cst_7 : f32 to vector<4x32xf32>
    %18 = arith.cmpf ogt, %16, %17 : vector<4x32xf32>
    %cst_8 = arith.constant 2.000000e-01 : f32
    %19 = vector.broadcast %cst_8 : f32 to vector<4x32xf32>
    %20 = arith.mulf %19, %16 : vector<4x32xf32>
    %21 = arith.select %18, %16, %20 : vector<4x32xi1>, vector<4x32xf32>
    %c0_9 = arith.constant 0 : index
    %c0_10 = arith.constant 0 : index
    %22 = vector.load %arg4[%c0_9, %c0_10] : memref<96x32xbf16, #tpu.memory_space<vmem>>, vector<96x32xbf16>
    %c0_11 = arith.constant 0 : index
    %c0_12 = arith.constant 0 : index
    %23 = vector.load %arg5[%c0_11, %c0_12] : memref<1x32xf32, #tpu.memory_space<vmem>>, vector<1x32xf32>
    %24 = arith.truncf %21 : vector<4x32xf32> to vector<4x32xbf16>
    %cst_13 = arith.constant 0.000000e+00 : bf16
    %25 = vector.broadcast %cst_13 : bf16 to vector<1x32xbf16>
    %26 = vector.extract_strided_slice %24 {offsets = [0, 0], sizes = [3, 32], strides = [1, 1]} : vector<4x32xbf16> to vector<3x32xbf16>
    %27 = tpu.concatenate %25, %26 in 0 : vector<1x32xbf16>, vector<3x32xbf16> -> vector<4x32xbf16>
    %28 = vector.extract_strided_slice %24 {offsets = [1, 0], sizes = [3, 32], strides = [1, 1]} : vector<4x32xbf16> to vector<3x32xbf16>
    %29 = tpu.concatenate %28, %25 in 0 : vector<3x32xbf16>, vector<1x32xbf16> -> vector<4x32xbf16>
    %30 = tpu.concatenate %27, %24, %29 in 1 : vector<4x32xbf16>, vector<4x32xbf16>, vector<4x32xbf16> -> vector<4x96xbf16>
    %cst_14 = arith.constant dense<0.000000e+00> : vector<4x32xf32>
    %31 = tpu.matmul %30, %22, %cst_14 {dimension_numbers = #tpu.dot_dimension_numbers<[1], [0], [0], [1], [0, 0, 1, 1], [], []>} : vector<4x96xbf16>, vector<96x32xbf16>, vector<4x32xf32> -> vector<4x32xf32>
    %32 = vector.broadcast %23 : vector<1x32xf32> to vector<4x32xf32>
    %33 = arith.addf %31, %32 : vector<4x32xf32>
    %34 = arith.addf %33, %21 : vector<4x32xf32>
    %cst_15 = arith.constant 0.000000e+00 : f32
    %35 = vector.broadcast %cst_15 : f32 to vector<4x32xf32>
    %36 = arith.cmpf ogt, %34, %35 : vector<4x32xf32>
    %cst_16 = arith.constant 2.000000e-01 : f32
    %37 = vector.broadcast %cst_16 : f32 to vector<4x32xf32>
    %38 = arith.mulf %37, %34 : vector<4x32xf32>
    %39 = arith.select %36, %34, %38 : vector<4x32xi1>, vector<4x32xf32>
    %c0_17 = arith.constant 0 : index
    %c0_18 = arith.constant 0 : index
    %40 = vector.load %arg6[%c0_17, %c0_18] : memref<96x32xbf16, #tpu.memory_space<vmem>>, vector<96x32xbf16>
    %c0_19 = arith.constant 0 : index
    %c0_20 = arith.constant 0 : index
    %41 = vector.load %arg7[%c0_19, %c0_20] : memref<1x32xf32, #tpu.memory_space<vmem>>, vector<1x32xf32>
    %42 = arith.truncf %39 : vector<4x32xf32> to vector<4x32xbf16>
    %cst_21 = arith.constant 0.000000e+00 : bf16
    %43 = vector.broadcast %cst_21 : bf16 to vector<1x32xbf16>
    %44 = vector.extract_strided_slice %42 {offsets = [0, 0], sizes = [3, 32], strides = [1, 1]} : vector<4x32xbf16> to vector<3x32xbf16>
    %45 = tpu.concatenate %43, %44 in 0 : vector<1x32xbf16>, vector<3x32xbf16> -> vector<4x32xbf16>
    %46 = vector.extract_strided_slice %42 {offsets = [1, 0], sizes = [3, 32], strides = [1, 1]} : vector<4x32xbf16> to vector<3x32xbf16>
    %47 = tpu.concatenate %46, %43 in 0 : vector<3x32xbf16>, vector<1x32xbf16> -> vector<4x32xbf16>
    %48 = tpu.concatenate %45, %42, %47 in 1 : vector<4x32xbf16>, vector<4x32xbf16>, vector<4x32xbf16> -> vector<4x96xbf16>
    %cst_22 = arith.constant dense<0.000000e+00> : vector<4x32xf32>
    %49 = tpu.matmul %48, %40, %cst_22 {dimension_numbers = #tpu.dot_dimension_numbers<[1], [0], [0], [1], [0, 0, 1, 1], [], []>} : vector<4x96xbf16>, vector<96x32xbf16>, vector<4x32xf32> -> vector<4x32xf32>
    %50 = vector.broadcast %41 : vector<1x32xf32> to vector<4x32xf32>
    %51 = arith.addf %49, %50 : vector<4x32xf32>
    %52 = arith.addf %51, %39 : vector<4x32xf32>
    %cst_23 = arith.constant 0.000000e+00 : f32
    %53 = vector.broadcast %cst_23 : f32 to vector<4x32xf32>
    %54 = arith.cmpf ogt, %52, %53 : vector<4x32xf32>
    %cst_24 = arith.constant 2.000000e-01 : f32
    %55 = vector.broadcast %cst_24 : f32 to vector<4x32xf32>
    %56 = arith.mulf %55, %52 : vector<4x32xf32>
    %57 = arith.select %54, %52, %56 : vector<4x32xi1>, vector<4x32xf32>
    %c0_25 = arith.constant 0 : index
    %c0_26 = arith.constant 0 : index
    %58 = vector.load %arg8[%c0_25, %c0_26] : memref<96x32xbf16, #tpu.memory_space<vmem>>, vector<96x32xbf16>
    %c0_27 = arith.constant 0 : index
    %c0_28 = arith.constant 0 : index
    %59 = vector.load %arg9[%c0_27, %c0_28] : memref<1x32xf32, #tpu.memory_space<vmem>>, vector<1x32xf32>
    %60 = arith.truncf %57 : vector<4x32xf32> to vector<4x32xbf16>
    %cst_29 = arith.constant 0.000000e+00 : bf16
    %61 = vector.broadcast %cst_29 : bf16 to vector<1x32xbf16>
    %62 = vector.extract_strided_slice %60 {offsets = [0, 0], sizes = [3, 32], strides = [1, 1]} : vector<4x32xbf16> to vector<3x32xbf16>
    %63 = tpu.concatenate %61, %62 in 0 : vector<1x32xbf16>, vector<3x32xbf16> -> vector<4x32xbf16>
    %64 = vector.extract_strided_slice %60 {offsets = [1, 0], sizes = [3, 32], strides = [1, 1]} : vector<4x32xbf16> to vector<3x32xbf16>
    %65 = tpu.concatenate %64, %61 in 0 : vector<3x32xbf16>, vector<1x32xbf16> -> vector<4x32xbf16>
    %66 = tpu.concatenate %63, %60, %65 in 1 : vector<4x32xbf16>, vector<4x32xbf16>, vector<4x32xbf16> -> vector<4x96xbf16>
    %cst_30 = arith.constant dense<0.000000e+00> : vector<4x32xf32>
    %67 = tpu.matmul %66, %58, %cst_30 {dimension_numbers = #tpu.dot_dimension_numbers<[1], [0], [0], [1], [0, 0, 1, 1], [], []>} : vector<4x96xbf16>, vector<96x32xbf16>, vector<4x32xf32> -> vector<4x32xf32>
    %68 = vector.broadcast %59 : vector<1x32xf32> to vector<4x32xf32>
    %69 = arith.addf %67, %68 : vector<4x32xf32>
    %70 = arith.addf %69, %21 : vector<4x32xf32>
    %cst_31 = arith.constant 0.000000e+00 : f32
    %71 = vector.broadcast %cst_31 : f32 to vector<4x32xf32>
    %72 = arith.maximumf %70, %71 : vector<4x32xf32>
    %c0_32 = arith.constant 0 : index
    %c0_33 = arith.constant 0 : index
    %73 = vector.load %arg10[%c0_32, %c0_33] : memref<32x16xbf16, #tpu.memory_space<vmem>>, vector<32x16xbf16>
    %c0_34 = arith.constant 0 : index
    %c0_35 = arith.constant 0 : index
    %74 = vector.load %arg11[%c0_34, %c0_35] : memref<1x16xf32, #tpu.memory_space<vmem>>, vector<1x16xf32>
    %75 = arith.truncf %72 : vector<4x32xf32> to vector<4x32xbf16>
    %cst_36 = arith.constant dense<0.000000e+00> : vector<4x16xf32>
    %76 = tpu.matmul %75, %73, %cst_36 {dimension_numbers = #tpu.dot_dimension_numbers<[1], [0], [0], [1], [0, 0, 1, 1], [], []>} : vector<4x32xbf16>, vector<32x16xbf16>, vector<4x16xf32> -> vector<4x16xf32>
    %77 = vector.broadcast %74 : vector<1x16xf32> to vector<4x16xf32>
    %78 = arith.addf %76, %77 : vector<4x16xf32>
    %c0_37 = arith.constant 0 : index
    %c0_38 = arith.constant 0 : index
    %79 = vector.load %arg12[%c0_37, %c0_38] : memref<32x16xf32, #tpu.memory_space<vmem>>, vector<32x16xf32>
    %c0_39 = arith.constant 0 : index
    %c0_40 = arith.constant 0 : index
    %80 = vector.load %arg13[%c0_39, %c0_40] : memref<1x32xf32, #tpu.memory_space<vmem>>, vector<1x32xf32>
    %81 = arith.truncf %78 : vector<4x16xf32> to vector<4x16xbf16>
    %82 = arith.truncf %79 : vector<32x16xf32> to vector<32x16xbf16>
    %cst_41 = arith.constant dense<0.000000e+00> : vector<4x32xf32>
    %83 = tpu.matmul %81, %82, %cst_41 {dimension_numbers = #tpu.dot_dimension_numbers<[1], [1], [0], [0], [0, 0, 1, 0], [], []>} : vector<4x16xbf16>, vector<32x16xbf16>, vector<4x32xf32> -> vector<4x32xf32>
    %cst_42 = arith.constant 2.000000e+00 : f32
    %84 = vector.broadcast %cst_42 : f32 to vector<4x32xf32>
    %85 = arith.mulf %84, %83 : vector<4x32xf32>
    %86 = vector.broadcast %80 : vector<1x32xf32> to vector<4x32xf32>
    %87 = arith.subf %86, %85 : vector<4x32xf32>
    %88 = tpu.iota {dimensions = array<i32: 1>} : vector<4x32xi32>
    %cst_43 = arith.constant dense<0x7F800000> : vector<4xf32>
    %89 = vector.multi_reduction <minimumf>, %87, %cst_43 [1] : vector<4x32xf32> to vector<4xf32>
    %90 = vector.shape_cast %89 : vector<4xf32> to vector<4x1xf32>
    %91 = vector.broadcast %90 : vector<4x1xf32> to vector<4x32xf32>
    %92 = arith.cmpf oeq, %87, %91 : vector<4x32xf32>
    %c32_i32 = arith.constant 32 : i32
    %93 = vector.broadcast %c32_i32 : i32 to vector<4x32xi32>
    %94 = arith.select %92, %88, %93 : vector<4x32xi1>, vector<4x32xi32>
    %cst_44 = arith.constant dense<2147483647> : vector<4xi32>
    %95 = vector.multi_reduction <minsi>, %94, %cst_44 [1] : vector<4x32xi32> to vector<4xi32>
    %96 = vector.shape_cast %95 : vector<4xi32> to vector<4x1xi32>
    %97 = vector.broadcast %96 : vector<4x1xi32> to vector<4x32xi32>
    %98 = arith.cmpi eq, %88, %97 : vector<4x32xi32>
    %99 = arith.extui %98 : vector<4x32xi1> to vector<4x32xi32>
    %100 = arith.sitofp %99 : vector<4x32xi32> to vector<4x32xf32>
    %cst_45 = arith.constant dense<0.000000e+00> : vector<4x16xf32>
    %101 = tpu.matmul %100, %79, %cst_45 {dimension_numbers = #tpu.dot_dimension_numbers<[1], [0], [0], [1], [0, 0, 1, 1], [], []>} : vector<4x32xf32>, vector<32x16xf32>, vector<4x16xf32> -> vector<4x16xf32>
    %c0_46 = arith.constant 0 : index
    %c0_47 = arith.constant 0 : index
    %c0_48 = arith.constant 0 : index
    %102 = vector.load %arg14[%c0_46, %c0_47, %c0_48] : memref<1x4x16xf32, #tpu.memory_space<vmem>>, vector<1x4x16xf32>
    %103 = vector.shape_cast %102 : vector<1x4x16xf32> to vector<4x16xf32>
    %104 = vector.shape_cast %101 : vector<4x16xf32> to vector<1x4x16xf32>
    tpu.vector_store %arg14[%c0_46, %c0_47, %c0_48], %104 {strides = array<i32>} : memref<1x4x16xf32, #tpu.memory_space<vmem>>, vector<1x4x16xf32>,
    return
  }
  func.func @transform_0(%arg0: i32) -> (i32, i32, i32) {
    %c0_i32 = arith.constant 0 : i32
    %c0_i32_0 = arith.constant 0 : i32
    %c0_i32_1 = arith.constant 0 : i32
    return %arg0, %c0_i32, %c0_i32_0 : i32, i32, i32
  }
  func.func @transform_1(%arg0: i32) -> (i32, i32) {
    %c0_i32 = arith.constant 0 : i32
    %c0_i32_0 = arith.constant 0 : i32
    %c0_i32_1 = arith.constant 0 : i32
    return %c0_i32, %c0_i32_0 : i32, i32
  }
  func.func @transform_2(%arg0: i32) -> (i32, i32) {
    %c0_i32 = arith.constant 0 : i32
    %c0_i32_0 = arith.constant 0 : i32
    %c0_i32_1 = arith.constant 0 : i32
    return %c0_i32, %c0_i32_0 : i32, i32
  }
  func.func @transform_3(%arg0: i32) -> (i32, i32) {
    %c0_i32 = arith.constant 0 : i32
    %c0_i32_0 = arith.constant 0 : i32
    %c0_i32_1 = arith.constant 0 : i32
    return %c0_i32, %c0_i32_0 : i32, i32
  }
  func.func @transform_4(%arg0: i32) -> (i32, i32) {
    %c0_i32 = arith.constant 0 : i32
    %c0_i32_0 = arith.constant 0 : i32
    %c0_i32_1 = arith.constant 0 : i32
    return %c0_i32, %c0_i32_0 : i32, i32
  }
  func.func @transform_5(%arg0: i32) -> (i32, i32) {
    %c0_i32 = arith.constant 0 : i32
    %c0_i32_0 = arith.constant 0 : i32
    %c0_i32_1 = arith.constant 0 : i32
    return %c0_i32, %c0_i32_0 : i32, i32
  }
  func.func @transform_6(%arg0: i32) -> (i32, i32) {
    %c0_i32 = arith.constant 0 : i32
    %c0_i32_0 = arith.constant 0 : i32
    %c0_i32_1 = arith.constant 0 : i32
    return %c0_i32, %c0_i32_0 : i32, i32
  }
  func.func @transform_7(%arg0: i32) -> (i32, i32) {
    %c0_i32 = arith.constant 0 : i32
    %c0_i32_0 = arith.constant 0 : i32
    %c0_i32_1 = arith.constant 0 : i32
    return %c0_i32, %c0_i32_0 : i32, i32
  }
  func.func @transform_8(%arg0: i32) -> (i32, i32) {
    %c0_i32 = arith.constant 0 : i32
    %c0_i32_0 = arith.constant 0 : i32
    %c0_i32_1 = arith.constant 0 : i32
    return %c0_i32, %c0_i32_0 : i32, i32
  }
  func.func @transform_9(%arg0: i32) -> (i32, i32) {
    %c0_i32 = arith.constant 0 : i32
    %c0_i32_0 = arith.constant 0 : i32
    %c0_i32_1 = arith.constant 0 : i32
    return %c0_i32, %c0_i32_0 : i32, i32
  }
  func.func @transform_10(%arg0: i32) -> (i32, i32) {
    %c0_i32 = arith.constant 0 : i32
    %c0_i32_0 = arith.constant 0 : i32
    %c0_i32_1 = arith.constant 0 : i32
    return %c0_i32, %c0_i32_0 : i32, i32
  }
  func.func @transform_11(%arg0: i32) -> (i32, i32) {
    %c0_i32 = arith.constant 0 : i32
    %c0_i32_0 = arith.constant 0 : i32
    %c0_i32_1 = arith.constant 0 : i32
    return %c0_i32, %c0_i32_0 : i32, i32
  }
  func.func @transform_12(%arg0: i32) -> (i32, i32) {
    %c0_i32 = arith.constant 0 : i32
    %c0_i32_0 = arith.constant 0 : i32
    %c0_i32_1 = arith.constant 0 : i32
    return %c0_i32, %c0_i32_0 : i32, i32
  }
  func.func @transform_13(%arg0: i32) -> (i32, i32, i32) {
    %c0_i32 = arith.constant 0 : i32
    %c0_i32_0 = arith.constant 0 : i32
    %c0_i32_1 = arith.constant 0 : i32
    return %arg0, %c0_i32, %c0_i32_0 : i32, i32, i32
  }
}

module attributes {stable_mosaic.version = 11 : i64} {
  func.func @_chain_kernel(%arg0: i32, %arg1: memref<1x4x32xbf16, #tpu.memory_space<vmem>>, %arg2: memref<96x32xbf16, #tpu.memory_space<vmem>>, %arg3: memref<1x32xf32, #tpu.memory_space<vmem>>, %arg4: memref<1x4x32xbf16, #tpu.memory_space<vmem>>) attributes {dimension_semantics = [#tpu.dimension_semantics<parallel>], iteration_bounds = array<i64: 2>, scalar_prefetch = 0 : i64, scratch_operands = 0 : i64, tpu.core_type = #tpu.core_type<tc>, window_params = [{transform_indices = @transform_0, window_bounds = array<i64: 1, 4, 32>}, {pipeline_mode = #tpu.pipeline_mode<synchronous>, transform_indices = @transform_1, window_bounds = array<i64: 96, 32>}, {pipeline_mode = #tpu.pipeline_mode<synchronous>, transform_indices = @transform_2, window_bounds = array<i64: 1, 32>}, {transform_indices = @transform_3, window_bounds = array<i64: 1, 4, 32>}]} {
    %c0 = arith.constant 0 : index
    %c0_0 = arith.constant 0 : index
    %c0_1 = arith.constant 0 : index
    %0 = vector.load %arg1[%c0, %c0_0, %c0_1] : memref<1x4x32xbf16, #tpu.memory_space<vmem>>, vector<1x4x32xbf16>
    %1 = vector.shape_cast %0 : vector<1x4x32xbf16> to vector<4x32xbf16>
    %2 = arith.extf %1 : vector<4x32xbf16> to vector<4x32xf32>
    %c0_2 = arith.constant 0 : index
    %c0_3 = arith.constant 0 : index
    %3 = vector.load %arg2[%c0_2, %c0_3] : memref<96x32xbf16, #tpu.memory_space<vmem>>, vector<96x32xbf16>
    %c0_4 = arith.constant 0 : index
    %c0_5 = arith.constant 0 : index
    %4 = vector.load %arg3[%c0_4, %c0_5] : memref<1x32xf32, #tpu.memory_space<vmem>>, vector<1x32xf32>
    %5 = arith.truncf %2 : vector<4x32xf32> to vector<4x32xbf16>
    %cst = arith.constant 0.000000e+00 : bf16
    %6 = vector.broadcast %cst : bf16 to vector<1x32xbf16>
    %7 = vector.extract_strided_slice %5 {offsets = [0, 0], sizes = [3, 32], strides = [1, 1]} : vector<4x32xbf16> to vector<3x32xbf16>
    %8 = tpu.concatenate %6, %7 in 0 : vector<1x32xbf16>, vector<3x32xbf16> -> vector<4x32xbf16>
    %9 = vector.extract_strided_slice %5 {offsets = [1, 0], sizes = [3, 32], strides = [1, 1]} : vector<4x32xbf16> to vector<3x32xbf16>
    %10 = tpu.concatenate %9, %6 in 0 : vector<3x32xbf16>, vector<1x32xbf16> -> vector<4x32xbf16>
    %11 = tpu.concatenate %8, %5, %10 in 1 : vector<4x32xbf16>, vector<4x32xbf16>, vector<4x32xbf16> -> vector<4x96xbf16>
    %cst_6 = arith.constant dense<0.000000e+00> : vector<4x32xf32>
    %12 = tpu.matmul %11, %3, %cst_6 {dimension_numbers = #tpu.dot_dimension_numbers<[1], [0], [0], [1], [0, 0, 1, 1], [], []>} : vector<4x96xbf16>, vector<96x32xbf16>, vector<4x32xf32> -> vector<4x32xf32>
    %13 = vector.broadcast %4 : vector<1x32xf32> to vector<4x32xf32>
    %14 = arith.addf %12, %13 : vector<4x32xf32>
    %cst_7 = arith.constant 0.000000e+00 : f32
    %15 = vector.broadcast %cst_7 : f32 to vector<4x32xf32>
    %16 = arith.cmpf ogt, %14, %15 : vector<4x32xf32>
    %cst_8 = arith.constant 2.000000e-01 : f32
    %17 = vector.broadcast %cst_8 : f32 to vector<4x32xf32>
    %18 = arith.mulf %17, %14 : vector<4x32xf32>
    %19 = arith.select %16, %14, %18 : vector<4x32xi1>, vector<4x32xf32>
    %20 = arith.truncf %19 : vector<4x32xf32> to vector<4x32xbf16>
    %c0_9 = arith.constant 0 : index
    %c0_10 = arith.constant 0 : index
    %c0_11 = arith.constant 0 : index
    %21 = vector.load %arg4[%c0_9, %c0_10, %c0_11] : memref<1x4x32xbf16, #tpu.memory_space<vmem>>, vector<1x4x32xbf16>
    %22 = vector.shape_cast %21 : vector<1x4x32xbf16> to vector<4x32xbf16>
    %23 = vector.shape_cast %20 : vector<4x32xbf16> to vector<1x4x32xbf16>
    tpu.vector_store %arg4[%c0_9, %c0_10, %c0_11], %23 {strides = array<i32>} : memref<1x4x32xbf16, #tpu.memory_space<vmem>>, vector<1x4x32xbf16>,
    return
  }
  func.func @transform_0(%arg0: i32) -> (i32, i32, i32) {
    %c0_i32 = arith.constant 0 : i32
    %c0_i32_0 = arith.constant 0 : i32
    %c0_i32_1 = arith.constant 0 : i32
    return %arg0, %c0_i32, %c0_i32_0 : i32, i32, i32
  }
  func.func @transform_1(%arg0: i32) -> (i32, i32) {
    %c0_i32 = arith.constant 0 : i32
    %c0_i32_0 = arith.constant 0 : i32
    %c0_i32_1 = arith.constant 0 : i32
    return %c0_i32, %c0_i32_0 : i32, i32
  }
  func.func @transform_2(%arg0: i32) -> (i32, i32) {
    %c0_i32 = arith.constant 0 : i32
    %c0_i32_0 = arith.constant 0 : i32
    %c0_i32_1 = arith.constant 0 : i32
    return %c0_i32, %c0_i32_0 : i32, i32
  }
  func.func @transform_3(%arg0: i32) -> (i32, i32, i32) {
    %c0_i32 = arith.constant 0 : i32
    %c0_i32_0 = arith.constant 0 : i32
    %c0_i32_1 = arith.constant 0 : i32
    return %arg0, %c0_i32, %c0_i32_0 : i32, i32, i32
  }
}

module attributes {stable_mosaic.version = 11 : i64} {
  func.func @_chain_kernel(%arg0: i32, %arg1: memref<1x8x16xbf16, #tpu.memory_space<vmem>>, %arg2: memref<48x16xbf16, #tpu.memory_space<vmem>>, %arg3: memref<1x16xf32, #tpu.memory_space<vmem>>, %arg4: memref<48x16xbf16, #tpu.memory_space<vmem>>, %arg5: memref<1x16xf32, #tpu.memory_space<vmem>>, %arg6: memref<48x16xbf16, #tpu.memory_space<vmem>>, %arg7: memref<1x16xf32, #tpu.memory_space<vmem>>, %arg8: memref<1x8x16xbf16, #tpu.memory_space<vmem>>) attributes {dimension_semantics = [#tpu.dimension_semantics<parallel>], iteration_bounds = array<i64: 2>, scalar_prefetch = 0 : i64, scratch_operands = 0 : i64, tpu.core_type = #tpu.core_type<tc>, window_params = [{transform_indices = @transform_0, window_bounds = array<i64: 1, 8, 16>}, {pipeline_mode = #tpu.pipeline_mode<synchronous>, transform_indices = @transform_1, window_bounds = array<i64: 48, 16>}, {pipeline_mode = #tpu.pipeline_mode<synchronous>, transform_indices = @transform_2, window_bounds = array<i64: 1, 16>}, {pipeline_mode = #tpu.pipeline_mode<synchronous>, transform_indices = @transform_3, window_bounds = array<i64: 48, 16>}, {pipeline_mode = #tpu.pipeline_mode<synchronous>, transform_indices = @transform_4, window_bounds = array<i64: 1, 16>}, {pipeline_mode = #tpu.pipeline_mode<synchronous>, transform_indices = @transform_5, window_bounds = array<i64: 48, 16>}, {pipeline_mode = #tpu.pipeline_mode<synchronous>, transform_indices = @transform_6, window_bounds = array<i64: 1, 16>}, {transform_indices = @transform_7, window_bounds = array<i64: 1, 8, 16>}]} {
    %c0 = arith.constant 0 : index
    %c0_0 = arith.constant 0 : index
    %c0_1 = arith.constant 0 : index
    %0 = vector.load %arg1[%c0, %c0_0, %c0_1] : memref<1x8x16xbf16, #tpu.memory_space<vmem>>, vector<1x8x16xbf16>
    %1 = vector.shape_cast %0 : vector<1x8x16xbf16> to vector<8x16xbf16>
    %2 = arith.extf %1 : vector<8x16xbf16> to vector<8x16xf32>
    %c0_2 = arith.constant 0 : index
    %c0_3 = arith.constant 0 : index
    %3 = vector.load %arg2[%c0_2, %c0_3] : memref<48x16xbf16, #tpu.memory_space<vmem>>, vector<48x16xbf16>
    %c0_4 = arith.constant 0 : index
    %c0_5 = arith.constant 0 : index
    %4 = vector.load %arg3[%c0_4, %c0_5] : memref<1x16xf32, #tpu.memory_space<vmem>>, vector<1x16xf32>
    %5 = arith.truncf %2 : vector<8x16xf32> to vector<8x16xbf16>
    %cst = arith.constant 0.000000e+00 : bf16
    %6 = vector.broadcast %cst : bf16 to vector<1x16xbf16>
    %7 = vector.extract_strided_slice %5 {offsets = [0, 0], sizes = [7, 16], strides = [1, 1]} : vector<8x16xbf16> to vector<7x16xbf16>
    %8 = tpu.concatenate %6, %7 in 0 : vector<1x16xbf16>, vector<7x16xbf16> -> vector<8x16xbf16>
    %9 = vector.extract_strided_slice %5 {offsets = [1, 0], sizes = [7, 16], strides = [1, 1]} : vector<8x16xbf16> to vector<7x16xbf16>
    %10 = tpu.concatenate %9, %6 in 0 : vector<7x16xbf16>, vector<1x16xbf16> -> vector<8x16xbf16>
    %11 = tpu.concatenate %8, %5, %10 in 1 : vector<8x16xbf16>, vector<8x16xbf16>, vector<8x16xbf16> -> vector<8x48xbf16>
    %cst_6 = arith.constant dense<0.000000e+00> : vector<8x16xf32>
    %12 = tpu.matmul %11, %3, %cst_6 {dimension_numbers = #tpu.dot_dimension_numbers<[1], [0], [0], [1], [0, 0, 1, 1], [], []>} : vector<8x48xbf16>, vector<48x16xbf16>, vector<8x16xf32> -> vector<8x16xf32>
    %13 = vector.broadcast %4 : vector<1x16xf32> to vector<8x16xf32>
    %14 = arith.addf %12, %13 : vector<8x16xf32>
    %15 = arith.addf %14, %2 : vector<8x16xf32>
    %cst_7 = arith.constant 0.000000e+00 : f32
    %16 = vector.broadcast %cst_7 : f32 to vector<8x16xf32>
    %17 = arith.cmpf ogt, %15, %16 : vector<8x16xf32>
    %cst_8 = arith.constant 2.000000e-01 : f32
    %18 = vector.broadcast %cst_8 : f32 to vector<8x16xf32>
    %19 = arith.mulf %18, %15 : vector<8x16xf32>
    %20 = arith.select %17, %15, %19 : vector<8x16xi1>, vector<8x16xf32>
    %c0_9 = arith.constant 0 : index
    %c0_10 = arith.constant 0 : index
    %21 = vector.load %arg4[%c0_9, %c0_10] : memref<48x16xbf16, #tpu.memory_space<vmem>>, vector<48x16xbf16>
    %c0_11 = arith.constant 0 : index
    %c0_12 = arith.constant 0 : index
    %22 = vector.load %arg5[%c0_11, %c0_12] : memref<1x16xf32, #tpu.memory_space<vmem>>, vector<1x16xf32>
    %23 = arith.truncf %20 : vector<8x16xf32> to vector<8x16xbf16>
    %cst_13 = arith.constant 0.000000e+00 : bf16
    %24 = vector.broadcast %cst_13 : bf16 to vector<1x16xbf16>
    %25 = vector.extract_strided_slice %23 {offsets = [0, 0], sizes = [7, 16], strides = [1, 1]} : vector<8x16xbf16> to vector<7x16xbf16>
    %26 = tpu.concatenate %24, %25 in 0 : vector<1x16xbf16>, vector<7x16xbf16> -> vector<8x16xbf16>
    %27 = vector.extract_strided_slice %23 {offsets = [1, 0], sizes = [7, 16], strides = [1, 1]} : vector<8x16xbf16> to vector<7x16xbf16>
    %28 = tpu.concatenate %27, %24 in 0 : vector<7x16xbf16>, vector<1x16xbf16> -> vector<8x16xbf16>
    %29 = tpu.concatenate %26, %23, %28 in 1 : vector<8x16xbf16>, vector<8x16xbf16>, vector<8x16xbf16> -> vector<8x48xbf16>
    %cst_14 = arith.constant dense<0.000000e+00> : vector<8x16xf32>
    %30 = tpu.matmul %29, %21, %cst_14 {dimension_numbers = #tpu.dot_dimension_numbers<[1], [0], [0], [1], [0, 0, 1, 1], [], []>} : vector<8x48xbf16>, vector<48x16xbf16>, vector<8x16xf32> -> vector<8x16xf32>
    %31 = vector.broadcast %22 : vector<1x16xf32> to vector<8x16xf32>
    %32 = arith.addf %30, %31 : vector<8x16xf32>
    %33 = arith.addf %32, %20 : vector<8x16xf32>
    %cst_15 = arith.constant 0.000000e+00 : f32
    %34 = vector.broadcast %cst_15 : f32 to vector<8x16xf32>
    %35 = arith.cmpf ogt, %33, %34 : vector<8x16xf32>
    %cst_16 = arith.constant 2.000000e-01 : f32
    %36 = vector.broadcast %cst_16 : f32 to vector<8x16xf32>
    %37 = arith.mulf %36, %33 : vector<8x16xf32>
    %38 = arith.select %35, %33, %37 : vector<8x16xi1>, vector<8x16xf32>
    %c0_17 = arith.constant 0 : index
    %c0_18 = arith.constant 0 : index
    %39 = vector.load %arg6[%c0_17, %c0_18] : memref<48x16xbf16, #tpu.memory_space<vmem>>, vector<48x16xbf16>
    %c0_19 = arith.constant 0 : index
    %c0_20 = arith.constant 0 : index
    %40 = vector.load %arg7[%c0_19, %c0_20] : memref<1x16xf32, #tpu.memory_space<vmem>>, vector<1x16xf32>
    %41 = arith.truncf %38 : vector<8x16xf32> to vector<8x16xbf16>
    %cst_21 = arith.constant 0.000000e+00 : bf16
    %42 = vector.broadcast %cst_21 : bf16 to vector<1x16xbf16>
    %43 = vector.extract_strided_slice %41 {offsets = [0, 0], sizes = [7, 16], strides = [1, 1]} : vector<8x16xbf16> to vector<7x16xbf16>
    %44 = tpu.concatenate %42, %43 in 0 : vector<1x16xbf16>, vector<7x16xbf16> -> vector<8x16xbf16>
    %45 = vector.extract_strided_slice %41 {offsets = [1, 0], sizes = [7, 16], strides = [1, 1]} : vector<8x16xbf16> to vector<7x16xbf16>
    %46 = tpu.concatenate %45, %42 in 0 : vector<7x16xbf16>, vector<1x16xbf16> -> vector<8x16xbf16>
    %47 = tpu.concatenate %44, %41, %46 in 1 : vector<8x16xbf16>, vector<8x16xbf16>, vector<8x16xbf16> -> vector<8x48xbf16>
    %cst_22 = arith.constant dense<0.000000e+00> : vector<8x16xf32>
    %48 = tpu.matmul %47, %39, %cst_22 {dimension_numbers = #tpu.dot_dimension_numbers<[1], [0], [0], [1], [0, 0, 1, 1], [], []>} : vector<8x48xbf16>, vector<48x16xbf16>, vector<8x16xf32> -> vector<8x16xf32>
    %49 = vector.broadcast %40 : vector<1x16xf32> to vector<8x16xf32>
    %50 = arith.addf %48, %49 : vector<8x16xf32>
    %51 = arith.addf %50, %2 : vector<8x16xf32>
    %cst_23 = arith.constant 0.000000e+00 : f32
    %52 = vector.broadcast %cst_23 : f32 to vector<8x16xf32>
    %53 = arith.maximumf %51, %52 : vector<8x16xf32>
    %54 = arith.truncf %53 : vector<8x16xf32> to vector<8x16xbf16>
    %c0_24 = arith.constant 0 : index
    %c0_25 = arith.constant 0 : index
    %c0_26 = arith.constant 0 : index
    %55 = vector.load %arg8[%c0_24, %c0_25, %c0_26] : memref<1x8x16xbf16, #tpu.memory_space<vmem>>, vector<1x8x16xbf16>
    %56 = vector.shape_cast %55 : vector<1x8x16xbf16> to vector<8x16xbf16>
    %57 = vector.shape_cast %54 : vector<8x16xbf16> to vector<1x8x16xbf16>
    tpu.vector_store %arg8[%c0_24, %c0_25, %c0_26], %57 {strides = array<i32>} : memref<1x8x16xbf16, #tpu.memory_space<vmem>>, vector<1x8x16xbf16>,
    return
  }
  func.func @transform_0(%arg0: i32) -> (i32, i32, i32) {
    %c0_i32 = arith.constant 0 : i32
    %c0_i32_0 = arith.constant 0 : i32
    %c0_i32_1 = arith.constant 0 : i32
    return %arg0, %c0_i32, %c0_i32_0 : i32, i32, i32
  }
  func.func @transform_1(%arg0: i32) -> (i32, i32) {
    %c0_i32 = arith.constant 0 : i32
    %c0_i32_0 = arith.constant 0 : i32
    %c0_i32_1 = arith.constant 0 : i32
    return %c0_i32, %c0_i32_0 : i32, i32
  }
  func.func @transform_2(%arg0: i32) -> (i32, i32) {
    %c0_i32 = arith.constant 0 : i32
    %c0_i32_0 = arith.constant 0 : i32
    %c0_i32_1 = arith.constant 0 : i32
    return %c0_i32, %c0_i32_0 : i32, i32
  }
  func.func @transform_3(%arg0: i32) -> (i32, i32) {
    %c0_i32 = arith.constant 0 : i32
    %c0_i32_0 = arith.constant 0 : i32
    %c0_i32_1 = arith.constant 0 : i32
    return %c0_i32, %c0_i32_0 : i32, i32
  }
  func.func @transform_4(%arg0: i32) -> (i32, i32) {
    %c0_i32 = arith.constant 0 : i32
    %c0_i32_0 = arith.constant 0 : i32
    %c0_i32_1 = arith.constant 0 : i32
    return %c0_i32, %c0_i32_0 : i32, i32
  }
  func.func @transform_5(%arg0: i32) -> (i32, i32) {
    %c0_i32 = arith.constant 0 : i32
    %c0_i32_0 = arith.constant 0 : i32
    %c0_i32_1 = arith.constant 0 : i32
    return %c0_i32, %c0_i32_0 : i32, i32
  }
  func.func @transform_6(%arg0: i32) -> (i32, i32) {
    %c0_i32 = arith.constant 0 : i32
    %c0_i32_0 = arith.constant 0 : i32
    %c0_i32_1 = arith.constant 0 : i32
    return %c0_i32, %c0_i32_0 : i32, i32
  }
  func.func @transform_7(%arg0: i32) -> (i32, i32, i32) {
    %c0_i32 = arith.constant 0 : i32
    %c0_i32_0 = arith.constant 0 : i32
    %c0_i32_1 = arith.constant 0 : i32
    return %arg0, %c0_i32, %c0_i32_0 : i32, i32, i32
  }
}

module attributes {stable_mosaic.version = 11 : i64} {
  func.func @_chain_kernel(%arg0: i32, %arg1: memref<1x8x16xbf16, #tpu.memory_space<vmem>>, %arg2: memref<48x16xbf16, #tpu.memory_space<vmem>>, %arg3: memref<1x16xf32, #tpu.memory_space<vmem>>, %arg4: memref<1x8x16xbf16, #tpu.memory_space<vmem>>) attributes {dimension_semantics = [#tpu.dimension_semantics<parallel>], iteration_bounds = array<i64: 2>, scalar_prefetch = 0 : i64, scratch_operands = 0 : i64, tpu.core_type = #tpu.core_type<tc>, window_params = [{transform_indices = @transform_0, window_bounds = array<i64: 1, 8, 16>}, {pipeline_mode = #tpu.pipeline_mode<synchronous>, transform_indices = @transform_1, window_bounds = array<i64: 48, 16>}, {pipeline_mode = #tpu.pipeline_mode<synchronous>, transform_indices = @transform_2, window_bounds = array<i64: 1, 16>}, {transform_indices = @transform_3, window_bounds = array<i64: 1, 8, 16>}]} {
    %c0 = arith.constant 0 : index
    %c0_0 = arith.constant 0 : index
    %c0_1 = arith.constant 0 : index
    %0 = vector.load %arg1[%c0, %c0_0, %c0_1] : memref<1x8x16xbf16, #tpu.memory_space<vmem>>, vector<1x8x16xbf16>
    %1 = vector.shape_cast %0 : vector<1x8x16xbf16> to vector<8x16xbf16>
    %2 = arith.extf %1 : vector<8x16xbf16> to vector<8x16xf32>
    %c0_2 = arith.constant 0 : index
    %c0_3 = arith.constant 0 : index
    %3 = vector.load %arg2[%c0_2, %c0_3] : memref<48x16xbf16, #tpu.memory_space<vmem>>, vector<48x16xbf16>
    %c0_4 = arith.constant 0 : index
    %c0_5 = arith.constant 0 : index
    %4 = vector.load %arg3[%c0_4, %c0_5] : memref<1x16xf32, #tpu.memory_space<vmem>>, vector<1x16xf32>
    %5 = arith.truncf %2 : vector<8x16xf32> to vector<8x16xbf16>
    %cst = arith.constant 0.000000e+00 : bf16
    %6 = vector.broadcast %cst : bf16 to vector<1x16xbf16>
    %7 = vector.extract_strided_slice %5 {offsets = [0, 0], sizes = [7, 16], strides = [1, 1]} : vector<8x16xbf16> to vector<7x16xbf16>
    %8 = tpu.concatenate %6, %7 in 0 : vector<1x16xbf16>, vector<7x16xbf16> -> vector<8x16xbf16>
    %9 = vector.extract_strided_slice %5 {offsets = [1, 0], sizes = [7, 16], strides = [1, 1]} : vector<8x16xbf16> to vector<7x16xbf16>
    %10 = tpu.concatenate %9, %6 in 0 : vector<7x16xbf16>, vector<1x16xbf16> -> vector<8x16xbf16>
    %11 = tpu.concatenate %8, %5, %10 in 1 : vector<8x16xbf16>, vector<8x16xbf16>, vector<8x16xbf16> -> vector<8x48xbf16>
    %cst_6 = arith.constant dense<0.000000e+00> : vector<8x16xf32>
    %12 = tpu.matmul %11, %3, %cst_6 {dimension_numbers = #tpu.dot_dimension_numbers<[1], [0], [0], [1], [0, 0, 1, 1], [], []>} : vector<8x48xbf16>, vector<48x16xbf16>, vector<8x16xf32> -> vector<8x16xf32>
    %13 = vector.broadcast %4 : vector<1x16xf32> to vector<8x16xf32>
    %14 = arith.addf %12, %13 : vector<8x16xf32>
    %cst_7 = arith.constant 0.000000e+00 : f32
    %15 = vector.broadcast %cst_7 : f32 to vector<8x16xf32>
    %16 = arith.cmpf ogt, %14, %15 : vector<8x16xf32>
    %cst_8 = arith.constant 2.000000e-01 : f32
    %17 = vector.broadcast %cst_8 : f32 to vector<8x16xf32>
    %18 = arith.mulf %17, %14 : vector<8x16xf32>
    %19 = arith.select %16, %14, %18 : vector<8x16xi1>, vector<8x16xf32>
    %20 = arith.truncf %19 : vector<8x16xf32> to vector<8x16xbf16>
    %c0_9 = arith.constant 0 : index
    %c0_10 = arith.constant 0 : index
    %c0_11 = arith.constant 0 : index
    %21 = vector.load %arg4[%c0_9, %c0_10, %c0_11] : memref<1x8x16xbf16, #tpu.memory_space<vmem>>, vector<1x8x16xbf16>
    %22 = vector.shape_cast %21 : vector<1x8x16xbf16> to vector<8x16xbf16>
    %23 = vector.shape_cast %20 : vector<8x16xbf16> to vector<1x8x16xbf16>
    tpu.vector_store %arg4[%c0_9, %c0_10, %c0_11], %23 {strides = array<i32>} : memref<1x8x16xbf16, #tpu.memory_space<vmem>>, vector<1x8x16xbf16>,
    return
  }
  func.func @transform_0(%arg0: i32) -> (i32, i32, i32) {
    %c0_i32 = arith.constant 0 : i32
    %c0_i32_0 = arith.constant 0 : i32
    %c0_i32_1 = arith.constant 0 : i32
    return %arg0, %c0_i32, %c0_i32_0 : i32, i32, i32
  }
  func.func @transform_1(%arg0: i32) -> (i32, i32) {
    %c0_i32 = arith.constant 0 : i32
    %c0_i32_0 = arith.constant 0 : i32
    %c0_i32_1 = arith.constant 0 : i32
    return %c0_i32, %c0_i32_0 : i32, i32
  }
  func.func @transform_2(%arg0: i32) -> (i32, i32) {
    %c0_i32 = arith.constant 0 : i32
    %c0_i32_0 = arith.constant 0 : i32
    %c0_i32_1 = arith.constant 0 : i32
    return %c0_i32, %c0_i32_0 : i32, i32
  }
  func.func @transform_3(%arg0: i32) -> (i32, i32, i32) {
    %c0_i32 = arith.constant 0 : i32
    %c0_i32_0 = arith.constant 0 : i32
    %c0_i32_1 = arith.constant 0 : i32
    return %arg0, %c0_i32, %c0_i32_0 : i32, i32, i32
  }
}

module attributes {stable_mosaic.version = 11 : i64} {
  func.func @_chain_kernel(%arg0: i32, %arg1: memref<1x16x8xbf16, #tpu.memory_space<vmem>>, %arg2: memref<24x8xbf16, #tpu.memory_space<vmem>>, %arg3: memref<1x8xf32, #tpu.memory_space<vmem>>, %arg4: memref<24x8xbf16, #tpu.memory_space<vmem>>, %arg5: memref<1x8xf32, #tpu.memory_space<vmem>>, %arg6: memref<24x8xbf16, #tpu.memory_space<vmem>>, %arg7: memref<1x8xf32, #tpu.memory_space<vmem>>, %arg8: memref<8x6xbf16, #tpu.memory_space<vmem>>, %arg9: memref<1x6xf32, #tpu.memory_space<vmem>>, %arg10: memref<1x16x6xf32, #tpu.memory_space<vmem>>) attributes {dimension_semantics = [#tpu.dimension_semantics<parallel>], iteration_bounds = array<i64: 2>, scalar_prefetch = 0 : i64, scratch_operands = 0 : i64, tpu.core_type = #tpu.core_type<tc>, window_params = [{transform_indices = @transform_0, window_bounds = array<i64: 1, 16, 8>}, {pipeline_mode = #tpu.pipeline_mode<synchronous>, transform_indices = @transform_1, window_bounds = array<i64: 24, 8>}, {pipeline_mode = #tpu.pipeline_mode<synchronous>, transform_indices = @transform_2, window_bounds = array<i64: 1, 8>}, {pipeline_mode = #tpu.pipeline_mode<synchronous>, transform_indices = @transform_3, window_bounds = array<i64: 24, 8>}, {pipeline_mode = #tpu.pipeline_mode<synchronous>, transform_indices = @transform_4, window_bounds = array<i64: 1, 8>}, {pipeline_mode = #tpu.pipeline_mode<synchronous>, transform_indices = @transform_5, window_bounds = array<i64: 24, 8>}, {pipeline_mode = #tpu.pipeline_mode<synchronous>, transform_indices = @transform_6, window_bounds = array<i64: 1, 8>}, {pipeline_mode = #tpu.pipeline_mode<synchronous>, transform_indices = @transform_7, window_bounds = array<i64: 8, 6>}, {pipeline_mode = #tpu.pipeline_mode<synchronous>, transform_indices = @transform_8, window_bounds = array<i64: 1, 6>}, {transform_indices = @transform_9, window_bounds = array<i64: 1, 16, 6>}]} {
    %c0 = arith.constant 0 : index
    %c0_0 = arith.constant 0 : index
    %c0_1 = arith.constant 0 : index
    %0 = vector.load %arg1[%c0, %c0_0, %c0_1] : memref<1x16x8xbf16, #tpu.memory_space<vmem>>, vector<1x16x8xbf16>
    %1 = vector.shape_cast %0 : vector<1x16x8xbf16> to vector<16x8xbf16>
    %2 = arith.extf %1 : vector<16x8xbf16> to vector<16x8xf32>
    %c0_2 = arith.constant 0 : index
    %c0_3 = arith.constant 0 : index
    %3 = vector.load %arg2[%c0_2, %c0_3] : memref<24x8xbf16, #tpu.memory_space<vmem>>, vector<24x8xbf16>
    %c0_4 = arith.constant 0 : index
    %c0_5 = arith.constant 0 : index
    %4 = vector.load %arg3[%c0_4, %c0_5] : memref<1x8xf32, #tpu.memory_space<vmem>>, vector<1x8xf32>
    %5 = arith.truncf %2 : vector<16x8xf32> to vector<16x8xbf16>
    %cst = arith.constant 0.000000e+00 : bf16
    %6 = vector.broadcast %cst : bf16 to vector<1x8xbf16>
    %7 = vector.extract_strided_slice %5 {offsets = [0, 0], sizes = [15, 8], strides = [1, 1]} : vector<16x8xbf16> to vector<15x8xbf16>
    %8 = tpu.concatenate %6, %7 in 0 : vector<1x8xbf16>, vector<15x8xbf16> -> vector<16x8xbf16>
    %9 = vector.extract_strided_slice %5 {offsets = [1, 0], sizes = [15, 8], strides = [1, 1]} : vector<16x8xbf16> to vector<15x8xbf16>
    %10 = tpu.concatenate %9, %6 in 0 : vector<15x8xbf16>, vector<1x8xbf16> -> vector<16x8xbf16>
    %11 = tpu.concatenate %8, %5, %10 in 1 : vector<16x8xbf16>, vector<16x8xbf16>, vector<16x8xbf16> -> vector<16x24xbf16>
    %cst_6 = arith.constant dense<0.000000e+00> : vector<16x8xf32>
    %12 = tpu.matmul %11, %3, %cst_6 {dimension_numbers = #tpu.dot_dimension_numbers<[1], [0], [0], [1], [0, 0, 1, 1], [], []>} : vector<16x24xbf16>, vector<24x8xbf16>, vector<16x8xf32> -> vector<16x8xf32>
    %13 = vector.broadcast %4 : vector<1x8xf32> to vector<16x8xf32>
    %14 = arith.addf %12, %13 : vector<16x8xf32>
    %15 = arith.addf %14, %2 : vector<16x8xf32>
    %cst_7 = arith.constant 0.000000e+00 : f32
    %16 = vector.broadcast %cst_7 : f32 to vector<16x8xf32>
    %17 = arith.cmpf ogt, %15, %16 : vector<16x8xf32>
    %cst_8 = arith.constant 2.000000e-01 : f32
    %18 = vector.broadcast %cst_8 : f32 to vector<16x8xf32>
    %19 = arith.mulf %18, %15 : vector<16x8xf32>
    %20 = arith.select %17, %15, %19 : vector<16x8xi1>, vector<16x8xf32>
    %c0_9 = arith.constant 0 : index
    %c0_10 = arith.constant 0 : index
    %21 = vector.load %arg4[%c0_9, %c0_10] : memref<24x8xbf16, #tpu.memory_space<vmem>>, vector<24x8xbf16>
    %c0_11 = arith.constant 0 : index
    %c0_12 = arith.constant 0 : index
    %22 = vector.load %arg5[%c0_11, %c0_12] : memref<1x8xf32, #tpu.memory_space<vmem>>, vector<1x8xf32>
    %23 = arith.truncf %20 : vector<16x8xf32> to vector<16x8xbf16>
    %cst_13 = arith.constant 0.000000e+00 : bf16
    %24 = vector.broadcast %cst_13 : bf16 to vector<1x8xbf16>
    %25 = vector.extract_strided_slice %23 {offsets = [0, 0], sizes = [15, 8], strides = [1, 1]} : vector<16x8xbf16> to vector<15x8xbf16>
    %26 = tpu.concatenate %24, %25 in 0 : vector<1x8xbf16>, vector<15x8xbf16> -> vector<16x8xbf16>
    %27 = vector.extract_strided_slice %23 {offsets = [1, 0], sizes = [15, 8], strides = [1, 1]} : vector<16x8xbf16> to vector<15x8xbf16>
    %28 = tpu.concatenate %27, %24 in 0 : vector<15x8xbf16>, vector<1x8xbf16> -> vector<16x8xbf16>
    %29 = tpu.concatenate %26, %23, %28 in 1 : vector<16x8xbf16>, vector<16x8xbf16>, vector<16x8xbf16> -> vector<16x24xbf16>
    %cst_14 = arith.constant dense<0.000000e+00> : vector<16x8xf32>
    %30 = tpu.matmul %29, %21, %cst_14 {dimension_numbers = #tpu.dot_dimension_numbers<[1], [0], [0], [1], [0, 0, 1, 1], [], []>} : vector<16x24xbf16>, vector<24x8xbf16>, vector<16x8xf32> -> vector<16x8xf32>
    %31 = vector.broadcast %22 : vector<1x8xf32> to vector<16x8xf32>
    %32 = arith.addf %30, %31 : vector<16x8xf32>
    %33 = arith.addf %32, %20 : vector<16x8xf32>
    %cst_15 = arith.constant 0.000000e+00 : f32
    %34 = vector.broadcast %cst_15 : f32 to vector<16x8xf32>
    %35 = arith.cmpf ogt, %33, %34 : vector<16x8xf32>
    %cst_16 = arith.constant 2.000000e-01 : f32
    %36 = vector.broadcast %cst_16 : f32 to vector<16x8xf32>
    %37 = arith.mulf %36, %33 : vector<16x8xf32>
    %38 = arith.select %35, %33, %37 : vector<16x8xi1>, vector<16x8xf32>
    %c0_17 = arith.constant 0 : index
    %c0_18 = arith.constant 0 : index
    %39 = vector.load %arg6[%c0_17, %c0_18] : memref<24x8xbf16, #tpu.memory_space<vmem>>, vector<24x8xbf16>
    %c0_19 = arith.constant 0 : index
    %c0_20 = arith.constant 0 : index
    %40 = vector.load %arg7[%c0_19, %c0_20] : memref<1x8xf32, #tpu.memory_space<vmem>>, vector<1x8xf32>
    %41 = arith.truncf %38 : vector<16x8xf32> to vector<16x8xbf16>
    %cst_21 = arith.constant 0.000000e+00 : bf16
    %42 = vector.broadcast %cst_21 : bf16 to vector<1x8xbf16>
    %43 = vector.extract_strided_slice %41 {offsets = [0, 0], sizes = [15, 8], strides = [1, 1]} : vector<16x8xbf16> to vector<15x8xbf16>
    %44 = tpu.concatenate %42, %43 in 0 : vector<1x8xbf16>, vector<15x8xbf16> -> vector<16x8xbf16>
    %45 = vector.extract_strided_slice %41 {offsets = [1, 0], sizes = [15, 8], strides = [1, 1]} : vector<16x8xbf16> to vector<15x8xbf16>
    %46 = tpu.concatenate %45, %42 in 0 : vector<15x8xbf16>, vector<1x8xbf16> -> vector<16x8xbf16>
    %47 = tpu.concatenate %44, %41, %46 in 1 : vector<16x8xbf16>, vector<16x8xbf16>, vector<16x8xbf16> -> vector<16x24xbf16>
    %cst_22 = arith.constant dense<0.000000e+00> : vector<16x8xf32>
    %48 = tpu.matmul %47, %39, %cst_22 {dimension_numbers = #tpu.dot_dimension_numbers<[1], [0], [0], [1], [0, 0, 1, 1], [], []>} : vector<16x24xbf16>, vector<24x8xbf16>, vector<16x8xf32> -> vector<16x8xf32>
    %49 = vector.broadcast %40 : vector<1x8xf32> to vector<16x8xf32>
    %50 = arith.addf %48, %49 : vector<16x8xf32>
    %51 = arith.addf %50, %2 : vector<16x8xf32>
    %cst_23 = arith.constant 0.000000e+00 : f32
    %52 = vector.broadcast %cst_23 : f32 to vector<16x8xf32>
    %53 = arith.maximumf %51, %52 : vector<16x8xf32>
    %c0_24 = arith.constant 0 : index
    %c0_25 = arith.constant 0 : index
    %54 = vector.load %arg8[%c0_24, %c0_25] : memref<8x6xbf16, #tpu.memory_space<vmem>>, vector<8x6xbf16>
    %c0_26 = arith.constant 0 : index
    %c0_27 = arith.constant 0 : index
    %55 = vector.load %arg9[%c0_26, %c0_27] : memref<1x6xf32, #tpu.memory_space<vmem>>, vector<1x6xf32>
    %56 = arith.truncf %53 : vector<16x8xf32> to vector<16x8xbf16>
    %cst_28 = arith.constant dense<0.000000e+00> : vector<16x6xf32>
    %57 = tpu.matmul %56, %54, %cst_28 {dimension_numbers = #tpu.dot_dimension_numbers<[1], [0], [0], [1], [0, 0, 1, 1], [], []>} : vector<16x8xbf16>, vector<8x6xbf16>, vector<16x6xf32> -> vector<16x6xf32>
    %58 = vector.broadcast %55 : vector<1x6xf32> to vector<16x6xf32>
    %59 = arith.addf %57, %58 : vector<16x6xf32>
    %c0_29 = arith.constant 0 : index
    %c0_30 = arith.constant 0 : index
    %c0_31 = arith.constant 0 : index
    %60 = vector.load %arg10[%c0_29, %c0_30, %c0_31] : memref<1x16x6xf32, #tpu.memory_space<vmem>>, vector<1x16x6xf32>
    %61 = vector.shape_cast %60 : vector<1x16x6xf32> to vector<16x6xf32>
    %62 = vector.shape_cast %59 : vector<16x6xf32> to vector<1x16x6xf32>
    tpu.vector_store %arg10[%c0_29, %c0_30, %c0_31], %62 {strides = array<i32>} : memref<1x16x6xf32, #tpu.memory_space<vmem>>, vector<1x16x6xf32>,
    return
  }
  func.func @transform_0(%arg0: i32) -> (i32, i32, i32) {
    %c0_i32 = arith.constant 0 : i32
    %c0_i32_0 = arith.constant 0 : i32
    %c0_i32_1 = arith.constant 0 : i32
    return %arg0, %c0_i32, %c0_i32_0 : i32, i32, i32
  }
  func.func @transform_1(%arg0: i32) -> (i32, i32) {
    %c0_i32 = arith.constant 0 : i32
    %c0_i32_0 = arith.constant 0 : i32
    %c0_i32_1 = arith.constant 0 : i32
    return %c0_i32, %c0_i32_0 : i32, i32
  }
  func.func @transform_2(%arg0: i32) -> (i32, i32) {
    %c0_i32 = arith.constant 0 : i32
    %c0_i32_0 = arith.constant 0 : i32
    %c0_i32_1 = arith.constant 0 : i32
    return %c0_i32, %c0_i32_0 : i32, i32
  }
  func.func @transform_3(%arg0: i32) -> (i32, i32) {
    %c0_i32 = arith.constant 0 : i32
    %c0_i32_0 = arith.constant 0 : i32
    %c0_i32_1 = arith.constant 0 : i32
    return %c0_i32, %c0_i32_0 : i32, i32
  }
  func.func @transform_4(%arg0: i32) -> (i32, i32) {
    %c0_i32 = arith.constant 0 : i32
    %c0_i32_0 = arith.constant 0 : i32
    %c0_i32_1 = arith.constant 0 : i32
    return %c0_i32, %c0_i32_0 : i32, i32
  }
  func.func @transform_5(%arg0: i32) -> (i32, i32) {
    %c0_i32 = arith.constant 0 : i32
    %c0_i32_0 = arith.constant 0 : i32
    %c0_i32_1 = arith.constant 0 : i32
    return %c0_i32, %c0_i32_0 : i32, i32
  }
  func.func @transform_6(%arg0: i32) -> (i32, i32) {
    %c0_i32 = arith.constant 0 : i32
    %c0_i32_0 = arith.constant 0 : i32
    %c0_i32_1 = arith.constant 0 : i32
    return %c0_i32, %c0_i32_0 : i32, i32
  }
  func.func @transform_7(%arg0: i32) -> (i32, i32) {
    %c0_i32 = arith.constant 0 : i32
    %c0_i32_0 = arith.constant 0 : i32
    %c0_i32_1 = arith.constant 0 : i32
    return %c0_i32, %c0_i32_0 : i32, i32
  }
  func.func @transform_8(%arg0: i32) -> (i32, i32) {
    %c0_i32 = arith.constant 0 : i32
    %c0_i32_0 = arith.constant 0 : i32
    %c0_i32_1 = arith.constant 0 : i32
    return %c0_i32, %c0_i32_0 : i32, i32
  }
  func.func @transform_9(%arg0: i32) -> (i32, i32, i32) {
    %c0_i32 = arith.constant 0 : i32
    %c0_i32_0 = arith.constant 0 : i32
    %c0_i32_1 = arith.constant 0 : i32
    return %arg0, %c0_i32, %c0_i32_0 : i32, i32, i32
  }
}

</mosaic_0001>

<llo_original>
// kernel: _lambda_.8
$region0: #{_lambda_.8}
  #allocation0 [shape = 'u32[]', space=smem, size = 0x4, offset = 0x4, fixed_abs, tag = 'smem constant byte address 0x4 - core index']
  #allocation1 [shape = 'u32[144,128]{1,0:T(1,128)}', space=vmem, size = 0x12000, scoped, tag = 'internal scratch']
  %s0 = inlined_call_operand.hbm [shape: f32[2,16,6], index: 0, kind: input, shape index: {}]
  %s1 = inlined_call_operand.hbm [shape: bf16[18,8], index: 1, kind: input, shape index: {}]
  %s2 = inlined_call_operand.hbm [shape: f32[1,8], index: 2, kind: input, shape index: {}]
  %s3 = inlined_call_operand.hbm [shape: bf16[24,8], index: 3, kind: input, shape index: {}]
  %s4 = inlined_call_operand.hbm [shape: f32[1,8], index: 4, kind: input, shape index: {}]
  %s5 = inlined_call_operand.hbm [shape: bf16[24,8], index: 5, kind: input, shape index: {}]
  %s6 = inlined_call_operand.hbm [shape: f32[1,8], index: 6, kind: input, shape index: {}]
  %s7 = inlined_call_operand.hbm [shape: bf16[24,8], index: 7, kind: input, shape index: {}]
  %s8 = inlined_call_operand.hbm [shape: f32[1,8], index: 8, kind: input, shape index: {}]
  %s9 = inlined_call_operand.hbm [shape: bf16[2,16,8], index: 9, kind: output, shape index: {}]
  %s10 = sld [smem:[#allocation0]]
  $region105: #{_lambda_.8} parent=0
    _
  %s12 = ssub.s32 1, %s10
  %s13 = scalar_select 0, %s12, %s10
  $region1: #{_lambda_.8} parent=0
    #allocation2 [shape = 'u8[16384]{0}', space=vmem, size = 0x4000, scoped, tag = 'input window, operand 0']
    #allocation3 [shape = 's32[2]{0}', space=sflag, size = 0x8, scoped, tag = 'scoped memory for _lambda_.8']
    #allocation4 [shape = 's32[2]{0}', space=sflag, size = 0x8, scoped, tag = 'scoped memory for _lambda_.8']
    #allocation5 [shape = 'u8[6144]{0}', space=vmem, size = 0x1800, scoped, tag = 'input window, operand 1, single buffered']
    #allocation6 [shape = 's32[1]{0}', space=sflag, size = 0x4, scoped, tag = 'scoped memory for _lambda_.8']
    #allocation7 [shape = 'u8[512]{0}', space=vmem, size = 0x400, scoped, tag = 'input window, operand 2, single buffered']
    #allocation8 [shape = 'u8[6144]{0}', space=vmem, size = 0x1800, scoped, tag = 'input window, operand 3, single buffered']
    #allocation9 [shape = 's32[1]{0}', space=sflag, size = 0x4, scoped, tag = 'scoped memory for _lambda_.8']
    #allocation10 [shape = 'u8[512]{0}', space=vmem, size = 0x400, scoped, tag = 'input window, operand 4, single buffered']
    #allocation11 [shape = 'u8[6144]{0}', space=vmem, size = 0x1800, scoped, tag = 'input window, operand 5, single buffered']
    #allocation12 [shape = 's32[1]{0}', space=sflag, size = 0x4, scoped, tag = 'scoped memory for _lambda_.8']
    #allocation13 [shape = 'u8[512]{0}', space=vmem, size = 0x400, scoped, tag = 'input window, operand 6, single buffered']
    #allocation14 [shape = 'u8[6144]{0}', space=vmem, size = 0x1800, scoped, tag = 'input window, operand 7, single buffered']
    #allocation15 [shape = 's32[1]{0}', space=sflag, size = 0x4, scoped, tag = 'scoped memory for _lambda_.8']
    #allocation16 [shape = 'u8[512]{0}', space=vmem, size = 0x400, scoped, tag = 'input window, operand 8, single buffered']
    #allocation17 [shape = 'u8[8192]{0}', space=vmem, size = 0x2000, scoped, tag = 'output window, operand 0']
    %14 = vsyncpa [#allocation3], 0
    %s15 = scalar_lea.sflag [#allocation3], 1
    %16 = vsyncpa %s15, 0
    %17 = vsyncpa [#allocation6], 0
    %18 = vsyncpa [#allocation9], 0
    %19 = vsyncpa [#allocation12], 0
    %20 = vsyncpa [#allocation15], 0
    %21 = vsyncpa [#allocation4], 0
    %s22 = scalar_lea.sflag [#allocation4], 1
    %23 = vsyncpa %s22, 0
    loop: start=0, step=1, limit=4
    $region2: #{_lambda_.8} parent=1 // loop_pre_header
      _
    $region3: #{_lambda_.8} parent=1 // loop_header
      %s25 = sphi 0, %s29
      %p26 = scmp.ge.s32.totalorder %s25, 4
      %s35 = sphi 0, %s37
      %s38 = sphi 0, %s35
      %s39 = sphi 0, %s38
      %s55 = sphi 0, %s39
      %s59 = sphi 0, %s59
      %s61 = sphi 0, %s59
      %s62 = sphi 0, %s61
      %s76 = sphi 0, %s62
      %s80 = sphi 0, %s80
      %s82 = sphi 0, %s80
      %s83 = sphi 0, %s82
      %s97 = sphi 0, %s83
      %s101 = sphi 0, %s101
      %s103 = sphi 0, %s101
      %s104 = sphi 0, %s103
      %s118 = sphi 0, %s104
      %s122 = sphi 0, %s122
      %s124 = sphi 0, %s122
      %s125 = sphi 0, %s124
      %s139 = sphi 0, %s125
      %s143 = sphi 0, %s143
      %s145 = sphi 0, %s143
      %s146 = sphi 0, %s145
      %s160 = sphi 0, %s146
      %s164 = sphi 0, %s164
      %s166 = sphi 0, %s164
      %s167 = sphi 0, %s166
      %s181 = sphi 0, %s167
      %s185 = sphi 0, %s185
      %s187 = sphi 0, %s185
      %s188 = sphi 0, %s187
      %s202 = sphi 0, %s188
      %s206 = sphi 0, %s206
      %s208 = sphi 0, %s206
      %s209 = sphi 0, %s208
      %s223 = sphi 0, %s209
      %s229 = sphi 0, %s231
      %s232 = sphi 0, %s229
      %s233 = sphi 0, %s232
      %s249 = sphi 0, %s233
    $region4: #{_lambda_.8} parent=1 // loop_header_branch
      %28 = sbr.rel (%p26) target = $region8
    $region5: #{_lambda_.8} parent=1 // loop_body
      %s30 = ssub.s32 %s25, 1
      %s31 = ssub.s32 %s25, 2
      %s32 = sadd.s32 %s25, 1
      %s33 = ssub.s32 %s25, %s32
      %p34 = scmp.eq.s32.totalorder %s33, 0
      %s36 = sadd.s32 %s35, 1
      %s37 = scalar_select %p34, %s35, %s36
      %p40 = pneg %p34
      %p41 = scmp.eq.s32.totalorder %s25, 1
      %p42 = por %p40, %p41
      %p43 = scmp.ne.s32.totalorder %s35, %s38
      %p44 = scmp.eq.s32.totalorder %s25, 0
      %p45 = por %p43, %p44
      %p46 = scmp.ne.s32.totalorder %s35, %s38
      %p47 = scmp.eq.s32.totalorder %s30, 1
      %p48 = por %p46, %p47
      %p49 = scmp.ne.s32.totalorder %s38, %s39
      %p50 = scmp.eq.s32.totalorder %s30, 0
      %p51 = por %p49, %p50
      %p52 = scmp.ne.s32.totalorder %s38, %s39
      %p53 = scmp.eq.s32.totalorder %s31, 1
      %p54 = por %p52, %p53
      %p56 = scmp.ne.s32.totalorder %s39, %s55
      %p57 = scmp.eq.s32.totalorder %s31, 0
      %p58 = por %p56, %p57
      %s60 = sadd.s32 %s59, 1
      %p63 = scmp.eq.s32.totalorder %s25, 1
      %p64 = scmp.ne.s32.totalorder %s59, %s61
      %p65 = scmp.eq.s32.totalorder %s25, 0
      %p66 = por %p64, %p65
      %p67 = scmp.ne.s32.totalorder %s59, %s61
      %p68 = scmp.eq.s32.totalorder %s30, 1
      %p69 = por %p67, %p68
      %p70 = scmp.ne.s32.totalorder %s61, %s62
      %p71 = scmp.eq.s32.totalorder %s30, 0
      %p72 = por %p70, %p71
      %p73 = scmp.ne.s32.totalorder %s61, %s62
      %p74 = scmp.eq.s32.totalorder %s31, 1
      %p75 = por %p73, %p74
      %p77 = scmp.ne.s32.totalorder %s62, %s76
      %p78 = scmp.eq.s32.totalorder %s31, 0
      %p79 = por %p77, %p78
      %s81 = sadd.s32 %s80, 1
      %p84 = scmp.eq.s32.totalorder %s25, 1
      %p85 = scmp.ne.s32.totalorder %s80, %s82
      %p86 = scmp.eq.s32.totalorder %s25, 0
      %p87 = por %p85, %p86
      %p88 = scmp.ne.s32.totalorder %s80, %s82
      %p89 = scmp.eq.s32.totalorder %s30, 1
      %p90 = por %p88, %p89
      %p91 = scmp.ne.s32.totalorder %s82, %s83
      %p92 = scmp.eq.s32.totalorder %s30, 0
      %p93 = por %p91, %p92
      %p94 = scmp.ne.s32.totalorder %s82, %s83
      %p95 = scmp.eq.s32.totalorder %s31, 1
      %p96 = por %p94, %p95
      %p98 = scmp.ne.s32.totalorder %s83, %s97
      %p99 = scmp.eq.s32.totalorder %s31, 0
      %p100 = por %p98, %p99
      %s102 = sadd.s32 %s101, 1
      %p105 = scmp.eq.s32.totalorder %s25, 1
      %p106 = scmp.ne.s32.totalorder %s101, %s103
      %p107 = scmp.eq.s32.totalorder %s25, 0
      %p108 = por %p106, %p107
      %p109 = scmp.ne.s32.totalorder %s101, %s103
      %p110 = scmp.eq.s32.totalorder %s30, 1
      %p111 = por %p109, %p110
      %p112 = scmp.ne.s32.totalorder %s103, %s104
      %p113 = scmp.eq.s32.totalorder %s30, 0
      %p114 = por %p112, %p113
      %p115 = scmp.ne.s32.totalorder %s103, %s104
      %p116 = scmp.eq.s32.totalorder %s31, 1
      %p117 = por %p115, %p116
      %p119 = scmp.ne.s32.totalorder %s104, %s118
      %p120 = scmp.eq.s32.totalorder %s31, 0
      %p121 = por %p119, %p120
      %s123 = sadd.s32 %s122, 1
      %p126 = scmp.eq.s32.totalorder %s25, 1
      %p127 = scmp.ne.s32.totalorder %s122, %s124
      %p128 = scmp.eq.s32.totalorder %s25, 0
      %p129 = por %p127, %p128
      %p130 = scmp.ne.s32.totalorder %s122, %s124
      %p131 = scmp.eq.s32.totalorder %s30, 1
      %p132 = por %p130, %p131
      %p133 = scmp.ne.s32.totalorder %s124, %s125
      %p134 = scmp.eq.s32.totalorder %s30, 0
      %p135 = por %p133, %p134
      %p136 = scmp.ne.s32.totalorder %s124, %s125
      %p137 = scmp.eq.s32.totalorder %s31, 1
      %p138 = por %p136, %p137
      %p140 = scmp.ne.s32.totalorder %s125, %s139
      %p141 = scmp.eq.s32.totalorder %s31, 0
      %p142 = por %p140, %p141
      %s144 = sadd.s32 %s143, 1
      %p147 = scmp.eq.s32.totalorder %s25, 1
      %p148 = scmp.ne.s32.totalorder %s143, %s145
      %p149 = scmp.eq.s32.totalorder %s25, 0
      %p150 = por %p148, %p149
      %p151 = scmp.ne.s32.totalorder %s143, %s145
      %p152 = scmp.eq.s32.totalorder %s30, 1
      %p153 = por %p151, %p152
      %p154 = scmp.ne.s32.totalorder %s145, %s146
      %p155 = scmp.eq.s32.totalorder %s30, 0
      %p156 = por %p154, %p155
      %p157 = scmp.ne.s32.totalorder %s145, %s146
      %p158 = scmp.eq.s32.totalorder %s31, 1
      %p159 = por %p157, %p158
      %p161 = scmp.ne.s32.totalorder %s146, %s160
      %p162 = scmp.eq.s32.totalorder %s31, 0
      %p163 = por %p161, %p162
      %s165 = sadd.s32 %s164, 1
      %p168 = scmp.eq.s32.totalorder %s25, 1
      %p169 = scmp.ne.s32.totalorder %s164, %s166
      %p170 = scmp.eq.s32.totalorder %s25, 0
      %p171 = por %p169, %p170
      %p172 = scmp.ne.s32.totalorder %s164, %s166
      %p173 = scmp.eq.s32.totalorder %s30, 1
      %p174 = por %p172, %p173
      %p175 = scmp.ne.s32.totalorder %s166, %s167
      %p176 = scmp.eq.s32.totalorder %s30, 0
      %p177 = por %p175, %p176
      %p178 = scmp.ne.s32.totalorder %s166, %s167
      %p179 = scmp.eq.s32.totalorder %s31, 1
      %p180 = por %p178, %p179
      %p182 = scmp.ne.s32.totalorder %s167, %s181
      %p183 = scmp.eq.s32.totalorder %s31, 0
      %p184 = por %p182, %p183
      %s186 = sadd.s32 %s185, 1
      %p189 = scmp.eq.s32.totalorder %s25, 1
      %p190 = scmp.ne.s32.totalorder %s185, %s187
      %p191 = scmp.eq.s32.totalorder %s25, 0
      %p192 = por %p190, %p191
      %p193 = scmp.ne.s32.totalorder %s185, %s187
      %p194 = scmp.eq.s32.totalorder %s30, 1
      %p195 = por %p193, %p194
      %p196 = scmp.ne.s32.totalorder %s187, %s188
      %p197 = scmp.eq.s32.totalorder %s30, 0
      %p198 = por %p196, %p197
      %p199 = scmp.ne.s32.totalorder %s187, %s188
      %p200 = scmp.eq.s32.totalorder %s31, 1
      %p201 = por %p199, %p200
      %p203 = scmp.ne.s32.totalorder %s188, %s202
      %p204 = scmp.eq.s32.totalorder %s31, 0
      %p205 = por %p203, %p204
      %s207 = sadd.s32 %s206, 1
      %p210 = scmp.eq.s32.totalorder %s25, 1
      %p211 = scmp.ne.s32.totalorder %s206, %s208
      %p212 = scmp.eq.s32.totalorder %s25, 0
      %p213 = por %p211, %p212
      %p214 = scmp.ne.s32.totalorder %s206, %s208
      %p215 = scmp.eq.s32.totalorder %s30, 1
      %p216 = por %p214, %p215
      %p217 = scmp.ne.s32.totalorder %s208, %s209
      %p218 = scmp.eq.s32.totalorder %s30, 0
      %p219 = por %p217, %p218
      %p220 = scmp.ne.s32.totalorder %s208, %s209
      %p221 = scmp.eq.s32.totalorder %s31, 1
      %p222 = por %p220, %p221
      %p224 = scmp.ne.s32.totalorder %s209, %s223
      %p225 = scmp.eq.s32.totalorder %s31, 0
      %p226 = por %p224, %p225
      %s227 = ssub.s32 %s25, %s32
      %p228 = scmp.eq.s32.totalorder %s227, 0
      %s230 = sadd.s32 %s229, 1
      %s231 = scalar_select %p228, %s229, %s230
      %p234 = pneg %p228
      %p235 = scmp.eq.s32.totalorder %s25, 1
      %p236 = por %p234, %p235
      %p237 = scmp.ne.s32.totalorder %s229, %s232
      %p238 = scmp.eq.s32.totalorder %s25, 0
      %p239 = por %p237, %p238
      %p240 = scmp.ne.s32.totalorder %s229, %s232
      %p241 = scmp.eq.s32.totalorder %s30, 1
      %p242 = por %p240, %p241
      %p243 = scmp.ne.s32.totalorder %s232, %s233
      %p244 = scmp.eq.s32.totalorder %s30, 0
      %p245 = por %p243, %p244
      %p246 = scmp.ne.s32.totalorder %s232, %s233
      %p247 = scmp.eq.s32.totalorder %s31, 1
      %p248 = por %p246, %p247
      %p250 = scmp.ne.s32.totalorder %s233, %s249
      %p251 = scmp.eq.s32.totalorder %s31, 0
      %p252 = por %p250, %p251
      %p253 = scmp.le.s32.totalorder 1, %s25
      %p254 = scmp.lt.s32.totalorder %s25, 3
      %p255 = pnand %p253, %p254
      %p256 = pneg %p255
      // Predicated region
      $region9: #{_lambda_.8} parent=5 // pred_check
        _
      $region10: #{_lambda_.8} parent=5 // pred_check_branch
        %258 = sbr.rel (%p255) target = $region12
      $region11: #{_lambda_.8} parent=5 // pred_region
        %s259 = ssub.s32 %s25, 1
        // Predicated region
        $region13: #{_lambda_.8} parent=11 // pred_check
          %p260 = pneg %p72
        $region14: #{_lambda_.8} parent=11 // pred_check_branch
          %262 = sbr.rel (%p260) target = $region16
        $region15: #{_lambda_.8} parent=11 // pred_region
          %s264 = ssub.s32 192, 192
          %265 = vsyncadd [#allocation6], %s264
          %s266 = sshll.u32 [#allocation5], 4
          %s267 = int_to_ptr.vmem [resolvable:$true] %s266
          %272 = dma.hbm_to_vmem [thread:$0]  %s1, 192, %s267, [#allocation6], 64, 64, 4
        $region16: #{_lambda_.8} parent=11 // pred_fallthru
          _
        // Predicated region
        $region17: #{_lambda_.8} parent=11 // pred_check
          %p273 = pneg %p93
        $region18: #{_lambda_.8} parent=11 // pred_check_branch
          %275 = sbr.rel (%p273) target = $region20
        $region19: #{_lambda_.8} parent=11 // pred_region
          %s277 = ssub.s32 16, 16
          %278 = vsyncadd [#allocation6], %s277
          %s280 = sshll.u32 [#allocation7], 4
          %s281 = int_to_ptr.vmem [resolvable:$true] %s280
          %283 = dma.hbm_to_vmem [thread:$0]  %s2, 16, %s281, [#allocation6]
        $region20: #{_lambda_.8} parent=11 // pred_fallthru
          _
        // Predicated region
        $region21: #{_lambda_.8} parent=11 // pred_check
          %p284 = pneg %p114
        $region22: #{_lambda_.8} parent=11 // pred_check_branch
          %286 = sbr.rel (%p284) target = $region24
        $region23: #{_lambda_.8} parent=11 // pred_region
          %s288 = ssub.s32 192, 192
          %289 = vsyncadd [#allocation9], %s288
          %s290 = sshll.u32 [#allocation8], 4
          %s291 = int_to_ptr.vmem [resolvable:$true] %s290
          %296 = dma.hbm_to_vmem [thread:$0]  %s3, 192, %s291, [#allocation9], 64, 64, 4
        $region24: #{_lambda_.8} parent=11 // pred_fallthru
          _
        // Predicated region
        $region25: #{_lambda_.8} parent=11 // pred_check
          %p297 = pneg %p135
        $region26: #{_lambda_.8} parent=11 // pred_check_branch
          %299 = sbr.rel (%p297) target = $region28
        $region27: #{_lambda_.8} parent=11 // pred_region
          %s301 = ssub.s32 16, 16
          %302 = vsyncadd [#allocation9], %s301
          %s304 = sshll.u32 [#allocation10], 4
          %s305 = int_to_ptr.vmem [resolvable:$true] %s304
          %307 = dma.hbm_to_vmem [thread:$0]  %s4, 16, %s305, [#allocation9]
        $region28: #{_lambda_.8} parent=11 // pred_fallthru
          _
        // Predicated region
        $region29: #{_lambda_.8} parent=11 // pred_check
          %p308 = pneg %p156
        $region30: #{_lambda_.8} parent=11 // pred_check_branch
          %310 = sbr.rel (%p308) target = $region32
        $region31: #{_lambda_.8} parent=11 // pred_region
          %s312 = ssub.s32 192, 192
          %313 = vsyncadd [#allocation12], %s312
          %s314 = sshll.u32 [#allocation11], 4
          %s315 = int_to_ptr.vmem [resolvable:$true] %s314
          %320 = dma.hbm_to_vmem [thread:$0]  %s5, 192, %s315, [#allocation12], 64, 64, 4
        $region32: #{_lambda_.8} parent=11 // pred_fallthru
          _
        // Predicated region
        $region33: #{_lambda_.8} parent=11 // pred_check
          %p321 = pneg %p177
        $region34: #{_lambda_.8} parent=11 // pred_check_branch
          %323 = sbr.rel (%p321) target = $region36
        $region35: #{_lambda_.8} parent=11 // pred_region
          %s325 = ssub.s32 16, 16
          %326 = vsyncadd [#allocation12], %s325
          %s328 = sshll.u32 [#allocation13], 4
          %s329 = int_to_ptr.vmem [resolvable:$true] %s328
          %331 = dma.hbm_to_vmem [thread:$0]  %s6, 16, %s329, [#allocation12]
        $region36: #{_lambda_.8} parent=11 // pred_fallthru
          _
        // Predicated region
        $region37: #{_lambda_.8} parent=11 // pred_check
          %p332 = pneg %p198
        $region38: #{_lambda_.8} parent=11 // pred_check_branch
          %334 = sbr.rel (%p332) target = $region40
        $region39: #{_lambda_.8} parent=11 // pred_region
          %s336 = ssub.s32 192, 192
          %337 = vsyncadd [#allocation15], %s336
          %s338 = sshll.u32 [#allocation14], 4
          %s339 = int_to_ptr.vmem [resolvable:$true] %s338
          %344 = dma.hbm_to_vmem [thread:$0]  %s7, 192, %s339, [#allocation15], 64, 64, 4
        $region40: #{_lambda_.8} parent=11 // pred_fallthru
          _
        // Predicated region
        $region41: #{_lambda_.8} parent=11 // pred_check
          %p345 = pneg %p219
        $region42: #{_lambda_.8} parent=11 // pred_check_branch
          %347 = sbr.rel (%p345) target = $region44
        $region43: #{_lambda_.8} parent=11 // pred_region
          %s349 = ssub.s32 16, 16
          %350 = vsyncadd [#allocation15], %s349
          %s352 = sshll.u32 [#allocation16], 4
          %s353 = int_to_ptr.vmem [resolvable:$true] %s352
          %355 = dma.hbm_to_vmem [thread:$0]  %s8, 16, %s353, [#allocation15]
        $region44: #{_lambda_.8} parent=11 // pred_fallthru
          _
      $region12: #{_lambda_.8} parent=5 // pred_fallthru
        _
      %p356 = scmp.lt.s32.totalorder %s25, 2
      // Predicated region
      $region45: #{_lambda_.8} parent=5 // pred_check
        %p357 = pneg %p356
      $region46: #{_lambda_.8} parent=5 // pred_check_branch
        %359 = sbr.rel (%p357) target = $region48
      $region47: #{_lambda_.8} parent=5 // pred_region
        // Predicated region
        $region49: #{_lambda_.8} parent=47 // pred_check
          %p360 = pneg %p45
        $region50: #{_lambda_.8} parent=47 // pred_check_branch
          %362 = sbr.rel (%p360) target = $region52
        $region51: #{_lambda_.8} parent=47 // pred_region
          %s363 = sand.u32 %s35, 1
          %s364 = scalar_lea.sflag [#allocation3], %s363
          %s365 = sand.u32 %s35, 1
          %s366 = smul.addr %s365, 16
          %s367 = scalar_lea.vmem [#allocation2], %s366
          %s369 = ssub.s32 256, 256
          %370 = vsyncadd %s364, %s369
          %s371 = smul.addr %s25, 2
          %s372 = smul.addr %s371, 128
          %s373 = scalar_lea.hbm %s0, %s372
          %s374 = sshll.u32 %s367, 4
          %s375 = int_to_ptr.vmem [resolvable:$true] %s374
          %380 = dma.hbm_to_vmem [thread:$0]  %s373, 256, %s375, %s364, 128, 128, 8
        $region52: #{_lambda_.8} parent=47 // pred_fallthru
          _
      $region48: #{_lambda_.8} parent=5 // pred_fallthru
        _
      %p381 = scmp.le.s32.totalorder 1, %s25
      %p382 = scmp.lt.s32.totalorder %s25, 3
      %p383 = pnand %p381, %p382
      %p384 = pneg %p383
      // Predicated region
      $region53: #{_lambda_.8} parent=5 // pred_check
        _
      $region54: #{_lambda_.8} parent=5 // pred_check_branch
        %386 = sbr.rel (%p383) target = $region56
      $region55: #{_lambda_.8} parent=5 // pred_region
        %s387 = ssub.s32 %s25, 1
        %s388 = sand.u32 %s38, 1
        %s389 = scalar_lea.sflag [#allocation3], %s388
        %s390 = sand.u32 %s38, 1
        %s391 = smul.addr %s390, 16
        %s392 = scalar_lea.vmem [#allocation2], %s391
        // Predicated region
        $region57: #{_lambda_.8} parent=55 // pred_check
          %p393 = pneg %p51
        $region58: #{_lambda_.8} parent=55 // pred_check_branch
          %395 = sbr.rel (%p393) target = $region60
        $region59: #{_lambda_.8} parent=55 // pred_region
          %396 = dma.done %s389, 256
        $region60: #{_lambda_.8} parent=55 // pred_fallthru
          _
        // Predicated region
        $region61: #{_lambda_.8} parent=55 // pred_check
          %p397 = pneg %p72
        $region62: #{_lambda_.8} parent=55 // pred_check_branch
          %399 = sbr.rel (%p397) target = $region64
        $region63: #{_lambda_.8} parent=55 // pred_region
          %400 = dma.done [#allocation6], 192
        $region64: #{_lambda_.8} parent=55 // pred_fallthru
          _
        // Predicated region
        $region65: #{_lambda_.8} parent=55 // pred_check
          %p401 = pneg %p93
        $region66: #{_lambda_.8} parent=55 // pred_check_branch
          %403 = sbr.rel (%p401) target = $region68
        $region67: #{_lambda_.8} parent=55 // pred_region
          %404 = dma.done [#allocation6], 16
        $region68: #{_lambda_.8} parent=55 // pred_fallthru
          _
        // Predicated region
        $region69: #{_lambda_.8} parent=55 // pred_check
          %p405 = pneg %p114
        $region70: #{_lambda_.8} parent=55 // pred_check_branch
          %407 = sbr.rel (%p405) target = $region72
        $region71: #{_lambda_.8} parent=55 // pred_region
          %408 = dma.done [#allocation9], 192
        $region72: #{_lambda_.8} parent=55 // pred_fallthru
          _
        // Predicated region
        $region73: #{_lambda_.8} parent=55 // pred_check
          %p409 = pneg %p135
        $region74: #{_lambda_.8} parent=55 // pred_check_branch
          %411 = sbr.rel (%p409) target = $region76
        $region75: #{_lambda_.8} parent=55 // pred_region
          %412 = dma.done [#allocation9], 16
        $region76: #{_lambda_.8} parent=55 // pred_fallthru
          _
        // Predicated region
        $region77: #{_lambda_.8} parent=55 // pred_check
          %p413 = pneg %p156
        $region78: #{_lambda_.8} parent=55 // pred_check_branch
          %415 = sbr.rel (%p413) target = $region80
        $region79: #{_lambda_.8} parent=55 // pred_region
          %416 = dma.done [#allocation12], 192
        $region80: #{_lambda_.8} parent=55 // pred_fallthru
          _
        // Predicated region
        $region81: #{_lambda_.8} parent=55 // pred_check
          %p417 = pneg %p177
        $region82: #{_lambda_.8} parent=55 // pred_check_branch
          %419 = sbr.rel (%p417) target = $region84
        $region83: #{_lambda_.8} parent=55 // pred_region
          %420 = dma.done [#allocation12], 16
        $region84: #{_lambda_.8} parent=55 // pred_fallthru
          _
        // Predicated region
        $region85: #{_lambda_.8} parent=55 // pred_check
          %p421 = pneg %p198
        $region86: #{_lambda_.8} parent=55 // pred_check_branch
          %423 = sbr.rel (%p421) target = $region88
        $region87: #{_lambda_.8} parent=55 // pred_region
          %424 = dma.done [#allocation15], 192
        $region88: #{_lambda_.8} parent=55 // pred_fallthru
          _
        // Predicated region
        $region89: #{_lambda_.8} parent=55 // pred_check
          %p425 = pneg %p219
        $region90: #{_lambda_.8} parent=55 // pred_check_branch
          %427 = sbr.rel (%p425) target = $region92
        $region91: #{_lambda_.8} parent=55 // pred_region
          %428 = dma.done [#allocation15], 16
        $region92: #{_lambda_.8} parent=55 // pred_fallthru
          _
        %s429 = sand.u32 %s38, 1
        %s430 = scalar_lea.sflag [#allocation3], %s429
        %s431 = sand.u32 %s38, 1
        %s432 = smul.addr %s431, 16
        %s433 = scalar_lea.vmem [#allocation2], %s432
        %p434 = pneg %p51
        %p435 = pneg %p48
        %p436 = pneg %p72
        %p437 = pneg %p69
        %p438 = pneg %p93
        %p439 = pneg %p90
        %p440 = pneg %p114
        %p441 = pneg %p111
        %p442 = pneg %p135
        %p443 = pneg %p132
        %p444 = pneg %p156
        %p445 = pneg %p153
        %p446 = pneg %p177
        %p447 = pneg %p174
        %p448 = pneg %p198
        %p449 = pneg %p195
        %p450 = pneg %p219
        %p451 = pneg %p216
        %p452 = pneg %p245
        %p453 = pneg %p242
        %s454 = sand.u32 %s232, 1
        %s455 = scalar_lea.sflag [#allocation4], %s454
        %s456 = sand.u32 %s232, 1
        %s457 = smul.addr %s456, 8
        %s458 = scalar_lea.vmem [#allocation17], %s457
        %v460 = vld [vmem:[%s392] sm:$0xff]
        %v461 = vld [vmem:[%s392 + $0x8] sm:$0xff]
        %v462 = vld [vmem:[#allocation5] sm:$0xf]
        %v463 = vld [vmem:[#allocation5 + $0x4] sm:$0xf]
        %v464 = vld [vmem:[#allocation5 + $0x8] sm:$0x1]
        %v465 = vld [vmem:[#allocation7] sm:$0x1]
        %v466 = vpack.c.bf16 %v461, %v460
        %v468 = vshrl.u32 %v466, 16
        %v470 = vrot.slane %v468, 7
        %v471 = vshll.u32 %v466, 16
        %v473 = vor.u32 %v470, %v471
        %vm475 = vcmask 1040384
        %vm476 = vsmask.f32 256
        %vm477 = vmand %vm475, %vm476
        %v478 = vsel %vm477, 0, %v473
        %v479 = vrot.slane %v471, 1
        %v480 = vor.u32 %v468, %v479
        %vm482 = vcmask 1047552
        %vm483 = vsmask.f32 7424
        %vm484 = vmand %vm482, %vm483
        %v485 = vsel %vm484, %v480, 0
        %487 = vrot.lane.b32.xlu0 %v466, 6
        %v488 = vpop.permute.xlu0 %487
        %490 = vrot.lane.b32.xlu0 %v485, 12
        %v491 = vpop.permute.xlu0 %490
        %vm492 = vcmask 48128
        %v495 = vsel %vm492, %v478, %v488
        %vm496 = vcmask 97280
        %v498 = vsel %vm496, %v495, %v491
        %v500 = vlaneseq
        %v501 = vshrl.u32 %v500, 7
        %v502 = vsub.s32 0, %v501
        %v503 = vrot.slane %v465, %v502
        %v508 = vunpack.c.l.b16 %v462
        %v509 = vunpack.c.l.b16 %v463
        %v510 = vunpack.c.l.b16 %v464
        %v511 = vpack.c.b16 %v509, %v508
        %v512 = vpack.c.b16 %v510, %v510
        %vm514 = vcmask 146432
        %v515 = vsel %vm514, %v498, 0
        %vm517 = vcmask 1040384
        %v519 = vsel %vm517, %v512, 0
        %521 = vmatprep.subr.bf16.mxu0 0
        %522 = vmatpush1.bf16.msra.mxu0 %v511
        %523 = vmatprep.subr.bf16.mxu0 0
        %524 = vmatpush1.bf16.msra.mxu0 %v519
        %525 = vmatprep.subr.bf16.mxu0 0
        %526 = vmatpush1.bf16.msra.mxu0 0
        %527 = vmatprep.subr.bf16.mxu0 0
        %528 = vmatpush1.bf16.msra.mxu0 0
        %529 = vmatprep.subr.bf16.mxu0 0
        %530 = vmatpush1.bf16.msra.mxu0 0
        %531 = vmatprep.subr.bf16.mxu0 0
        %532 = vmatpush1.bf16.msra.mxu0 0
        %533 = vmatprep.subr.bf16.mxu0 0
        %534 = vmatpush1.bf16.msra.mxu0 0
        %535 = vmatprep.subr.bf16.mxu0 0
        %536 = vmatpush1.bf16.msra.mxu0 0
        %537 = vmatprep.subr.bf16.mxu0 0
        %538 = vmatpush1.bf16.msra.mxu0 0
        %539 = vmatprep.subr.bf16.mxu0 0
        %540 = vmatpush1.bf16.msra.mxu0 0
        %541 = vmatprep.subr.bf16.mxu0 0
        %542 = vmatpush1.bf16.msra.mxu0 0
        %543 = vmatprep.subr.bf16.mxu0 0
        %544 = vmatpush1.bf16.msra.mxu0 0
        %545 = vmatprep.subr.bf16.mxu0 0
        %546 = vmatpush1.bf16.msra.mxu0 0
        %547 = vmatprep.subr.bf16.mxu0 0
        %548 = vmatpush1.bf16.msra.mxu0 0
        %549 = vmatprep.subr.bf16.mxu0 0
        %550 = vmatpush1.bf16.msra.mxu0 0
        %551 = vmatprep.subr.bf16.mxu0 0
        %552 = vmatpush1.bf16.msra.mxu0 0
        %553 = vmatprep.mubr.bf16.mxu0 0
        %554 = vmatmul.mubr.bf16.gmra.mrb[0].mxu0 %v515
        %v555 = vpop.f32.mrb[0].mxu0
        %v556 = vadd.f32 %v503, %v555
        %v557 = vpop.f32.mrb[0].mxu0
        %v558 = vpop.f32.mrb[0].mxu0
        %v559 = vadd.f32 %v503, %v558
        %v560 = vpop.f32.mrb[0].mxu0
        %561 = vdwg.mxu0
        %vm562 = vcmp.gt.f32.partialorder %v556, 0.0
        %vm563 = vcmp.gt.f32.partialorder %v559, 0.0
        %v564 = vmul.f32 %v556, 0.2
        %v565 = vmul.f32 %v559, 0.2
        %v566 = vsel %vm562, %v556, %v564
        %v567 = vsel %vm563, %v559, %v565
        %v568 = vld [vmem:[#allocation8] sm:$0xf]
        %v569 = vld [vmem:[#allocation8 + $0x4] sm:$0xf]
        %v570 = vld [vmem:[#allocation8 + $0x8] sm:$0xf]
        %v571 = vld [vmem:[#allocation10] sm:$0x1]
        %v572 = vpack.c.bf16 %v567, %v566
        %v574 = vshrl.u32 %v572, 16
        %v576 = vrot.slane %v574, 7
        %v577 = vshll.u32 %v572, 16
        %v579 = vor.u32 %v576, %v577
        %v581 = vsel %vm477, 0, %v579
        %v582 = vrot.slane %v577, 1
        %v583 = vor.u32 %v574, %v582
        %v585 = vsel %vm484, %v583, 0
        %587 = vrot.lane.b32.xlu0 %v572, 8
        %v588 = vpop.permute.xlu0 %587
        %590 = vrot.lane.b32.xlu0 %v585, 16
        %v591 = vpop.permute.xlu0 %590
        %vm592 = vcmask 64512
        %v595 = vsel %vm592, %v581, %v588
        %vm596 = vcmask 130048
        %v598 = vsel %vm596, %v595, %v591
        %v600 = vlaneseq
        %v601 = vshrl.u32 %v600, 7
        %v602 = vsub.s32 0, %v601
        %v603 = vrot.slane %v571, %v602
        %v608 = vunpack.c.l.b16 %v568
        %v609 = vunpack.c.l.b16 %v569
        %v610 = vunpack.c.l.b16 %v570
        %v611 = vpack.c.b16 %v609, %v608
        %v612 = vpack.c.b16 %v610, %v610
        %vm614 = vcmask 195584
        %v615 = vsel %vm614, %v598, 0
        %vm617 = vcmask 1043456
        %v619 = vsel %vm617, %v612, 0
        %621 = vmatprep.subr.bf16.mxu0 0
        %622 = vmatpush1.bf16.msra.mxu0 %v611
        %623 = vmatprep.subr.bf16.mxu0 0
        %624 = vmatpush1.bf16.msra.mxu0 %v619
        %625 = vmatprep.subr.bf16.mxu0 0
        %626 = vmatpush1.bf16.msra.mxu0 0
        %627 = vmatprep.subr.bf16.mxu0 0
        %628 = vmatpush1.bf16.msra.mxu0 0
        %629 = vmatprep.subr.bf16.mxu0 0
        %630 = vmatpush1.bf16.msra.mxu0 0
        %631 = vmatprep.subr.bf16.mxu0 0
        %632 = vmatpush1.bf16.msra.mxu0 0
        %633 = vmatprep.subr.bf16.mxu0 0
        %634 = vmatpush1.bf16.msra.mxu0 0
        %635 = vmatprep.subr.bf16.mxu0 0
        %636 = vmatpush1.bf16.msra.mxu0 0
        %637 = vmatprep.subr.bf16.mxu0 0
        %638 = vmatpush1.bf16.msra.mxu0 0
        %639 = vmatprep.subr.bf16.mxu0 0
        %640 = vmatpush1.bf16.msra.mxu0 0
        %641 = vmatprep.subr.bf16.mxu0 0
        %642 = vmatpush1.bf16.msra.mxu0 0
        %643 = vmatprep.subr.bf16.mxu0 0
        %644 = vmatpush1.bf16.msra.mxu0 0
        %645 = vmatprep.subr.bf16.mxu0 0
        %646 = vmatpush1.bf16.msra.mxu0 0
        %647 = vmatprep.subr.bf16.mxu0 0
        %648 = vmatpush1.bf16.msra.mxu0 0
        %649 = vmatprep.subr.bf16.mxu0 0
        %650 = vmatpush1.bf16.msra.mxu0 0
        %651 = vmatprep.subr.bf16.mxu0 0
        %652 = vmatpush1.bf16.msra.mxu0 0
        %653 = vmatprep.mubr.bf16.mxu0 0
        %654 = vmatmul.mubr.bf16.gmra.mrb[0].mxu0 %v615
        %v655 = vpop.f32.mrb[0].mxu0
        %v656 = vadd.f32 %v603, %v655
        %v657 = vpop.f32.mrb[0].mxu0
        %v658 = vpop.f32.mrb[0].mxu0
        %v659 = vadd.f32 %v603, %v658
        %v660 = vpop.f32.mrb[0].mxu0
        %661 = vdwg.mxu0
        %v662 = vadd.f32 %v656, %v566
        %v663 = vadd.f32 %v659, %v567
        %vm664 = vcmp.gt.f32.partialorder %v662, 0.0
        %vm665 = vcmp.gt.f32.partialorder %v663, 0.0
        %v666 = vmul.f32 %v662, 0.2
        %v667 = vmul.f32 %v663, 0.2
        %v668 = vsel %vm664, %v662, %v666
        %v669 = vsel %vm665, %v663, %v667
        %v670 = vld [vmem:[#allocation11] sm:$0xf]
        %v671 = vld [vmem:[#allocation11 + $0x4] sm:$0xf]
        %v672 = vld [vmem:[#allocation11 + $0x8] sm:$0xf]
        %v673 = vld [vmem:[#allocation13] sm:$0x1]
        %v674 = vpack.c.bf16 %v669, %v668
        %v676 = vshrl.u32 %v674, 16
        %v678 = vrot.slane %v676, 7
        %v679 = vshll.u32 %v674, 16
        %v681 = vor.u32 %v678, %v679
        %v683 = vsel %vm477, 0, %v681
        %v684 = vrot.slane %v679, 1
        %v685 = vor.u32 %v676, %v684
        %v687 = vsel %vm484, %v685, 0
        %689 = vrot.lane.b32.xlu0 %v674, 8
        %v690 = vpop.permute.xlu0 %689
        %692 = vrot.lane.b32.xlu0 %v687, 16
        %v693 = vpop.permute.xlu0 %692
        %v696 = vsel %vm592, %v683, %v690
        %v698 = vsel %vm596, %v696, %v693
        %v700 = vlaneseq
        %v701 = vshrl.u32 %v700, 7
        %v702 = vsub.s32 0, %v701
        %v703 = vrot.slane %v673, %v702
        %v708 = vunpack.c.l.b16 %v670
        %v709 = vunpack.c.l.b16 %v671
        %v710 = vunpack.c.l.b16 %v672
        %v711 = vpack.c.b16 %v709, %v708
        %v712 = vpack.c.b16 %v710, %v710
        %v714 = vsel %vm614, %v698, 0
        %v717 = vsel %vm617, %v712, 0
        %719 = vmatprep.subr.bf16.mxu0 0
        %720 = vmatpush1.bf16.msra.mxu0 %v711
        %721 = vmatprep.subr.bf16.mxu0 0
        %722 = vmatpush1.bf16.msra.mxu0 %v717
        %723 = vmatprep.subr.bf16.mxu0 0
        %724 = vmatpush1.bf16.msra.mxu0 0
        %725 = vmatprep.subr.bf16.mxu0 0
        %726 = vmatpush1.bf16.msra.mxu0 0
        %727 = vmatprep.subr.bf16.mxu0 0
        %728 = vmatpush1.bf16.msra.mxu0 0
        %729 = vmatprep.subr.bf16.mxu0 0
        %730 = vmatpush1.bf16.msra.mxu0 0
        %731 = vmatprep.subr.bf16.mxu0 0
        %732 = vmatpush1.bf16.msra.mxu0 0
        %733 = vmatprep.subr.bf16.mxu0 0
        %734 = vmatpush1.bf16.msra.mxu0 0
        %735 = vmatprep.subr.bf16.mxu0 0
        %736 = vmatpush1.bf16.msra.mxu0 0
        %737 = vmatprep.subr.bf16.mxu0 0
        %738 = vmatpush1.bf16.msra.mxu0 0
        %739 = vmatprep.subr.bf16.mxu0 0
        %740 = vmatpush1.bf16.msra.mxu0 0
        %741 = vmatprep.subr.bf16.mxu0 0
        %742 = vmatpush1.bf16.msra.mxu0 0
        %743 = vmatprep.subr.bf16.mxu0 0
        %744 = vmatpush1.bf16.msra.mxu0 0
        %745 = vmatprep.subr.bf16.mxu0 0
        %746 = vmatpush1.bf16.msra.mxu0 0
        %747 = vmatprep.subr.bf16.mxu0 0
        %748 = vmatpush1.bf16.msra.mxu0 0
        %749 = vmatprep.subr.bf16.mxu0 0
        %750 = vmatpush1.bf16.msra.mxu0 0
        %751 = vmatprep.mubr.bf16.mxu0 0
        %752 = vmatmul.mubr.bf16.gmra.mrb[0].mxu0 %v714
        %v753 = vpop.f32.mrb[0].mxu0
        %v754 = vadd.f32 %v703, %v753
        %v755 = vpop.f32.mrb[0].mxu0
        %v756 = vpop.f32.mrb[0].mxu0
        %v757 = vadd.f32 %v703, %v756
        %v758 = vpop.f32.mrb[0].mxu0
        %759 = vdwg.mxu0
        %v760 = vadd.f32 %v754, %v668
        %v761 = vadd.f32 %v757, %v669
        %vm762 = vcmp.gt.f32.partialorder %v760, 0.0
        %vm763 = vcmp.gt.f32.partialorder %v761, 0.0
        %v764 = vmul.f32 %v760, 0.2
        %v765 = vmul.f32 %v761, 0.2
        %v766 = vsel %vm762, %v760, %v764
        %v767 = vsel %vm763, %v761, %v765
        %v768 = vld [vmem:[#allocation14] sm:$0xf]
        %v769 = vld [vmem:[#allocation14 + $0x4] sm:$0xf]
        %v770 = vld [vmem:[#allocation14 + $0x8] sm:$0xf]
        %v771 = vld [vmem:[#allocation16] sm:$0x1]
        %v772 = vpack.c.bf16 %v767, %v766
        %v774 = vshrl.u32 %v772, 16
        %v776 = vrot.slane %v774, 7
        %v777 = vshll.u32 %v772, 16
        %v779 = vor.u32 %v776, %v777
        %v781 = vsel %vm477, 0, %v779
        %v782 = vrot.slane %v777, 1
        %v783 = vor.u32 %v774, %v782
        %v785 = vsel %vm484, %v783, 0
        %787 = vrot.lane.b32.xlu0 %v772, 8
        %v788 = vpop.permute.xlu0 %787
        %790 = vrot.lane.b32.xlu0 %v785, 16
        %v791 = vpop.permute.xlu0 %790
        %v794 = vsel %vm592, %v781, %v788
        %v796 = vsel %vm596, %v794, %v791
        %v798 = vlaneseq
        %v799 = vshrl.u32 %v798, 7
        %v800 = vsub.s32 0, %v799
        %v801 = vrot.slane %v771, %v800
        %v806 = vunpack.c.l.b16 %v768
        %v807 = vunpack.c.l.b16 %v769
        %v808 = vunpack.c.l.b16 %v770
        %v809 = vpack.c.b16 %v807, %v806
        %v810 = vpack.c.b16 %v808, %v808
        %v812 = vsel %vm614, %v796, 0
        %v815 = vsel %vm617, %v810, 0
        %817 = vmatprep.subr.bf16.mxu0 0
        %818 = vmatpush1.bf16.msra.mxu0 %v809
        %819 = vmatprep.subr.bf16.mxu0 0
        %820 = vmatpush1.bf16.msra.mxu0 %v815
        %821 = vmatprep.subr.bf16.mxu0 0
        %822 = vmatpush1.bf16.msra.mxu0 0
        %823 = vmatprep.subr.bf16.mxu0 0
        %824 = vmatpush1.bf16.msra.mxu0 0
        %825 = vmatprep.subr.bf16.mxu0 0
        %826 = vmatpush1.bf16.msra.mxu0 0
        %827 = vmatprep.subr.bf16.mxu0 0
        %828 = vmatpush1.bf16.msra.mxu0 0
        %829 = vmatprep.subr.bf16.mxu0 0
        %830 = vmatpush1.bf16.msra.mxu0 0
        %831 = vmatprep.subr.bf16.mxu0 0
        %832 = vmatpush1.bf16.msra.mxu0 0
        %833 = vmatprep.subr.bf16.mxu0 0
        %834 = vmatpush1.bf16.msra.mxu0 0
        %835 = vmatprep.subr.bf16.mxu0 0
        %836 = vmatpush1.bf16.msra.mxu0 0
        %837 = vmatprep.subr.bf16.mxu0 0
        %838 = vmatpush1.bf16.msra.mxu0 0
        %839 = vmatprep.subr.bf16.mxu0 0
        %840 = vmatpush1.bf16.msra.mxu0 0
        %841 = vmatprep.subr.bf16.mxu0 0
        %842 = vmatpush1.bf16.msra.mxu0 0
        %843 = vmatprep.subr.bf16.mxu0 0
        %844 = vmatpush1.bf16.msra.mxu0 0
        %845 = vmatprep.subr.bf16.mxu0 0
        %846 = vmatpush1.bf16.msra.mxu0 0
        %847 = vmatprep.subr.bf16.mxu0 0
        %848 = vmatpush1.bf16.msra.mxu0 0
        %849 = vmatprep.mubr.bf16.mxu0 0
        %850 = vmatmul.mubr.bf16.gmra.mrb[0].mxu0 %v812
        %v851 = vpop.f32.mrb[0].mxu0
        %v852 = vadd.f32 %v801, %v851
        %v853 = vpop.f32.mrb[0].mxu0
        %v854 = vpop.f32.mrb[0].mxu0
        %v855 = vadd.f32 %v801, %v854
        %v856 = vpop.f32.mrb[0].mxu0
        %857 = vdwg.mxu0
        %v858 = vadd.f32 %v852, %v566
        %v859 = vadd.f32 %v855, %v567
        %v860 = vmax.f32 %v858, 0.0
        %v861 = vmax.f32 %v859, 0.0
        %v862 = vpack.c.bf16 %v861, %v860
        %v864 = vunpack.c.l.b16 %v862
        %v865 = vunpack.c.h.b16 %v862
        %v866 = vpack.c.b16 %v864, %v864
        %v867 = vpack.c.b16 %v865, %v865
        %vm870 = vcmask 60416
        %871 = vst.msk [vmem:[%s458] sm:$0xf] %vm870, %v866
        %872 = vst.msk [vmem:[%s458 + $0x4] sm:$0xf] %vm870, %v867
        %s873 = sand.u32 %s232, 1
        %s874 = scalar_lea.sflag [#allocation4], %s873
        %s875 = sand.u32 %s232, 1
        %s876 = smul.addr %s875, 8
        %s877 = scalar_lea.vmem [#allocation17], %s876
        // Predicated region
        $region93: #{_lambda_.8} parent=55 // pred_check
          %p878 = pneg %p242
        $region94: #{_lambda_.8} parent=55 // pred_check_branch
          %880 = sbr.rel (%p878) target = $region96
        $region95: #{_lambda_.8} parent=55 // pred_region
          %s882 = ssub.s32 128, 128
          %883 = vsyncadd %s874, %s882
          %s884 = smul.addr %s30, 2
          %s885 = smul.addr %s884, 64
          %s886 = scalar_lea.hbm %s9, %s885
          %s887 = sshll.u32 %s877, 4
          %s888 = int_to_ptr.vmem [resolvable:$true] %s887
          %893 = dma.vmem_to_hbm [thread:$0]  %s888, 128, %s886, %s874, 64, 64, 4
        $region96: #{_lambda_.8} parent=55 // pred_fallthru
          _
      $region56: #{_lambda_.8} parent=5 // pred_fallthru
        _
      %p894 = scmp.le.s32.totalorder 2, %s25
      // Predicated region
      $region97: #{_lambda_.8} parent=5 // pred_check
        %p895 = pneg %p894
      $region98: #{_lambda_.8} parent=5 // pred_check_branch
        %897 = sbr.rel (%p895) target = $region100
      $region99: #{_lambda_.8} parent=5 // pred_region
        %s898 = ssub.s32 %s25, 2
        // Predicated region
        $region101: #{_lambda_.8} parent=99 // pred_check
          %p899 = pneg %p248
        $region102: #{_lambda_.8} parent=99 // pred_check_branch
          %901 = sbr.rel (%p899) target = $region104
        $region103: #{_lambda_.8} parent=99 // pred_region
          %s902 = sand.u32 %s233, 1
          %s903 = scalar_lea.sflag [#allocation4], %s902
          %s904 = sand.u32 %s233, 1
          %s905 = smul.addr %s904, 8
          %s906 = scalar_lea.vmem [#allocation17], %s905
          %907 = dma.done %s903, 128
        $region104: #{_lambda_.8} parent=99 // pred_fallthru
          _
      $region100: #{_lambda_.8} parent=5 // pred_fallthru
        _
    $region6: #{_lambda_.8} parent=1 // loop_footer
      %s29 = sadd.s32 1, %s25
    $region7: #{_lambda_.8} parent=1 // loop_footer_branch
      %24 = sbr.rel target = $region3
    $region8: #{_lambda_.8} parent=1 // loop_exit
      _
    %908 = vsyncpa [#allocation3], 1
    %s909 = scalar_lea.sflag [#allocation3], 1
    %910 = vsyncpa %s909, 1
    %911 = vsyncpa [#allocation6], 1
    %912 = vsyncpa [#allocation9], 1
    %913 = vsyncpa [#allocation12], 1
    %914 = vsyncpa [#allocation15], 1
    %915 = vsyncpa [#allocation4], 1
    %s916 = scalar_lea.sflag [#allocation4], 1
    %917 = vsyncpa %s916, 1

// kernel: _lambda_.9
$region0: #{_lambda_.9}
  #allocation0 [shape = 'u32[]', space=smem, size = 0x4, offset = 0x4, fixed_abs, tag = 'smem constant byte address 0x4 - core index']
  #allocation1 [shape = 'u32[144,128]{1,0:T(1,128)}', space=vmem, size = 0x12000, scoped, tag = 'internal scratch']
  %s0 = inlined_call_operand.hbm [shape: bf16[2,8,16], index: 0, kind: input, shape index: {}]
  %s1 = inlined_call_operand.hbm [shape: bf16[32,16], index: 1, kind: input, shape index: {}]
  %s2 = inlined_call_operand.hbm [shape: f32[1,16], index: 2, kind: input, shape index: {}]
  %s3 = inlined_call_operand.hbm [shape: bf16[48,16], index: 3, kind: input, shape index: {}]
  %s4 = inlined_call_operand.hbm [shape: f32[1,16], index: 4, kind: input, shape index: {}]
  %s5 = inlined_call_operand.hbm [shape: bf16[48,16], index: 5, kind: input, shape index: {}]
  %s6 = inlined_call_operand.hbm [shape: f32[1,16], index: 6, kind: input, shape index: {}]
  %s7 = inlined_call_operand.hbm [shape: bf16[48,16], index: 7, kind: input, shape index: {}]
  %s8 = inlined_call_operand.hbm [shape: f32[1,16], index: 8, kind: input, shape index: {}]
  %s9 = inlined_call_operand.hbm [shape: bf16[2,8,16], index: 9, kind: output, shape index: {}]
  %s10 = sld [smem:[#allocation0]]
  $region105: #{_lambda_.9} parent=0
    _
  %s12 = ssub.s32 1, %s10
  %s13 = scalar_select 0, %s12, %s10
  $region1: #{_lambda_.9} parent=0
    #allocation2 [shape = 'u8[4096]{0}', space=vmem, size = 0x1000, scoped, tag = 'input window, operand 0']
    #allocation3 [shape = 's32[2]{0}', space=sflag, size = 0x8, scoped, tag = 'scoped memory for _lambda_.9']
    #allocation4 [shape = 's32[2]{0}', space=sflag, size = 0x8, scoped, tag = 'scoped memory for _lambda_.9']
    #allocation5 [shape = 'u8[8192]{0}', space=vmem, size = 0x2000, scoped, tag = 'input window, operand 1, single buffered']
    #allocation6 [shape = 's32[1]{0}', space=sflag, size = 0x4, scoped, tag = 'scoped memory for _lambda_.9']
    #allocation7 [shape = 'u8[512]{0}', space=vmem, size = 0x400, scoped, tag = 'input window, operand 2, single buffered']
    #allocation8 [shape = 'u8[12288]{0}', space=vmem, size = 0x3000, scoped, tag = 'input window, operand 3, single buffered']
    #allocation9 [shape = 's32[1]{0}', space=sflag, size = 0x4, scoped, tag = 'scoped memory for _lambda_.9']
    #allocation10 [shape = 'u8[512]{0}', space=vmem, size = 0x400, scoped, tag = 'input window, operand 4, single buffered']
    #allocation11 [shape = 'u8[12288]{0}', space=vmem, size = 0x3000, scoped, tag = 'input window, operand 5, single buffered']
    #allocation12 [shape = 's32[1]{0}', space=sflag, size = 0x4, scoped, tag = 'scoped memory for _lambda_.9']
    #allocation13 [shape = 'u8[512]{0}', space=vmem, size = 0x400, scoped, tag = 'input window, operand 6, single buffered']
    #allocation14 [shape = 'u8[12288]{0}', space=vmem, size = 0x3000, scoped, tag = 'input window, operand 7, single buffered']
    #allocation15 [shape = 's32[1]{0}', space=sflag, size = 0x4, scoped, tag = 'scoped memory for _lambda_.9']
    #allocation16 [shape = 'u8[512]{0}', space=vmem, size = 0x400, scoped, tag = 'input window, operand 8, single buffered']
    #allocation17 [shape = 'u8[4096]{0}', space=vmem, size = 0x1000, scoped, tag = 'output window, operand 0']
    %14 = vsyncpa [#allocation3], 0
    %s15 = scalar_lea.sflag [#allocation3], 1
    %16 = vsyncpa %s15, 0
    %17 = vsyncpa [#allocation6], 0
    %18 = vsyncpa [#allocation9], 0
    %19 = vsyncpa [#allocation12], 0
    %20 = vsyncpa [#allocation15], 0
    %21 = vsyncpa [#allocation4], 0
    %s22 = scalar_lea.sflag [#allocation4], 1
    %23 = vsyncpa %s22, 0
    loop: start=0, step=1, limit=4
    $region2: #{_lambda_.9} parent=1 // loop_pre_header
      _
    $region3: #{_lambda_.9} parent=1 // loop_header
      %s25 = sphi 0, %s29
      %p26 = scmp.ge.s32.totalorder %s25, 4
      %s35 = sphi 0, %s37
      %s38 = sphi 0, %s35
      %s39 = sphi 0, %s38
      %s55 = sphi 0, %s39
      %s59 = sphi 0, %s59
      %s61 = sphi 0, %s59
      %s62 = sphi 0, %s61
      %s76 = sphi 0, %s62
      %s80 = sphi 0, %s80
      %s82 = sphi 0, %s80
      %s83 = sphi 0, %s82
      %s97 = sphi 0, %s83
      %s101 = sphi 0, %s101
      %s103 = sphi 0, %s101
      %s104 = sphi 0, %s103
      %s118 = sphi 0, %s104
      %s122 = sphi 0, %s122
      %s124 = sphi 0, %s122
      %s125 = sphi 0, %s124
      %s139 = sphi 0, %s125
      %s143 = sphi 0, %s143
      %s145 = sphi 0, %s143
      %s146 = sphi 0, %s145
      %s160 = sphi 0, %s146
      %s164 = sphi 0, %s164
      %s166 = sphi 0, %s164
      %s167 = sphi 0, %s166
      %s181 = sphi 0, %s167
      %s185 = sphi 0, %s185
      %s187 = sphi 0, %s185
      %s188 = sphi 0, %s187
      %s202 = sphi 0, %s188
      %s206 = sphi 0, %s206
      %s208 = sphi 0, %s206
      %s209 = sphi 0, %s208
      %s223 = sphi 0, %s209
      %s229 = sphi 0, %s231
      %s232 = sphi 0, %s229
      %s233 = sphi 0, %s232
      %s249 = sphi 0, %s233
    $region4: #{_lambda_.9} parent=1 // loop_header_branch
      %28 = sbr.rel (%p26) target = $region8
    $region5: #{_lambda_.9} parent=1 // loop_body
      %s30 = ssub.s32 %s25, 1
      %s31 = ssub.s32 %s25, 2
      %s32 = sadd.s32 %s25, 1
      %s33 = ssub.s32 %s25, %s32
      %p34 = scmp.eq.s32.totalorder %s33, 0
      %s36 = sadd.s32 %s35, 1
      %s37 = scalar_select %p34, %s35, %s36
      %p40 = pneg %p34
      %p41 = scmp.eq.s32.totalorder %s25, 1
      %p42 = por %p40, %p41
      %p43 = scmp.ne.s32.totalorder %s35, %s38
      %p44 = scmp.eq.s32.totalorder %s25, 0
      %p45 = por %p43, %p44
      %p46 = scmp.ne.s32.totalorder %s35, %s38
      %p47 = scmp.eq.s32.totalorder %s30, 1
      %p48 = por %p46, %p47
      %p49 = scmp.ne.s32.totalorder %s38, %s39
      %p50 = scmp.eq.s32.totalorder %s30, 0
      %p51 = por %p49, %p50
      %p52 = scmp.ne.s32.totalorder %s38, %s39
      %p53 = scmp.eq.s32.totalorder %s31, 1
      %p54 = por %p52, %p53
      %p56 = scmp.ne.s32.totalorder %s39, %s55
      %p57 = scmp.eq.s32.totalorder %s31, 0
      %p58 = por %p56, %p57
      %s60 = sadd.s32 %s59, 1
      %p63 = scmp.eq.s32.totalorder %s25, 1
      %p64 = scmp.ne.s32.totalorder %s59, %s61
      %p65 = scmp.eq.s32.totalorder %s25, 0
      %p66 = por %p64, %p65
      %p67 = scmp.ne.s32.totalorder %s59, %s61
      %p68 = scmp.eq.s32.totalorder %s30, 1
      %p69 = por %p67, %p68
      %p70 = scmp.ne.s32.totalorder %s61, %s62
      %p71 = scmp.eq.s32.totalorder %s30, 0
      %p72 = por %p70, %p71
      %p73 = scmp.ne.s32.totalorder %s61, %s62
      %p74 = scmp.eq.s32.totalorder %s31, 1
      %p75 = por %p73, %p74
      %p77 = scmp.ne.s32.totalorder %s62, %s76
      %p78 = scmp.eq.s32.totalorder %s31, 0
      %p79 = por %p77, %p78
      %s81 = sadd.s32 %s80, 1
      %p84 = scmp.eq.s32.totalorder %s25, 1
      %p85 = scmp.ne.s32.totalorder %s80, %s82
      %p86 = scmp.eq.s32.totalorder %s25, 0
      %p87 = por %p85, %p86
      %p88 = scmp.ne.s32.totalorder %s80, %s82
      %p89 = scmp.eq.s32.totalorder %s30, 1
      %p90 = por %p88, %p89
      %p91 = scmp.ne.s32.totalorder %s82, %s83
      %p92 = scmp.eq.s32.totalorder %s30, 0
      %p93 = por %p91, %p92
      %p94 = scmp.ne.s32.totalorder %s82, %s83
      %p95 = scmp.eq.s32.totalorder %s31, 1
      %p96 = por %p94, %p95
      %p98 = scmp.ne.s32.totalorder %s83, %s97
      %p99 = scmp.eq.s32.totalorder %s31, 0
      %p100 = por %p98, %p99
      %s102 = sadd.s32 %s101, 1
      %p105 = scmp.eq.s32.totalorder %s25, 1
      %p106 = scmp.ne.s32.totalorder %s101, %s103
      %p107 = scmp.eq.s32.totalorder %s25, 0
      %p108 = por %p106, %p107
      %p109 = scmp.ne.s32.totalorder %s101, %s103
      %p110 = scmp.eq.s32.totalorder %s30, 1
      %p111 = por %p109, %p110
      %p112 = scmp.ne.s32.totalorder %s103, %s104
      %p113 = scmp.eq.s32.totalorder %s30, 0
      %p114 = por %p112, %p113
      %p115 = scmp.ne.s32.totalorder %s103, %s104
      %p116 = scmp.eq.s32.totalorder %s31, 1
      %p117 = por %p115, %p116
      %p119 = scmp.ne.s32.totalorder %s104, %s118
      %p120 = scmp.eq.s32.totalorder %s31, 0
      %p121 = por %p119, %p120
      %s123 = sadd.s32 %s122, 1
      %p126 = scmp.eq.s32.totalorder %s25, 1
      %p127 = scmp.ne.s32.totalorder %s122, %s124
      %p128 = scmp.eq.s32.totalorder %s25, 0
      %p129 = por %p127, %p128
      %p130 = scmp.ne.s32.totalorder %s122, %s124
      %p131 = scmp.eq.s32.totalorder %s30, 1
      %p132 = por %p130, %p131
      %p133 = scmp.ne.s32.totalorder %s124, %s125
      %p134 = scmp.eq.s32.totalorder %s30, 0
      %p135 = por %p133, %p134
      %p136 = scmp.ne.s32.totalorder %s124, %s125
      %p137 = scmp.eq.s32.totalorder %s31, 1
      %p138 = por %p136, %p137
      %p140 = scmp.ne.s32.totalorder %s125, %s139
      %p141 = scmp.eq.s32.totalorder %s31, 0
      %p142 = por %p140, %p141
      %s144 = sadd.s32 %s143, 1
      %p147 = scmp.eq.s32.totalorder %s25, 1
      %p148 = scmp.ne.s32.totalorder %s143, %s145
      %p149 = scmp.eq.s32.totalorder %s25, 0
      %p150 = por %p148, %p149
      %p151 = scmp.ne.s32.totalorder %s143, %s145
      %p152 = scmp.eq.s32.totalorder %s30, 1
      %p153 = por %p151, %p152
      %p154 = scmp.ne.s32.totalorder %s145, %s146
      %p155 = scmp.eq.s32.totalorder %s30, 0
      %p156 = por %p154, %p155
      %p157 = scmp.ne.s32.totalorder %s145, %s146
      %p158 = scmp.eq.s32.totalorder %s31, 1
      %p159 = por %p157, %p158
      %p161 = scmp.ne.s32.totalorder %s146, %s160
      %p162 = scmp.eq.s32.totalorder %s31, 0
      %p163 = por %p161, %p162
      %s165 = sadd.s32 %s164, 1
      %p168 = scmp.eq.s32.totalorder %s25, 1
      %p169 = scmp.ne.s32.totalorder %s164, %s166
      %p170 = scmp.eq.s32.totalorder %s25, 0
      %p171 = por %p169, %p170
      %p172 = scmp.ne.s32.totalorder %s164, %s166
      %p173 = scmp.eq.s32.totalorder %s30, 1
      %p174 = por %p172, %p173
      %p175 = scmp.ne.s32.totalorder %s166, %s167
      %p176 = scmp.eq.s32.totalorder %s30, 0
      %p177 = por %p175, %p176
      %p178 = scmp.ne.s32.totalorder %s166, %s167
      %p179 = scmp.eq.s32.totalorder %s31, 1
      %p180 = por %p178, %p179
      %p182 = scmp.ne.s32.totalorder %s167, %s181
      %p183 = scmp.eq.s32.totalorder %s31, 0
      %p184 = por %p182, %p183
      %s186 = sadd.s32 %s185, 1
      %p189 = scmp.eq.s32.totalorder %s25, 1
      %p190 = scmp.ne.s32.totalorder %s185, %s187
      %p191 = scmp.eq.s32.totalorder %s25, 0
      %p192 = por %p190, %p191
      %p193 = scmp.ne.s32.totalorder %s185, %s187
      %p194 = scmp.eq.s32.totalorder %s30, 1
      %p195 = por %p193, %p194
      %p196 = scmp.ne.s32.totalorder %s187, %s188
      %p197 = scmp.eq.s32.totalorder %s30, 0
      %p198 = por %p196, %p197
      %p199 = scmp.ne.s32.totalorder %s187, %s188
      %p200 = scmp.eq.s32.totalorder %s31, 1
      %p201 = por %p199, %p200
      %p203 = scmp.ne.s32.totalorder %s188, %s202
      %p204 = scmp.eq.s32.totalorder %s31, 0
      %p205 = por %p203, %p204
      %s207 = sadd.s32 %s206, 1
      %p210 = scmp.eq.s32.totalorder %s25, 1
      %p211 = scmp.ne.s32.totalorder %s206, %s208
      %p212 = scmp.eq.s32.totalorder %s25, 0
      %p213 = por %p211, %p212
      %p214 = scmp.ne.s32.totalorder %s206, %s208
      %p215 = scmp.eq.s32.totalorder %s30, 1
      %p216 = por %p214, %p215
      %p217 = scmp.ne.s32.totalorder %s208, %s209
      %p218 = scmp.eq.s32.totalorder %s30, 0
      %p219 = por %p217, %p218
      %p220 = scmp.ne.s32.totalorder %s208, %s209
      %p221 = scmp.eq.s32.totalorder %s31, 1
      %p222 = por %p220, %p221
      %p224 = scmp.ne.s32.totalorder %s209, %s223
      %p225 = scmp.eq.s32.totalorder %s31, 0
      %p226 = por %p224, %p225
      %s227 = ssub.s32 %s25, %s32
      %p228 = scmp.eq.s32.totalorder %s227, 0
      %s230 = sadd.s32 %s229, 1
      %s231 = scalar_select %p228, %s229, %s230
      %p234 = pneg %p228
      %p235 = scmp.eq.s32.totalorder %s25, 1
      %p236 = por %p234, %p235
      %p237 = scmp.ne.s32.totalorder %s229, %s232
      %p238 = scmp.eq.s32.totalorder %s25, 0
      %p239 = por %p237, %p238
      %p240 = scmp.ne.s32.totalorder %s229, %s232
      %p241 = scmp.eq.s32.totalorder %s30, 1
      %p242 = por %p240, %p241
      %p243 = scmp.ne.s32.totalorder %s232, %s233
      %p244 = scmp.eq.s32.totalorder %s30, 0
      %p245 = por %p243, %p244
      %p246 = scmp.ne.s32.totalorder %s232, %s233
      %p247 = scmp.eq.s32.totalorder %s31, 1
      %p248 = por %p246, %p247
      %p250 = scmp.ne.s32.totalorder %s233, %s249
      %p251 = scmp.eq.s32.totalorder %s31, 0
      %p252 = por %p250, %p251
      %p253 = scmp.le.s32.totalorder 1, %s25
      %p254 = scmp.lt.s32.totalorder %s25, 3
      %p255 = pnand %p253, %p254
      %p256 = pneg %p255
      // Predicated region
      $region9: #{_lambda_.9} parent=5 // pred_check
        _
      $region10: #{_lambda_.9} parent=5 // pred_check_branch
        %258 = sbr.rel (%p255) target = $region12
      $region11: #{_lambda_.9} parent=5 // pred_region
        %s259 = ssub.s32 %s25, 1
        // Predicated region
        $region13: #{_lambda_.9} parent=11 // pred_check
          %p260 = pneg %p72
        $region14: #{_lambda_.9} parent=11 // pred_check_branch
          %262 = sbr.rel (%p260) target = $region16
        $region15: #{_lambda_.9} parent=11 // pred_region
          %s264 = ssub.s32 256, 256
          %265 = vsyncadd [#allocation6], %s264
          %s266 = sshll.u32 [#allocation5], 4
          %s267 = int_to_ptr.vmem [resolvable:$true] %s266
          %272 = dma.hbm_to_vmem [thread:$0]  %s1, 256, %s267, [#allocation6], 64, 64, 4
        $region16: #{_lambda_.9} parent=11 // pred_fallthru
          _
        // Predicated region
        $region17: #{_lambda_.9} parent=11 // pred_check
          %p273 = pneg %p93
        $region18: #{_lambda_.9} parent=11 // pred_check_branch
          %275 = sbr.rel (%p273) target = $region20
        $region19: #{_lambda_.9} parent=11 // pred_region
          %s277 = ssub.s32 16, 16
          %278 = vsyncadd [#allocation6], %s277
          %s280 = sshll.u32 [#allocation7], 4
          %s281 = int_to_ptr.vmem [resolvable:$true] %s280
          %283 = dma.hbm_to_vmem [thread:$0]  %s2, 16, %s281, [#allocation6]
        $region20: #{_lambda_.9} parent=11 // pred_fallthru
          _
        // Predicated region
        $region21: #{_lambda_.9} parent=11 // pred_check
          %p284 = pneg %p114
        $region22: #{_lambda_.9} parent=11 // pred_check_branch
          %286 = sbr.rel (%p284) target = $region24
        $region23: #{_lambda_.9} parent=11 // pred_region
          %s288 = ssub.s32 384, 384
          %289 = vsyncadd [#allocation9], %s288
          %s290 = sshll.u32 [#allocation8], 4
          %s291 = int_to_ptr.vmem [resolvable:$true] %s290
          %296 = dma.hbm_to_vmem [thread:$0]  %s3, 384, %s291, [#allocation9], 64, 64, 4
        $region24: #{_lambda_.9} parent=11 // pred_fallthru
          _
        // Predicated region
        $region25: #{_lambda_.9} parent=11 // pred_check
          %p297 = pneg %p135
        $region26: #{_lambda_.9} parent=11 // pred_check_branch
          %299 = sbr.rel (%p297) target = $region28
        $region27: #{_lambda_.9} parent=11 // pred_region
          %s301 = ssub.s32 16, 16
          %302 = vsyncadd [#allocation9], %s301
          %s304 = sshll.u32 [#allocation10], 4
          %s305 = int_to_ptr.vmem [resolvable:$true] %s304
          %307 = dma.hbm_to_vmem [thread:$0]  %s4, 16, %s305, [#allocation9]
        $region28: #{_lambda_.9} parent=11 // pred_fallthru
          _
        // Predicated region
        $region29: #{_lambda_.9} parent=11 // pred_check
          %p308 = pneg %p156
        $region30: #{_lambda_.9} parent=11 // pred_check_branch
          %310 = sbr.rel (%p308) target = $region32
        $region31: #{_lambda_.9} parent=11 // pred_region
          %s312 = ssub.s32 384, 384
          %313 = vsyncadd [#allocation12], %s312
          %s314 = sshll.u32 [#allocation11], 4
          %s315 = int_to_ptr.vmem [resolvable:$true] %s314
          %320 = dma.hbm_to_vmem [thread:$0]  %s5, 384, %s315, [#allocation12], 64, 64, 4
        $region32: #{_lambda_.9} parent=11 // pred_fallthru
          _
        // Predicated region
        $region33: #{_lambda_.9} parent=11 // pred_check
          %p321 = pneg %p177
        $region34: #{_lambda_.9} parent=11 // pred_check_branch
          %323 = sbr.rel (%p321) target = $region36
        $region35: #{_lambda_.9} parent=11 // pred_region
          %s325 = ssub.s32 16, 16
          %326 = vsyncadd [#allocation12], %s325
          %s328 = sshll.u32 [#allocation13], 4
          %s329 = int_to_ptr.vmem [resolvable:$true] %s328
          %331 = dma.hbm_to_vmem [thread:$0]  %s6, 16, %s329, [#allocation12]
        $region36: #{_lambda_.9} parent=11 // pred_fallthru
          _
        // Predicated region
        $region37: #{_lambda_.9} parent=11 // pred_check
          %p332 = pneg %p198
        $region38: #{_lambda_.9} parent=11 // pred_check_branch
          %334 = sbr.rel (%p332) target = $region40
        $region39: #{_lambda_.9} parent=11 // pred_region
          %s336 = ssub.s32 384, 384
          %337 = vsyncadd [#allocation15], %s336
          %s338 = sshll.u32 [#allocation14], 4
          %s339 = int_to_ptr.vmem [resolvable:$true] %s338
          %344 = dma.hbm_to_vmem [thread:$0]  %s7, 384, %s339, [#allocation15], 64, 64, 4
        $region40: #{_lambda_.9} parent=11 // pred_fallthru
          _
        // Predicated region
        $region41: #{_lambda_.9} parent=11 // pred_check
          %p345 = pneg %p219
        $region42: #{_lambda_.9} parent=11 // pred_check_branch
          %347 = sbr.rel (%p345) target = $region44
        $region43: #{_lambda_.9} parent=11 // pred_region
          %s349 = ssub.s32 16, 16
          %350 = vsyncadd [#allocation15], %s349
          %s352 = sshll.u32 [#allocation16], 4
          %s353 = int_to_ptr.vmem [resolvable:$true] %s352
          %355 = dma.hbm_to_vmem [thread:$0]  %s8, 16, %s353, [#allocation15]
        $region44: #{_lambda_.9} parent=11 // pred_fallthru
          _
      $region12: #{_lambda_.9} parent=5 // pred_fallthru
        _
      %p356 = scmp.lt.s32.totalorder %s25, 2
      // Predicated region
      $region45: #{_lambda_.9} parent=5 // pred_check
        %p357 = pneg %p356
      $region46: #{_lambda_.9} parent=5 // pred_check_branch
        %359 = sbr.rel (%p357) target = $region48
      $region47: #{_lambda_.9} parent=5 // pred_region
        // Predicated region
        $region49: #{_lambda_.9} parent=47 // pred_check
          %p360 = pneg %p45
        $region50: #{_lambda_.9} parent=47 // pred_check_branch
          %362 = sbr.rel (%p360) target = $region52
        $region51: #{_lambda_.9} parent=47 // pred_region
          %s363 = sand.u32 %s35, 1
          %s364 = scalar_lea.sflag [#allocation3], %s363
          %s365 = sand.u32 %s35, 1
          %s366 = smul.addr %s365, 4
          %s367 = scalar_lea.vmem [#allocation2], %s366
          %s369 = ssub.s32 64, 64
          %370 = vsyncadd %s364, %s369
          %s371 = smul.addr %s25, 64
          %s372 = scalar_lea.hbm %s0, %s371
          %s374 = sshll.u32 %s367, 4
          %s375 = int_to_ptr.vmem [resolvable:$true] %s374
          %377 = dma.hbm_to_vmem [thread:$0]  %s372, 64, %s375, %s364
        $region52: #{_lambda_.9} parent=47 // pred_fallthru
          _
      $region48: #{_lambda_.9} parent=5 // pred_fallthru
        _
      %p378 = scmp.le.s32.totalorder 1, %s25
      %p379 = scmp.lt.s32.totalorder %s25, 3
      %p380 = pnand %p378, %p379
      %p381 = pneg %p380
      // Predicated region
      $region53: #{_lambda_.9} parent=5 // pred_check
        _
      $region54: #{_lambda_.9} parent=5 // pred_check_branch
        %383 = sbr.rel (%p380) target = $region56
      $region55: #{_lambda_.9} parent=5 // pred_region
        %s384 = ssub.s32 %s25, 1
        %s385 = sand.u32 %s38, 1
        %s386 = scalar_lea.sflag [#allocation3], %s385
        %s387 = sand.u32 %s38, 1
        %s388 = smul.addr %s387, 4
        %s389 = scalar_lea.vmem [#allocation2], %s388
        // Predicated region
        $region57: #{_lambda_.9} parent=55 // pred_check
          %p390 = pneg %p51
        $region58: #{_lambda_.9} parent=55 // pred_check_branch
          %392 = sbr.rel (%p390) target = $region60
        $region59: #{_lambda_.9} parent=55 // pred_region
          %393 = dma.done %s386, 64
        $region60: #{_lambda_.9} parent=55 // pred_fallthru
          _
        // Predicated region
        $region61: #{_lambda_.9} parent=55 // pred_check
          %p394 = pneg %p72
        $region62: #{_lambda_.9} parent=55 // pred_check_branch
          %396 = sbr.rel (%p394) target = $region64
        $region63: #{_lambda_.9} parent=55 // pred_region
          %397 = dma.done [#allocation6], 256
        $region64: #{_lambda_.9} parent=55 // pred_fallthru
          _
        // Predicated region
        $region65: #{_lambda_.9} parent=55 // pred_check
          %p398 = pneg %p93
        $region66: #{_lambda_.9} parent=55 // pred_check_branch
          %400 = sbr.rel (%p398) target = $region68
        $region67: #{_lambda_.9} parent=55 // pred_region
          %401 = dma.done [#allocation6], 16
        $region68: #{_lambda_.9} parent=55 // pred_fallthru
          _
        // Predicated region
        $region69: #{_lambda_.9} parent=55 // pred_check
          %p402 = pneg %p114
        $region70: #{_lambda_.9} parent=55 // pred_check_branch
          %404 = sbr.rel (%p402) target = $region72
        $region71: #{_lambda_.9} parent=55 // pred_region
          %405 = dma.done [#allocation9], 384
        $region72: #{_lambda_.9} parent=55 // pred_fallthru
          _
        // Predicated region
        $region73: #{_lambda_.9} parent=55 // pred_check
          %p406 = pneg %p135
        $region74: #{_lambda_.9} parent=55 // pred_check_branch
          %408 = sbr.rel (%p406) target = $region76
        $region75: #{_lambda_.9} parent=55 // pred_region
          %409 = dma.done [#allocation9], 16
        $region76: #{_lambda_.9} parent=55 // pred_fallthru
          _
        // Predicated region
        $region77: #{_lambda_.9} parent=55 // pred_check
          %p410 = pneg %p156
        $region78: #{_lambda_.9} parent=55 // pred_check_branch
          %412 = sbr.rel (%p410) target = $region80
        $region79: #{_lambda_.9} parent=55 // pred_region
          %413 = dma.done [#allocation12], 384
        $region80: #{_lambda_.9} parent=55 // pred_fallthru
          _
        // Predicated region
        $region81: #{_lambda_.9} parent=55 // pred_check
          %p414 = pneg %p177
        $region82: #{_lambda_.9} parent=55 // pred_check_branch
          %416 = sbr.rel (%p414) target = $region84
        $region83: #{_lambda_.9} parent=55 // pred_region
          %417 = dma.done [#allocation12], 16
        $region84: #{_lambda_.9} parent=55 // pred_fallthru
          _
        // Predicated region
        $region85: #{_lambda_.9} parent=55 // pred_check
          %p418 = pneg %p198
        $region86: #{_lambda_.9} parent=55 // pred_check_branch
          %420 = sbr.rel (%p418) target = $region88
        $region87: #{_lambda_.9} parent=55 // pred_region
          %421 = dma.done [#allocation15], 384
        $region88: #{_lambda_.9} parent=55 // pred_fallthru
          _
        // Predicated region
        $region89: #{_lambda_.9} parent=55 // pred_check
          %p422 = pneg %p219
        $region90: #{_lambda_.9} parent=55 // pred_check_branch
          %424 = sbr.rel (%p422) target = $region92
        $region91: #{_lambda_.9} parent=55 // pred_region
          %425 = dma.done [#allocation15], 16
        $region92: #{_lambda_.9} parent=55 // pred_fallthru
          _
        %s426 = sand.u32 %s38, 1
        %s427 = scalar_lea.sflag [#allocation3], %s426
        %s428 = sand.u32 %s38, 1
        %s429 = smul.addr %s428, 4
        %s430 = scalar_lea.vmem [#allocation2], %s429
        %p431 = pneg %p51
        %p432 = pneg %p48
        %p433 = pneg %p72
        %p434 = pneg %p69
        %p435 = pneg %p93
        %p436 = pneg %p90
        %p437 = pneg %p114
        %p438 = pneg %p111
        %p439 = pneg %p135
        %p440 = pneg %p132
        %p441 = pneg %p156
        %p442 = pneg %p153
        %p443 = pneg %p177
        %p444 = pneg %p174
        %p445 = pneg %p198
        %p446 = pneg %p195
        %p447 = pneg %p219
        %p448 = pneg %p216
        %p449 = pneg %p245
        %p450 = pneg %p242
        %s451 = sand.u32 %s232, 1
        %s452 = scalar_lea.sflag [#allocation4], %s451
        %s453 = sand.u32 %s232, 1
        %s454 = smul.addr %s453, 4
        %s455 = scalar_lea.vmem [#allocation17], %s454
        %v457 = vld [vmem:[%s389] sm:$0xf]
        %v458 = vld [vmem:[#allocation5] sm:$0xf]
        %v459 = vld [vmem:[#allocation5 + $0x4] sm:$0xf]
        %v460 = vld [vmem:[#allocation5 + $0x8] sm:$0xf]
        %v461 = vld [vmem:[#allocation5 + $0xc] sm:$0xf]
        %v462 = vld [vmem:[#allocation7] sm:$0x1]
        %v464 = vunpack.c.l.b16 %v457
        %v465 = vpack.c.b16 %v464, %v464
        %v467 = vshrl.u32 %v465, 16
        %v469 = vrot.slane %v467, 7
        %v470 = vshll.u32 %v465, 16
        %v472 = vor.u32 %v469, %v470
        %473 = vrot.lane.b32.xlu0 %v472, 120
        %v474 = vpop.permute.xlu0 %473
        %vm476 = vcmask 1040384
        %vm477 = vsmask.f32 256
        %vm478 = vmand %vm476, %vm477
        %v479 = vsel %vm478, 0, %v474
        %v480 = vrot.slane %v470, 1
        %v481 = vor.u32 %v467, %v480
        %vm483 = vcmask 1043456
        %vm484 = vsmask.f32 3328
        %vm485 = vmand %vm483, %vm484
        %v486 = vsel %vm485, %v481, 0
        %487 = vrot.lane.b32.xlu0 %v465, 8
        %v488 = vpop.permute.xlu0 %487
        %490 = vrot.lane.b32.xlu0 %v486, 24
        %v491 = vpop.permute.xlu0 %490
        %vm492 = vcmask 64512
        %v495 = vsel %vm492, %v479, %v488
        %vm496 = vcmask 130048
        %v497 = vsel %vm496, %v495, %v488
        %vm498 = vcmask 195584
        %v500 = vsel %vm498, %v497, %v491
        %v502 = vlaneseq
        %v503 = vshrl.u32 %v502, 7
        %v504 = vsub.s32 0, %v503
        %v505 = vrot.slane %v462, %v504
        %v511 = vunpack.c.l.b16 %v458
        %v512 = vunpack.c.l.b16 %v459
        %v513 = vunpack.c.l.b16 %v460
        %v514 = vunpack.c.l.b16 %v461
        %v515 = vpack.c.b16 %v512, %v511
        %v516 = vpack.c.b16 %v514, %v513
        %vm519 = vcmask 261120
        %v520 = vsel %vm519, %v500, 0
        %522 = vmatprep.subr.bf16.mxu0 0
        %523 = vmatpush1.bf16.msra.mxu0 %v515
        %524 = vmatprep.subr.bf16.mxu0 0
        %525 = vmatpush1.bf16.msra.mxu0 %v516
        %526 = vmatprep.subr.bf16.mxu0 0
        %527 = vmatpush1.bf16.msra.mxu0 0
        %528 = vmatprep.subr.bf16.mxu0 0
        %529 = vmatpush1.bf16.msra.mxu0 0
        %530 = vmatprep.subr.bf16.mxu0 0
        %531 = vmatpush1.bf16.msra.mxu0 0
        %532 = vmatprep.subr.bf16.mxu0 0
        %533 = vmatpush1.bf16.msra.mxu0 0
        %534 = vmatprep.subr.bf16.mxu0 0
        %535 = vmatpush1.bf16.msra.mxu0 0
        %536 = vmatprep.subr.bf16.mxu0 0
        %537 = vmatpush1.bf16.msra.mxu0 0
        %538 = vmatprep.subr.bf16.mxu0 0
        %539 = vmatpush1.bf16.msra.mxu0 0
        %540 = vmatprep.subr.bf16.mxu0 0
        %541 = vmatpush1.bf16.msra.mxu0 0
        %542 = vmatprep.subr.bf16.mxu0 0
        %543 = vmatpush1.bf16.msra.mxu0 0
        %544 = vmatprep.subr.bf16.mxu0 0
        %545 = vmatpush1.bf16.msra.mxu0 0
        %546 = vmatprep.subr.bf16.mxu0 0
        %547 = vmatpush1.bf16.msra.mxu0 0
        %548 = vmatprep.subr.bf16.mxu0 0
        %549 = vmatpush1.bf16.msra.mxu0 0
        %550 = vmatprep.subr.bf16.mxu0 0
        %551 = vmatpush1.bf16.msra.mxu0 0
        %552 = vmatprep.subr.bf16.mxu0 0
        %553 = vmatpush1.bf16.msra.mxu0 0
        %554 = vmatprep.mubr.bf16.mxu0 0
        %555 = vmatmul.mubr.bf16.gmra.mrb[0].mxu0 %v520
        %v556 = vpop.f32.mrb[0].mxu0
        %v557 = vadd.f32 %v505, %v556
        %v558 = vpop.f32.mrb[0].mxu0
        %v559 = vpop.f32.mrb[0].mxu0
        %v560 = vpop.f32.mrb[0].mxu0
        %561 = vdwg.mxu0
        %vm562 = vcmp.gt.f32.partialorder %v557, 0.0
        %v563 = vmul.f32 %v557, 0.2
        %v564 = vsel %vm562, %v557, %v563
        %v565 = vld [vmem:[#allocation8] sm:$0xf]
        %v566 = vld [vmem:[#allocation8 + $0x4] sm:$0xf]
        %v567 = vld [vmem:[#allocation8 + $0x8] sm:$0xf]
        %v568 = vld [vmem:[#allocation8 + $0xc] sm:$0xf]
        %v569 = vld [vmem:[#allocation8 + $0x10] sm:$0xf]
        %v570 = vld [vmem:[#allocation8 + $0x14] sm:$0xf]
        %v571 = vld [vmem:[#allocation10] sm:$0x1]
        %v572 = vpack.c.bf16 %v564, %v564
        %v574 = vshrl.u32 %v572, 16
        %v576 = vrot.slane %v574, 7
        %v577 = vshll.u32 %v572, 16
        %v579 = vor.u32 %v576, %v577
        %v581 = vsel %vm478, 0, %v579
        %v582 = vrot.slane %v577, 1
        %v583 = vor.u32 %v574, %v582
        %v585 = vsel %vm485, %v583, 0
        %587 = vrot.lane.b32.xlu0 %v572, 16
        %v588 = vpop.permute.xlu0 %587
        %590 = vrot.lane.b32.xlu0 %v585, 32
        %v591 = vpop.permute.xlu0 %590
        %v594 = vsel %vm496, %v581, %v588
        %v596 = vsel %vm519, %v594, %v591
        %v598 = vlaneseq
        %v599 = vshrl.u32 %v598, 7
        %v600 = vsub.s32 0, %v599
        %v601 = vrot.slane %v571, %v600
        %v609 = vunpack.c.l.b16 %v565
        %v610 = vunpack.c.l.b16 %v566
        %v611 = vunpack.c.l.b16 %v567
        %v612 = vunpack.c.l.b16 %v568
        %v613 = vunpack.c.l.b16 %v569
        %v614 = vunpack.c.l.b16 %v570
        %v615 = vpack.c.b16 %v610, %v609
        %v616 = vpack.c.b16 %v612, %v611
        %v617 = vpack.c.b16 %v614, %v613
        %vm621 = vcmask 392192
        %v622 = vsel %vm621, %v596, 0
        %624 = vmatprep.subr.bf16.mxu0 0
        %625 = vmatpush1.bf16.msra.mxu0 %v615
        %626 = vmatprep.subr.bf16.mxu0 0
        %627 = vmatpush1.bf16.msra.mxu0 %v616
        %628 = vmatprep.subr.bf16.mxu0 0
        %629 = vmatpush1.bf16.msra.mxu0 %v617
        %630 = vmatprep.subr.bf16.mxu0 0
        %631 = vmatpush1.bf16.msra.mxu0 0
        %632 = vmatprep.subr.bf16.mxu0 0
        %633 = vmatpush1.bf16.msra.mxu0 0
        %634 = vmatprep.subr.bf16.mxu0 0
        %635 = vmatpush1.bf16.msra.mxu0 0
        %636 = vmatprep.subr.bf16.mxu0 0
        %637 = vmatpush1.bf16.msra.mxu0 0
        %638 = vmatprep.subr.bf16.mxu0 0
        %639 = vmatpush1.bf16.msra.mxu0 0
        %640 = vmatprep.subr.bf16.mxu0 0
        %641 = vmatpush1.bf16.msra.mxu0 0
        %642 = vmatprep.subr.bf16.mxu0 0
        %643 = vmatpush1.bf16.msra.mxu0 0
        %644 = vmatprep.subr.bf16.mxu0 0
        %645 = vmatpush1.bf16.msra.mxu0 0
        %646 = vmatprep.subr.bf16.mxu0 0
        %647 = vmatpush1.bf16.msra.mxu0 0
        %648 = vmatprep.subr.bf16.mxu0 0
        %649 = vmatpush1.bf16.msra.mxu0 0
        %650 = vmatprep.subr.bf16.mxu0 0
        %651 = vmatpush1.bf16.msra.mxu0 0
        %652 = vmatprep.subr.bf16.mxu0 0
        %653 = vmatpush1.bf16.msra.mxu0 0
        %654 = vmatprep.subr.bf16.mxu0 0
        %655 = vmatpush1.bf16.msra.mxu0 0
        %656 = vmatprep.mubr.bf16.mxu0 0
        %657 = vmatmul.mubr.bf16.gmra.mrb[0].mxu0 %v622
        %v658 = vpop.f32.mrb[0].mxu0
        %v659 = vadd.f32 %v601, %v658
        %v660 = vpop.f32.mrb[0].mxu0
        %v661 = vpop.f32.mrb[0].mxu0
        %v662 = vpop.f32.mrb[0].mxu0
        %663 = vdwg.mxu0
        %v664 = vadd.f32 %v659, %v564
        %vm665 = vcmp.gt.f32.partialorder %v664, 0.0
        %v666 = vmul.f32 %v664, 0.2
        %v667 = vsel %vm665, %v664, %v666
        %v668 = vld [vmem:[#allocation11] sm:$0xf]
        %v669 = vld [vmem:[#allocation11 + $0x4] sm:$0xf]
        %v670 = vld [vmem:[#allocation11 + $0x8] sm:$0xf]
        %v671 = vld [vmem:[#allocation11 + $0xc] sm:$0xf]
        %v672 = vld [vmem:[#allocation11 + $0x10] sm:$0xf]
        %v673 = vld [vmem:[#allocation11 + $0x14] sm:$0xf]
        %v674 = vld [vmem:[#allocation13] sm:$0x1]
        %v675 = vpack.c.bf16 %v667, %v667
        %v677 = vshrl.u32 %v675, 16
        %v679 = vrot.slane %v677, 7
        %v680 = vshll.u32 %v675, 16
        %v682 = vor.u32 %v679, %v680
        %v684 = vsel %vm478, 0, %v682
        %v685 = vrot.slane %v680, 1
        %v686 = vor.u32 %v677, %v685
        %v688 = vsel %vm485, %v686, 0
        %690 = vrot.lane.b32.xlu0 %v675, 16
        %v691 = vpop.permute.xlu0 %690
        %693 = vrot.lane.b32.xlu0 %v688, 32
        %v694 = vpop.permute.xlu0 %693
        %v697 = vsel %vm496, %v684, %v691
        %v699 = vsel %vm519, %v697, %v694
        %v701 = vlaneseq
        %v702 = vshrl.u32 %v701, 7
        %v703 = vsub.s32 0, %v702
        %v704 = vrot.slane %v674, %v703
        %v712 = vunpack.c.l.b16 %v668
        %v713 = vunpack.c.l.b16 %v669
        %v714 = vunpack.c.l.b16 %v670
        %v715 = vunpack.c.l.b16 %v671
        %v716 = vunpack.c.l.b16 %v672
        %v717 = vunpack.c.l.b16 %v673
        %v718 = vpack.c.b16 %v713, %v712
        %v719 = vpack.c.b16 %v715, %v714
        %v720 = vpack.c.b16 %v717, %v716
        %v724 = vsel %vm621, %v699, 0
        %726 = vmatprep.subr.bf16.mxu0 0
        %727 = vmatpush1.bf16.msra.mxu0 %v718
        %728 = vmatprep.subr.bf16.mxu0 0
        %729 = vmatpush1.bf16.msra.mxu0 %v719
        %730 = vmatprep.subr.bf16.mxu0 0
        %731 = vmatpush1.bf16.msra.mxu0 %v720
        %732 = vmatprep.subr.bf16.mxu0 0
        %733 = vmatpush1.bf16.msra.mxu0 0
        %734 = vmatprep.subr.bf16.mxu0 0
        %735 = vmatpush1.bf16.msra.mxu0 0
        %736 = vmatprep.subr.bf16.mxu0 0
        %737 = vmatpush1.bf16.msra.mxu0 0
        %738 = vmatprep.subr.bf16.mxu0 0
        %739 = vmatpush1.bf16.msra.mxu0 0
        %740 = vmatprep.subr.bf16.mxu0 0
        %741 = vmatpush1.bf16.msra.mxu0 0
        %742 = vmatprep.subr.bf16.mxu0 0
        %743 = vmatpush1.bf16.msra.mxu0 0
        %744 = vmatprep.subr.bf16.mxu0 0
        %745 = vmatpush1.bf16.msra.mxu0 0
        %746 = vmatprep.subr.bf16.mxu0 0
        %747 = vmatpush1.bf16.msra.mxu0 0
        %748 = vmatprep.subr.bf16.mxu0 0
        %749 = vmatpush1.bf16.msra.mxu0 0
        %750 = vmatprep.subr.bf16.mxu0 0
        %751 = vmatpush1.bf16.msra.mxu0 0
        %752 = vmatprep.subr.bf16.mxu0 0
        %753 = vmatpush1.bf16.msra.mxu0 0
        %754 = vmatprep.subr.bf16.mxu0 0
        %755 = vmatpush1.bf16.msra.mxu0 0
        %756 = vmatprep.subr.bf16.mxu0 0
        %757 = vmatpush1.bf16.msra.mxu0 0
        %758 = vmatprep.mubr.bf16.mxu0 0
        %759 = vmatmul.mubr.bf16.gmra.mrb[0].mxu0 %v724
        %v760 = vpop.f32.mrb[0].mxu0
        %v761 = vadd.f32 %v704, %v760
        %v762 = vpop.f32.mrb[0].mxu0
        %v763 = vpop.f32.mrb[0].mxu0
        %v764 = vpop.f32.mrb[0].mxu0
        %765 = vdwg.mxu0
        %v766 = vadd.f32 %v761, %v667
        %vm767 = vcmp.gt.f32.partialorder %v766, 0.0
        %v768 = vmul.f32 %v766, 0.2
        %v769 = vsel %vm767, %v766, %v768
        %v770 = vld [vmem:[#allocation14] sm:$0xf]
        %v771 = vld [vmem:[#allocation14 + $0x4] sm:$0xf]
        %v772 = vld [vmem:[#allocation14 + $0x8] sm:$0xf]
        %v773 = vld [vmem:[#allocation14 + $0xc] sm:$0xf]
        %v774 = vld [vmem:[#allocation14 + $0x10] sm:$0xf]
        %v775 = vld [vmem:[#allocation14 + $0x14] sm:$0xf]
        %v776 = vld [vmem:[#allocation16] sm:$0x1]
        %v777 = vpack.c.bf16 %v769, %v769
        %v779 = vshrl.u32 %v777, 16
        %v781 = vrot.slane %v779, 7
        %v782 = vshll.u32 %v777, 16
        %v784 = vor.u32 %v781, %v782
        %v786 = vsel %vm478, 0, %v784
        %v787 = vrot.slane %v782, 1
        %v788 = vor.u32 %v779, %v787
        %v790 = vsel %vm485, %v788, 0
        %792 = vrot.lane.b32.xlu0 %v777, 16
        %v793 = vpop.permute.xlu0 %792
        %795 = vrot.lane.b32.xlu0 %v790, 32
        %v796 = vpop.permute.xlu0 %795
        %v799 = vsel %vm496, %v786, %v793
        %v801 = vsel %vm519, %v799, %v796
        %v803 = vlaneseq
        %v804 = vshrl.u32 %v803, 7
        %v805 = vsub.s32 0, %v804
        %v806 = vrot.slane %v776, %v805
        %v814 = vunpack.c.l.b16 %v770
        %v815 = vunpack.c.l.b16 %v771
        %v816 = vunpack.c.l.b16 %v772
        %v817 = vunpack.c.l.b16 %v773
        %v818 = vunpack.c.l.b16 %v774
        %v819 = vunpack.c.l.b16 %v775
        %v820 = vpack.c.b16 %v815, %v814
        %v821 = vpack.c.b16 %v817, %v816
        %v822 = vpack.c.b16 %v819, %v818
        %v826 = vsel %vm621, %v801, 0
        %828 = vmatprep.subr.bf16.mxu0 0
        %829 = vmatpush1.bf16.msra.mxu0 %v820
        %830 = vmatprep.subr.bf16.mxu0 0
        %831 = vmatpush1.bf16.msra.mxu0 %v821
        %832 = vmatprep.subr.bf16.mxu0 0
        %833 = vmatpush1.bf16.msra.mxu0 %v822
        %834 = vmatprep.subr.bf16.mxu0 0
        %835 = vmatpush1.bf16.msra.mxu0 0
        %836 = vmatprep.subr.bf16.mxu0 0
        %837 = vmatpush1.bf16.msra.mxu0 0
        %838 = vmatprep.subr.bf16.mxu0 0
        %839 = vmatpush1.bf16.msra.mxu0 0
        %840 = vmatprep.subr.bf16.mxu0 0
        %841 = vmatpush1.bf16.msra.mxu0 0
        %842 = vmatprep.subr.bf16.mxu0 0
        %843 = vmatpush1.bf16.msra.mxu0 0
        %844 = vmatprep.subr.bf16.mxu0 0
        %845 = vmatpush1.bf16.msra.mxu0 0
        %846 = vmatprep.subr.bf16.mxu0 0
        %847 = vmatpush1.bf16.msra.mxu0 0
        %848 = vmatprep.subr.bf16.mxu0 0
        %849 = vmatpush1.bf16.msra.mxu0 0
        %850 = vmatprep.subr.bf16.mxu0 0
        %851 = vmatpush1.bf16.msra.mxu0 0
        %852 = vmatprep.subr.bf16.mxu0 0
        %853 = vmatpush1.bf16.msra.mxu0 0
        %854 = vmatprep.subr.bf16.mxu0 0
        %855 = vmatpush1.bf16.msra.mxu0 0
        %856 = vmatprep.subr.bf16.mxu0 0
        %857 = vmatpush1.bf16.msra.mxu0 0
        %858 = vmatprep.subr.bf16.mxu0 0
        %859 = vmatpush1.bf16.msra.mxu0 0
        %860 = vmatprep.mubr.bf16.mxu0 0
        %861 = vmatmul.mubr.bf16.gmra.mrb[0].mxu0 %v826
        %v862 = vpop.f32.mrb[0].mxu0
        %v863 = vadd.f32 %v806, %v862
        %v864 = vpop.f32.mrb[0].mxu0
        %v865 = vpop.f32.mrb[0].mxu0
        %v866 = vpop.f32.mrb[0].mxu0
        %867 = vdwg.mxu0
        %v868 = vadd.f32 %v863, %v564
        %v869 = vmax.f32 %v868, 0.0
        %v870 = vpack.c.bf16 %v869, %v869
        %vm871 = vcmask 125952
        %872 = vst.msk [vmem:[%s455] sm:$0xf] %vm871, %v870
        %s873 = sand.u32 %s232, 1
        %s874 = scalar_lea.sflag [#allocation4], %s873
        %s875 = sand.u32 %s232, 1
        %s876 = smul.addr %s875, 4
        %s877 = scalar_lea.vmem [#allocation17], %s876
        // Predicated region
        $region93: #{_lambda_.9} parent=55 // pred_check
          %p878 = pneg %p242
        $region94: #{_lambda_.9} parent=55 // pred_check_branch
          %880 = sbr.rel (%p878) target = $region96
        $region95: #{_lambda_.9} parent=55 // pred_region
          %s882 = ssub.s32 64, 64
          %883 = vsyncadd %s874, %s882
          %s884 = smul.addr %s30, 64
          %s885 = scalar_lea.hbm %s9, %s884
          %s887 = sshll.u32 %s877, 4
          %s888 = int_to_ptr.vmem [resolvable:$true] %s887
          %890 = dma.vmem_to_hbm [thread:$0]  %s888, 64, %s885, %s874
        $region96: #{_lambda_.9} parent=55 // pred_fallthru
          _
      $region56: #{_lambda_.9} parent=5 // pred_fallthru
        _
      %p891 = scmp.le.s32.totalorder 2, %s25
      // Predicated region
      $region97: #{_lambda_.9} parent=5 // pred_check
        %p892 = pneg %p891
      $region98: #{_lambda_.9} parent=5 // pred_check_branch
        %894 = sbr.rel (%p892) target = $region100
      $region99: #{_lambda_.9} parent=5 // pred_region
        %s895 = ssub.s32 %s25, 2
        // Predicated region
        $region101: #{_lambda_.9} parent=99 // pred_check
          %p896 = pneg %p248
        $region102: #{_lambda_.9} parent=99 // pred_check_branch
          %898 = sbr.rel (%p896) target = $region104
        $region103: #{_lambda_.9} parent=99 // pred_region
          %s899 = sand.u32 %s233, 1
          %s900 = scalar_lea.sflag [#allocation4], %s899
          %s901 = sand.u32 %s233, 1
          %s902 = smul.addr %s901, 4
          %s903 = scalar_lea.vmem [#allocation17], %s902
          %904 = dma.done %s900, 64
        $region104: #{_lambda_.9} parent=99 // pred_fallthru
          _
      $region100: #{_lambda_.9} parent=5 // pred_fallthru
        _
    $region6: #{_lambda_.9} parent=1 // loop_footer
      %s29 = sadd.s32 1, %s25
    $region7: #{_lambda_.9} parent=1 // loop_footer_branch
      %24 = sbr.rel target = $region3
    $region8: #{_lambda_.9} parent=1 // loop_exit
      _
    %905 = vsyncpa [#allocation3], 1
    %s906 = scalar_lea.sflag [#allocation3], 1
    %907 = vsyncpa %s906, 1
    %908 = vsyncpa [#allocation6], 1
    %909 = vsyncpa [#allocation9], 1
    %910 = vsyncpa [#allocation12], 1
    %911 = vsyncpa [#allocation15], 1
    %912 = vsyncpa [#allocation4], 1
    %s913 = scalar_lea.sflag [#allocation4], 1
    %914 = vsyncpa %s913, 1

// kernel: _lambda_.11
$region0: #{_lambda_.11}
  #allocation0 [shape = 'u32[]', space=smem, size = 0x4, offset = 0x4, fixed_abs, tag = 'smem constant byte address 0x4 - core index']
  #allocation1 [shape = 'u32[144,128]{1,0:T(1,128)}', space=vmem, size = 0x12000, scoped, tag = 'internal scratch']
  %s0 = inlined_call_operand.hbm [shape: f32[2,4,16], index: 0, kind: input, shape index: {}]
  %s1 = inlined_call_operand.hbm [shape: bf16[16,32], index: 1, kind: input, shape index: {}]
  %s2 = inlined_call_operand.hbm [shape: f32[1,32], index: 2, kind: input, shape index: {}]
  %s3 = inlined_call_operand.hbm [shape: bf16[96,32], index: 3, kind: input, shape index: {}]
  %s4 = inlined_call_operand.hbm [shape: f32[1,32], index: 4, kind: input, shape index: {}]
  %s5 = inlined_call_operand.hbm [shape: bf16[96,32], index: 5, kind: input, shape index: {}]
  %s6 = inlined_call_operand.hbm [shape: f32[1,32], index: 6, kind: input, shape index: {}]
  %s7 = inlined_call_operand.hbm [shape: bf16[96,32], index: 7, kind: input, shape index: {}]
  %s8 = inlined_call_operand.hbm [shape: f32[1,32], index: 8, kind: input, shape index: {}]
  %s9 = inlined_call_operand.hbm [shape: bf16[2,4,32], index: 9, kind: output, shape index: {}]
  %s10 = sld [smem:[#allocation0]]
  $region105: #{_lambda_.11} parent=0
    _
  %s12 = ssub.s32 1, %s10
  %s13 = scalar_select 0, %s12, %s10
  $region1: #{_lambda_.11} parent=0
    #allocation2 [shape = 'u8[4096]{0}', space=vmem, size = 0x1000, scoped, tag = 'input window, operand 0']
    #allocation3 [shape = 's32[2]{0}', space=sflag, size = 0x8, scoped, tag = 'scoped memory for _lambda_.11']
    #allocation4 [shape = 's32[2]{0}', space=sflag, size = 0x8, scoped, tag = 'scoped memory for _lambda_.11']
    #allocation5 [shape = 'u8[4096]{0}', space=vmem, size = 0x1000, scoped, tag = 'input window, operand 1, single buffered']
    #allocation6 [shape = 's32[1]{0}', space=sflag, size = 0x4, scoped, tag = 'scoped memory for _lambda_.11']
    #allocation7 [shape = 'u8[512]{0}', space=vmem, size = 0x400, scoped, tag = 'input window, operand 2, single buffered']
    #allocation8 [shape = 'u8[24576]{0}', space=vmem, size = 0x6000, scoped, tag = 'input window, operand 3, single buffered']
    #allocation9 [shape = 's32[1]{0}', space=sflag, size = 0x4, scoped, tag = 'scoped memory for _lambda_.11']
    #allocation10 [shape = 'u8[512]{0}', space=vmem, size = 0x400, scoped, tag = 'input window, operand 4, single buffered']
    #allocation11 [shape = 'u8[24576]{0}', space=vmem, size = 0x6000, scoped, tag = 'input window, operand 5, single buffered']
    #allocation12 [shape = 's32[1]{0}', space=sflag, size = 0x4, scoped, tag = 'scoped memory for _lambda_.11']
    #allocation13 [shape = 'u8[512]{0}', space=vmem, size = 0x400, scoped, tag = 'input window, operand 6, single buffered']
    #allocation14 [shape = 'u8[24576]{0}', space=vmem, size = 0x6000, scoped, tag = 'input window, operand 7, single buffered']
    #allocation15 [shape = 's32[1]{0}', space=sflag, size = 0x4, scoped, tag = 'scoped memory for _lambda_.11']
    #allocation16 [shape = 'u8[512]{0}', space=vmem, size = 0x400, scoped, tag = 'input window, operand 8, single buffered']
    #allocation17 [shape = 'u8[2048]{0}', space=vmem, size = 0x800, scoped, tag = 'output window, operand 0']
    %14 = vsyncpa [#allocation3], 0
    %s15 = scalar_lea.sflag [#allocation3], 1
    %16 = vsyncpa %s15, 0
    %17 = vsyncpa [#allocation6], 0
    %18 = vsyncpa [#allocation9], 0
    %19 = vsyncpa [#allocation12], 0
    %20 = vsyncpa [#allocation15], 0
    %21 = vsyncpa [#allocation4], 0
    %s22 = scalar_lea.sflag [#allocation4], 1
    %23 = vsyncpa %s22, 0
    loop: start=0, step=1, limit=4
    $region2: #{_lambda_.11} parent=1 // loop_pre_header
      _
    $region3: #{_lambda_.11} parent=1 // loop_header
      %s25 = sphi 0, %s29
      %p26 = scmp.ge.s32.totalorder %s25, 4
      %s35 = sphi 0, %s37
      %s38 = sphi 0, %s35
      %s39 = sphi 0, %s38
      %s55 = sphi 0, %s39
      %s59 = sphi 0, %s59
      %s61 = sphi 0, %s59
      %s62 = sphi 0, %s61
      %s76 = sphi 0, %s62
      %s80 = sphi 0, %s80
      %s82 = sphi 0, %s80
      %s83 = sphi 0, %s82
      %s97 = sphi 0, %s83
      %s101 = sphi 0, %s101
      %s103 = sphi 0, %s101
      %s104 = sphi 0, %s103
      %s118 = sphi 0, %s104
      %s122 = sphi 0, %s122
      %s124 = sphi 0, %s122
      %s125 = sphi 0, %s124
      %s139 = sphi 0, %s125
      %s143 = sphi 0, %s143
      %s145 = sphi 0, %s143
      %s146 = sphi 0, %s145
      %s160 = sphi 0, %s146
      %s164 = sphi 0, %s164
      %s166 = sphi 0, %s164
      %s167 = sphi 0, %s166
      %s181 = sphi 0, %s167
      %s185 = sphi 0, %s185
      %s187 = sphi 0, %s185
      %s188 = sphi 0, %s187
      %s202 = sphi 0, %s188
      %s206 = sphi 0, %s206
      %s208 = sphi 0, %s206
      %s209 = sphi 0, %s208
      %s223 = sphi 0, %s209
      %s229 = sphi 0, %s231
      %s232 = sphi 0, %s229
      %s233 = sphi 0, %s232
      %s249 = sphi 0, %s233
    $region4: #{_lambda_.11} parent=1 // loop_header_branch
      %28 = sbr.rel (%p26) target = $region8
    $region5: #{_lambda_.11} parent=1 // loop_body
      %s30 = ssub.s32 %s25, 1
      %s31 = ssub.s32 %s25, 2
      %s32 = sadd.s32 %s25, 1
      %s33 = ssub.s32 %s25, %s32
      %p34 = scmp.eq.s32.totalorder %s33, 0
      %s36 = sadd.s32 %s35, 1
      %s37 = scalar_select %p34, %s35, %s36
      %p40 = pneg %p34
      %p41 = scmp.eq.s32.totalorder %s25, 1
      %p42 = por %p40, %p41
      %p43 = scmp.ne.s32.totalorder %s35, %s38
      %p44 = scmp.eq.s32.totalorder %s25, 0
      %p45 = por %p43, %p44
      %p46 = scmp.ne.s32.totalorder %s35, %s38
      %p47 = scmp.eq.s32.totalorder %s30, 1
      %p48 = por %p46, %p47
      %p49 = scmp.ne.s32.totalorder %s38, %s39
      %p50 = scmp.eq.s32.totalorder %s30, 0
      %p51 = por %p49, %p50
      %p52 = scmp.ne.s32.totalorder %s38, %s39
      %p53 = scmp.eq.s32.totalorder %s31, 1
      %p54 = por %p52, %p53
      %p56 = scmp.ne.s32.totalorder %s39, %s55
      %p57 = scmp.eq.s32.totalorder %s31, 0
      %p58 = por %p56, %p57
      %s60 = sadd.s32 %s59, 1
      %p63 = scmp.eq.s32.totalorder %s25, 1
      %p64 = scmp.ne.s32.totalorder %s59, %s61
      %p65 = scmp.eq.s32.totalorder %s25, 0
      %p66 = por %p64, %p65
      %p67 = scmp.ne.s32.totalorder %s59, %s61
      %p68 = scmp.eq.s32.totalorder %s30, 1
      %p69 = por %p67, %p68
      %p70 = scmp.ne.s32.totalorder %s61, %s62
      %p71 = scmp.eq.s32.totalorder %s30, 0
      %p72 = por %p70, %p71
      %p73 = scmp.ne.s32.totalorder %s61, %s62
      %p74 = scmp.eq.s32.totalorder %s31, 1
      %p75 = por %p73, %p74
      %p77 = scmp.ne.s32.totalorder %s62, %s76
      %p78 = scmp.eq.s32.totalorder %s31, 0
      %p79 = por %p77, %p78
      %s81 = sadd.s32 %s80, 1
      %p84 = scmp.eq.s32.totalorder %s25, 1
      %p85 = scmp.ne.s32.totalorder %s80, %s82
      %p86 = scmp.eq.s32.totalorder %s25, 0
      %p87 = por %p85, %p86
      %p88 = scmp.ne.s32.totalorder %s80, %s82
      %p89 = scmp.eq.s32.totalorder %s30, 1
      %p90 = por %p88, %p89
      %p91 = scmp.ne.s32.totalorder %s82, %s83
      %p92 = scmp.eq.s32.totalorder %s30, 0
      %p93 = por %p91, %p92
      %p94 = scmp.ne.s32.totalorder %s82, %s83
      %p95 = scmp.eq.s32.totalorder %s31, 1
      %p96 = por %p94, %p95
      %p98 = scmp.ne.s32.totalorder %s83, %s97
      %p99 = scmp.eq.s32.totalorder %s31, 0
      %p100 = por %p98, %p99
      %s102 = sadd.s32 %s101, 1
      %p105 = scmp.eq.s32.totalorder %s25, 1
      %p106 = scmp.ne.s32.totalorder %s101, %s103
      %p107 = scmp.eq.s32.totalorder %s25, 0
      %p108 = por %p106, %p107
      %p109 = scmp.ne.s32.totalorder %s101, %s103
      %p110 = scmp.eq.s32.totalorder %s30, 1
      %p111 = por %p109, %p110
      %p112 = scmp.ne.s32.totalorder %s103, %s104
      %p113 = scmp.eq.s32.totalorder %s30, 0
      %p114 = por %p112, %p113
      %p115 = scmp.ne.s32.totalorder %s103, %s104
      %p116 = scmp.eq.s32.totalorder %s31, 1
      %p117 = por %p115, %p116
      %p119 = scmp.ne.s32.totalorder %s104, %s118
      %p120 = scmp.eq.s32.totalorder %s31, 0
      %p121 = por %p119, %p120
      %s123 = sadd.s32 %s122, 1
      %p126 = scmp.eq.s32.totalorder %s25, 1
      %p127 = scmp.ne.s32.totalorder %s122, %s124
      %p128 = scmp.eq.s32.totalorder %s25, 0
      %p129 = por %p127, %p128
      %p130 = scmp.ne.s32.totalorder %s122, %s124
      %p131 = scmp.eq.s32.totalorder %s30, 1
      %p132 = por %p130, %p131
      %p133 = scmp.ne.s32.totalorder %s124, %s125
      %p134 = scmp.eq.s32.totalorder %s30, 0
      %p135 = por %p133, %p134
      %p136 = scmp.ne.s32.totalorder %s124, %s125
      %p137 = scmp.eq.s32.totalorder %s31, 1
      %p138 = por %p136, %p137
      %p140 = scmp.ne.s32.totalorder %s125, %s139
      %p141 = scmp.eq.s32.totalorder %s31, 0
      %p142 = por %p140, %p141
      %s144 = sadd.s32 %s143, 1
      %p147 = scmp.eq.s32.totalorder %s25, 1
      %p148 = scmp.ne.s32.totalorder %s143, %s145
      %p149 = scmp.eq.s32.totalorder %s25, 0
      %p150 = por %p148, %p149
      %p151 = scmp.ne.s32.totalorder %s143, %s145
      %p152 = scmp.eq.s32.totalorder %s30, 1
      %p153 = por %p151, %p152
      %p154 = scmp.ne.s32.totalorder %s145, %s146
      %p155 = scmp.eq.s32.totalorder %s30, 0
      %p156 = por %p154, %p155
      %p157 = scmp.ne.s32.totalorder %s145, %s146
      %p158 = scmp.eq.s32.totalorder %s31, 1
      %p159 = por %p157, %p158
      %p161 = scmp.ne.s32.totalorder %s146, %s160
      %p162 = scmp.eq.s32.totalorder %s31, 0
      %p163 = por %p161, %p162
      %s165 = sadd.s32 %s164, 1
      %p168 = scmp.eq.s32.totalorder %s25, 1
      %p169 = scmp.ne.s32.totalorder %s164, %s166
      %p170 = scmp.eq.s32.totalorder %s25, 0
      %p171 = por %p169, %p170
      %p172 = scmp.ne.s32.totalorder %s164, %s166
      %p173 = scmp.eq.s32.totalorder %s30, 1
      %p174 = por %p172, %p173
      %p175 = scmp.ne.s32.totalorder %s166, %s167
      %p176 = scmp.eq.s32.totalorder %s30, 0
      %p177 = por %p175, %p176
      %p178 = scmp.ne.s32.totalorder %s166, %s167
      %p179 = scmp.eq.s32.totalorder %s31, 1
      %p180 = por %p178, %p179
      %p182 = scmp.ne.s32.totalorder %s167, %s181
      %p183 = scmp.eq.s32.totalorder %s31, 0
      %p184 = por %p182, %p183
      %s186 = sadd.s32 %s185, 1
      %p189 = scmp.eq.s32.totalorder %s25, 1
      %p190 = scmp.ne.s32.totalorder %s185, %s187
      %p191 = scmp.eq.s32.totalorder %s25, 0
      %p192 = por %p190, %p191
      %p193 = scmp.ne.s32.totalorder %s185, %s187
      %p194 = scmp.eq.s32.totalorder %s30, 1
      %p195 = por %p193, %p194
      %p196 = scmp.ne.s32.totalorder %s187, %s188
      %p197 = scmp.eq.s32.totalorder %s30, 0
      %p198 = por %p196, %p197
      %p199 = scmp.ne.s32.totalorder %s187, %s188
      %p200 = scmp.eq.s32.totalorder %s31, 1
      %p201 = por %p199, %p200
      %p203 = scmp.ne.s32.totalorder %s188, %s202
      %p204 = scmp.eq.s32.totalorder %s31, 0
      %p205 = por %p203, %p204
      %s207 = sadd.s32 %s206, 1
      %p210 = scmp.eq.s32.totalorder %s25, 1
      %p211 = scmp.ne.s32.totalorder %s206, %s208
      %p212 = scmp.eq.s32.totalorder %s25, 0
      %p213 = por %p211, %p212
      %p214 = scmp.ne.s32.totalorder %s206, %s208
      %p215 = scmp.eq.s32.totalorder %s30, 1
      %p216 = por %p214, %p215
      %p217 = scmp.ne.s32.totalorder %s208, %s209
      %p218 = scmp.eq.s32.totalorder %s30, 0
      %p219 = por %p217, %p218
      %p220 = scmp.ne.s32.totalorder %s208, %s209
      %p221 = scmp.eq.s32.totalorder %s31, 1
      %p222 = por %p220, %p221
      %p224 = scmp.ne.s32.totalorder %s209, %s223
      %p225 = scmp.eq.s32.totalorder %s31, 0
      %p226 = por %p224, %p225
      %s227 = ssub.s32 %s25, %s32
      %p228 = scmp.eq.s32.totalorder %s227, 0
      %s230 = sadd.s32 %s229, 1
      %s231 = scalar_select %p228, %s229, %s230
      %p234 = pneg %p228
      %p235 = scmp.eq.s32.totalorder %s25, 1
      %p236 = por %p234, %p235
      %p237 = scmp.ne.s32.totalorder %s229, %s232
      %p238 = scmp.eq.s32.totalorder %s25, 0
      %p239 = por %p237, %p238
      %p240 = scmp.ne.s32.totalorder %s229, %s232
      %p241 = scmp.eq.s32.totalorder %s30, 1
      %p242 = por %p240, %p241
      %p243 = scmp.ne.s32.totalorder %s232, %s233
      %p244 = scmp.eq.s32.totalorder %s30, 0
      %p245 = por %p243, %p244
      %p246 = scmp.ne.s32.totalorder %s232, %s233
      %p247 = scmp.eq.s32.totalorder %s31, 1
      %p248 = por %p246, %p247
      %p250 = scmp.ne.s32.totalorder %s233, %s249
      %p251 = scmp.eq.s32.totalorder %s31, 0
      %p252 = por %p250, %p251
      %p253 = scmp.le.s32.totalorder 1, %s25
      %p254 = scmp.lt.s32.totalorder %s25, 3
      %p255 = pnand %p253, %p254
      %p256 = pneg %p255
      // Predicated region
      $region9: #{_lambda_.11} parent=5 // pred_check
        _
      $region10: #{_lambda_.11} parent=5 // pred_check_branch
        %258 = sbr.rel (%p255) target = $region12
      $region11: #{_lambda_.11} parent=5 // pred_region
        %s259 = ssub.s32 %s25, 1
        // Predicated region
        $region13: #{_lambda_.11} parent=11 // pred_check
          %p260 = pneg %p72
        $region14: #{_lambda_.11} parent=11 // pred_check_branch
          %262 = sbr.rel (%p260) target = $region16
        $region15: #{_lambda_.11} parent=11 // pred_region
          %s264 = ssub.s32 128, 128
          %265 = vsyncadd [#allocation6], %s264
          %s266 = sshll.u32 [#allocation5], 4
          %s267 = int_to_ptr.vmem [resolvable:$true] %s266
          %272 = dma.hbm_to_vmem [thread:$0]  %s1, 128, %s267, [#allocation6], 64, 64, 4
        $region16: #{_lambda_.11} parent=11 // pred_fallthru
          _
        // Predicated region
        $region17: #{_lambda_.11} parent=11 // pred_check
          %p273 = pneg %p93
        $region18: #{_lambda_.11} parent=11 // pred_check_branch
          %275 = sbr.rel (%p273) target = $region20
        $region19: #{_lambda_.11} parent=11 // pred_region
          %s277 = ssub.s32 16, 16
          %278 = vsyncadd [#allocation6], %s277
          %s280 = sshll.u32 [#allocation7], 4
          %s281 = int_to_ptr.vmem [resolvable:$true] %s280
          %283 = dma.hbm_to_vmem [thread:$0]  %s2, 16, %s281, [#allocation6]
        $region20: #{_lambda_.11} parent=11 // pred_fallthru
          _
        // Predicated region
        $region21: #{_lambda_.11} parent=11 // pred_check
          %p284 = pneg %p114
        $region22: #{_lambda_.11} parent=11 // pred_check_branch
          %286 = sbr.rel (%p284) target = $region24
        $region23: #{_lambda_.11} parent=11 // pred_region
          %s288 = ssub.s32 768, 768
          %289 = vsyncadd [#allocation9], %s288
          %s290 = sshll.u32 [#allocation8], 4
          %s291 = int_to_ptr.vmem [resolvable:$true] %s290
          %296 = dma.hbm_to_vmem [thread:$0]  %s3, 768, %s291, [#allocation9], 64, 64, 4
        $region24: #{_lambda_.11} parent=11 // pred_fallthru
          _
        // Predicated region
        $region25: #{_lambda_.11} parent=11 // pred_check
          %p297 = pneg %p135
        $region26: #{_lambda_.11} parent=11 // pred_check_branch
          %299 = sbr.rel (%p297) target = $region28
        $region27: #{_lambda_.11} parent=11 // pred_region
          %s301 = ssub.s32 16, 16
          %302 = vsyncadd [#allocation9], %s301
          %s304 = sshll.u32 [#allocation10], 4
          %s305 = int_to_ptr.vmem [resolvable:$true] %s304
          %307 = dma.hbm_to_vmem [thread:$0]  %s4, 16, %s305, [#allocation9]
        $region28: #{_lambda_.11} parent=11 // pred_fallthru
          _
        // Predicated region
        $region29: #{_lambda_.11} parent=11 // pred_check
          %p308 = pneg %p156
        $region30: #{_lambda_.11} parent=11 // pred_check_branch
          %310 = sbr.rel (%p308) target = $region32
        $region31: #{_lambda_.11} parent=11 // pred_region
          %s312 = ssub.s32 768, 768
          %313 = vsyncadd [#allocation12], %s312
          %s314 = sshll.u32 [#allocation11], 4
          %s315 = int_to_ptr.vmem [resolvable:$true] %s314
          %320 = dma.hbm_to_vmem [thread:$0]  %s5, 768, %s315, [#allocation12], 64, 64, 4
        $region32: #{_lambda_.11} parent=11 // pred_fallthru
          _
        // Predicated region
        $region33: #{_lambda_.11} parent=11 // pred_check
          %p321 = pneg %p177
        $region34: #{_lambda_.11} parent=11 // pred_check_branch
          %323 = sbr.rel (%p321) target = $region36
        $region35: #{_lambda_.11} parent=11 // pred_region
          %s325 = ssub.s32 16, 16
          %326 = vsyncadd [#allocation12], %s325
          %s328 = sshll.u32 [#allocation13], 4
          %s329 = int_to_ptr.vmem [resolvable:$true] %s328
          %331 = dma.hbm_to_vmem [thread:$0]  %s6, 16, %s329, [#allocation12]
        $region36: #{_lambda_.11} parent=11 // pred_fallthru
          _
        // Predicated region
        $region37: #{_lambda_.11} parent=11 // pred_check
          %p332 = pneg %p198
        $region38: #{_lambda_.11} parent=11 // pred_check_branch
          %334 = sbr.rel (%p332) target = $region40
        $region39: #{_lambda_.11} parent=11 // pred_region
          %s336 = ssub.s32 768, 768
          %337 = vsyncadd [#allocation15], %s336
          %s338 = sshll.u32 [#allocation14], 4
          %s339 = int_to_ptr.vmem [resolvable:$true] %s338
          %344 = dma.hbm_to_vmem [thread:$0]  %s7, 768, %s339, [#allocation15], 64, 64, 4
        $region40: #{_lambda_.11} parent=11 // pred_fallthru
          _
        // Predicated region
        $region41: #{_lambda_.11} parent=11 // pred_check
          %p345 = pneg %p219
        $region42: #{_lambda_.11} parent=11 // pred_check_branch
          %347 = sbr.rel (%p345) target = $region44
        $region43: #{_lambda_.11} parent=11 // pred_region
          %s349 = ssub.s32 16, 16
          %350 = vsyncadd [#allocation15], %s349
          %s352 = sshll.u32 [#allocation16], 4
          %s353 = int_to_ptr.vmem [resolvable:$true] %s352
          %355 = dma.hbm_to_vmem [thread:$0]  %s8, 16, %s353, [#allocation15]
        $region44: #{_lambda_.11} parent=11 // pred_fallthru
          _
      $region12: #{_lambda_.11} parent=5 // pred_fallthru
        _
      %p356 = scmp.lt.s32.totalorder %s25, 2
      // Predicated region
      $region45: #{_lambda_.11} parent=5 // pred_check
        %p357 = pneg %p356
      $region46: #{_lambda_.11} parent=5 // pred_check_branch
        %359 = sbr.rel (%p357) target = $region48
      $region47: #{_lambda_.11} parent=5 // pred_region
        // Predicated region
        $region49: #{_lambda_.11} parent=47 // pred_check
          %p360 = pneg %p45
        $region50: #{_lambda_.11} parent=47 // pred_check_branch
          %362 = sbr.rel (%p360) target = $region52
        $region51: #{_lambda_.11} parent=47 // pred_region
          %s363 = sand.u32 %s35, 1
          %s364 = scalar_lea.sflag [#allocation3], %s363
          %s365 = sand.u32 %s35, 1
          %s366 = smul.addr %s365, 4
          %s367 = scalar_lea.vmem [#allocation2], %s366
          %s369 = ssub.s32 64, 64
          %370 = vsyncadd %s364, %s369
          %s371 = smul.addr %s25, 64
          %s372 = scalar_lea.hbm %s0, %s371
          %s374 = sshll.u32 %s367, 4
          %s375 = int_to_ptr.vmem [resolvable:$true] %s374
          %377 = dma.hbm_to_vmem [thread:$0]  %s372, 64, %s375, %s364
        $region52: #{_lambda_.11} parent=47 // pred_fallthru
          _
      $region48: #{_lambda_.11} parent=5 // pred_fallthru
        _
      %p378 = scmp.le.s32.totalorder 1, %s25
      %p379 = scmp.lt.s32.totalorder %s25, 3
      %p380 = pnand %p378, %p379
      %p381 = pneg %p380
      // Predicated region
      $region53: #{_lambda_.11} parent=5 // pred_check
        _
      $region54: #{_lambda_.11} parent=5 // pred_check_branch
        %383 = sbr.rel (%p380) target = $region56
      $region55: #{_lambda_.11} parent=5 // pred_region
        %s384 = ssub.s32 %s25, 1
        %s385 = sand.u32 %s38, 1
        %s386 = scalar_lea.sflag [#allocation3], %s385
        %s387 = sand.u32 %s38, 1
        %s388 = smul.addr %s387, 4
        %s389 = scalar_lea.vmem [#allocation2], %s388
        // Predicated region
        $region57: #{_lambda_.11} parent=55 // pred_check
          %p390 = pneg %p51
        $region58: #{_lambda_.11} parent=55 // pred_check_branch
          %392 = sbr.rel (%p390) target = $region60
        $region59: #{_lambda_.11} parent=55 // pred_region
          %393 = dma.done %s386, 64
        $region60: #{_lambda_.11} parent=55 // pred_fallthru
          _
        // Predicated region
        $region61: #{_lambda_.11} parent=55 // pred_check
          %p394 = pneg %p72
        $region62: #{_lambda_.11} parent=55 // pred_check_branch
          %396 = sbr.rel (%p394) target = $region64
        $region63: #{_lambda_.11} parent=55 // pred_region
          %397 = dma.done [#allocation6], 128
        $region64: #{_lambda_.11} parent=55 // pred_fallthru
          _
        // Predicated region
        $region65: #{_lambda_.11} parent=55 // pred_check
          %p398 = pneg %p93
        $region66: #{_lambda_.11} parent=55 // pred_check_branch
          %400 = sbr.rel (%p398) target = $region68
        $region67: #{_lambda_.11} parent=55 // pred_region
          %401 = dma.done [#allocation6], 16
        $region68: #{_lambda_.11} parent=55 // pred_fallthru
          _
        // Predicated region
        $region69: #{_lambda_.11} parent=55 // pred_check
          %p402 = pneg %p114
        $region70: #{_lambda_.11} parent=55 // pred_check_branch
          %404 = sbr.rel (%p402) target = $region72
        $region71: #{_lambda_.11} parent=55 // pred_region
          %405 = dma.done [#allocation9], 768
        $region72: #{_lambda_.11} parent=55 // pred_fallthru
          _
        // Predicated region
        $region73: #{_lambda_.11} parent=55 // pred_check
          %p406 = pneg %p135
        $region74: #{_lambda_.11} parent=55 // pred_check_branch
          %408 = sbr.rel (%p406) target = $region76
        $region75: #{_lambda_.11} parent=55 // pred_region
          %409 = dma.done [#allocation9], 16
        $region76: #{_lambda_.11} parent=55 // pred_fallthru
          _
        // Predicated region
        $region77: #{_lambda_.11} parent=55 // pred_check
          %p410 = pneg %p156
        $region78: #{_lambda_.11} parent=55 // pred_check_branch
          %412 = sbr.rel (%p410) target = $region80
        $region79: #{_lambda_.11} parent=55 // pred_region
          %413 = dma.done [#allocation12], 768
        $region80: #{_lambda_.11} parent=55 // pred_fallthru
          _
        // Predicated region
        $region81: #{_lambda_.11} parent=55 // pred_check
          %p414 = pneg %p177
        $region82: #{_lambda_.11} parent=55 // pred_check_branch
          %416 = sbr.rel (%p414) target = $region84
        $region83: #{_lambda_.11} parent=55 // pred_region
          %417 = dma.done [#allocation12], 16
        $region84: #{_lambda_.11} parent=55 // pred_fallthru
          _
        // Predicated region
        $region85: #{_lambda_.11} parent=55 // pred_check
          %p418 = pneg %p198
        $region86: #{_lambda_.11} parent=55 // pred_check_branch
          %420 = sbr.rel (%p418) target = $region88
        $region87: #{_lambda_.11} parent=55 // pred_region
          %421 = dma.done [#allocation15], 768
        $region88: #{_lambda_.11} parent=55 // pred_fallthru
          _
        // Predicated region
        $region89: #{_lambda_.11} parent=55 // pred_check
          %p422 = pneg %p219
        $region90: #{_lambda_.11} parent=55 // pred_check_branch
          %424 = sbr.rel (%p422) target = $region92
        $region91: #{_lambda_.11} parent=55 // pred_region
          %425 = dma.done [#allocation15], 16
        $region92: #{_lambda_.11} parent=55 // pred_fallthru
          _
        %s426 = sand.u32 %s38, 1
        %s427 = scalar_lea.sflag [#allocation3], %s426
        %s428 = sand.u32 %s38, 1
        %s429 = smul.addr %s428, 4
        %s430 = scalar_lea.vmem [#allocation2], %s429
        %p431 = pneg %p51
        %p432 = pneg %p48
        %p433 = pneg %p72
        %p434 = pneg %p69
        %p435 = pneg %p93
        %p436 = pneg %p90
        %p437 = pneg %p114
        %p438 = pneg %p111
        %p439 = pneg %p135
        %p440 = pneg %p132
        %p441 = pneg %p156
        %p442 = pneg %p153
        %p443 = pneg %p177
        %p444 = pneg %p174
        %p445 = pneg %p198
        %p446 = pneg %p195
        %p447 = pneg %p219
        %p448 = pneg %p216
        %p449 = pneg %p245
        %p450 = pneg %p242
        %s451 = sand.u32 %s232, 1
        %s452 = scalar_lea.sflag [#allocation4], %s451
        %s453 = sand.u32 %s232, 1
        %s454 = smul.addr %s453, 2
        %s455 = scalar_lea.vmem [#allocation17], %s454
        %v457 = vld [vmem:[%s389] sm:$0xf]
        %v458 = vld [vmem:[#allocation5] sm:$0xf]
        %v459 = vld [vmem:[#allocation5 + $0x4] sm:$0xf]
        %v460 = vld [vmem:[#allocation7] sm:$0x1]
        %v461 = vpack.c.bf16 %v457, %v457
        %v463 = vlaneseq
        %v464 = vshrl.u32 %v463, 7
        %v465 = vsub.s32 0, %v464
        %v466 = vrot.slane %v460, %v465
        %v470 = vunpack.c.l.b16 %v458
        %v471 = vunpack.c.l.b16 %v459
        %v472 = vpack.c.b16 %v471, %v470
        %vm474 = vcmask 130048
        %v476 = vsel %vm474, %v461, 0
        %478 = vmatprep.subr.bf16.mxu0 0
        %479 = vmatpush1.bf16.msra.mxu0 %v472
        %480 = vmatprep.subr.bf16.mxu0 0
        %481 = vmatpush1.bf16.msra.mxu0 0
        %482 = vmatprep.subr.bf16.mxu0 0
        %483 = vmatpush1.bf16.msra.mxu0 0
        %484 = vmatprep.subr.bf16.mxu0 0
        %485 = vmatpush1.bf16.msra.mxu0 0
        %486 = vmatprep.subr.bf16.mxu0 0
        %487 = vmatpush1.bf16.msra.mxu0 0
        %488 = vmatprep.subr.bf16.mxu0 0
        %489 = vmatpush1.bf16.msra.mxu0 0
        %490 = vmatprep.subr.bf16.mxu0 0
        %491 = vmatpush1.bf16.msra.mxu0 0
        %492 = vmatprep.subr.bf16.mxu0 0
        %493 = vmatpush1.bf16.msra.mxu0 0
        %494 = vmatprep.subr.bf16.mxu0 0
        %495 = vmatpush1.bf16.msra.mxu0 0
        %496 = vmatprep.subr.bf16.mxu0 0
        %497 = vmatpush1.bf16.msra.mxu0 0
        %498 = vmatprep.subr.bf16.mxu0 0
        %499 = vmatpush1.bf16.msra.mxu0 0
        %500 = vmatprep.subr.bf16.mxu0 0
        %501 = vmatpush1.bf16.msra.mxu0 0
        %502 = vmatprep.subr.bf16.mxu0 0
        %503 = vmatpush1.bf16.msra.mxu0 0
        %504 = vmatprep.subr.bf16.mxu0 0
        %505 = vmatpush1.bf16.msra.mxu0 0
        %506 = vmatprep.subr.bf16.mxu0 0
        %507 = vmatpush1.bf16.msra.mxu0 0
        %508 = vmatprep.subr.bf16.mxu0 0
        %509 = vmatpush1.bf16.msra.mxu0 0
        %510 = vmatprep.mubr.bf16.mxu0 0
        %511 = vmatmul.mubr.bf16.gmra.mrb[0].mxu0 %v476
        %v512 = vpop.f32.mrb[0].mxu0
        %v513 = vadd.f32 %v466, %v512
        %v514 = vpop.f32.mrb[0].mxu0
        %v515 = vpop.f32.mrb[0].mxu0
        %v516 = vpop.f32.mrb[0].mxu0
        %517 = vdwg.mxu0
        %v518 = vld [vmem:[#allocation8] sm:$0xf]
        %v519 = vld [vmem:[#allocation8 + $0x4] sm:$0xf]
        %v520 = vld [vmem:[#allocation8 + $0x8] sm:$0xf]
        %v521 = vld [vmem:[#allocation8 + $0xc] sm:$0xf]
        %v522 = vld [vmem:[#allocation8 + $0x10] sm:$0xf]
        %v523 = vld [vmem:[#allocation8 + $0x14] sm:$0xf]
        %v524 = vld [vmem:[#allocation8 + $0x18] sm:$0xf]
        %v525 = vld [vmem:[#allocation8 + $0x1c] sm:$0xf]
        %v526 = vld [vmem:[#allocation8 + $0x20] sm:$0xf]
        %v527 = vld [vmem:[#allocation8 + $0x24] sm:$0xf]
        %v528 = vld [vmem:[#allocation8 + $0x28] sm:$0xf]
        %v529 = vld [vmem:[#allocation8 + $0x2c] sm:$0xf]
        %v530 = vld [vmem:[#allocation10] sm:$0x1]
        %v531 = vpack.c.bf16 %v513, %v513
        %v533 = vshrl.u32 %v531, 16
        %v535 = vrot.slane %v533, 7
        %v536 = vshll.u32 %v531, 16
        %v538 = vor.u32 %v535, %v536
        %vm540 = vcmask 1040384
        %vm541 = vsmask.f32 256
        %vm542 = vmand %vm540, %vm541
        %v543 = vsel %vm542, 0, %v538
        %v544 = vrot.slane %v536, 1
        %v545 = vor.u32 %v533, %v544
        %vm547 = vcmask 1041408
        %vm548 = vsmask.f32 1280
        %vm549 = vmand %vm547, %vm548
        %v550 = vsel %vm549, %v545, 0
        %552 = vrot.lane.b32.xlu0 %v531, 32
        %v553 = vpop.permute.xlu0 %552
        %555 = vrot.lane.b32.xlu0 %v550, 64
        %v556 = vpop.permute.xlu0 %555
        %vm557 = vcmask 261120
        %v560 = vsel %vm557, %v543, %v553
        %vm561 = vcmask 523264
        %v563 = vsel %vm561, %v560, %v556
        %v565 = vlaneseq
        %v566 = vshrl.u32 %v565, 7
        %v567 = vsub.s32 0, %v566
        %v568 = vrot.slane %v530, %v567
        %v582 = vunpack.c.l.b16 %v518
        %v583 = vunpack.c.l.b16 %v519
        %v584 = vunpack.c.l.b16 %v520
        %v585 = vunpack.c.l.b16 %v521
        %v586 = vunpack.c.l.b16 %v522
        %v587 = vunpack.c.l.b16 %v523
        %v588 = vunpack.c.l.b16 %v524
        %v589 = vunpack.c.l.b16 %v525
        %v590 = vunpack.c.l.b16 %v526
        %v591 = vunpack.c.l.b16 %v527
        %v592 = vunpack.c.l.b16 %v528
        %v593 = vunpack.c.l.b16 %v529
        %v594 = vpack.c.b16 %v583, %v582
        %v595 = vpack.c.b16 %v585, %v584
        %v596 = vpack.c.b16 %v587, %v586
        %v597 = vpack.c.b16 %v589, %v588
        %v598 = vpack.c.b16 %v591, %v590
        %v599 = vpack.c.b16 %v593, %v592
        %vm606 = vcmask 785408
        %v607 = vsel %vm606, %v563, 0
        %609 = vmatprep.subr.bf16.mxu0 0
        %610 = vmatpush1.bf16.msra.mxu0 %v594
        %611 = vmatprep.subr.bf16.mxu0 0
        %612 = vmatpush1.bf16.msra.mxu0 %v595
        %613 = vmatprep.subr.bf16.mxu0 0
        %614 = vmatpush1.bf16.msra.mxu0 %v596
        %615 = vmatprep.subr.bf16.mxu0 0
        %616 = vmatpush1.bf16.msra.mxu0 %v597
        %617 = vmatprep.subr.bf16.mxu0 0
        %618 = vmatpush1.bf16.msra.mxu0 %v598
        %619 = vmatprep.subr.bf16.mxu0 0
        %620 = vmatpush1.bf16.msra.mxu0 %v599
        %621 = vmatprep.subr.bf16.mxu0 0
        %622 = vmatpush1.bf16.msra.mxu0 0
        %623 = vmatprep.subr.bf16.mxu0 0
        %624 = vmatpush1.bf16.msra.mxu0 0
        %625 = vmatprep.subr.bf16.mxu0 0
        %626 = vmatpush1.bf16.msra.mxu0 0
        %627 = vmatprep.subr.bf16.mxu0 0
        %628 = vmatpush1.bf16.msra.mxu0 0
        %629 = vmatprep.subr.bf16.mxu0 0
        %630 = vmatpush1.bf16.msra.mxu0 0
        %631 = vmatprep.subr.bf16.mxu0 0
        %632 = vmatpush1.bf16.msra.mxu0 0
        %633 = vmatprep.subr.bf16.mxu0 0
        %634 = vmatpush1.bf16.msra.mxu0 0
        %635 = vmatprep.subr.bf16.mxu0 0
        %636 = vmatpush1.bf16.msra.mxu0 0
        %637 = vmatprep.subr.bf16.mxu0 0
        %638 = vmatpush1.bf16.msra.mxu0 0
        %639 = vmatprep.subr.bf16.mxu0 0
        %640 = vmatpush1.bf16.msra.mxu0 0
        %641 = vmatprep.mubr.bf16.mxu0 0
        %642 = vmatmul.mubr.bf16.gmra.mrb[0].mxu0 %v607
        %v643 = vpop.f32.mrb[0].mxu0
        %v644 = vadd.f32 %v568, %v643
        %v645 = vpop.f32.mrb[0].mxu0
        %v646 = vpop.f32.mrb[0].mxu0
        %v647 = vpop.f32.mrb[0].mxu0
        %648 = vdwg.mxu0
        %v649 = vadd.f32 %v644, %v513
        %vm650 = vcmp.gt.f32.partialorder %v649, 0.0
        %v651 = vmul.f32 %v649, 0.2
        %v652 = vsel %vm650, %v649, %v651
        %v653 = vld [vmem:[#allocation11] sm:$0xf]
        %v654 = vld [vmem:[#allocation11 + $0x4] sm:$0xf]
        %v655 = vld [vmem:[#allocation11 + $0x8] sm:$0xf]
        %v656 = vld [vmem:[#allocation11 + $0xc] sm:$0xf]
        %v657 = vld [vmem:[#allocation11 + $0x10] sm:$0xf]
        %v658 = vld [vmem:[#allocation11 + $0x14] sm:$0xf]
        %v659 = vld [vmem:[#allocation11 + $0x18] sm:$0xf]
        %v660 = vld [vmem:[#allocation11 + $0x1c] sm:$0xf]
        %v661 = vld [vmem:[#allocation11 + $0x20] sm:$0xf]
        %v662 = vld [vmem:[#allocation11 + $0x24] sm:$0xf]
        %v663 = vld [vmem:[#allocation11 + $0x28] sm:$0xf]
        %v664 = vld [vmem:[#allocation11 + $0x2c] sm:$0xf]
        %v665 = vld [vmem:[#allocation13] sm:$0x1]
        %v666 = vpack.c.bf16 %v652, %v652
        %v668 = vshrl.u32 %v666, 16
        %v670 = vrot.slane %v668, 7
        %v671 = vshll.u32 %v666, 16
        %v673 = vor.u32 %v670, %v671
        %v675 = vsel %vm542, 0, %v673
        %v676 = vrot.slane %v671, 1
        %v677 = vor.u32 %v668, %v676
        %v679 = vsel %vm549, %v677, 0
        %681 = vrot.lane.b32.xlu0 %v666, 32
        %v682 = vpop.permute.xlu0 %681
        %684 = vrot.lane.b32.xlu0 %v679, 64
        %v685 = vpop.permute.xlu0 %684
        %v688 = vsel %vm557, %v675, %v682
        %v690 = vsel %vm561, %v688, %v685
        %v692 = vlaneseq
        %v693 = vshrl.u32 %v692, 7
        %v694 = vsub.s32 0, %v693
        %v695 = vrot.slane %v665, %v694
        %v709 = vunpack.c.l.b16 %v653
        %v710 = vunpack.c.l.b16 %v654
        %v711 = vunpack.c.l.b16 %v655
        %v712 = vunpack.c.l.b16 %v656
        %v713 = vunpack.c.l.b16 %v657
        %v714 = vunpack.c.l.b16 %v658
        %v715 = vunpack.c.l.b16 %v659
        %v716 = vunpack.c.l.b16 %v660
        %v717 = vunpack.c.l.b16 %v661
        %v718 = vunpack.c.l.b16 %v662
        %v719 = vunpack.c.l.b16 %v663
        %v720 = vunpack.c.l.b16 %v664
        %v721 = vpack.c.b16 %v710, %v709
        %v722 = vpack.c.b16 %v712, %v711
        %v723 = vpack.c.b16 %v714, %v713
        %v724 = vpack.c.b16 %v716, %v715
        %v725 = vpack.c.b16 %v718, %v717
        %v726 = vpack.c.b16 %v720, %v719
        %v733 = vsel %vm606, %v690, 0
        %735 = vmatprep.subr.bf16.mxu0 0
        %736 = vmatpush1.bf16.msra.mxu0 %v721
        %737 = vmatprep.subr.bf16.mxu0 0
        %738 = vmatpush1.bf16.msra.mxu0 %v722
        %739 = vmatprep.subr.bf16.mxu0 0
        %740 = vmatpush1.bf16.msra.mxu0 %v723
        %741 = vmatprep.subr.bf16.mxu0 0
        %742 = vmatpush1.bf16.msra.mxu0 %v724
        %743 = vmatprep.subr.bf16.mxu0 0
        %744 = vmatpush1.bf16.msra.mxu0 %v725
        %745 = vmatprep.subr.bf16.mxu0 0
        %746 = vmatpush1.bf16.msra.mxu0 %v726
        %747 = vmatprep.subr.bf16.mxu0 0
        %748 = vmatpush1.bf16.msra.mxu0 0
        %749 = vmatprep.subr.bf16.mxu0 0
        %750 = vmatpush1.bf16.msra.mxu0 0
        %751 = vmatprep.subr.bf16.mxu0 0
        %752 = vmatpush1.bf16.msra.mxu0 0
        %753 = vmatprep.subr.bf16.mxu0 0
        %754 = vmatpush1.bf16.msra.mxu0 0
        %755 = vmatprep.subr.bf16.mxu0 0
        %756 = vmatpush1.bf16.msra.mxu0 0
        %757 = vmatprep.subr.bf16.mxu0 0
        %758 = vmatpush1.bf16.msra.mxu0 0
        %759 = vmatprep.subr.bf16.mxu0 0
        %760 = vmatpush1.bf16.msra.mxu0 0
        %761 = vmatprep.subr.bf16.mxu0 0
        %762 = vmatpush1.bf16.msra.mxu0 0
        %763 = vmatprep.subr.bf16.mxu0 0
        %764 = vmatpush1.bf16.msra.mxu0 0
        %765 = vmatprep.subr.bf16.mxu0 0
        %766 = vmatpush1.bf16.msra.mxu0 0
        %767 = vmatprep.mubr.bf16.mxu0 0
        %768 = vmatmul.mubr.bf16.gmra.mrb[0].mxu0 %v733
        %v769 = vpop.f32.mrb[0].mxu0
        %v770 = vadd.f32 %v695, %v769
        %v771 = vpop.f32.mrb[0].mxu0
        %v772 = vpop.f32.mrb[0].mxu0
        %v773 = vpop.f32.mrb[0].mxu0
        %774 = vdwg.mxu0
        %v775 = vadd.f32 %v770, %v652
        %vm776 = vcmp.gt.f32.partialorder %v775, 0.0
        %v777 = vmul.f32 %v775, 0.2
        %v778 = vsel %vm776, %v775, %v777
        %v779 = vld [vmem:[#allocation14] sm:$0xf]
        %v780 = vld [vmem:[#allocation14 + $0x4] sm:$0xf]
        %v781 = vld [vmem:[#allocation14 + $0x8] sm:$0xf]
        %v782 = vld [vmem:[#allocation14 + $0xc] sm:$0xf]
        %v783 = vld [vmem:[#allocation14 + $0x10] sm:$0xf]
        %v784 = vld [vmem:[#allocation14 + $0x14] sm:$0xf]
        %v785 = vld [vmem:[#allocation14 + $0x18] sm:$0xf]
        %v786 = vld [vmem:[#allocation14 + $0x1c] sm:$0xf]
        %v787 = vld [vmem:[#allocation14 + $0x20] sm:$0xf]
        %v788 = vld [vmem:[#allocation14 + $0x24] sm:$0xf]
        %v789 = vld [vmem:[#allocation14 + $0x28] sm:$0xf]
        %v790 = vld [vmem:[#allocation14 + $0x2c] sm:$0xf]
        %v791 = vld [vmem:[#allocation16] sm:$0x1]
        %v792 = vpack.c.bf16 %v778, %v778
        %v794 = vshrl.u32 %v792, 16
        %v796 = vrot.slane %v794, 7
        %v797 = vshll.u32 %v792, 16
        %v799 = vor.u32 %v796, %v797
        %v801 = vsel %vm542, 0, %v799
        %v802 = vrot.slane %v797, 1
        %v803 = vor.u32 %v794, %v802
        %v805 = vsel %vm549, %v803, 0
        %807 = vrot.lane.b32.xlu0 %v792, 32
        %v808 = vpop.permute.xlu0 %807
        %810 = vrot.lane.b32.xlu0 %v805, 64
        %v811 = vpop.permute.xlu0 %810
        %v814 = vsel %vm557, %v801, %v808
        %v816 = vsel %vm561, %v814, %v811
        %v818 = vlaneseq
        %v819 = vshrl.u32 %v818, 7
        %v820 = vsub.s32 0, %v819
        %v821 = vrot.slane %v791, %v820
        %v835 = vunpack.c.l.b16 %v779
        %v836 = vunpack.c.l.b16 %v780
        %v837 = vunpack.c.l.b16 %v781
        %v838 = vunpack.c.l.b16 %v782
        %v839 = vunpack.c.l.b16 %v783
        %v840 = vunpack.c.l.b16 %v784
        %v841 = vunpack.c.l.b16 %v785
        %v842 = vunpack.c.l.b16 %v786
        %v843 = vunpack.c.l.b16 %v787
        %v844 = vunpack.c.l.b16 %v788
        %v845 = vunpack.c.l.b16 %v789
        %v846 = vunpack.c.l.b16 %v790
        %v847 = vpack.c.b16 %v836, %v835
        %v848 = vpack.c.b16 %v838, %v837
        %v849 = vpack.c.b16 %v840, %v839
        %v850 = vpack.c.b16 %v842, %v841
        %v851 = vpack.c.b16 %v844, %v843
        %v852 = vpack.c.b16 %v846, %v845
        %v859 = vsel %vm606, %v816, 0
        %861 = vmatprep.subr.bf16.mxu0 0
        %862 = vmatpush1.bf16.msra.mxu0 %v847
        %863 = vmatprep.subr.bf16.mxu0 0
        %864 = vmatpush1.bf16.msra.mxu0 %v848
        %865 = vmatprep.subr.bf16.mxu0 0
        %866 = vmatpush1.bf16.msra.mxu0 %v849
        %867 = vmatprep.subr.bf16.mxu0 0
        %868 = vmatpush1.bf16.msra.mxu0 %v850
        %869 = vmatprep.subr.bf16.mxu0 0
        %870 = vmatpush1.bf16.msra.mxu0 %v851
        %871 = vmatprep.subr.bf16.mxu0 0
        %872 = vmatpush1.bf16.msra.mxu0 %v852
        %873 = vmatprep.subr.bf16.mxu0 0
        %874 = vmatpush1.bf16.msra.mxu0 0
        %875 = vmatprep.subr.bf16.mxu0 0
        %876 = vmatpush1.bf16.msra.mxu0 0
        %877 = vmatprep.subr.bf16.mxu0 0
        %878 = vmatpush1.bf16.msra.mxu0 0
        %879 = vmatprep.subr.bf16.mxu0 0
        %880 = vmatpush1.bf16.msra.mxu0 0
        %881 = vmatprep.subr.bf16.mxu0 0
        %882 = vmatpush1.bf16.msra.mxu0 0
        %883 = vmatprep.subr.bf16.mxu0 0
        %884 = vmatpush1.bf16.msra.mxu0 0
        %885 = vmatprep.subr.bf16.mxu0 0
        %886 = vmatpush1.bf16.msra.mxu0 0
        %887 = vmatprep.subr.bf16.mxu0 0
        %888 = vmatpush1.bf16.msra.mxu0 0
        %889 = vmatprep.subr.bf16.mxu0 0
        %890 = vmatpush1.bf16.msra.mxu0 0
        %891 = vmatprep.subr.bf16.mxu0 0
        %892 = vmatpush1.bf16.msra.mxu0 0
        %893 = vmatprep.mubr.bf16.mxu0 0
        %894 = vmatmul.mubr.bf16.gmra.mrb[0].mxu0 %v859
        %v895 = vpop.f32.mrb[0].mxu0
        %v896 = vadd.f32 %v821, %v895
        %v897 = vpop.f32.mrb[0].mxu0
        %v898 = vpop.f32.mrb[0].mxu0
        %v899 = vpop.f32.mrb[0].mxu0
        %900 = vdwg.mxu0
        %v901 = vadd.f32 %v896, %v513
        %v902 = vmax.f32 %v901, 0.0
        %v903 = vpack.c.bf16 %v902, %v902
        %vm904 = vcmask 254976
        %905 = vst.msk [vmem:[%s455] sm:$0x3] %vm904, %v903
        %s906 = sand.u32 %s232, 1
        %s907 = scalar_lea.sflag [#allocation4], %s906
        %s908 = sand.u32 %s232, 1
        %s909 = smul.addr %s908, 2
        %s910 = scalar_lea.vmem [#allocation17], %s909
        // Predicated region
        $region93: #{_lambda_.11} parent=55 // pred_check
          %p911 = pneg %p242
        $region94: #{_lambda_.11} parent=55 // pred_check_branch
          %913 = sbr.rel (%p911) target = $region96
        $region95: #{_lambda_.11} parent=55 // pred_region
          %s915 = ssub.s32 32, 32
          %916 = vsyncadd %s907, %s915
          %s917 = smul.addr %s30, 32
          %s918 = scalar_lea.hbm %s9, %s917
          %s920 = sshll.u32 %s910, 4
          %s921 = int_to_ptr.vmem [resolvable:$true] %s920
          %923 = dma.vmem_to_hbm [thread:$0]  %s921, 32, %s918, %s907
        $region96: #{_lambda_.11} parent=55 // pred_fallthru
          _
      $region56: #{_lambda_.11} parent=5 // pred_fallthru
        _
      %p924 = scmp.le.s32.totalorder 2, %s25
      // Predicated region
      $region97: #{_lambda_.11} parent=5 // pred_check
        %p925 = pneg %p924
      $region98: #{_lambda_.11} parent=5 // pred_check_branch
        %927 = sbr.rel (%p925) target = $region100
      $region99: #{_lambda_.11} parent=5 // pred_region
        %s928 = ssub.s32 %s25, 2
        // Predicated region
        $region101: #{_lambda_.11} parent=99 // pred_check
          %p929 = pneg %p248
        $region102: #{_lambda_.11} parent=99 // pred_check_branch
          %931 = sbr.rel (%p929) target = $region104
        $region103: #{_lambda_.11} parent=99 // pred_region
          %s932 = sand.u32 %s233, 1
          %s933 = scalar_lea.sflag [#allocation4], %s932
          %s934 = sand.u32 %s233, 1
          %s935 = smul.addr %s934, 2
          %s936 = scalar_lea.vmem [#allocation17], %s935
          %937 = dma.done %s933, 32
        $region104: #{_lambda_.11} parent=99 // pred_fallthru
          _
      $region100: #{_lambda_.11} parent=5 // pred_fallthru
        _
    $region6: #{_lambda_.11} parent=1 // loop_footer
      %s29 = sadd.s32 1, %s25
    $region7: #{_lambda_.11} parent=1 // loop_footer_branch
      %24 = sbr.rel target = $region3
    $region8: #{_lambda_.11} parent=1 // loop_exit
      _
    %938 = vsyncpa [#allocation3], 1
    %s939 = scalar_lea.sflag [#allocation3], 1
    %940 = vsyncpa %s939, 1
    %941 = vsyncpa [#allocation6], 1
    %942 = vsyncpa [#allocation9], 1
    %943 = vsyncpa [#allocation12], 1
    %944 = vsyncpa [#allocation15], 1
    %945 = vsyncpa [#allocation4], 1
    %s946 = scalar_lea.sflag [#allocation4], 1
    %947 = vsyncpa %s946, 1

// kernel: _lambda_.10
$region0: #{_lambda_.10}
  #allocation0 [shape = 'u32[]', space=smem, size = 0x4, offset = 0x4, fixed_abs, tag = 'smem constant byte address 0x4 - core index']
  #allocation1 [shape = 'u32[144,128]{1,0:T(1,128)}', space=vmem, size = 0x12000, scoped, tag = 'internal scratch']
  %s0 = inlined_call_operand.hbm [shape: bf16[2,4,32], index: 0, kind: input, shape index: {}]
  %s1 = inlined_call_operand.hbm [shape: bf16[64,32], index: 1, kind: input, shape index: {}]
  %s2 = inlined_call_operand.hbm [shape: f32[1,32], index: 2, kind: input, shape index: {}]
  %s3 = inlined_call_operand.hbm [shape: bf16[96,32], index: 3, kind: input, shape index: {}]
  %s4 = inlined_call_operand.hbm [shape: f32[1,32], index: 4, kind: input, shape index: {}]
  %s5 = inlined_call_operand.hbm [shape: bf16[96,32], index: 5, kind: input, shape index: {}]
  %s6 = inlined_call_operand.hbm [shape: f32[1,32], index: 6, kind: input, shape index: {}]
  %s7 = inlined_call_operand.hbm [shape: bf16[96,32], index: 7, kind: input, shape index: {}]
  %s8 = inlined_call_operand.hbm [shape: f32[1,32], index: 8, kind: input, shape index: {}]
  %s9 = inlined_call_operand.hbm [shape: bf16[32,16], index: 9, kind: input, shape index: {}]
  %s10 = inlined_call_operand.hbm [shape: f32[1,16], index: 10, kind: input, shape index: {}]
  %s11 = inlined_call_operand.hbm [shape: f32[32,16], index: 11, kind: input, shape index: {}]
  %s12 = inlined_call_operand.hbm [shape: f32[1,32], index: 12, kind: input, shape index: {}]
  %s13 = inlined_call_operand.hbm [shape: f32[2,4,16], index: 13, kind: output, shape index: {}]
  %s14 = sld [smem:[#allocation0]]
  $region137: #{_lambda_.10} parent=0
    _
  %s16 = ssub.s32 1, %s14
  %s17 = scalar_select 0, %s16, %s14
  $region1: #{_lambda_.10} parent=0
    #allocation2 [shape = 'u8[2048]{0}', space=vmem, size = 0x800, scoped, tag = 'input window, operand 0']
    #allocation3 [shape = 's32[2]{0}', space=sflag, size = 0x8, scoped, tag = 'scoped memory for _lambda_.10']
    #allocation4 [shape = 's32[2]{0}', space=sflag, size = 0x8, scoped, tag = 'scoped memory for _lambda_.10']
    #allocation5 [shape = 'u8[16384]{0}', space=vmem, size = 0x4000, scoped, tag = 'input window, operand 1, single buffered']
    #allocation6 [shape = 's32[1]{0}', space=sflag, size = 0x4, scoped, tag = 'scoped memory for _lambda_.10']
    #allocation7 [shape = 'u8[512]{0}', space=vmem, size = 0x400, scoped, tag = 'input window, operand 2, single buffered']
    #allocation8 [shape = 'u8[24576]{0}', space=vmem, size = 0x6000, scoped, tag = 'input window, operand 3, single buffered']
    #allocation9 [shape = 's32[1]{0}', space=sflag, size = 0x4, scoped, tag = 'scoped memory for _lambda_.10']
    #allocation10 [shape = 'u8[512]{0}', space=vmem, size = 0x400, scoped, tag = 'input window, operand 4, single buffered']
    #allocation11 [shape = 'u8[24576]{0}', space=vmem, size = 0x6000, scoped, tag = 'input window, operand 5, single buffered']
    #allocation12 [shape = 's32[1]{0}', space=sflag, size = 0x4, scoped, tag = 'scoped memory for _lambda_.10']
    #allocation13 [shape = 'u8[512]{0}', space=vmem, size = 0x400, scoped, tag = 'input window, operand 6, single buffered']
    #allocation14 [shape = 'u8[24576]{0}', space=vmem, size = 0x6000, scoped, tag = 'input window, operand 7, single buffered']
    #allocation15 [shape = 's32[1]{0}', space=sflag, size = 0x4, scoped, tag = 'scoped memory for _lambda_.10']
    #allocation16 [shape = 'u8[512]{0}', space=vmem, size = 0x400, scoped, tag = 'input window, operand 8, single buffered']
    #allocation17 [shape = 'u8[8192]{0}', space=vmem, size = 0x2000, scoped, tag = 'input window, operand 9, single buffered']
    #allocation18 [shape = 's32[1]{0}', space=sflag, size = 0x4, scoped, tag = 'scoped memory for _lambda_.10']
    #allocation19 [shape = 'u8[512]{0}', space=vmem, size = 0x400, scoped, tag = 'input window, operand 10, single buffered']
    #allocation20 [shape = 'u8[16384]{0}', space=vmem, size = 0x4000, scoped, tag = 'input window, operand 11, single buffered']
    #allocation21 [shape = 's32[1]{0}', space=sflag, size = 0x4, scoped, tag = 'scoped memory for _lambda_.10']
    #allocation22 [shape = 'u8[512]{0}', space=vmem, size = 0x400, scoped, tag = 'input window, operand 12, single buffered']
    #allocation23 [shape = 'u8[4096]{0}', space=vmem, size = 0x1000, scoped, tag = 'output window, operand 0']
    %18 = vsyncpa [#allocation3], 0
    %s19 = scalar_lea.sflag [#allocation3], 1
    %20 = vsyncpa %s19, 0
    %21 = vsyncpa [#allocation6], 0
    %22 = vsyncpa [#allocation9], 0
    %23 = vsyncpa [#allocation12], 0
    %24 = vsyncpa [#allocation15], 0
    %25 = vsyncpa [#allocation18], 0
    %26 = vsyncpa [#allocation21], 0
    %27 = vsyncpa [#allocation4], 0
    %s28 = scalar_lea.sflag [#allocation4], 1
    %29 = vsyncpa %s28, 0
    loop: start=0, step=1, limit=4
    $region2: #{_lambda_.10} parent=1 // loop_pre_header
      _
    $region3: #{_lambda_.10} parent=1 // loop_header
      %s31 = sphi 0, %s35
      %p32 = scmp.ge.s32.totalorder %s31, 4
      %s41 = sphi 0, %s43
      %s44 = sphi 0, %s41
      %s45 = sphi 0, %s44
      %s61 = sphi 0, %s45
      %s65 = sphi 0, %s65
      %s67 = sphi 0, %s65
      %s68 = sphi 0, %s67
      %s82 = sphi 0, %s68
      %s86 = sphi 0, %s86
      %s88 = sphi 0, %s86
      %s89 = sphi 0, %s88
      %s103 = sphi 0, %s89
      %s107 = sphi 0, %s107
      %s109 = sphi 0, %s107
      %s110 = sphi 0, %s109
      %s124 = sphi 0, %s110
      %s128 = sphi 0, %s128
      %s130 = sphi 0, %s128
      %s131 = sphi 0, %s130
      %s145 = sphi 0, %s131
      %s149 = sphi 0, %s149
      %s151 = sphi 0, %s149
      %s152 = sphi 0, %s151
      %s166 = sphi 0, %s152
      %s170 = sphi 0, %s170
      %s172 = sphi 0, %s170
      %s173 = sphi 0, %s172
      %s187 = sphi 0, %s173
      %s191 = sphi 0, %s191
      %s193 = sphi 0, %s191
      %s194 = sphi 0, %s193
      %s208 = sphi 0, %s194
      %s212 = sphi 0, %s212
      %s214 = sphi 0, %s212
      %s215 = sphi 0, %s214
      %s229 = sphi 0, %s215
      %s233 = sphi 0, %s233
      %s235 = sphi 0, %s233
      %s236 = sphi 0, %s235
      %s250 = sphi 0, %s236
      %s254 = sphi 0, %s254
      %s256 = sphi 0, %s254
      %s257 = sphi 0, %s256
      %s271 = sphi 0, %s257
      %s275 = sphi 0, %s275
      %s277 = sphi 0, %s275
      %s278 = sphi 0, %s277
      %s292 = sphi 0, %s278
      %s296 = sphi 0, %s296
      %s298 = sphi 0, %s296
      %s299 = sphi 0, %s298
      %s313 = sphi 0, %s299
      %s319 = sphi 0, %s321
      %s322 = sphi 0, %s319
      %s323 = sphi 0, %s322
      %s339 = sphi 0, %s323
    $region4: #{_lambda_.10} parent=1 // loop_header_branch
      %34 = sbr.rel (%p32) target = $region8
    $region5: #{_lambda_.10} parent=1 // loop_body
      %s36 = ssub.s32 %s31, 1
      %s37 = ssub.s32 %s31, 2
      %s38 = sadd.s32 %s31, 1
      %s39 = ssub.s32 %s31, %s38
      %p40 = scmp.eq.s32.totalorder %s39, 0
      %s42 = sadd.s32 %s41, 1
      %s43 = scalar_select %p40, %s41, %s42
      %p46 = pneg %p40
      %p47 = scmp.eq.s32.totalorder %s31, 1
      %p48 = por %p46, %p47
      %p49 = scmp.ne.s32.totalorder %s41, %s44
      %p50 = scmp.eq.s32.totalorder %s31, 0
      %p51 = por %p49, %p50
      %p52 = scmp.ne.s32.totalorder %s41, %s44
      %p53 = scmp.eq.s32.totalorder %s36, 1
      %p54 = por %p52, %p53
      %p55 = scmp.ne.s32.totalorder %s44, %s45
      %p56 = scmp.eq.s32.totalorder %s36, 0
      %p57 = por %p55, %p56
      %p58 = scmp.ne.s32.totalorder %s44, %s45
      %p59 = scmp.eq.s32.totalorder %s37, 1
      %p60 = por %p58, %p59
      %p62 = scmp.ne.s32.totalorder %s45, %s61
      %p63 = scmp.eq.s32.totalorder %s37, 0
      %p64 = por %p62, %p63
      %s66 = sadd.s32 %s65, 1
      %p69 = scmp.eq.s32.totalorder %s31, 1
      %p70 = scmp.ne.s32.totalorder %s65, %s67
      %p71 = scmp.eq.s32.totalorder %s31, 0
      %p72 = por %p70, %p71
      %p73 = scmp.ne.s32.totalorder %s65, %s67
      %p74 = scmp.eq.s32.totalorder %s36, 1
      %p75 = por %p73, %p74
      %p76 = scmp.ne.s32.totalorder %s67, %s68
      %p77 = scmp.eq.s32.totalorder %s36, 0
      %p78 = por %p76, %p77
      %p79 = scmp.ne.s32.totalorder %s67, %s68
      %p80 = scmp.eq.s32.totalorder %s37, 1
      %p81 = por %p79, %p80
      %p83 = scmp.ne.s32.totalorder %s68, %s82
      %p84 = scmp.eq.s32.totalorder %s37, 0
      %p85 = por %p83, %p84
      %s87 = sadd.s32 %s86, 1
      %p90 = scmp.eq.s32.totalorder %s31, 1
      %p91 = scmp.ne.s32.totalorder %s86, %s88
      %p92 = scmp.eq.s32.totalorder %s31, 0
      %p93 = por %p91, %p92
      %p94 = scmp.ne.s32.totalorder %s86, %s88
      %p95 = scmp.eq.s32.totalorder %s36, 1
      %p96 = por %p94, %p95
      %p97 = scmp.ne.s32.totalorder %s88, %s89
      %p98 = scmp.eq.s32.totalorder %s36, 0
      %p99 = por %p97, %p98
      %p100 = scmp.ne.s32.totalorder %s88, %s89
      %p101 = scmp.eq.s32.totalorder %s37, 1
      %p102 = por %p100, %p101
      %p104 = scmp.ne.s32.totalorder %s89, %s103
      %p105 = scmp.eq.s32.totalorder %s37, 0
      %p106 = por %p104, %p105
      %s108 = sadd.s32 %s107, 1
      %p111 = scmp.eq.s32.totalorder %s31, 1
      %p112 = scmp.ne.s32.totalorder %s107, %s109
      %p113 = scmp.eq.s32.totalorder %s31, 0
      %p114 = por %p112, %p113
      %p115 = scmp.ne.s32.totalorder %s107, %s109
      %p116 = scmp.eq.s32.totalorder %s36, 1
      %p117 = por %p115, %p116
      %p118 = scmp.ne.s32.totalorder %s109, %s110
      %p119 = scmp.eq.s32.totalorder %s36, 0
      %p120 = por %p118, %p119
      %p121 = scmp.ne.s32.totalorder %s109, %s110
      %p122 = scmp.eq.s32.totalorder %s37, 1
      %p123 = por %p121, %p122
      %p125 = scmp.ne.s32.totalorder %s110, %s124
      %p126 = scmp.eq.s32.totalorder %s37, 0
      %p127 = por %p125, %p126
      %s129 = sadd.s32 %s128, 1
      %p132 = scmp.eq.s32.totalorder %s31, 1
      %p133 = scmp.ne.s32.totalorder %s128, %s130
      %p134 = scmp.eq.s32.totalorder %s31, 0
      %p135 = por %p133, %p134
      %p136 = scmp.ne.s32.totalorder %s128, %s130
      %p137 = scmp.eq.s32.totalorder %s36, 1
      %p138 = por %p136, %p137
      %p139 = scmp.ne.s32.totalorder %s130, %s131
      %p140 = scmp.eq.s32.totalorder %s36, 0
      %p141 = por %p139, %p140
      %p142 = scmp.ne.s32.totalorder %s130, %s131
      %p143 = scmp.eq.s32.totalorder %s37, 1
      %p144 = por %p142, %p143
      %p146 = scmp.ne.s32.totalorder %s131, %s145
      %p147 = scmp.eq.s32.totalorder %s37, 0
      %p148 = por %p146, %p147
      %s150 = sadd.s32 %s149, 1
      %p153 = scmp.eq.s32.totalorder %s31, 1
      %p154 = scmp.ne.s32.totalorder %s149, %s151
      %p155 = scmp.eq.s32.totalorder %s31, 0
      %p156 = por %p154, %p155
      %p157 = scmp.ne.s32.totalorder %s149, %s151
      %p158 = scmp.eq.s32.totalorder %s36, 1
      %p159 = por %p157, %p158
      %p160 = scmp.ne.s32.totalorder %s151, %s152
      %p161 = scmp.eq.s32.totalorder %s36, 0
      %p162 = por %p160, %p161
      %p163 = scmp.ne.s32.totalorder %s151, %s152
      %p164 = scmp.eq.s32.totalorder %s37, 1
      %p165 = por %p163, %p164
      %p167 = scmp.ne.s32.totalorder %s152, %s166
      %p168 = scmp.eq.s32.totalorder %s37, 0
      %p169 = por %p167, %p168
      %s171 = sadd.s32 %s170, 1
      %p174 = scmp.eq.s32.totalorder %s31, 1
      %p175 = scmp.ne.s32.totalorder %s170, %s172
      %p176 = scmp.eq.s32.totalorder %s31, 0
      %p177 = por %p175, %p176
      %p178 = scmp.ne.s32.totalorder %s170, %s172
      %p179 = scmp.eq.s32.totalorder %s36, 1
      %p180 = por %p178, %p179
      %p181 = scmp.ne.s32.totalorder %s172, %s173
      %p182 = scmp.eq.s32.totalorder %s36, 0
      %p183 = por %p181, %p182
      %p184 = scmp.ne.s32.totalorder %s172, %s173
      %p185 = scmp.eq.s32.totalorder %s37, 1
      %p186 = por %p184, %p185
      %p188 = scmp.ne.s32.totalorder %s173, %s187
      %p189 = scmp.eq.s32.totalorder %s37, 0
      %p190 = por %p188, %p189
      %s192 = sadd.s32 %s191, 1
      %p195 = scmp.eq.s32.totalorder %s31, 1
      %p196 = scmp.ne.s32.totalorder %s191, %s193
      %p197 = scmp.eq.s32.totalorder %s31, 0
      %p198 = por %p196, %p197
      %p199 = scmp.ne.s32.totalorder %s191, %s193
      %p200 = scmp.eq.s32.totalorder %s36, 1
      %p201 = por %p199, %p200
      %p202 = scmp.ne.s32.totalorder %s193, %s194
      %p203 = scmp.eq.s32.totalorder %s36, 0
      %p204 = por %p202, %p203
      %p205 = scmp.ne.s32.totalorder %s193, %s194
      %p206 = scmp.eq.s32.totalorder %s37, 1
      %p207 = por %p205, %p206
      %p209 = scmp.ne.s32.totalorder %s194, %s208
      %p210 = scmp.eq.s32.totalorder %s37, 0
      %p211 = por %p209, %p210
      %s213 = sadd.s32 %s212, 1
      %p216 = scmp.eq.s32.totalorder %s31, 1
      %p217 = scmp.ne.s32.totalorder %s212, %s214
      %p218 = scmp.eq.s32.totalorder %s31, 0
      %p219 = por %p217, %p218
      %p220 = scmp.ne.s32.totalorder %s212, %s214
      %p221 = scmp.eq.s32.totalorder %s36, 1
      %p222 = por %p220, %p221
      %p223 = scmp.ne.s32.totalorder %s214, %s215
      %p224 = scmp.eq.s32.totalorder %s36, 0
      %p225 = por %p223, %p224
      %p226 = scmp.ne.s32.totalorder %s214, %s215
      %p227 = scmp.eq.s32.totalorder %s37, 1
      %p228 = por %p226, %p227
      %p230 = scmp.ne.s32.totalorder %s215, %s229
      %p231 = scmp.eq.s32.totalorder %s37, 0
      %p232 = por %p230, %p231
      %s234 = sadd.s32 %s233, 1
      %p237 = scmp.eq.s32.totalorder %s31, 1
      %p238 = scmp.ne.s32.totalorder %s233, %s235
      %p239 = scmp.eq.s32.totalorder %s31, 0
      %p240 = por %p238, %p239
      %p241 = scmp.ne.s32.totalorder %s233, %s235
      %p242 = scmp.eq.s32.totalorder %s36, 1
      %p243 = por %p241, %p242
      %p244 = scmp.ne.s32.totalorder %s235, %s236
      %p245 = scmp.eq.s32.totalorder %s36, 0
      %p246 = por %p244, %p245
      %p247 = scmp.ne.s32.totalorder %s235, %s236
      %p248 = scmp.eq.s32.totalorder %s37, 1
      %p249 = por %p247, %p248
      %p251 = scmp.ne.s32.totalorder %s236, %s250
      %p252 = scmp.eq.s32.totalorder %s37, 0
      %p253 = por %p251, %p252
      %s255 = sadd.s32 %s254, 1
      %p258 = scmp.eq.s32.totalorder %s31, 1
      %p259 = scmp.ne.s32.totalorder %s254, %s256
      %p260 = scmp.eq.s32.totalorder %s31, 0
      %p261 = por %p259, %p260
      %p262 = scmp.ne.s32.totalorder %s254, %s256
      %p263 = scmp.eq.s32.totalorder %s36, 1
      %p264 = por %p262, %p263
      %p265 = scmp.ne.s32.totalorder %s256, %s257
      %p266 = scmp.eq.s32.totalorder %s36, 0
      %p267 = por %p265, %p266
      %p268 = scmp.ne.s32.totalorder %s256, %s257
      %p269 = scmp.eq.s32.totalorder %s37, 1
      %p270 = por %p268, %p269
      %p272 = scmp.ne.s32.totalorder %s257, %s271
      %p273 = scmp.eq.s32.totalorder %s37, 0
      %p274 = por %p272, %p273
      %s276 = sadd.s32 %s275, 1
      %p279 = scmp.eq.s32.totalorder %s31, 1
      %p280 = scmp.ne.s32.totalorder %s275, %s277
      %p281 = scmp.eq.s32.totalorder %s31, 0
      %p282 = por %p280, %p281
      %p283 = scmp.ne.s32.totalorder %s275, %s277
      %p284 = scmp.eq.s32.totalorder %s36, 1
      %p285 = por %p283, %p284
      %p286 = scmp.ne.s32.totalorder %s277, %s278
      %p287 = scmp.eq.s32.totalorder %s36, 0
      %p288 = por %p286, %p287
      %p289 = scmp.ne.s32.totalorder %s277, %s278
      %p290 = scmp.eq.s32.totalorder %s37, 1
      %p291 = por %p289, %p290
      %p293 = scmp.ne.s32.totalorder %s278, %s292
      %p294 = scmp.eq.s32.totalorder %s37, 0
      %p295 = por %p293, %p294
      %s297 = sadd.s32 %s296, 1
      %p300 = scmp.eq.s32.totalorder %s31, 1
      %p301 = scmp.ne.s32.totalorder %s296, %s298
      %p302 = scmp.eq.s32.totalorder %s31, 0
      %p303 = por %p301, %p302
      %p304 = scmp.ne.s32.totalorder %s296, %s298
      %p305 = scmp.eq.s32.totalorder %s36, 1
      %p306 = por %p304, %p305
      %p307 = scmp.ne.s32.totalorder %s298, %s299
      %p308 = scmp.eq.s32.totalorder %s36, 0
      %p309 = por %p307, %p308
      %p310 = scmp.ne.s32.totalorder %s298, %s299
      %p311 = scmp.eq.s32.totalorder %s37, 1
      %p312 = por %p310, %p311
      %p314 = scmp.ne.s32.totalorder %s299, %s313
      %p315 = scmp.eq.s32.totalorder %s37, 0
      %p316 = por %p314, %p315
      %s317 = ssub.s32 %s31, %s38
      %p318 = scmp.eq.s32.totalorder %s317, 0
      %s320 = sadd.s32 %s319, 1
      %s321 = scalar_select %p318, %s319, %s320
      %p324 = pneg %p318
      %p325 = scmp.eq.s32.totalorder %s31, 1
      %p326 = por %p324, %p325
      %p327 = scmp.ne.s32.totalorder %s319, %s322
      %p328 = scmp.eq.s32.totalorder %s31, 0
      %p329 = por %p327, %p328
      %p330 = scmp.ne.s32.totalorder %s319, %s322
      %p331 = scmp.eq.s32.totalorder %s36, 1
      %p332 = por %p330, %p331
      %p333 = scmp.ne.s32.totalorder %s322, %s323
      %p334 = scmp.eq.s32.totalorder %s36, 0
      %p335 = por %p333, %p334
      %p336 = scmp.ne.s32.totalorder %s322, %s323
      %p337 = scmp.eq.s32.totalorder %s37, 1
      %p338 = por %p336, %p337
      %p340 = scmp.ne.s32.totalorder %s323, %s339
      %p341 = scmp.eq.s32.totalorder %s37, 0
      %p342 = por %p340, %p341
      %p343 = scmp.le.s32.totalorder 1, %s31
      %p344 = scmp.lt.s32.totalorder %s31, 3
      %p345 = pnand %p343, %p344
      %p346 = pneg %p345
      // Predicated region
      $region9: #{_lambda_.10} parent=5 // pred_check
        _
      $region10: #{_lambda_.10} parent=5 // pred_check_branch
        %348 = sbr.rel (%p345) target = $region12
      $region11: #{_lambda_.10} parent=5 // pred_region
        %s349 = ssub.s32 %s31, 1
        // Predicated region
        $region13: #{_lambda_.10} parent=11 // pred_check
          %p350 = pneg %p78
        $region14: #{_lambda_.10} parent=11 // pred_check_branch
          %352 = sbr.rel (%p350) target = $region16
        $region15: #{_lambda_.10} parent=11 // pred_region
          %s354 = ssub.s32 512, 512
          %355 = vsyncadd [#allocation6], %s354
          %s356 = sshll.u32 [#allocation5], 4
          %s357 = int_to_ptr.vmem [resolvable:$true] %s356
          %362 = dma.hbm_to_vmem [thread:$0]  %s1, 512, %s357, [#allocation6], 64, 64, 4
        $region16: #{_lambda_.10} parent=11 // pred_fallthru
          _
        // Predicated region
        $region17: #{_lambda_.10} parent=11 // pred_check
          %p363 = pneg %p99
        $region18: #{_lambda_.10} parent=11 // pred_check_branch
          %365 = sbr.rel (%p363) target = $region20
        $region19: #{_lambda_.10} parent=11 // pred_region
          %s367 = ssub.s32 16, 16
          %368 = vsyncadd [#allocation6], %s367
          %s370 = sshll.u32 [#allocation7], 4
          %s371 = int_to_ptr.vmem [resolvable:$true] %s370
          %373 = dma.hbm_to_vmem [thread:$0]  %s2, 16, %s371, [#allocation6]
        $region20: #{_lambda_.10} parent=11 // pred_fallthru
          _
        // Predicated region
        $region21: #{_lambda_.10} parent=11 // pred_check
          %p374 = pneg %p120
        $region22: #{_lambda_.10} parent=11 // pred_check_branch
          %376 = sbr.rel (%p374) target = $region24
        $region23: #{_lambda_.10} parent=11 // pred_region
          %s378 = ssub.s32 768, 768
          %379 = vsyncadd [#allocation9], %s378
          %s380 = sshll.u32 [#allocation8], 4
          %s381 = int_to_ptr.vmem [resolvable:$true] %s380
          %386 = dma.hbm_to_vmem [thread:$0]  %s3, 768, %s381, [#allocation9], 64, 64, 4
        $region24: #{_lambda_.10} parent=11 // pred_fallthru
          _
        // Predicated region
        $region25: #{_lambda_.10} parent=11 // pred_check
          %p387 = pneg %p141
        $region26: #{_lambda_.10} parent=11 // pred_check_branch
          %389 = sbr.rel (%p387) target = $region28
        $region27: #{_lambda_.10} parent=11 // pred_region
          %s391 = ssub.s32 16, 16
          %392 = vsyncadd [#allocation9], %s391
          %s394 = sshll.u32 [#allocation10], 4
          %s395 = int_to_ptr.vmem [resolvable:$true] %s394
          %397 = dma.hbm_to_vmem [thread:$0]  %s4, 16, %s395, [#allocation9]
        $region28: #{_lambda_.10} parent=11 // pred_fallthru
          _
        // Predicated region
        $region29: #{_lambda_.10} parent=11 // pred_check
          %p398 = pneg %p162
        $region30: #{_lambda_.10} parent=11 // pred_check_branch
          %400 = sbr.rel (%p398) target = $region32
        $region31: #{_lambda_.10} parent=11 // pred_region
          %s402 = ssub.s32 768, 768
          %403 = vsyncadd [#allocation12], %s402
          %s404 = sshll.u32 [#allocation11], 4
          %s405 = int_to_ptr.vmem [resolvable:$true] %s404
          %410 = dma.hbm_to_vmem [thread:$0]  %s5, 768, %s405, [#allocation12], 64, 64, 4
        $region32: #{_lambda_.10} parent=11 // pred_fallthru
          _
        // Predicated region
        $region33: #{_lambda_.10} parent=11 // pred_check
          %p411 = pneg %p183
        $region34: #{_lambda_.10} parent=11 // pred_check_branch
          %413 = sbr.rel (%p411) target = $region36
        $region35: #{_lambda_.10} parent=11 // pred_region
          %s415 = ssub.s32 16, 16
          %416 = vsyncadd [#allocation12], %s415
          %s418 = sshll.u32 [#allocation13], 4
          %s419 = int_to_ptr.vmem [resolvable:$true] %s418
          %421 = dma.hbm_to_vmem [thread:$0]  %s6, 16, %s419, [#allocation12]
        $region36: #{_lambda_.10} parent=11 // pred_fallthru
          _
        // Predicated region
        $region37: #{_lambda_.10} parent=11 // pred_check
          %p422 = pneg %p204
        $region38: #{_lambda_.10} parent=11 // pred_check_branch
          %424 = sbr.rel (%p422) target = $region40
        $region39: #{_lambda_.10} parent=11 // pred_region
          %s426 = ssub.s32 768, 768
          %427 = vsyncadd [#allocation15], %s426
          %s428 = sshll.u32 [#allocation14], 4
          %s429 = int_to_ptr.vmem [resolvable:$true] %s428
          %434 = dma.hbm_to_vmem [thread:$0]  %s7, 768, %s429, [#allocation15], 64, 64, 4
        $region40: #{_lambda_.10} parent=11 // pred_fallthru
          _
        // Predicated region
        $region41: #{_lambda_.10} parent=11 // pred_check
          %p435 = pneg %p225
        $region42: #{_lambda_.10} parent=11 // pred_check_branch
          %437 = sbr.rel (%p435) target = $region44
        $region43: #{_lambda_.10} parent=11 // pred_region
          %s439 = ssub.s32 16, 16
          %440 = vsyncadd [#allocation15], %s439
          %s442 = sshll.u32 [#allocation16], 4
          %s443 = int_to_ptr.vmem [resolvable:$true] %s442
          %445 = dma.hbm_to_vmem [thread:$0]  %s8, 16, %s443, [#allocation15]
        $region44: #{_lambda_.10} parent=11 // pred_fallthru
          _
        // Predicated region
        $region45: #{_lambda_.10} parent=11 // pred_check
          %p446 = pneg %p246
        $region46: #{_lambda_.10} parent=11 // pred_check_branch
          %448 = sbr.rel (%p446) target = $region48
        $region47: #{_lambda_.10} parent=11 // pred_region
          %s450 = ssub.s32 256, 256
          %451 = vsyncadd [#allocation18], %s450
          %s452 = sshll.u32 [#allocation17], 4
          %s453 = int_to_ptr.vmem [resolvable:$true] %s452
          %458 = dma.hbm_to_vmem [thread:$0]  %s9, 256, %s453, [#allocation18], 64, 64, 4
        $region48: #{_lambda_.10} parent=11 // pred_fallthru
          _
        // Predicated region
        $region49: #{_lambda_.10} parent=11 // pred_check
          %p459 = pneg %p267
        $region50: #{_lambda_.10} parent=11 // pred_check_branch
          %461 = sbr.rel (%p459) target = $region52
        $region51: #{_lambda_.10} parent=11 // pred_region
          %s463 = ssub.s32 16, 16
          %464 = vsyncadd [#allocation18], %s463
          %s466 = sshll.u32 [#allocation19], 4
          %s467 = int_to_ptr.vmem [resolvable:$true] %s466
          %469 = dma.hbm_to_vmem [thread:$0]  %s10, 16, %s467, [#allocation18]
        $region52: #{_lambda_.10} parent=11 // pred_fallthru
          _
        // Predicated region
        $region53: #{_lambda_.10} parent=11 // pred_check
          %p470 = pneg %p288
        $region54: #{_lambda_.10} parent=11 // pred_check_branch
          %472 = sbr.rel (%p470) target = $region56
        $region55: #{_lambda_.10} parent=11 // pred_region
          %s474 = ssub.s32 512, 512
          %475 = vsyncadd [#allocation21], %s474
          %s476 = sshll.u32 [#allocation20], 4
          %s477 = int_to_ptr.vmem [resolvable:$true] %s476
          %482 = dma.hbm_to_vmem [thread:$0]  %s11, 512, %s477, [#allocation21], 128, 128, 8
        $region56: #{_lambda_.10} parent=11 // pred_fallthru
          _
        // Predicated region
        $region57: #{_lambda_.10} parent=11 // pred_check
          %p483 = pneg %p309
        $region58: #{_lambda_.10} parent=11 // pred_check_branch
          %485 = sbr.rel (%p483) target = $region60
        $region59: #{_lambda_.10} parent=11 // pred_region
          %s487 = ssub.s32 16, 16
          %488 = vsyncadd [#allocation21], %s487
          %s490 = sshll.u32 [#allocation22], 4
          %s491 = int_to_ptr.vmem [resolvable:$true] %s490
          %493 = dma.hbm_to_vmem [thread:$0]  %s12, 16, %s491, [#allocation21]
        $region60: #{_lambda_.10} parent=11 // pred_fallthru
          _
      $region12: #{_lambda_.10} parent=5 // pred_fallthru
        _
      %p494 = scmp.lt.s32.totalorder %s31, 2
      // Predicated region
      $region61: #{_lambda_.10} parent=5 // pred_check
        %p495 = pneg %p494
      $region62: #{_lambda_.10} parent=5 // pred_check_branch
        %497 = sbr.rel (%p495) target = $region64
      $region63: #{_lambda_.10} parent=5 // pred_region
        // Predicated region
        $region65: #{_lambda_.10} parent=63 // pred_check
          %p498 = pneg %p51
        $region66: #{_lambda_.10} parent=63 // pred_check_branch
          %500 = sbr.rel (%p498) target = $region68
        $region67: #{_lambda_.10} parent=63 // pred_region
          %s501 = sand.u32 %s41, 1
          %s502 = scalar_lea.sflag [#allocation3], %s501
          %s503 = sand.u32 %s41, 1
          %s504 = smul.addr %s503, 2
          %s505 = scalar_lea.vmem [#allocation2], %s504
          %s507 = ssub.s32 32, 32
          %508 = vsyncadd %s502, %s507
          %s509 = smul.addr %s31, 32
          %s510 = scalar_lea.hbm %s0, %s509
          %s512 = sshll.u32 %s505, 4
          %s513 = int_to_ptr.vmem [resolvable:$true] %s512
          %515 = dma.hbm_to_vmem [thread:$0]  %s510, 32, %s513, %s502
        $region68: #{_lambda_.10} parent=63 // pred_fallthru
          _
      $region64: #{_lambda_.10} parent=5 // pred_fallthru
        _
      %p516 = scmp.le.s32.totalorder 1, %s31
      %p517 = scmp.lt.s32.totalorder %s31, 3
      %p518 = pnand %p516, %p517
      %p519 = pneg %p518
      // Predicated region
      $region69: #{_lambda_.10} parent=5 // pred_check
        _
      $region70: #{_lambda_.10} parent=5 // pred_check_branch
        %521 = sbr.rel (%p518) target = $region72
      $region71: #{_lambda_.10} parent=5 // pred_region
        %s522 = ssub.s32 %s31, 1
        %s523 = sand.u32 %s44, 1
        %s524 = scalar_lea.sflag [#allocation3], %s523
        %s525 = sand.u32 %s44, 1
        %s526 = smul.addr %s525, 2
        %s527 = scalar_lea.vmem [#allocation2], %s526
        // Predicated region
        $region73: #{_lambda_.10} parent=71 // pred_check
          %p528 = pneg %p57
        $region74: #{_lambda_.10} parent=71 // pred_check_branch
          %530 = sbr.rel (%p528) target = $region76
        $region75: #{_lambda_.10} parent=71 // pred_region
          %531 = dma.done %s524, 32
        $region76: #{_lambda_.10} parent=71 // pred_fallthru
          _
        // Predicated region
        $region77: #{_lambda_.10} parent=71 // pred_check
          %p532 = pneg %p78
        $region78: #{_lambda_.10} parent=71 // pred_check_branch
          %534 = sbr.rel (%p532) target = $region80
        $region79: #{_lambda_.10} parent=71 // pred_region
          %535 = dma.done [#allocation6], 512
        $region80: #{_lambda_.10} parent=71 // pred_fallthru
          _
        // Predicated region
        $region81: #{_lambda_.10} parent=71 // pred_check
          %p536 = pneg %p99
        $region82: #{_lambda_.10} parent=71 // pred_check_branch
          %538 = sbr.rel (%p536) target = $region84
        $region83: #{_lambda_.10} parent=71 // pred_region
          %539 = dma.done [#allocation6], 16
        $region84: #{_lambda_.10} parent=71 // pred_fallthru
          _
        // Predicated region
        $region85: #{_lambda_.10} parent=71 // pred_check
          %p540 = pneg %p120
        $region86: #{_lambda_.10} parent=71 // pred_check_branch
          %542 = sbr.rel (%p540) target = $region88
        $region87: #{_lambda_.10} parent=71 // pred_region
          %543 = dma.done [#allocation9], 768
        $region88: #{_lambda_.10} parent=71 // pred_fallthru
          _
        // Predicated region
        $region89: #{_lambda_.10} parent=71 // pred_check
          %p544 = pneg %p141
        $region90: #{_lambda_.10} parent=71 // pred_check_branch
          %546 = sbr.rel (%p544) target = $region92
        $region91: #{_lambda_.10} parent=71 // pred_region
          %547 = dma.done [#allocation9], 16
        $region92: #{_lambda_.10} parent=71 // pred_fallthru
          _
        // Predicated region
        $region93: #{_lambda_.10} parent=71 // pred_check
          %p548 = pneg %p162
        $region94: #{_lambda_.10} parent=71 // pred_check_branch
          %550 = sbr.rel (%p548) target = $region96
        $region95: #{_lambda_.10} parent=71 // pred_region
          %551 = dma.done [#allocation12], 768
        $region96: #{_lambda_.10} parent=71 // pred_fallthru
          _
        // Predicated region
        $region97: #{_lambda_.10} parent=71 // pred_check
          %p552 = pneg %p183
        $region98: #{_lambda_.10} parent=71 // pred_check_branch
          %554 = sbr.rel (%p552) target = $region100
        $region99: #{_lambda_.10} parent=71 // pred_region
          %555 = dma.done [#allocation12], 16
        $region100: #{_lambda_.10} parent=71 // pred_fallthru
          _
        // Predicated region
        $region101: #{_lambda_.10} parent=71 // pred_check
          %p556 = pneg %p204
        $region102: #{_lambda_.10} parent=71 // pred_check_branch
          %558 = sbr.rel (%p556) target = $region104
        $region103: #{_lambda_.10} parent=71 // pred_region
          %559 = dma.done [#allocation15], 768
        $region104: #{_lambda_.10} parent=71 // pred_fallthru
          _
        // Predicated region
        $region105: #{_lambda_.10} parent=71 // pred_check
          %p560 = pneg %p225
        $region106: #{_lambda_.10} parent=71 // pred_check_branch
          %562 = sbr.rel (%p560) target = $region108
        $region107: #{_lambda_.10} parent=71 // pred_region
          %563 = dma.done [#allocation15], 16
        $region108: #{_lambda_.10} parent=71 // pred_fallthru
          _
        // Predicated region
        $region109: #{_lambda_.10} parent=71 // pred_check
          %p564 = pneg %p246
        $region110: #{_lambda_.10} parent=71 // pred_check_branch
          %566 = sbr.rel (%p564) target = $region112
        $region111: #{_lambda_.10} parent=71 // pred_region
          %567 = dma.done [#allocation18], 256
        $region112: #{_lambda_.10} parent=71 // pred_fallthru
          _
        // Predicated region
        $region113: #{_lambda_.10} parent=71 // pred_check
          %p568 = pneg %p267
        $region114: #{_lambda_.10} parent=71 // pred_check_branch
          %570 = sbr.rel (%p568) target = $region116
        $region115: #{_lambda_.10} parent=71 // pred_region
          %571 = dma.done [#allocation18], 16
        $region116: #{_lambda_.10} parent=71 // pred_fallthru
          _
        // Predicated region
        $region117: #{_lambda_.10} parent=71 // pred_check
          %p572 = pneg %p288
        $region118: #{_lambda_.10} parent=71 // pred_check_branch
          %574 = sbr.rel (%p572) target = $region120
        $region119: #{_lambda_.10} parent=71 // pred_region
          %575 = dma.done [#allocation21], 512
        $region120: #{_lambda_.10} parent=71 // pred_fallthru
          _
        // Predicated region
        $region121: #{_lambda_.10} parent=71 // pred_check
          %p576 = pneg %p309
        $region122: #{_lambda_.10} parent=71 // pred_check_branch
          %578 = sbr.rel (%p576) target = $region124
        $region123: #{_lambda_.10} parent=71 // pred_region
          %579 = dma.done [#allocation21], 16
        $region124: #{_lambda_.10} parent=71 // pred_fallthru
          _
        %s580 = sand.u32 %s44, 1
        %s581 = scalar_lea.sflag [#allocation3], %s580
        %s582 = sand.u32 %s44, 1
        %s583 = smul.addr %s582, 2
        %s584 = scalar_lea.vmem [#allocation2], %s583
        %p585 = pneg %p57
        %p586 = pneg %p54
        %p587 = pneg %p78
        %p588 = pneg %p75
        %p589 = pneg %p99
        %p590 = pneg %p96
        %p591 = pneg %p120
        %p592 = pneg %p117
        %p593 = pneg %p141
        %p594 = pneg %p138
        %p595 = pneg %p162
        %p596 = pneg %p159
        %p597 = pneg %p183
        %p598 = pneg %p180
        %p599 = pneg %p204
        %p600 = pneg %p201
        %p601 = pneg %p225
        %p602 = pneg %p222
        %p603 = pneg %p246
        %p604 = pneg %p243
        %p605 = pneg %p267
        %p606 = pneg %p264
        %p607 = pneg %p288
        %p608 = pneg %p285
        %p609 = pneg %p309
        %p610 = pneg %p306
        %p611 = pneg %p335
        %p612 = pneg %p332
        %s613 = sand.u32 %s322, 1
        %s614 = scalar_lea.sflag [#allocation4], %s613
        %s615 = sand.u32 %s322, 1
        %s616 = smul.addr %s615, 4
        %s617 = scalar_lea.vmem [#allocation23], %s616
        %v619 = vld [vmem:[%s527] sm:$0x3]
        %v620 = vld [vmem:[#allocation5] sm:$0xf]
        %v621 = vld [vmem:[#allocation5 + $0x4] sm:$0xf]
        %v622 = vld [vmem:[#allocation5 + $0x8] sm:$0xf]
        %v623 = vld [vmem:[#allocation5 + $0xc] sm:$0xf]
        %v624 = vld [vmem:[#allocation5 + $0x10] sm:$0xf]
        %v625 = vld [vmem:[#allocation5 + $0x14] sm:$0xf]
        %v626 = vld [vmem:[#allocation5 + $0x18] sm:$0xf]
        %v627 = vld [vmem:[#allocation5 + $0x1c] sm:$0xf]
        %v628 = vld [vmem:[#allocation7] sm:$0x1]
        %v631 = vunpack.c.l.s4 1983009808
        %v632 = vunpack.c.0.s8 %v631
        %v633 = vlaneseq
        %v634 = vshrl.u32 %v633, 7
        %v635 = vsub.s32 %v632, %v634
        %v636 = vrot.slane %v619, %v635
        %v638 = vshrl.u32 %v636, 16
        %v640 = vrot.slane %v638, 7
        %v641 = vshll.u32 %v636, 16
        %v643 = vor.u32 %v640, %v641
        %644 = vrot.lane.b32.xlu0 %v643, 112
        %v645 = vpop.permute.xlu0 %644
        %vm647 = vcmask 1040384
        %vm648 = vsmask.f32 256
        %vm649 = vmand %vm647, %vm648
        %v650 = vsel %vm649, 0, %v645
        %v651 = vrot.slane %v641, 1
        %v652 = vor.u32 %v638, %v651
        %vm654 = vcmask 1041408
        %vm655 = vsmask.f32 1280
        %vm656 = vmand %vm654, %vm655
        %v657 = vsel %vm656, %v652, 0
        %658 = vrot.lane.b32.xlu0 %v636, 16
        %v659 = vpop.permute.xlu0 %658
        %661 = vrot.lane.b32.xlu0 %v657, 48
        %v662 = vpop.permute.xlu0 %661
        %vm663 = vcmask 130048
        %v666 = vsel %vm663, %v650, %v659
        %vm667 = vcmask 261120
        %v668 = vsel %vm667, %v666, %v659
        %vm669 = vcmask 392192
        %v671 = vsel %vm669, %v668, %v662
        %v673 = vlaneseq
        %v674 = vshrl.u32 %v673, 7
        %v675 = vsub.s32 0, %v674
        %v676 = vrot.slane %v628, %v675
        %v686 = vunpack.c.l.b16 %v620
        %v687 = vunpack.c.l.b16 %v621
        %v688 = vunpack.c.l.b16 %v622
        %v689 = vunpack.c.l.b16 %v623
        %v690 = vunpack.c.l.b16 %v624
        %v691 = vunpack.c.l.b16 %v625
        %v692 = vunpack.c.l.b16 %v626
        %v693 = vunpack.c.l.b16 %v627
        %v694 = vpack.c.b16 %v687, %v686
        %v695 = vpack.c.b16 %v689, %v688
        %v696 = vpack.c.b16 %v691, %v690
        %v697 = vpack.c.b16 %v693, %v692
        %vm702 = vcmask 523264
        %v703 = vsel %vm702, %v671, 0
        %705 = vmatprep.subr.bf16.mxu0 0
        %706 = vmatpush1.bf16.msra.mxu0 %v694
        %707 = vmatprep.subr.bf16.mxu0 0
        %708 = vmatpush1.bf16.msra.mxu0 %v695
        %709 = vmatprep.subr.bf16.mxu0 0
        %710 = vmatpush1.bf16.msra.mxu0 %v696
        %711 = vmatprep.subr.bf16.mxu0 0
        %712 = vmatpush1.bf16.msra.mxu0 %v697
        %713 = vmatprep.subr.bf16.mxu0 0
        %714 = vmatpush1.bf16.msra.mxu0 0
        %715 = vmatprep.subr.bf16.mxu0 0
        %716 = vmatpush1.bf16.msra.mxu0 0
        %717 = vmatprep.subr.bf16.mxu0 0
        %718 = vmatpush1.bf16.msra.mxu0 0
        %719 = vmatprep.subr.bf16.mxu0 0
        %720 = vmatpush1.bf16.msra.mxu0 0
        %721 = vmatprep.subr.bf16.mxu0 0
        %722 = vmatpush1.bf16.msra.mxu0 0
        %723 = vmatprep.subr.bf16.mxu0 0
        %724 = vmatpush1.bf16.msra.mxu0 0
        %725 = vmatprep.subr.bf16.mxu0 0
        %726 = vmatpush1.bf16.msra.mxu0 0
        %727 = vmatprep.subr.bf16.mxu0 0
        %728 = vmatpush1.bf16.msra.mxu0 0
        %729 = vmatprep.subr.bf16.mxu0 0
        %730 = vmatpush1.bf16.msra.mxu0 0
        %731 = vmatprep.subr.bf16.mxu0 0
        %732 = vmatpush1.bf16.msra.mxu0 0
        %733 = vmatprep.subr.bf16.mxu0 0
        %734 = vmatpush1.bf16.msra.mxu0 0
        %735 = vmatprep.subr.bf16.mxu0 0
        %736 = vmatpush1.bf16.msra.mxu0 0
        %737 = vmatprep.mubr.bf16.mxu0 0
        %738 = vmatmul.mubr.bf16.gmra.mrb[0].mxu0 %v703
        %v739 = vpop.f32.mrb[0].mxu0
        %v740 = vadd.f32 %v676, %v739
        %v741 = vpop.f32.mrb[0].mxu0
        %v742 = vpop.f32.mrb[0].mxu0
        %v743 = vpop.f32.mrb[0].mxu0
        %744 = vdwg.mxu0
        %vm745 = vcmp.gt.f32.partialorder %v740, 0.0
        %v746 = vmul.f32 %v740, 0.2
        %v747 = vsel %vm745, %v740, %v746
        %v748 = vld [vmem:[#allocation8] sm:$0xf]
        %v749 = vld [vmem:[#allocation8 + $0x4] sm:$0xf]
        %v750 = vld [vmem:[#allocation8 + $0x8] sm:$0xf]
        %v751 = vld [vmem:[#allocation8 + $0xc] sm:$0xf]
        %v752 = vld [vmem:[#allocation8 + $0x10] sm:$0xf]
        %v753 = vld [vmem:[#allocation8 + $0x14] sm:$0xf]
        %v754 = vld [vmem:[#allocation8 + $0x18] sm:$0xf]
        %v755 = vld [vmem:[#allocation8 + $0x1c] sm:$0xf]
        %v756 = vld [vmem:[#allocation8 + $0x20] sm:$0xf]
        %v757 = vld [vmem:[#allocation8 + $0x24] sm:$0xf]
        %v758 = vld [vmem:[#allocation8 + $0x28] sm:$0xf]
        %v759 = vld [vmem:[#allocation8 + $0x2c] sm:$0xf]
        %v760 = vld [vmem:[#allocation10] sm:$0x1]
        %v761 = vpack.c.bf16 %v747, %v747
        %v763 = vshrl.u32 %v761, 16
        %v765 = vrot.slane %v763, 7
        %v766 = vshll.u32 %v761, 16
        %v768 = vor.u32 %v765, %v766
        %v770 = vsel %vm649, 0, %v768
        %v771 = vrot.slane %v766, 1
        %v772 = vor.u32 %v763, %v771
        %v774 = vsel %vm656, %v772, 0
        %776 = vrot.lane.b32.xlu0 %v761, 32
        %v777 = vpop.permute.xlu0 %776
        %779 = vrot.lane.b32.xlu0 %v774, 64
        %v780 = vpop.permute.xlu0 %779
        %v783 = vsel %vm667, %v770, %v777
        %v785 = vsel %vm702, %v783, %v780
        %v787 = vlaneseq
        %v788 = vshrl.u32 %v787, 7
        %v789 = vsub.s32 0, %v788
        %v790 = vrot.slane %v760, %v789
        %v804 = vunpack.c.l.b16 %v748
        %v805 = vunpack.c.l.b16 %v749
        %v806 = vunpack.c.l.b16 %v750
        %v807 = vunpack.c.l.b16 %v751
        %v808 = vunpack.c.l.b16 %v752
        %v809 = vunpack.c.l.b16 %v753
        %v810 = vunpack.c.l.b16 %v754
        %v811 = vunpack.c.l.b16 %v755
        %v812 = vunpack.c.l.b16 %v756
        %v813 = vunpack.c.l.b16 %v757
        %v814 = vunpack.c.l.b16 %v758
        %v815 = vunpack.c.l.b16 %v759
        %v816 = vpack.c.b16 %v805, %v804
        %v817 = vpack.c.b16 %v807, %v806
        %v818 = vpack.c.b16 %v809, %v808
        %v819 = vpack.c.b16 %v811, %v810
        %v820 = vpack.c.b16 %v813, %v812
        %v821 = vpack.c.b16 %v815, %v814
        %vm828 = vcmask 785408
        %v829 = vsel %vm828, %v785, 0
        %831 = vmatprep.subr.bf16.mxu0 0
        %832 = vmatpush1.bf16.msra.mxu0 %v816
        %833 = vmatprep.subr.bf16.mxu0 0
        %834 = vmatpush1.bf16.msra.mxu0 %v817
        %835 = vmatprep.subr.bf16.mxu0 0
        %836 = vmatpush1.bf16.msra.mxu0 %v818
        %837 = vmatprep.subr.bf16.mxu0 0
        %838 = vmatpush1.bf16.msra.mxu0 %v819
        %839 = vmatprep.subr.bf16.mxu0 0
        %840 = vmatpush1.bf16.msra.mxu0 %v820
        %841 = vmatprep.subr.bf16.mxu0 0
        %842 = vmatpush1.bf16.msra.mxu0 %v821
        %843 = vmatprep.subr.bf16.mxu0 0
        %844 = vmatpush1.bf16.msra.mxu0 0
        %845 = vmatprep.subr.bf16.mxu0 0
        %846 = vmatpush1.bf16.msra.mxu0 0
        %847 = vmatprep.subr.bf16.mxu0 0
        %848 = vmatpush1.bf16.msra.mxu0 0
        %849 = vmatprep.subr.bf16.mxu0 0
        %850 = vmatpush1.bf16.msra.mxu0 0
        %851 = vmatprep.subr.bf16.mxu0 0
        %852 = vmatpush1.bf16.msra.mxu0 0
        %853 = vmatprep.subr.bf16.mxu0 0
        %854 = vmatpush1.bf16.msra.mxu0 0
        %855 = vmatprep.subr.bf16.mxu0 0
        %856 = vmatpush1.bf16.msra.mxu0 0
        %857 = vmatprep.subr.bf16.mxu0 0
        %858 = vmatpush1.bf16.msra.mxu0 0
        %859 = vmatprep.subr.bf16.mxu0 0
        %860 = vmatpush1.bf16.msra.mxu0 0
        %861 = vmatprep.subr.bf16.mxu0 0
        %862 = vmatpush1.bf16.msra.mxu0 0
        %863 = vmatprep.mubr.bf16.mxu0 0
        %864 = vmatmul.mubr.bf16.gmra.mrb[0].mxu0 %v829
        %v865 = vpop.f32.mrb[0].mxu0
        %v866 = vadd.f32 %v790, %v865
        %v867 = vpop.f32.mrb[0].mxu0
        %v868 = vpop.f32.mrb[0].mxu0
        %v869 = vpop.f32.mrb[0].mxu0
        %870 = vdwg.mxu0
        %v871 = vadd.f32 %v866, %v747
        %vm872 = vcmp.gt.f32.partialorder %v871, 0.0
        %v873 = vmul.f32 %v871, 0.2
        %v874 = vsel %vm872, %v871, %v873
        %v875 = vld [vmem:[#allocation11] sm:$0xf]
        %v876 = vld [vmem:[#allocation11 + $0x4] sm:$0xf]
        %v877 = vld [vmem:[#allocation11 + $0x8] sm:$0xf]
        %v878 = vld [vmem:[#allocation11 + $0xc] sm:$0xf]
        %v879 = vld [vmem:[#allocation11 + $0x10] sm:$0xf]
        %v880 = vld [vmem:[#allocation11 + $0x14] sm:$0xf]
        %v881 = vld [vmem:[#allocation11 + $0x18] sm:$0xf]
        %v882 = vld [vmem:[#allocation11 + $0x1c] sm:$0xf]
        %v883 = vld [vmem:[#allocation11 + $0x20] sm:$0xf]
        %v884 = vld [vmem:[#allocation11 + $0x24] sm:$0xf]
        %v885 = vld [vmem:[#allocation11 + $0x28] sm:$0xf]
        %v886 = vld [vmem:[#allocation11 + $0x2c] sm:$0xf]
        %v887 = vld [vmem:[#allocation13] sm:$0x1]
        %v888 = vpack.c.bf16 %v874, %v874
        %v890 = vshrl.u32 %v888, 16
        %v892 = vrot.slane %v890, 7
        %v893 = vshll.u32 %v888, 16
        %v895 = vor.u32 %v892, %v893
        %v897 = vsel %vm649, 0, %v895
        %v898 = vrot.slane %v893, 1
        %v899 = vor.u32 %v890, %v898
        %v901 = vsel %vm656, %v899, 0
        %903 = vrot.lane.b32.xlu0 %v888, 32
        %v904 = vpop.permute.xlu0 %903
        %906 = vrot.lane.b32.xlu0 %v901, 64
        %v907 = vpop.permute.xlu0 %906
        %v910 = vsel %vm667, %v897, %v904
        %v912 = vsel %vm702, %v910, %v907
        %v914 = vlaneseq
        %v915 = vshrl.u32 %v914, 7
        %v916 = vsub.s32 0, %v915
        %v917 = vrot.slane %v887, %v916
        %v931 = vunpack.c.l.b16 %v875
        %v932 = vunpack.c.l.b16 %v876
        %v933 = vunpack.c.l.b16 %v877
        %v934 = vunpack.c.l.b16 %v878
        %v935 = vunpack.c.l.b16 %v879
        %v936 = vunpack.c.l.b16 %v880
        %v937 = vunpack.c.l.b16 %v881
        %v938 = vunpack.c.l.b16 %v882
        %v939 = vunpack.c.l.b16 %v883
        %v940 = vunpack.c.l.b16 %v884
        %v941 = vunpack.c.l.b16 %v885
        %v942 = vunpack.c.l.b16 %v886
        %v943 = vpack.c.b16 %v932, %v931
        %v944 = vpack.c.b16 %v934, %v933
        %v945 = vpack.c.b16 %v936, %v935
        %v946 = vpack.c.b16 %v938, %v937
        %v947 = vpack.c.b16 %v940, %v939
        %v948 = vpack.c.b16 %v942, %v941
        %v955 = vsel %vm828, %v912, 0
        %957 = vmatprep.subr.bf16.mxu0 0
        %958 = vmatpush1.bf16.msra.mxu0 %v943
        %959 = vmatprep.subr.bf16.mxu0 0
        %960 = vmatpush1.bf16.msra.mxu0 %v944
        %961 = vmatprep.subr.bf16.mxu0 0
        %962 = vmatpush1.bf16.msra.mxu0 %v945
        %963 = vmatprep.subr.bf16.mxu0 0
        %964 = vmatpush1.bf16.msra.mxu0 %v946
        %965 = vmatprep.subr.bf16.mxu0 0
        %966 = vmatpush1.bf16.msra.mxu0 %v947
        %967 = vmatprep.subr.bf16.mxu0 0
        %968 = vmatpush1.bf16.msra.mxu0 %v948
        %969 = vmatprep.subr.bf16.mxu0 0
        %970 = vmatpush1.bf16.msra.mxu0 0
        %971 = vmatprep.subr.bf16.mxu0 0
        %972 = vmatpush1.bf16.msra.mxu0 0
        %973 = vmatprep.subr.bf16.mxu0 0
        %974 = vmatpush1.bf16.msra.mxu0 0
        %975 = vmatprep.subr.bf16.mxu0 0
        %976 = vmatpush1.bf16.msra.mxu0 0
        %977 = vmatprep.subr.bf16.mxu0 0
        %978 = vmatpush1.bf16.msra.mxu0 0
        %979 = vmatprep.subr.bf16.mxu0 0
        %980 = vmatpush1.bf16.msra.mxu0 0
        %981 = vmatprep.subr.bf16.mxu0 0
        %982 = vmatpush1.bf16.msra.mxu0 0
        %983 = vmatprep.subr.bf16.mxu0 0
        %984 = vmatpush1.bf16.msra.mxu0 0
        %985 = vmatprep.subr.bf16.mxu0 0
        %986 = vmatpush1.bf16.msra.mxu0 0
        %987 = vmatprep.subr.bf16.mxu0 0
        %988 = vmatpush1.bf16.msra.mxu0 0
        %989 = vmatprep.mubr.bf16.mxu0 0
        %990 = vmatmul.mubr.bf16.gmra.mrb[0].mxu0 %v955
        %v991 = vpop.f32.mrb[0].mxu0
        %v992 = vadd.f32 %v917, %v991
        %v993 = vpop.f32.mrb[0].mxu0
        %v994 = vpop.f32.mrb[0].mxu0
        %v995 = vpop.f32.mrb[0].mxu0
        %996 = vdwg.mxu0
        %v997 = vadd.f32 %v992, %v874
        %vm998 = vcmp.gt.f32.partialorder %v997, 0.0
        %v999 = vmul.f32 %v997, 0.2
        %v1000 = vsel %vm998, %v997, %v999
        %v1001 = vld [vmem:[#allocation14] sm:$0xf]
        %v1002 = vld [vmem:[#allocation14 + $0x4] sm:$0xf]
        %v1003 = vld [vmem:[#allocation14 + $0x8] sm:$0xf]
        %v1004 = vld [vmem:[#allocation14 + $0xc] sm:$0xf]
        %v1005 = vld [vmem:[#allocation14 + $0x10] sm:$0xf]
        %v1006 = vld [vmem:[#allocation14 + $0x14] sm:$0xf]
        %v1007 = vld [vmem:[#allocation14 + $0x18] sm:$0xf]
        %v1008 = vld [vmem:[#allocation14 + $0x1c] sm:$0xf]
        %v1009 = vld [vmem:[#allocation14 + $0x20] sm:$0xf]
        %v1010 = vld [vmem:[#allocation14 + $0x24] sm:$0xf]
        %v1011 = vld [vmem:[#allocation14 + $0x28] sm:$0xf]
        %v1012 = vld [vmem:[#allocation14 + $0x2c] sm:$0xf]
        %v1013 = vld [vmem:[#allocation16] sm:$0x1]
        %v1014 = vpack.c.bf16 %v1000, %v1000
        %v1016 = vshrl.u32 %v1014, 16
        %v1018 = vrot.slane %v1016, 7
        %v1019 = vshll.u32 %v1014, 16
        %v1021 = vor.u32 %v1018, %v1019
        %v1023 = vsel %vm649, 0, %v1021
        %v1024 = vrot.slane %v1019, 1
        %v1025 = vor.u32 %v1016, %v1024
        %v1027 = vsel %vm656, %v1025, 0
        %1029 = vrot.lane.b32.xlu0 %v1014, 32
        %v1030 = vpop.permute.xlu0 %1029
        %1032 = vrot.lane.b32.xlu0 %v1027, 64
        %v1033 = vpop.permute.xlu0 %1032
        %v1036 = vsel %vm667, %v1023, %v1030
        %v1038 = vsel %vm702, %v1036, %v1033
        %v1040 = vlaneseq
        %v1041 = vshrl.u32 %v1040, 7
        %v1042 = vsub.s32 0, %v1041
        %v1043 = vrot.slane %v1013, %v1042
        %v1057 = vunpack.c.l.b16 %v1001
        %v1058 = vunpack.c.l.b16 %v1002
        %v1059 = vunpack.c.l.b16 %v1003
        %v1060 = vunpack.c.l.b16 %v1004
        %v1061 = vunpack.c.l.b16 %v1005
        %v1062 = vunpack.c.l.b16 %v1006
        %v1063 = vunpack.c.l.b16 %v1007
        %v1064 = vunpack.c.l.b16 %v1008
        %v1065 = vunpack.c.l.b16 %v1009
        %v1066 = vunpack.c.l.b16 %v1010
        %v1067 = vunpack.c.l.b16 %v1011
        %v1068 = vunpack.c.l.b16 %v1012
        %v1069 = vpack.c.b16 %v1058, %v1057
        %v1070 = vpack.c.b16 %v1060, %v1059
        %v1071 = vpack.c.b16 %v1062, %v1061
        %v1072 = vpack.c.b16 %v1064, %v1063
        %v1073 = vpack.c.b16 %v1066, %v1065
        %v1074 = vpack.c.b16 %v1068, %v1067
        %v1081 = vsel %vm828, %v1038, 0
        %1083 = vmatprep.subr.bf16.mxu0 0
        %1084 = vmatpush1.bf16.msra.mxu0 %v1069
        %1085 = vmatprep.subr.bf16.mxu0 0
        %1086 = vmatpush1.bf16.msra.mxu0 %v1070
        %1087 = vmatprep.subr.bf16.mxu0 0
        %1088 = vmatpush1.bf16.msra.mxu0 %v1071
        %1089 = vmatprep.subr.bf16.mxu0 0
        %1090 = vmatpush1.bf16.msra.mxu0 %v1072
        %1091 = vmatprep.subr.bf16.mxu0 0
        %1092 = vmatpush1.bf16.msra.mxu0 %v1073
        %1093 = vmatprep.subr.bf16.mxu0 0
        %1094 = vmatpush1.bf16.msra.mxu0 %v1074
        %1095 = vmatprep.subr.bf16.mxu0 0
        %1096 = vmatpush1.bf16.msra.mxu0 0
        %1097 = vmatprep.subr.bf16.mxu0 0
        %1098 = vmatpush1.bf16.msra.mxu0 0
        %1099 = vmatprep.subr.bf16.mxu0 0
        %1100 = vmatpush1.bf16.msra.mxu0 0
        %1101 = vmatprep.subr.bf16.mxu0 0
        %1102 = vmatpush1.bf16.msra.mxu0 0
        %1103 = vmatprep.subr.bf16.mxu0 0
        %1104 = vmatpush1.bf16.msra.mxu0 0
        %1105 = vmatprep.subr.bf16.mxu0 0
        %1106 = vmatpush1.bf16.msra.mxu0 0
        %1107 = vmatprep.subr.bf16.mxu0 0
        %1108 = vmatpush1.bf16.msra.mxu0 0
        %1109 = vmatprep.subr.bf16.mxu0 0
        %1110 = vmatpush1.bf16.msra.mxu0 0
        %1111 = vmatprep.subr.bf16.mxu0 0
        %1112 = vmatpush1.bf16.msra.mxu0 0
        %1113 = vmatprep.subr.bf16.mxu0 0
        %1114 = vmatpush1.bf16.msra.mxu0 0
        %1115 = vmatprep.mubr.bf16.mxu0 0
        %1116 = vmatmul.mubr.bf16.gmra.mrb[0].mxu0 %v1081
        %v1117 = vpop.f32.mrb[0].mxu0
        %v1118 = vadd.f32 %v1043, %v1117
        %v1119 = vpop.f32.mrb[0].mxu0
        %v1120 = vpop.f32.mrb[0].mxu0
        %v1121 = vpop.f32.mrb[0].mxu0
        %1122 = vdwg.mxu0
        %v1123 = vadd.f32 %v1118, %v747
        %v1124 = vmax.f32 %v1123, 0.0
        %v1125 = vld [vmem:[#allocation17] sm:$0xf]
        %v1126 = vld [vmem:[#allocation17 + $0x4] sm:$0xf]
        %v1127 = vld [vmem:[#allocation17 + $0x8] sm:$0xf]
        %v1128 = vld [vmem:[#allocation17 + $0xc] sm:$0xf]
        %v1129 = vld [vmem:[#allocation19] sm:$0x1]
        %v1130 = vpack.c.bf16 %v1124, %v1124
        %v1132 = vlaneseq
        %v1133 = vshrl.u32 %v1132, 7
        %v1134 = vsub.s32 0, %v1133
        %v1135 = vrot.slane %v1129, %v1134
        %v1141 = vunpack.c.l.b16 %v1125
        %v1142 = vunpack.c.l.b16 %v1126
        %v1143 = vunpack.c.l.b16 %v1127
        %v1144 = vunpack.c.l.b16 %v1128
        %v1145 = vpack.c.b16 %v1142, %v1141
        %v1146 = vpack.c.b16 %v1144, %v1143
        %v1150 = vsel %vm667, %v1130, 0
        %1152 = vmatprep.subr.bf16.mxu0 0
        %1153 = vmatpush1.bf16.msra.mxu0 %v1145
        %1154 = vmatprep.subr.bf16.mxu0 0
        %1155 = vmatpush1.bf16.msra.mxu0 %v1146
        %1156 = vmatprep.subr.bf16.mxu0 0
        %1157 = vmatpush1.bf16.msra.mxu0 0
        %1158 = vmatprep.subr.bf16.mxu0 0
        %1159 = vmatpush1.bf16.msra.mxu0 0
        %1160 = vmatprep.subr.bf16.mxu0 0
        %1161 = vmatpush1.bf16.msra.mxu0 0
        %1162 = vmatprep.subr.bf16.mxu0 0
        %1163 = vmatpush1.bf16.msra.mxu0 0
        %1164 = vmatprep.subr.bf16.mxu0 0
        %1165 = vmatpush1.bf16.msra.mxu0 0
        %1166 = vmatprep.subr.bf16.mxu0 0
        %1167 = vmatpush1.bf16.msra.mxu0 0
        %1168 = vmatprep.subr.bf16.mxu0 0
        %1169 = vmatpush1.bf16.msra.mxu0 0
        %1170 = vmatprep.subr.bf16.mxu0 0
        %1171 = vmatpush1.bf16.msra.mxu0 0
        %1172 = vmatprep.subr.bf16.mxu0 0
        %1173 = vmatpush1.bf16.msra.mxu0 0
        %1174 = vmatprep.subr.bf16.mxu0 0
        %1175 = vmatpush1.bf16.msra.mxu0 0
        %1176 = vmatprep.subr.bf16.mxu0 0
        %1177 = vmatpush1.bf16.msra.mxu0 0
        %1178 = vmatprep.subr.bf16.mxu0 0
        %1179 = vmatpush1.bf16.msra.mxu0 0
        %1180 = vmatprep.subr.bf16.mxu0 0
        %1181 = vmatpush1.bf16.msra.mxu0 0
        %1182 = vmatprep.subr.bf16.mxu0 0
        %1183 = vmatpush1.bf16.msra.mxu0 0
        %1184 = vmatprep.mubr.bf16.mxu0 0
        %1185 = vmatmul.mubr.bf16.gmra.mrb[0].mxu0 %v1150
        %v1186 = vpop.f32.mrb[0].mxu0
        %v1187 = vadd.f32 %v1135, %v1186
        %v1188 = vpop.f32.mrb[0].mxu0
        %v1189 = vpop.f32.mrb[0].mxu0
        %v1190 = vpop.f32.mrb[0].mxu0
        %1191 = vdwg.mxu0
        %v1192 = vld [vmem:[#allocation20] sm:$0xff]
        %v1193 = vld [vmem:[#allocation20 + $0x8] sm:$0xff]
        %v1194 = vld [vmem:[#allocation20 + $0x10] sm:$0xff]
        %v1195 = vld [vmem:[#allocation20 + $0x18] sm:$0xff]
        %v1196 = vld [vmem:[#allocation22] sm:$0x1]
        %v1197 = vpack.c.bf16 %v1187, %v1187
        %v1198 = vpack.c.bf16 %v1193, %v1192
        %v1199 = vpack.c.bf16 %v1195, %v1194
        %v1201 = vsel %vm663, %v1197, 0
        %v1204 = vsel %vm663, %v1198, 0
        %v1207 = vsel %vm663, %v1199, 0
        %1209 = vmatprep.subr.bf16.mxu0 0
        %1210 = vmatpush1.bf16.xpose.msra.mxu0 %v1204
        %1211 = vmatprep.subr.bf16.mxu0 0
        %1212 = vmatpush1.bf16.xpose.msra.mxu0 %v1207
        %1213 = vmatprep.subr.bf16.mxu0 0
        %1214 = vmatpush1.bf16.xpose.msra.mxu0 0
        %1215 = vmatprep.subr.bf16.mxu0 0
        %1216 = vmatpush1.bf16.xpose.msra.mxu0 0
        %1217 = vmatprep.subr.bf16.mxu0 0
        %1218 = vmatpush1.bf16.xpose.msra.mxu0 0
        %1219 = vmatprep.subr.bf16.mxu0 0
        %1220 = vmatpush1.bf16.xpose.msra.mxu0 0
        %1221 = vmatprep.subr.bf16.mxu0 0
        %1222 = vmatpush1.bf16.xpose.msra.mxu0 0
        %1223 = vmatprep.subr.bf16.mxu0 0
        %1224 = vmatpush1.bf16.xpose.msra.mxu0 0
        %1225 = vmatprep.subr.bf16.mxu0 0
        %1226 = vmatpush1.bf16.xpose.msra.mxu0 0
        %1227 = vmatprep.subr.bf16.mxu0 0
        %1228 = vmatpush1.bf16.xpose.msra.mxu0 0
        %1229 = vmatprep.subr.bf16.mxu0 0
        %1230 = vmatpush1.bf16.xpose.msra.mxu0 0
        %1231 = vmatprep.subr.bf16.mxu0 0
        %1232 = vmatpush1.bf16.xpose.msra.mxu0 0
        %1233 = vmatprep.subr.bf16.mxu0 0
        %1234 = vmatpush1.bf16.xpose.msra.mxu0 0
        %1235 = vmatprep.subr.bf16.mxu0 0
        %1236 = vmatpush1.bf16.xpose.msra.mxu0 0
        %1237 = vmatprep.subr.bf16.mxu0 0
        %1238 = vmatpush1.bf16.xpose.msra.mxu0 0
        %1239 = vmatprep.subr.bf16.mxu0 0
        %1240 = vmatpush1.bf16.xpose.msra.mxu0 0
        %1241 = vmatprep.mubr.bf16.mxu0 0
        %1242 = vmatmul.mubr.bf16.gmra.mrb[0].mxu0 %v1201
        %v1243 = vpop.f32.mrb[0].mxu0
        %v1244 = vadd.f32 0.0, %v1243
        %v1245 = vpop.f32.mrb[0].mxu0
        %v1246 = vpop.f32.mrb[0].mxu0
        %v1247 = vpop.f32.mrb[0].mxu0
        %1248 = vdwg.mxu0
        %v1249 = vmul.f32 %v1244, 2.0
        %v1251 = vlaneseq
        %v1252 = vshrl.u32 %v1251, 7
        %v1253 = vsub.s32 0, %v1252
        %v1254 = vrot.slane %v1196, %v1253
        %v1256 = vsub.f32 %v1254, %v1249
        %v1257 = vlaneseq
        %v1258 = vand.u32 %v1257, 127
        %vm1259 = vcmask 257024
        %v1260 = vsel %vm1259, %v1256, inf
        %1261 = vmin.xlane.f32.xlu0 %v1260
        %v1262 = vpop.xlane.xlu0 %1261
        %vm1263 = vcmp.eq.f32.partialorder %v1256, %v1262
        %v1264 = vsel %vm1263, %v1258, 32
        %v1265 = vsel %vm1259, %v1264, 2147483647
        %v1266 = vand.u32 %v1265, 65535
        %v1267 = vshra.s32 %v1265, 16
        %v1268 = vcvt.s32.f32 %v1266
        %v1269 = vcvt.s32.f32 %v1267
        %1270 = vmin.xlane.f32.xlu0 %v1269
        %v1271 = vpop.xlane.xlu0 %1270
        %vm1272 = vcmp.eq.f32.partialorder %v1269, %v1271
        %v1273 = vsel %vm1272, %v1268, inf
        %1274 = vmin.xlane.f32.xlu0 %v1273
        %v1275 = vpop.xlane.xlu0 %1274
        %v1276 = vcvt.f32.s32 %v1275
        %v1277 = vcvt.f32.s32 %v1271
        %v1278 = vshll.u32 %v1277, 16
        %v1279 = vadd.s32 %v1278, %v1276
        %vm1280 = vcmp.eq.s32.totalorder %v1258, %v1279
        %v1281 = vsel %vm1280, 1, 0
        %v1282 = vcvt.s32.f32 %v1281
        %v1284 = vsel %vm667, %v1282, 0
        %1286 = vmatprep.subr.mxu0 0.0
        %1287 = vmatpush1.msra.mxu0 %v1192
        %1288 = vmatprep.subr.mxu0 0.0
        %1289 = vmatpush1.msra.mxu0 %v1193
        %1290 = vmatprep.subr.mxu0 0.0
        %1291 = vmatpush1.msra.mxu0 %v1194
        %1292 = vmatprep.subr.mxu0 0.0
        %1293 = vmatpush1.msra.mxu0 %v1195
        %1294 = vmatprep.subr.mxu0 0.0
        %1295 = vmatpush1.msra.mxu0 0.0
        %1296 = vmatprep.subr.mxu0 0.0
        %1297 = vmatpush1.msra.mxu0 0.0
        %1298 = vmatprep.subr.mxu0 0.0
        %1299 = vmatpush1.msra.mxu0 0.0
        %1300 = vmatprep.subr.mxu0 0.0
        %1301 = vmatpush1.msra.mxu0 0.0
        %1302 = vmatprep.subr.mxu0 0.0
        %1303 = vmatpush1.msra.mxu0 0.0
        %1304 = vmatprep.subr.mxu0 0.0
        %1305 = vmatpush1.msra.mxu0 0.0
        %1306 = vmatprep.subr.mxu0 0.0
        %1307 = vmatpush1.msra.mxu0 0.0
        %1308 = vmatprep.subr.mxu0 0.0
        %1309 = vmatpush1.msra.mxu0 0.0
        %1310 = vmatprep.subr.mxu0 0.0
        %1311 = vmatpush1.msra.mxu0 0.0
        %1312 = vmatprep.subr.mxu0 0.0
        %1313 = vmatpush1.msra.mxu0 0.0
        %1314 = vmatprep.subr.mxu0 0.0
        %1315 = vmatpush1.msra.mxu0 0.0
        %1316 = vmatprep.subr.mxu0 0.0
        %1317 = vmatpush1.msra.mxu0 0.0
        %1318 = vmatprep.subr.mxu0 0.0
        %1319 = vmatpush1.msra.mxu0 0.0
        %1320 = vmatprep.subr.mxu0 0.0
        %1321 = vmatpush1.msra.mxu0 0.0
        %1322 = vmatprep.subr.mxu0 0.0
        %1323 = vmatpush1.msra.mxu0 0.0
        %1324 = vmatprep.subr.mxu0 0.0
        %1325 = vmatpush1.msra.mxu0 0.0
        %1326 = vmatprep.subr.mxu0 0.0
        %1327 = vmatpush1.msra.mxu0 0.0
        %1328 = vmatprep.subr.mxu0 0.0
        %1329 = vmatpush1.msra.mxu0 0.0
        %1330 = vmatprep.subr.mxu0 0.0
        %1331 = vmatpush1.msra.mxu0 0.0
        %1332 = vmatprep.subr.mxu0 0.0
        %1333 = vmatpush1.msra.mxu0 0.0
        %1334 = vmatprep.subr.mxu0 0.0
        %1335 = vmatpush1.msra.mxu0 0.0
        %1336 = vmatprep.subr.mxu0 0.0
        %1337 = vmatpush1.msra.mxu0 0.0
        %1338 = vmatprep.subr.mxu0 0.0
        %1339 = vmatpush1.msra.mxu0 0.0
        %1340 = vmatprep.subr.mxu0 0.0
        %1341 = vmatpush1.msra.mxu0 0.0
        %1342 = vmatprep.subr.mxu0 0.0
        %1343 = vmatpush1.msra.mxu0 0.0
        %1344 = vmatprep.subr.mxu0 0.0
        %1345 = vmatpush1.msra.mxu0 0.0
        %1346 = vmatprep.subr.mxu0 0.0
        %1347 = vmatpush1.msra.mxu0 0.0
        %1348 = vmatprep.subr.mxu0 0.0
        %1349 = vmatpush1.msra.mxu0 0.0
        %1350 = vmatprep.mubr.f32.mxu0 0.0
        %1351 = vmatmul.mubr.f32.gmra.mrb[0].mxu0 %v1284
        %v1352 = vpop.f32.mrb[0].mxu0
        %v1353 = vadd.f32 0.0, %v1352
        %v1354 = vpop.f32.mrb[0].mxu0
        %1355 = vdwg.mxu0
        %vm1356 = vcmask 125952
        %1357 = vst.msk [vmem:[%s617] sm:$0xf] %vm1356, %v1353
        %s1358 = sand.u32 %s322, 1
        %s1359 = scalar_lea.sflag [#allocation4], %s1358
        %s1360 = sand.u32 %s322, 1
        %s1361 = smul.addr %s1360, 4
        %s1362 = scalar_lea.vmem [#allocation23], %s1361
        // Predicated region
        $region125: #{_lambda_.10} parent=71 // pred_check
          %p1363 = pneg %p332
        $region126: #{_lambda_.10} parent=71 // pred_check_branch
          %1365 = sbr.rel (%p1363) target = $region128
        $region127: #{_lambda_.10} parent=71 // pred_region
          %s1367 = ssub.s32 64, 64
          %1368 = vsyncadd %s1359, %s1367
          %s1369 = smul.addr %s36, 64
          %s1370 = scalar_lea.hbm %s13, %s1369
          %s1372 = sshll.u32 %s1362, 4
          %s1373 = int_to_ptr.vmem [resolvable:$true] %s1372
          %1375 = dma.vmem_to_hbm [thread:$0]  %s1373, 64, %s1370, %s1359
        $region128: #{_lambda_.10} parent=71 // pred_fallthru
          _
      $region72: #{_lambda_.10} parent=5 // pred_fallthru
        _
      %p1376 = scmp.le.s32.totalorder 2, %s31
      // Predicated region
      $region129: #{_lambda_.10} parent=5 // pred_check
        %p1377 = pneg %p1376
      $region130: #{_lambda_.10} parent=5 // pred_check_branch
        %1379 = sbr.rel (%p1377) target = $region132
      $region131: #{_lambda_.10} parent=5 // pred_region
        %s1380 = ssub.s32 %s31, 2
        // Predicated region
        $region133: #{_lambda_.10} parent=131 // pred_check
          %p1381 = pneg %p338
        $region134: #{_lambda_.10} parent=131 // pred_check_branch
          %1383 = sbr.rel (%p1381) target = $region136
        $region135: #{_lambda_.10} parent=131 // pred_region
          %s1384 = sand.u32 %s323, 1
          %s1385 = scalar_lea.sflag [#allocation4], %s1384
          %s1386 = sand.u32 %s323, 1
          %s1387 = smul.addr %s1386, 4
          %s1388 = scalar_lea.vmem [#allocation23], %s1387
          %1389 = dma.done %s1385, 64
        $region136: #{_lambda_.10} parent=131 // pred_fallthru
          _
      $region132: #{_lambda_.10} parent=5 // pred_fallthru
        _
    $region6: #{_lambda_.10} parent=1 // loop_footer
      %s35 = sadd.s32 1, %s31
    $region7: #{_lambda_.10} parent=1 // loop_footer_branch
      %30 = sbr.rel target = $region3
    $region8: #{_lambda_.10} parent=1 // loop_exit
      _
    %1390 = vsyncpa [#allocation3], 1
    %s1391 = scalar_lea.sflag [#allocation3], 1
    %1392 = vsyncpa %s1391, 1
    %1393 = vsyncpa [#allocation6], 1
    %1394 = vsyncpa [#allocation9], 1
    %1395 = vsyncpa [#allocation12], 1
    %1396 = vsyncpa [#allocation15], 1
    %1397 = vsyncpa [#allocation18], 1
    %1398 = vsyncpa [#allocation21], 1
    %1399 = vsyncpa [#allocation4], 1
    %s1400 = scalar_lea.sflag [#allocation4], 1
    %1401 = vsyncpa %s1400, 1

// kernel: _lambda_.12
$region0: #{_lambda_.12}
  #allocation0 [shape = 'u32[]', space=smem, size = 0x4, offset = 0x4, fixed_abs, tag = 'smem constant byte address 0x4 - core index']
  #allocation1 [shape = 'u32[144,128]{1,0:T(1,128)}', space=vmem, size = 0x12000, scoped, tag = 'internal scratch']
  %s0 = inlined_call_operand.hbm [shape: bf16[2,4,32], index: 0, kind: input, shape index: {}]
  %s1 = inlined_call_operand.hbm [shape: bf16[96,32], index: 1, kind: input, shape index: {}]
  %s2 = inlined_call_operand.hbm [shape: f32[1,32], index: 2, kind: input, shape index: {}]
  %s3 = inlined_call_operand.hbm [shape: bf16[2,4,32], index: 3, kind: output, shape index: {}]
  %s4 = sld [smem:[#allocation0]]
  $region57: #{_lambda_.12} parent=0
    _
  %s6 = ssub.s32 1, %s4
  %s7 = scalar_select 0, %s6, %s4
  $region1: #{_lambda_.12} parent=0
    #allocation2 [shape = 'u8[2048]{0}', space=vmem, size = 0x800, scoped, tag = 'input window, operand 0']
    #allocation3 [shape = 's32[2]{0}', space=sflag, size = 0x8, scoped, tag = 'scoped memory for _lambda_.12']
    #allocation4 [shape = 's32[2]{0}', space=sflag, size = 0x8, scoped, tag = 'scoped memory for _lambda_.12']
    #allocation5 [shape = 'u8[24576]{0}', space=vmem, size = 0x6000, scoped, tag = 'input window, operand 1, single buffered']
    #allocation6 [shape = 's32[1]{0}', space=sflag, size = 0x4, scoped, tag = 'scoped memory for _lambda_.12']
    #allocation7 [shape = 'u8[512]{0}', space=vmem, size = 0x400, scoped, tag = 'input window, operand 2, single buffered']
    #allocation8 [shape = 'u8[2048]{0}', space=vmem, size = 0x800, scoped, tag = 'output window, operand 0']
    %8 = vsyncpa [#allocation3], 0
    %s9 = scalar_lea.sflag [#allocation3], 1
    %10 = vsyncpa %s9, 0
    %11 = vsyncpa [#allocation6], 0
    %12 = vsyncpa [#allocation4], 0
    %s13 = scalar_lea.sflag [#allocation4], 1
    %14 = vsyncpa %s13, 0
    loop: start=0, step=1, limit=4
    $region2: #{_lambda_.12} parent=1 // loop_pre_header
      _
    $region3: #{_lambda_.12} parent=1 // loop_header
      %s16 = sphi 0, %s20
      %p17 = scmp.ge.s32.totalorder %s16, 4
      %s26 = sphi 0, %s28
      %s29 = sphi 0, %s26
      %s30 = sphi 0, %s29
      %s46 = sphi 0, %s30
      %s50 = sphi 0, %s50
      %s52 = sphi 0, %s50
      %s53 = sphi 0, %s52
      %s67 = sphi 0, %s53
      %s71 = sphi 0, %s71
      %s73 = sphi 0, %s71
      %s74 = sphi 0, %s73
      %s88 = sphi 0, %s74
      %s94 = sphi 0, %s96
      %s97 = sphi 0, %s94
      %s98 = sphi 0, %s97
      %s114 = sphi 0, %s98
    $region4: #{_lambda_.12} parent=1 // loop_header_branch
      %19 = sbr.rel (%p17) target = $region8
    $region5: #{_lambda_.12} parent=1 // loop_body
      %s21 = ssub.s32 %s16, 1
      %s22 = ssub.s32 %s16, 2
      %s23 = sadd.s32 %s16, 1
      %s24 = ssub.s32 %s16, %s23
      %p25 = scmp.eq.s32.totalorder %s24, 0
      %s27 = sadd.s32 %s26, 1
      %s28 = scalar_select %p25, %s26, %s27
      %p31 = pneg %p25
      %p32 = scmp.eq.s32.totalorder %s16, 1
      %p33 = por %p31, %p32
      %p34 = scmp.ne.s32.totalorder %s26, %s29
      %p35 = scmp.eq.s32.totalorder %s16, 0
      %p36 = por %p34, %p35
      %p37 = scmp.ne.s32.totalorder %s26, %s29
      %p38 = scmp.eq.s32.totalorder %s21, 1
      %p39 = por %p37, %p38
      %p40 = scmp.ne.s32.totalorder %s29, %s30
      %p41 = scmp.eq.s32.totalorder %s21, 0
      %p42 = por %p40, %p41
      %p43 = scmp.ne.s32.totalorder %s29, %s30
      %p44 = scmp.eq.s32.totalorder %s22, 1
      %p45 = por %p43, %p44
      %p47 = scmp.ne.s32.totalorder %s30, %s46
      %p48 = scmp.eq.s32.totalorder %s22, 0
      %p49 = por %p47, %p48
      %s51 = sadd.s32 %s50, 1
      %p54 = scmp.eq.s32.totalorder %s16, 1
      %p55 = scmp.ne.s32.totalorder %s50, %s52
      %p56 = scmp.eq.s32.totalorder %s16, 0
      %p57 = por %p55, %p56
      %p58 = scmp.ne.s32.totalorder %s50, %s52
      %p59 = scmp.eq.s32.totalorder %s21, 1
      %p60 = por %p58, %p59
      %p61 = scmp.ne.s32.totalorder %s52, %s53
      %p62 = scmp.eq.s32.totalorder %s21, 0
      %p63 = por %p61, %p62
      %p64 = scmp.ne.s32.totalorder %s52, %s53
      %p65 = scmp.eq.s32.totalorder %s22, 1
      %p66 = por %p64, %p65
      %p68 = scmp.ne.s32.totalorder %s53, %s67
      %p69 = scmp.eq.s32.totalorder %s22, 0
      %p70 = por %p68, %p69
      %s72 = sadd.s32 %s71, 1
      %p75 = scmp.eq.s32.totalorder %s16, 1
      %p76 = scmp.ne.s32.totalorder %s71, %s73
      %p77 = scmp.eq.s32.totalorder %s16, 0
      %p78 = por %p76, %p77
      %p79 = scmp.ne.s32.totalorder %s71, %s73
      %p80 = scmp.eq.s32.totalorder %s21, 1
      %p81 = por %p79, %p80
      %p82 = scmp.ne.s32.totalorder %s73, %s74
      %p83 = scmp.eq.s32.totalorder %s21, 0
      %p84 = por %p82, %p83
      %p85 = scmp.ne.s32.totalorder %s73, %s74
      %p86 = scmp.eq.s32.totalorder %s22, 1
      %p87 = por %p85, %p86
      %p89 = scmp.ne.s32.totalorder %s74, %s88
      %p90 = scmp.eq.s32.totalorder %s22, 0
      %p91 = por %p89, %p90
      %s92 = ssub.s32 %s16, %s23
      %p93 = scmp.eq.s32.totalorder %s92, 0
      %s95 = sadd.s32 %s94, 1
      %s96 = scalar_select %p93, %s94, %s95
      %p99 = pneg %p93
      %p100 = scmp.eq.s32.totalorder %s16, 1
      %p101 = por %p99, %p100
      %p102 = scmp.ne.s32.totalorder %s94, %s97
      %p103 = scmp.eq.s32.totalorder %s16, 0
      %p104 = por %p102, %p103
      %p105 = scmp.ne.s32.totalorder %s94, %s97
      %p106 = scmp.eq.s32.totalorder %s21, 1
      %p107 = por %p105, %p106
      %p108 = scmp.ne.s32.totalorder %s97, %s98
      %p109 = scmp.eq.s32.totalorder %s21, 0
      %p110 = por %p108, %p109
      %p111 = scmp.ne.s32.totalorder %s97, %s98
      %p112 = scmp.eq.s32.totalorder %s22, 1
      %p113 = por %p111, %p112
      %p115 = scmp.ne.s32.totalorder %s98, %s114
      %p116 = scmp.eq.s32.totalorder %s22, 0
      %p117 = por %p115, %p116
      %p118 = scmp.le.s32.totalorder 1, %s16
      %p119 = scmp.lt.s32.totalorder %s16, 3
      %p120 = pnand %p118, %p119
      %p121 = pneg %p120
      // Predicated region
      $region9: #{_lambda_.12} parent=5 // pred_check
        _
      $region10: #{_lambda_.12} parent=5 // pred_check_branch
        %123 = sbr.rel (%p120) target = $region12
      $region11: #{_lambda_.12} parent=5 // pred_region
        %s124 = ssub.s32 %s16, 1
        // Predicated region
        $region13: #{_lambda_.12} parent=11 // pred_check
          %p125 = pneg %p63
        $region14: #{_lambda_.12} parent=11 // pred_check_branch
          %127 = sbr.rel (%p125) target = $region16
        $region15: #{_lambda_.12} parent=11 // pred_region
          %s129 = ssub.s32 768, 768
          %130 = vsyncadd [#allocation6], %s129
          %s131 = sshll.u32 [#allocation5], 4
          %s132 = int_to_ptr.vmem [resolvable:$true] %s131
          %137 = dma.hbm_to_vmem [thread:$0]  %s1, 768, %s132, [#allocation6], 64, 64, 4
        $region16: #{_lambda_.12} parent=11 // pred_fallthru
          _
        // Predicated region
        $region17: #{_lambda_.12} parent=11 // pred_check
          %p138 = pneg %p84
        $region18: #{_lambda_.12} parent=11 // pred_check_branch
          %140 = sbr.rel (%p138) target = $region20
        $region19: #{_lambda_.12} parent=11 // pred_region
          %s142 = ssub.s32 16, 16
          %143 = vsyncadd [#allocation6], %s142
          %s145 = sshll.u32 [#allocation7], 4
          %s146 = int_to_ptr.vmem [resolvable:$true] %s145
          %148 = dma.hbm_to_vmem [thread:$0]  %s2, 16, %s146, [#allocation6]
        $region20: #{_lambda_.12} parent=11 // pred_fallthru
          _
      $region12: #{_lambda_.12} parent=5 // pred_fallthru
        _
      %p149 = scmp.lt.s32.totalorder %s16, 2
      // Predicated region
      $region21: #{_lambda_.12} parent=5 // pred_check
        %p150 = pneg %p149
      $region22: #{_lambda_.12} parent=5 // pred_check_branch
        %152 = sbr.rel (%p150) target = $region24
      $region23: #{_lambda_.12} parent=5 // pred_region
        // Predicated region
        $region25: #{_lambda_.12} parent=23 // pred_check
          %p153 = pneg %p36
        $region26: #{_lambda_.12} parent=23 // pred_check_branch
          %155 = sbr.rel (%p153) target = $region28
        $region27: #{_lambda_.12} parent=23 // pred_region
          %s156 = sand.u32 %s26, 1
          %s157 = scalar_lea.sflag [#allocation3], %s156
          %s158 = sand.u32 %s26, 1
          %s159 = smul.addr %s158, 2
          %s160 = scalar_lea.vmem [#allocation2], %s159
          %s162 = ssub.s32 32, 32
          %163 = vsyncadd %s157, %s162
          %s164 = smul.addr %s16, 32
          %s165 = scalar_lea.hbm %s0, %s164
          %s167 = sshll.u32 %s160, 4
          %s168 = int_to_ptr.vmem [resolvable:$true] %s167
          %170 = dma.hbm_to_vmem [thread:$0]  %s165, 32, %s168, %s157
        $region28: #{_lambda_.12} parent=23 // pred_fallthru
          _
      $region24: #{_lambda_.12} parent=5 // pred_fallthru
        _
      %p171 = scmp.le.s32.totalorder 1, %s16
      %p172 = scmp.lt.s32.totalorder %s16, 3
      %p173 = pnand %p171, %p172
      %p174 = pneg %p173
      // Predicated region
      $region29: #{_lambda_.12} parent=5 // pred_check
        _
      $region30: #{_lambda_.12} parent=5 // pred_check_branch
        %176 = sbr.rel (%p173) target = $region32
      $region31: #{_lambda_.12} parent=5 // pred_region
        %s177 = ssub.s32 %s16, 1
        %s178 = sand.u32 %s29, 1
        %s179 = scalar_lea.sflag [#allocation3], %s178
        %s180 = sand.u32 %s29, 1
        %s181 = smul.addr %s180, 2
        %s182 = scalar_lea.vmem [#allocation2], %s181
        // Predicated region
        $region33: #{_lambda_.12} parent=31 // pred_check
          %p183 = pneg %p42
        $region34: #{_lambda_.12} parent=31 // pred_check_branch
          %185 = sbr.rel (%p183) target = $region36
        $region35: #{_lambda_.12} parent=31 // pred_region
          %186 = dma.done %s179, 32
        $region36: #{_lambda_.12} parent=31 // pred_fallthru
          _
        // Predicated region
        $region37: #{_lambda_.12} parent=31 // pred_check
          %p187 = pneg %p63
        $region38: #{_lambda_.12} parent=31 // pred_check_branch
          %189 = sbr.rel (%p187) target = $region40
        $region39: #{_lambda_.12} parent=31 // pred_region
          %190 = dma.done [#allocation6], 768
        $region40: #{_lambda_.12} parent=31 // pred_fallthru
          _
        // Predicated region
        $region41: #{_lambda_.12} parent=31 // pred_check
          %p191 = pneg %p84
        $region42: #{_lambda_.12} parent=31 // pred_check_branch
          %193 = sbr.rel (%p191) target = $region44
        $region43: #{_lambda_.12} parent=31 // pred_region
          %194 = dma.done [#allocation6], 16
        $region44: #{_lambda_.12} parent=31 // pred_fallthru
          _
        %s195 = sand.u32 %s29, 1
        %s196 = scalar_lea.sflag [#allocation3], %s195
        %s197 = sand.u32 %s29, 1
        %s198 = smul.addr %s197, 2
        %s199 = scalar_lea.vmem [#allocation2], %s198
        %p200 = pneg %p42
        %p201 = pneg %p39
        %p202 = pneg %p63
        %p203 = pneg %p60
        %p204 = pneg %p84
        %p205 = pneg %p81
        %p206 = pneg %p110
        %p207 = pneg %p107
        %s208 = sand.u32 %s97, 1
        %s209 = scalar_lea.sflag [#allocation4], %s208
        %s210 = sand.u32 %s97, 1
        %s211 = smul.addr %s210, 2
        %s212 = scalar_lea.vmem [#allocation8], %s211
        %v214 = vld [vmem:[%s182] sm:$0x3]
        %v215 = vld [vmem:[#allocation5] sm:$0xf]
        %v216 = vld [vmem:[#allocation5 + $0x4] sm:$0xf]
        %v217 = vld [vmem:[#allocation5 + $0x8] sm:$0xf]
        %v218 = vld [vmem:[#allocation5 + $0xc] sm:$0xf]
        %v219 = vld [vmem:[#allocation5 + $0x10] sm:$0xf]
        %v220 = vld [vmem:[#allocation5 + $0x14] sm:$0xf]
        %v221 = vld [vmem:[#allocation5 + $0x18] sm:$0xf]
        %v222 = vld [vmem:[#allocation5 + $0x1c] sm:$0xf]
        %v223 = vld [vmem:[#allocation5 + $0x20] sm:$0xf]
        %v224 = vld [vmem:[#allocation5 + $0x24] sm:$0xf]
        %v225 = vld [vmem:[#allocation5 + $0x28] sm:$0xf]
        %v226 = vld [vmem:[#allocation5 + $0x2c] sm:$0xf]
        %v227 = vld [vmem:[#allocation7] sm:$0x1]
        %v230 = vunpack.c.l.s4 1983009808
        %v231 = vunpack.c.0.s8 %v230
        %v232 = vlaneseq
        %v233 = vshrl.u32 %v232, 7
        %v234 = vsub.s32 %v231, %v233
        %v235 = vrot.slane %v214, %v234
        %v237 = vshrl.u32 %v235, 16
        %v239 = vrot.slane %v237, 7
        %v240 = vshll.u32 %v235, 16
        %v242 = vor.u32 %v239, %v240
        %vm244 = vcmask 1040384
        %vm245 = vsmask.f32 256
        %vm246 = vmand %vm244, %vm245
        %v247 = vsel %vm246, 0, %v242
        %v248 = vrot.slane %v240, 1
        %v249 = vor.u32 %v237, %v248
        %vm251 = vcmask 1041408
        %vm252 = vsmask.f32 1280
        %vm253 = vmand %vm251, %vm252
        %v254 = vsel %vm253, %v249, 0
        %255 = vrot.lane.b32.xlu0 %v235, 32
        %v256 = vpop.permute.xlu0 %255
        %258 = vrot.lane.b32.xlu0 %v254, 64
        %v259 = vpop.permute.xlu0 %258
        %vm260 = vcmask 261120
        %v263 = vsel %vm260, %v247, %v256
        %vm264 = vcmask 523264
        %v266 = vsel %vm264, %v263, %v259
        %v268 = vlaneseq
        %v269 = vshrl.u32 %v268, 7
        %v270 = vsub.s32 0, %v269
        %v271 = vrot.slane %v227, %v270
        %v285 = vunpack.c.l.b16 %v215
        %v286 = vunpack.c.l.b16 %v216
        %v287 = vunpack.c.l.b16 %v217
        %v288 = vunpack.c.l.b16 %v218
        %v289 = vunpack.c.l.b16 %v219
        %v290 = vunpack.c.l.b16 %v220
        %v291 = vunpack.c.l.b16 %v221
        %v292 = vunpack.c.l.b16 %v222
        %v293 = vunpack.c.l.b16 %v223
        %v294 = vunpack.c.l.b16 %v224
        %v295 = vunpack.c.l.b16 %v225
        %v296 = vunpack.c.l.b16 %v226
        %v297 = vpack.c.b16 %v286, %v285
        %v298 = vpack.c.b16 %v288, %v287
        %v299 = vpack.c.b16 %v290, %v289
        %v300 = vpack.c.b16 %v292, %v291
        %v301 = vpack.c.b16 %v294, %v293
        %v302 = vpack.c.b16 %v296, %v295
        %vm309 = vcmask 785408
        %v310 = vsel %vm309, %v266, 0
        %312 = vmatprep.subr.bf16.mxu0 0
        %313 = vmatpush1.bf16.msra.mxu0 %v297
        %314 = vmatprep.subr.bf16.mxu0 0
        %315 = vmatpush1.bf16.msra.mxu0 %v298
        %316 = vmatprep.subr.bf16.mxu0 0
        %317 = vmatpush1.bf16.msra.mxu0 %v299
        %318 = vmatprep.subr.bf16.mxu0 0
        %319 = vmatpush1.bf16.msra.mxu0 %v300
        %320 = vmatprep.subr.bf16.mxu0 0
        %321 = vmatpush1.bf16.msra.mxu0 %v301
        %322 = vmatprep.subr.bf16.mxu0 0
        %323 = vmatpush1.bf16.msra.mxu0 %v302
        %324 = vmatprep.subr.bf16.mxu0 0
        %325 = vmatpush1.bf16.msra.mxu0 0
        %326 = vmatprep.subr.bf16.mxu0 0
        %327 = vmatpush1.bf16.msra.mxu0 0
        %328 = vmatprep.subr.bf16.mxu0 0
        %329 = vmatpush1.bf16.msra.mxu0 0
        %330 = vmatprep.subr.bf16.mxu0 0
        %331 = vmatpush1.bf16.msra.mxu0 0
        %332 = vmatprep.subr.bf16.mxu0 0
        %333 = vmatpush1.bf16.msra.mxu0 0
        %334 = vmatprep.subr.bf16.mxu0 0
        %335 = vmatpush1.bf16.msra.mxu0 0
        %336 = vmatprep.subr.bf16.mxu0 0
        %337 = vmatpush1.bf16.msra.mxu0 0
        %338 = vmatprep.subr.bf16.mxu0 0
        %339 = vmatpush1.bf16.msra.mxu0 0
        %340 = vmatprep.subr.bf16.mxu0 0
        %341 = vmatpush1.bf16.msra.mxu0 0
        %342 = vmatprep.subr.bf16.mxu0 0
        %343 = vmatpush1.bf16.msra.mxu0 0
        %344 = vmatprep.mubr.bf16.mxu0 0
        %345 = vmatmul.mubr.bf16.gmra.mrb[0].mxu0 %v310
        %v346 = vpop.f32.mrb[0].mxu0
        %v347 = vadd.f32 %v271, %v346
        %v348 = vpop.f32.mrb[0].mxu0
        %v349 = vpop.f32.mrb[0].mxu0
        %v350 = vpop.f32.mrb[0].mxu0
        %351 = vdwg.mxu0
        %vm352 = vcmp.gt.f32.partialorder %v347, 0.0
        %v353 = vmul.f32 %v347, 0.2
        %v354 = vsel %vm352, %v347, %v353
        %v355 = vpack.c.bf16 %v354, %v354
        %vm356 = vcmask 254976
        %357 = vst.msk [vmem:[%s212] sm:$0x3] %vm356, %v355
        %s358 = sand.u32 %s97, 1
        %s359 = scalar_lea.sflag [#allocation4], %s358
        %s360 = sand.u32 %s97, 1
        %s361 = smul.addr %s360, 2
        %s362 = scalar_lea.vmem [#allocation8], %s361
        // Predicated region
        $region45: #{_lambda_.12} parent=31 // pred_check
          %p363 = pneg %p107
        $region46: #{_lambda_.12} parent=31 // pred_check_branch
          %365 = sbr.rel (%p363) target = $region48
        $region47: #{_lambda_.12} parent=31 // pred_region
          %s367 = ssub.s32 32, 32
          %368 = vsyncadd %s359, %s367
          %s369 = smul.addr %s21, 32
          %s370 = scalar_lea.hbm %s3, %s369
          %s372 = sshll.u32 %s362, 4
          %s373 = int_to_ptr.vmem [resolvable:$true] %s372
          %375 = dma.vmem_to_hbm [thread:$0]  %s373, 32, %s370, %s359
        $region48: #{_lambda_.12} parent=31 // pred_fallthru
          _
      $region32: #{_lambda_.12} parent=5 // pred_fallthru
        _
      %p376 = scmp.le.s32.totalorder 2, %s16
      // Predicated region
      $region49: #{_lambda_.12} parent=5 // pred_check
        %p377 = pneg %p376
      $region50: #{_lambda_.12} parent=5 // pred_check_branch
        %379 = sbr.rel (%p377) target = $region52
      $region51: #{_lambda_.12} parent=5 // pred_region
        %s380 = ssub.s32 %s16, 2
        // Predicated region
        $region53: #{_lambda_.12} parent=51 // pred_check
          %p381 = pneg %p113
        $region54: #{_lambda_.12} parent=51 // pred_check_branch
          %383 = sbr.rel (%p381) target = $region56
        $region55: #{_lambda_.12} parent=51 // pred_region
          %s384 = sand.u32 %s98, 1
          %s385 = scalar_lea.sflag [#allocation4], %s384
          %s386 = sand.u32 %s98, 1
          %s387 = smul.addr %s386, 2
          %s388 = scalar_lea.vmem [#allocation8], %s387
          %389 = dma.done %s385, 32
        $region56: #{_lambda_.12} parent=51 // pred_fallthru
          _
      $region52: #{_lambda_.12} parent=5 // pred_fallthru
        _
    $region6: #{_lambda_.12} parent=1 // loop_footer
      %s20 = sadd.s32 1, %s16
    $region7: #{_lambda_.12} parent=1 // loop_footer_branch
      %15 = sbr.rel target = $region3
    $region8: #{_lambda_.12} parent=1 // loop_exit
      _
    %390 = vsyncpa [#allocation3], 1
    %s391 = scalar_lea.sflag [#allocation3], 1
    %392 = vsyncpa %s391, 1
    %393 = vsyncpa [#allocation6], 1
    %394 = vsyncpa [#allocation4], 1
    %s395 = scalar_lea.sflag [#allocation4], 1
    %396 = vsyncpa %s395, 1

// kernel: _lambda_.13
$region0: #{_lambda_.13}
  #allocation0 [shape = 'u32[]', space=smem, size = 0x4, offset = 0x4, fixed_abs, tag = 'smem constant byte address 0x4 - core index']
  #allocation1 [shape = 'u32[144,128]{1,0:T(1,128)}', space=vmem, size = 0x12000, scoped, tag = 'internal scratch']
  %s0 = inlined_call_operand.hbm [shape: bf16[2,8,16], index: 0, kind: input, shape index: {}]
  %s1 = inlined_call_operand.hbm [shape: bf16[48,16], index: 1, kind: input, shape index: {}]
  %s2 = inlined_call_operand.hbm [shape: f32[1,16], index: 2, kind: input, shape index: {}]
  %s3 = inlined_call_operand.hbm [shape: bf16[48,16], index: 3, kind: input, shape index: {}]
  %s4 = inlined_call_operand.hbm [shape: f32[1,16], index: 4, kind: input, shape index: {}]
  %s5 = inlined_call_operand.hbm [shape: bf16[48,16], index: 5, kind: input, shape index: {}]
  %s6 = inlined_call_operand.hbm [shape: f32[1,16], index: 6, kind: input, shape index: {}]
  %s7 = inlined_call_operand.hbm [shape: bf16[2,8,16], index: 7, kind: output, shape index: {}]
  %s8 = sld [smem:[#allocation0]]
  $region89: #{_lambda_.13} parent=0
    _
  %s10 = ssub.s32 1, %s8
  %s11 = scalar_select 0, %s10, %s8
  $region1: #{_lambda_.13} parent=0
    #allocation2 [shape = 'u8[4096]{0}', space=vmem, size = 0x1000, scoped, tag = 'input window, operand 0']
    #allocation3 [shape = 's32[2]{0}', space=sflag, size = 0x8, scoped, tag = 'scoped memory for _lambda_.13']
    #allocation4 [shape = 's32[2]{0}', space=sflag, size = 0x8, scoped, tag = 'scoped memory for _lambda_.13']
    #allocation5 [shape = 'u8[12288]{0}', space=vmem, size = 0x3000, scoped, tag = 'input window, operand 1, single buffered']
    #allocation6 [shape = 's32[1]{0}', space=sflag, size = 0x4, scoped, tag = 'scoped memory for _lambda_.13']
    #allocation7 [shape = 'u8[512]{0}', space=vmem, size = 0x400, scoped, tag = 'input window, operand 2, single buffered']
    #allocation8 [shape = 'u8[12288]{0}', space=vmem, size = 0x3000, scoped, tag = 'input window, operand 3, single buffered']
    #allocation9 [shape = 's32[1]{0}', space=sflag, size = 0x4, scoped, tag = 'scoped memory for _lambda_.13']
    #allocation10 [shape = 'u8[512]{0}', space=vmem, size = 0x400, scoped, tag = 'input window, operand 4, single buffered']
    #allocation11 [shape = 'u8[12288]{0}', space=vmem, size = 0x3000, scoped, tag = 'input window, operand 5, single buffered']
    #allocation12 [shape = 's32[1]{0}', space=sflag, size = 0x4, scoped, tag = 'scoped memory for _lambda_.13']
    #allocation13 [shape = 'u8[512]{0}', space=vmem, size = 0x400, scoped, tag = 'input window, operand 6, single buffered']
    #allocation14 [shape = 'u8[4096]{0}', space=vmem, size = 0x1000, scoped, tag = 'output window, operand 0']
    %12 = vsyncpa [#allocation3], 0
    %s13 = scalar_lea.sflag [#allocation3], 1
    %14 = vsyncpa %s13, 0
    %15 = vsyncpa [#allocation6], 0
    %16 = vsyncpa [#allocation9], 0
    %17 = vsyncpa [#allocation12], 0
    %18 = vsyncpa [#allocation4], 0
    %s19 = scalar_lea.sflag [#allocation4], 1
    %20 = vsyncpa %s19, 0
    loop: start=0, step=1, limit=4
    $region2: #{_lambda_.13} parent=1 // loop_pre_header
      _
    $region3: #{_lambda_.13} parent=1 // loop_header
      %s22 = sphi 0, %s26
      %p23 = scmp.ge.s32.totalorder %s22, 4
      %s32 = sphi 0, %s34
      %s35 = sphi 0, %s32
      %s36 = sphi 0, %s35
      %s52 = sphi 0, %s36
      %s56 = sphi 0, %s56
      %s58 = sphi 0, %s56
      %s59 = sphi 0, %s58
      %s73 = sphi 0, %s59
      %s77 = sphi 0, %s77
      %s79 = sphi 0, %s77
      %s80 = sphi 0, %s79
      %s94 = sphi 0, %s80
      %s98 = sphi 0, %s98
      %s100 = sphi 0, %s98
      %s101 = sphi 0, %s100
      %s115 = sphi 0, %s101
      %s119 = sphi 0, %s119
      %s121 = sphi 0, %s119
      %s122 = sphi 0, %s121
      %s136 = sphi 0, %s122
      %s140 = sphi 0, %s140
      %s142 = sphi 0, %s140
      %s143 = sphi 0, %s142
      %s157 = sphi 0, %s143
      %s161 = sphi 0, %s161
      %s163 = sphi 0, %s161
      %s164 = sphi 0, %s163
      %s178 = sphi 0, %s164
      %s184 = sphi 0, %s186
      %s187 = sphi 0, %s184
      %s188 = sphi 0, %s187
      %s204 = sphi 0, %s188
    $region4: #{_lambda_.13} parent=1 // loop_header_branch
      %25 = sbr.rel (%p23) target = $region8
    $region5: #{_lambda_.13} parent=1 // loop_body
      %s27 = ssub.s32 %s22, 1
      %s28 = ssub.s32 %s22, 2
      %s29 = sadd.s32 %s22, 1
      %s30 = ssub.s32 %s22, %s29
      %p31 = scmp.eq.s32.totalorder %s30, 0
      %s33 = sadd.s32 %s32, 1
      %s34 = scalar_select %p31, %s32, %s33
      %p37 = pneg %p31
      %p38 = scmp.eq.s32.totalorder %s22, 1
      %p39 = por %p37, %p38
      %p40 = scmp.ne.s32.totalorder %s32, %s35
      %p41 = scmp.eq.s32.totalorder %s22, 0
      %p42 = por %p40, %p41
      %p43 = scmp.ne.s32.totalorder %s32, %s35
      %p44 = scmp.eq.s32.totalorder %s27, 1
      %p45 = por %p43, %p44
      %p46 = scmp.ne.s32.totalorder %s35, %s36
      %p47 = scmp.eq.s32.totalorder %s27, 0
      %p48 = por %p46, %p47
      %p49 = scmp.ne.s32.totalorder %s35, %s36
      %p50 = scmp.eq.s32.totalorder %s28, 1
      %p51 = por %p49, %p50
      %p53 = scmp.ne.s32.totalorder %s36, %s52
      %p54 = scmp.eq.s32.totalorder %s28, 0
      %p55 = por %p53, %p54
      %s57 = sadd.s32 %s56, 1
      %p60 = scmp.eq.s32.totalorder %s22, 1
      %p61 = scmp.ne.s32.totalorder %s56, %s58
      %p62 = scmp.eq.s32.totalorder %s22, 0
      %p63 = por %p61, %p62
      %p64 = scmp.ne.s32.totalorder %s56, %s58
      %p65 = scmp.eq.s32.totalorder %s27, 1
      %p66 = por %p64, %p65
      %p67 = scmp.ne.s32.totalorder %s58, %s59
      %p68 = scmp.eq.s32.totalorder %s27, 0
      %p69 = por %p67, %p68
      %p70 = scmp.ne.s32.totalorder %s58, %s59
      %p71 = scmp.eq.s32.totalorder %s28, 1
      %p72 = por %p70, %p71
      %p74 = scmp.ne.s32.totalorder %s59, %s73
      %p75 = scmp.eq.s32.totalorder %s28, 0
      %p76 = por %p74, %p75
      %s78 = sadd.s32 %s77, 1
      %p81 = scmp.eq.s32.totalorder %s22, 1
      %p82 = scmp.ne.s32.totalorder %s77, %s79
      %p83 = scmp.eq.s32.totalorder %s22, 0
      %p84 = por %p82, %p83
      %p85 = scmp.ne.s32.totalorder %s77, %s79
      %p86 = scmp.eq.s32.totalorder %s27, 1
      %p87 = por %p85, %p86
      %p88 = scmp.ne.s32.totalorder %s79, %s80
      %p89 = scmp.eq.s32.totalorder %s27, 0
      %p90 = por %p88, %p89
      %p91 = scmp.ne.s32.totalorder %s79, %s80
      %p92 = scmp.eq.s32.totalorder %s28, 1
      %p93 = por %p91, %p92
      %p95 = scmp.ne.s32.totalorder %s80, %s94
      %p96 = scmp.eq.s32.totalorder %s28, 0
      %p97 = por %p95, %p96
      %s99 = sadd.s32 %s98, 1
      %p102 = scmp.eq.s32.totalorder %s22, 1
      %p103 = scmp.ne.s32.totalorder %s98, %s100
      %p104 = scmp.eq.s32.totalorder %s22, 0
      %p105 = por %p103, %p104
      %p106 = scmp.ne.s32.totalorder %s98, %s100
      %p107 = scmp.eq.s32.totalorder %s27, 1
      %p108 = por %p106, %p107
      %p109 = scmp.ne.s32.totalorder %s100, %s101
      %p110 = scmp.eq.s32.totalorder %s27, 0
      %p111 = por %p109, %p110
      %p112 = scmp.ne.s32.totalorder %s100, %s101
      %p113 = scmp.eq.s32.totalorder %s28, 1
      %p114 = por %p112, %p113
      %p116 = scmp.ne.s32.totalorder %s101, %s115
      %p117 = scmp.eq.s32.totalorder %s28, 0
      %p118 = por %p116, %p117
      %s120 = sadd.s32 %s119, 1
      %p123 = scmp.eq.s32.totalorder %s22, 1
      %p124 = scmp.ne.s32.totalorder %s119, %s121
      %p125 = scmp.eq.s32.totalorder %s22, 0
      %p126 = por %p124, %p125
      %p127 = scmp.ne.s32.totalorder %s119, %s121
      %p128 = scmp.eq.s32.totalorder %s27, 1
      %p129 = por %p127, %p128
      %p130 = scmp.ne.s32.totalorder %s121, %s122
      %p131 = scmp.eq.s32.totalorder %s27, 0
      %p132 = por %p130, %p131
      %p133 = scmp.ne.s32.totalorder %s121, %s122
      %p134 = scmp.eq.s32.totalorder %s28, 1
      %p135 = por %p133, %p134
      %p137 = scmp.ne.s32.totalorder %s122, %s136
      %p138 = scmp.eq.s32.totalorder %s28, 0
      %p139 = por %p137, %p138
      %s141 = sadd.s32 %s140, 1
      %p144 = scmp.eq.s32.totalorder %s22, 1
      %p145 = scmp.ne.s32.totalorder %s140, %s142
      %p146 = scmp.eq.s32.totalorder %s22, 0
      %p147 = por %p145, %p146
      %p148 = scmp.ne.s32.totalorder %s140, %s142
      %p149 = scmp.eq.s32.totalorder %s27, 1
      %p150 = por %p148, %p149
      %p151 = scmp.ne.s32.totalorder %s142, %s143
      %p152 = scmp.eq.s32.totalorder %s27, 0
      %p153 = por %p151, %p152
      %p154 = scmp.ne.s32.totalorder %s142, %s143
      %p155 = scmp.eq.s32.totalorder %s28, 1
      %p156 = por %p154, %p155
      %p158 = scmp.ne.s32.totalorder %s143, %s157
      %p159 = scmp.eq.s32.totalorder %s28, 0
      %p160 = por %p158, %p159
      %s162 = sadd.s32 %s161, 1
      %p165 = scmp.eq.s32.totalorder %s22, 1
      %p166 = scmp.ne.s32.totalorder %s161, %s163
      %p167 = scmp.eq.s32.totalorder %s22, 0
      %p168 = por %p166, %p167
      %p169 = scmp.ne.s32.totalorder %s161, %s163
      %p170 = scmp.eq.s32.totalorder %s27, 1
      %p171 = por %p169, %p170
      %p172 = scmp.ne.s32.totalorder %s163, %s164
      %p173 = scmp.eq.s32.totalorder %s27, 0
      %p174 = por %p172, %p173
      %p175 = scmp.ne.s32.totalorder %s163, %s164
      %p176 = scmp.eq.s32.totalorder %s28, 1
      %p177 = por %p175, %p176
      %p179 = scmp.ne.s32.totalorder %s164, %s178
      %p180 = scmp.eq.s32.totalorder %s28, 0
      %p181 = por %p179, %p180
      %s182 = ssub.s32 %s22, %s29
      %p183 = scmp.eq.s32.totalorder %s182, 0
      %s185 = sadd.s32 %s184, 1
      %s186 = scalar_select %p183, %s184, %s185
      %p189 = pneg %p183
      %p190 = scmp.eq.s32.totalorder %s22, 1
      %p191 = por %p189, %p190
      %p192 = scmp.ne.s32.totalorder %s184, %s187
      %p193 = scmp.eq.s32.totalorder %s22, 0
      %p194 = por %p192, %p193
      %p195 = scmp.ne.s32.totalorder %s184, %s187
      %p196 = scmp.eq.s32.totalorder %s27, 1
      %p197 = por %p195, %p196
      %p198 = scmp.ne.s32.totalorder %s187, %s188
      %p199 = scmp.eq.s32.totalorder %s27, 0
      %p200 = por %p198, %p199
      %p201 = scmp.ne.s32.totalorder %s187, %s188
      %p202 = scmp.eq.s32.totalorder %s28, 1
      %p203 = por %p201, %p202
      %p205 = scmp.ne.s32.totalorder %s188, %s204
      %p206 = scmp.eq.s32.totalorder %s28, 0
      %p207 = por %p205, %p206
      %p208 = scmp.le.s32.totalorder 1, %s22
      %p209 = scmp.lt.s32.totalorder %s22, 3
      %p210 = pnand %p208, %p209
      %p211 = pneg %p210
      // Predicated region
      $region9: #{_lambda_.13} parent=5 // pred_check
        _
      $region10: #{_lambda_.13} parent=5 // pred_check_branch
        %213 = sbr.rel (%p210) target = $region12
      $region11: #{_lambda_.13} parent=5 // pred_region
        %s214 = ssub.s32 %s22, 1
        // Predicated region
        $region13: #{_lambda_.13} parent=11 // pred_check
          %p215 = pneg %p69
        $region14: #{_lambda_.13} parent=11 // pred_check_branch
          %217 = sbr.rel (%p215) target = $region16
        $region15: #{_lambda_.13} parent=11 // pred_region
          %s219 = ssub.s32 384, 384
          %220 = vsyncadd [#allocation6], %s219
          %s221 = sshll.u32 [#allocation5], 4
          %s222 = int_to_ptr.vmem [resolvable:$true] %s221
          %227 = dma.hbm_to_vmem [thread:$0]  %s1, 384, %s222, [#allocation6], 64, 64, 4
        $region16: #{_lambda_.13} parent=11 // pred_fallthru
          _
        // Predicated region
        $region17: #{_lambda_.13} parent=11 // pred_check
          %p228 = pneg %p90
        $region18: #{_lambda_.13} parent=11 // pred_check_branch
          %230 = sbr.rel (%p228) target = $region20
        $region19: #{_lambda_.13} parent=11 // pred_region
          %s232 = ssub.s32 16, 16
          %233 = vsyncadd [#allocation6], %s232
          %s235 = sshll.u32 [#allocation7], 4
          %s236 = int_to_ptr.vmem [resolvable:$true] %s235
          %238 = dma.hbm_to_vmem [thread:$0]  %s2, 16, %s236, [#allocation6]
        $region20: #{_lambda_.13} parent=11 // pred_fallthru
          _
        // Predicated region
        $region21: #{_lambda_.13} parent=11 // pred_check
          %p239 = pneg %p111
        $region22: #{_lambda_.13} parent=11 // pred_check_branch
          %241 = sbr.rel (%p239) target = $region24
        $region23: #{_lambda_.13} parent=11 // pred_region
          %s243 = ssub.s32 384, 384
          %244 = vsyncadd [#allocation9], %s243
          %s245 = sshll.u32 [#allocation8], 4
          %s246 = int_to_ptr.vmem [resolvable:$true] %s245
          %251 = dma.hbm_to_vmem [thread:$0]  %s3, 384, %s246, [#allocation9], 64, 64, 4
        $region24: #{_lambda_.13} parent=11 // pred_fallthru
          _
        // Predicated region
        $region25: #{_lambda_.13} parent=11 // pred_check
          %p252 = pneg %p132
        $region26: #{_lambda_.13} parent=11 // pred_check_branch
          %254 = sbr.rel (%p252) target = $region28
        $region27: #{_lambda_.13} parent=11 // pred_region
          %s256 = ssub.s32 16, 16
          %257 = vsyncadd [#allocation9], %s256
          %s259 = sshll.u32 [#allocation10], 4
          %s260 = int_to_ptr.vmem [resolvable:$true] %s259
          %262 = dma.hbm_to_vmem [thread:$0]  %s4, 16, %s260, [#allocation9]
        $region28: #{_lambda_.13} parent=11 // pred_fallthru
          _
        // Predicated region
        $region29: #{_lambda_.13} parent=11 // pred_check
          %p263 = pneg %p153
        $region30: #{_lambda_.13} parent=11 // pred_check_branch
          %265 = sbr.rel (%p263) target = $region32
        $region31: #{_lambda_.13} parent=11 // pred_region
          %s267 = ssub.s32 384, 384
          %268 = vsyncadd [#allocation12], %s267
          %s269 = sshll.u32 [#allocation11], 4
          %s270 = int_to_ptr.vmem [resolvable:$true] %s269
          %275 = dma.hbm_to_vmem [thread:$0]  %s5, 384, %s270, [#allocation12], 64, 64, 4
        $region32: #{_lambda_.13} parent=11 // pred_fallthru
          _
        // Predicated region
        $region33: #{_lambda_.13} parent=11 // pred_check
          %p276 = pneg %p174
        $region34: #{_lambda_.13} parent=11 // pred_check_branch
          %278 = sbr.rel (%p276) target = $region36
        $region35: #{_lambda_.13} parent=11 // pred_region
          %s280 = ssub.s32 16, 16
          %281 = vsyncadd [#allocation12], %s280
          %s283 = sshll.u32 [#allocation13], 4
          %s284 = int_to_ptr.vmem [resolvable:$true] %s283
          %286 = dma.hbm_to_vmem [thread:$0]  %s6, 16, %s284, [#allocation12]
        $region36: #{_lambda_.13} parent=11 // pred_fallthru
          _
      $region12: #{_lambda_.13} parent=5 // pred_fallthru
        _
      %p287 = scmp.lt.s32.totalorder %s22, 2
      // Predicated region
      $region37: #{_lambda_.13} parent=5 // pred_check
        %p288 = pneg %p287
      $region38: #{_lambda_.13} parent=5 // pred_check_branch
        %290 = sbr.rel (%p288) target = $region40
      $region39: #{_lambda_.13} parent=5 // pred_region
        // Predicated region
        $region41: #{_lambda_.13} parent=39 // pred_check
          %p291 = pneg %p42
        $region42: #{_lambda_.13} parent=39 // pred_check_branch
          %293 = sbr.rel (%p291) target = $region44
        $region43: #{_lambda_.13} parent=39 // pred_region
          %s294 = sand.u32 %s32, 1
          %s295 = scalar_lea.sflag [#allocation3], %s294
          %s296 = sand.u32 %s32, 1
          %s297 = smul.addr %s296, 4
          %s298 = scalar_lea.vmem [#allocation2], %s297
          %s300 = ssub.s32 64, 64
          %301 = vsyncadd %s295, %s300
          %s302 = smul.addr %s22, 64
          %s303 = scalar_lea.hbm %s0, %s302
          %s305 = sshll.u32 %s298, 4
          %s306 = int_to_ptr.vmem [resolvable:$true] %s305
          %308 = dma.hbm_to_vmem [thread:$0]  %s303, 64, %s306, %s295
        $region44: #{_lambda_.13} parent=39 // pred_fallthru
          _
      $region40: #{_lambda_.13} parent=5 // pred_fallthru
        _
      %p309 = scmp.le.s32.totalorder 1, %s22
      %p310 = scmp.lt.s32.totalorder %s22, 3
      %p311 = pnand %p309, %p310
      %p312 = pneg %p311
      // Predicated region
      $region45: #{_lambda_.13} parent=5 // pred_check
        _
      $region46: #{_lambda_.13} parent=5 // pred_check_branch
        %314 = sbr.rel (%p311) target = $region48
      $region47: #{_lambda_.13} parent=5 // pred_region
        %s315 = ssub.s32 %s22, 1
        %s316 = sand.u32 %s35, 1
        %s317 = scalar_lea.sflag [#allocation3], %s316
        %s318 = sand.u32 %s35, 1
        %s319 = smul.addr %s318, 4
        %s320 = scalar_lea.vmem [#allocation2], %s319
        // Predicated region
        $region49: #{_lambda_.13} parent=47 // pred_check
          %p321 = pneg %p48
        $region50: #{_lambda_.13} parent=47 // pred_check_branch
          %323 = sbr.rel (%p321) target = $region52
        $region51: #{_lambda_.13} parent=47 // pred_region
          %324 = dma.done %s317, 64
        $region52: #{_lambda_.13} parent=47 // pred_fallthru
          _
        // Predicated region
        $region53: #{_lambda_.13} parent=47 // pred_check
          %p325 = pneg %p69
        $region54: #{_lambda_.13} parent=47 // pred_check_branch
          %327 = sbr.rel (%p325) target = $region56
        $region55: #{_lambda_.13} parent=47 // pred_region
          %328 = dma.done [#allocation6], 384
        $region56: #{_lambda_.13} parent=47 // pred_fallthru
          _
        // Predicated region
        $region57: #{_lambda_.13} parent=47 // pred_check
          %p329 = pneg %p90
        $region58: #{_lambda_.13} parent=47 // pred_check_branch
          %331 = sbr.rel (%p329) target = $region60
        $region59: #{_lambda_.13} parent=47 // pred_region
          %332 = dma.done [#allocation6], 16
        $region60: #{_lambda_.13} parent=47 // pred_fallthru
          _
        // Predicated region
        $region61: #{_lambda_.13} parent=47 // pred_check
          %p333 = pneg %p111
        $region62: #{_lambda_.13} parent=47 // pred_check_branch
          %335 = sbr.rel (%p333) target = $region64
        $region63: #{_lambda_.13} parent=47 // pred_region
          %336 = dma.done [#allocation9], 384
        $region64: #{_lambda_.13} parent=47 // pred_fallthru
          _
        // Predicated region
        $region65: #{_lambda_.13} parent=47 // pred_check
          %p337 = pneg %p132
        $region66: #{_lambda_.13} parent=47 // pred_check_branch
          %339 = sbr.rel (%p337) target = $region68
        $region67: #{_lambda_.13} parent=47 // pred_region
          %340 = dma.done [#allocation9], 16
        $region68: #{_lambda_.13} parent=47 // pred_fallthru
          _
        // Predicated region
        $region69: #{_lambda_.13} parent=47 // pred_check
          %p341 = pneg %p153
        $region70: #{_lambda_.13} parent=47 // pred_check_branch
          %343 = sbr.rel (%p341) target = $region72
        $region71: #{_lambda_.13} parent=47 // pred_region
          %344 = dma.done [#allocation12], 384
        $region72: #{_lambda_.13} parent=47 // pred_fallthru
          _
        // Predicated region
        $region73: #{_lambda_.13} parent=47 // pred_check
          %p345 = pneg %p174
        $region74: #{_lambda_.13} parent=47 // pred_check_branch
          %347 = sbr.rel (%p345) target = $region76
        $region75: #{_lambda_.13} parent=47 // pred_region
          %348 = dma.done [#allocation12], 16
        $region76: #{_lambda_.13} parent=47 // pred_fallthru
          _
        %s349 = sand.u32 %s35, 1
        %s350 = scalar_lea.sflag [#allocation3], %s349
        %s351 = sand.u32 %s35, 1
        %s352 = smul.addr %s351, 4
        %s353 = scalar_lea.vmem [#allocation2], %s352
        %p354 = pneg %p48
        %p355 = pneg %p45
        %p356 = pneg %p69
        %p357 = pneg %p66
        %p358 = pneg %p90
        %p359 = pneg %p87
        %p360 = pneg %p111
        %p361 = pneg %p108
        %p362 = pneg %p132
        %p363 = pneg %p129
        %p364 = pneg %p153
        %p365 = pneg %p150
        %p366 = pneg %p174
        %p367 = pneg %p171
        %p368 = pneg %p200
        %p369 = pneg %p197
        %s370 = sand.u32 %s187, 1
        %s371 = scalar_lea.sflag [#allocation4], %s370
        %s372 = sand.u32 %s187, 1
        %s373 = smul.addr %s372, 4
        %s374 = scalar_lea.vmem [#allocation14], %s373
        %v376 = vld [vmem:[%s320] sm:$0xf]
        %v377 = vunpack.c.l.bf16 %v376
        %v378 = vld [vmem:[#allocation5] sm:$0xf]
        %v379 = vld [vmem:[#allocation5 + $0x4] sm:$0xf]
        %v380 = vld [vmem:[#allocation5 + $0x8] sm:$0xf]
        %v381 = vld [vmem:[#allocation5 + $0xc] sm:$0xf]
        %v382 = vld [vmem:[#allocation5 + $0x10] sm:$0xf]
        %v383 = vld [vmem:[#allocation5 + $0x14] sm:$0xf]
        %v384 = vld [vmem:[#allocation7] sm:$0x1]
        %v386 = vunpack.c.l.b16 %v376
        %v387 = vpack.c.b16 %v386, %v386
        %v389 = vshrl.u32 %v387, 16
        %v391 = vrot.slane %v389, 7
        %v392 = vshll.u32 %v387, 16
        %v394 = vor.u32 %v391, %v392
        %vm396 = vcmask 1040384
        %vm397 = vsmask.f32 256
        %vm398 = vmand %vm396, %vm397
        %v399 = vsel %vm398, 0, %v394
        %v400 = vrot.slane %v392, 1
        %v401 = vor.u32 %v389, %v400
        %vm403 = vcmask 1043456
        %vm404 = vsmask.f32 3328
        %vm405 = vmand %vm403, %vm404
        %v406 = vsel %vm405, %v401, 0
        %407 = vrot.lane.b32.xlu0 %v387, 16
        %v408 = vpop.permute.xlu0 %407
        %410 = vrot.lane.b32.xlu0 %v406, 32
        %v411 = vpop.permute.xlu0 %410
        %vm412 = vcmask 130048
        %v415 = vsel %vm412, %v399, %v408
        %vm416 = vcmask 261120
        %v418 = vsel %vm416, %v415, %v411
        %v420 = vlaneseq
        %v421 = vshrl.u32 %v420, 7
        %v422 = vsub.s32 0, %v421
        %v423 = vrot.slane %v384, %v422
        %v431 = vunpack.c.l.b16 %v378
        %v432 = vunpack.c.l.b16 %v379
        %v433 = vunpack.c.l.b16 %v380
        %v434 = vunpack.c.l.b16 %v381
        %v435 = vunpack.c.l.b16 %v382
        %v436 = vunpack.c.l.b16 %v383
        %v437 = vpack.c.b16 %v432, %v431
        %v438 = vpack.c.b16 %v434, %v433
        %v439 = vpack.c.b16 %v436, %v435
        %vm443 = vcmask 392192
        %v444 = vsel %vm443, %v418, 0
        %446 = vmatprep.subr.bf16.mxu0 0
        %447 = vmatpush1.bf16.msra.mxu0 %v437
        %448 = vmatprep.subr.bf16.mxu0 0
        %449 = vmatpush1.bf16.msra.mxu0 %v438
        %450 = vmatprep.subr.bf16.mxu0 0
        %451 = vmatpush1.bf16.msra.mxu0 %v439
        %452 = vmatprep.subr.bf16.mxu0 0
        %453 = vmatpush1.bf16.msra.mxu0 0
        %454 = vmatprep.subr.bf16.mxu0 0
        %455 = vmatpush1.bf16.msra.mxu0 0
        %456 = vmatprep.subr.bf16.mxu0 0
        %457 = vmatpush1.bf16.msra.mxu0 0
        %458 = vmatprep.subr.bf16.mxu0 0
        %459 = vmatpush1.bf16.msra.mxu0 0
        %460 = vmatprep.subr.bf16.mxu0 0
        %461 = vmatpush1.bf16.msra.mxu0 0
        %462 = vmatprep.subr.bf16.mxu0 0
        %463 = vmatpush1.bf16.msra.mxu0 0
        %464 = vmatprep.subr.bf16.mxu0 0
        %465 = vmatpush1.bf16.msra.mxu0 0
        %466 = vmatprep.subr.bf16.mxu0 0
        %467 = vmatpush1.bf16.msra.mxu0 0
        %468 = vmatprep.subr.bf16.mxu0 0
        %469 = vmatpush1.bf16.msra.mxu0 0
        %470 = vmatprep.subr.bf16.mxu0 0
        %471 = vmatpush1.bf16.msra.mxu0 0
        %472 = vmatprep.subr.bf16.mxu0 0
        %473 = vmatpush1.bf16.msra.mxu0 0
        %474 = vmatprep.subr.bf16.mxu0 0
        %475 = vmatpush1.bf16.msra.mxu0 0
        %476 = vmatprep.subr.bf16.mxu0 0
        %477 = vmatpush1.bf16.msra.mxu0 0
        %478 = vmatprep.mubr.bf16.mxu0 0
        %479 = vmatmul.mubr.bf16.gmra.mrb[0].mxu0 %v444
        %v480 = vpop.f32.mrb[0].mxu0
        %v481 = vadd.f32 %v423, %v480
        %v482 = vpop.f32.mrb[0].mxu0
        %v483 = vpop.f32.mrb[0].mxu0
        %v484 = vpop.f32.mrb[0].mxu0
        %485 = vdwg.mxu0
        %v486 = vadd.f32 %v481, %v377
        %vm487 = vcmp.gt.f32.partialorder %v486, 0.0
        %v488 = vmul.f32 %v486, 0.2
        %v489 = vsel %vm487, %v486, %v488
        %v490 = vld [vmem:[#allocation8] sm:$0xf]
        %v491 = vld [vmem:[#allocation8 + $0x4] sm:$0xf]
        %v492 = vld [vmem:[#allocation8 + $0x8] sm:$0xf]
        %v493 = vld [vmem:[#allocation8 + $0xc] sm:$0xf]
        %v494 = vld [vmem:[#allocation8 + $0x10] sm:$0xf]
        %v495 = vld [vmem:[#allocation8 + $0x14] sm:$0xf]
        %v496 = vld [vmem:[#allocation10] sm:$0x1]
        %v497 = vpack.c.bf16 %v489, %v489
        %v499 = vshrl.u32 %v497, 16
        %v501 = vrot.slane %v499, 7
        %v502 = vshll.u32 %v497, 16
        %v504 = vor.u32 %v501, %v502
        %v506 = vsel %vm398, 0, %v504
        %v507 = vrot.slane %v502, 1
        %v508 = vor.u32 %v499, %v507
        %v510 = vsel %vm405, %v508, 0
        %512 = vrot.lane.b32.xlu0 %v497, 16
        %v513 = vpop.permute.xlu0 %512
        %515 = vrot.lane.b32.xlu0 %v510, 32
        %v516 = vpop.permute.xlu0 %515
        %v519 = vsel %vm412, %v506, %v513
        %v521 = vsel %vm416, %v519, %v516
        %v523 = vlaneseq
        %v524 = vshrl.u32 %v523, 7
        %v525 = vsub.s32 0, %v524
        %v526 = vrot.slane %v496, %v525
        %v534 = vunpack.c.l.b16 %v490
        %v535 = vunpack.c.l.b16 %v491
        %v536 = vunpack.c.l.b16 %v492
        %v537 = vunpack.c.l.b16 %v493
        %v538 = vunpack.c.l.b16 %v494
        %v539 = vunpack.c.l.b16 %v495
        %v540 = vpack.c.b16 %v535, %v534
        %v541 = vpack.c.b16 %v537, %v536
        %v542 = vpack.c.b16 %v539, %v538
        %v546 = vsel %vm443, %v521, 0
        %548 = vmatprep.subr.bf16.mxu0 0
        %549 = vmatpush1.bf16.msra.mxu0 %v540
        %550 = vmatprep.subr.bf16.mxu0 0
        %551 = vmatpush1.bf16.msra.mxu0 %v541
        %552 = vmatprep.subr.bf16.mxu0 0
        %553 = vmatpush1.bf16.msra.mxu0 %v542
        %554 = vmatprep.subr.bf16.mxu0 0
        %555 = vmatpush1.bf16.msra.mxu0 0
        %556 = vmatprep.subr.bf16.mxu0 0
        %557 = vmatpush1.bf16.msra.mxu0 0
        %558 = vmatprep.subr.bf16.mxu0 0
        %559 = vmatpush1.bf16.msra.mxu0 0
        %560 = vmatprep.subr.bf16.mxu0 0
        %561 = vmatpush1.bf16.msra.mxu0 0
        %562 = vmatprep.subr.bf16.mxu0 0
        %563 = vmatpush1.bf16.msra.mxu0 0
        %564 = vmatprep.subr.bf16.mxu0 0
        %565 = vmatpush1.bf16.msra.mxu0 0
        %566 = vmatprep.subr.bf16.mxu0 0
        %567 = vmatpush1.bf16.msra.mxu0 0
        %568 = vmatprep.subr.bf16.mxu0 0
        %569 = vmatpush1.bf16.msra.mxu0 0
        %570 = vmatprep.subr.bf16.mxu0 0
        %571 = vmatpush1.bf16.msra.mxu0 0
        %572 = vmatprep.subr.bf16.mxu0 0
        %573 = vmatpush1.bf16.msra.mxu0 0
        %574 = vmatprep.subr.bf16.mxu0 0
        %575 = vmatpush1.bf16.msra.mxu0 0
        %576 = vmatprep.subr.bf16.mxu0 0
        %577 = vmatpush1.bf16.msra.mxu0 0
        %578 = vmatprep.subr.bf16.mxu0 0
        %579 = vmatpush1.bf16.msra.mxu0 0
        %580 = vmatprep.mubr.bf16.mxu0 0
        %581 = vmatmul.mubr.bf16.gmra.mrb[0].mxu0 %v546
        %v582 = vpop.f32.mrb[0].mxu0
        %v583 = vadd.f32 %v526, %v582
        %v584 = vpop.f32.mrb[0].mxu0
        %v585 = vpop.f32.mrb[0].mxu0
        %v586 = vpop.f32.mrb[0].mxu0
        %587 = vdwg.mxu0
        %v588 = vadd.f32 %v583, %v489
        %vm589 = vcmp.gt.f32.partialorder %v588, 0.0
        %v590 = vmul.f32 %v588, 0.2
        %v591 = vsel %vm589, %v588, %v590
        %v592 = vld [vmem:[#allocation11] sm:$0xf]
        %v593 = vld [vmem:[#allocation11 + $0x4] sm:$0xf]
        %v594 = vld [vmem:[#allocation11 + $0x8] sm:$0xf]
        %v595 = vld [vmem:[#allocation11 + $0xc] sm:$0xf]
        %v596 = vld [vmem:[#allocation11 + $0x10] sm:$0xf]
        %v597 = vld [vmem:[#allocation11 + $0x14] sm:$0xf]
        %v598 = vld [vmem:[#allocation13] sm:$0x1]
        %v599 = vpack.c.bf16 %v591, %v591
        %v601 = vshrl.u32 %v599, 16
        %v603 = vrot.slane %v601, 7
        %v604 = vshll.u32 %v599, 16
        %v606 = vor.u32 %v603, %v604
        %v608 = vsel %vm398, 0, %v606
        %v609 = vrot.slane %v604, 1
        %v610 = vor.u32 %v601, %v609
        %v612 = vsel %vm405, %v610, 0
        %614 = vrot.lane.b32.xlu0 %v599, 16
        %v615 = vpop.permute.xlu0 %614
        %617 = vrot.lane.b32.xlu0 %v612, 32
        %v618 = vpop.permute.xlu0 %617
        %v621 = vsel %vm412, %v608, %v615
        %v623 = vsel %vm416, %v621, %v618
        %v625 = vlaneseq
        %v626 = vshrl.u32 %v625, 7
        %v627 = vsub.s32 0, %v626
        %v628 = vrot.slane %v598, %v627
        %v636 = vunpack.c.l.b16 %v592
        %v637 = vunpack.c.l.b16 %v593
        %v638 = vunpack.c.l.b16 %v594
        %v639 = vunpack.c.l.b16 %v595
        %v640 = vunpack.c.l.b16 %v596
        %v641 = vunpack.c.l.b16 %v597
        %v642 = vpack.c.b16 %v637, %v636
        %v643 = vpack.c.b16 %v639, %v638
        %v644 = vpack.c.b16 %v641, %v640
        %v648 = vsel %vm443, %v623, 0
        %650 = vmatprep.subr.bf16.mxu0 0
        %651 = vmatpush1.bf16.msra.mxu0 %v642
        %652 = vmatprep.subr.bf16.mxu0 0
        %653 = vmatpush1.bf16.msra.mxu0 %v643
        %654 = vmatprep.subr.bf16.mxu0 0
        %655 = vmatpush1.bf16.msra.mxu0 %v644
        %656 = vmatprep.subr.bf16.mxu0 0
        %657 = vmatpush1.bf16.msra.mxu0 0
        %658 = vmatprep.subr.bf16.mxu0 0
        %659 = vmatpush1.bf16.msra.mxu0 0
        %660 = vmatprep.subr.bf16.mxu0 0
        %661 = vmatpush1.bf16.msra.mxu0 0
        %662 = vmatprep.subr.bf16.mxu0 0
        %663 = vmatpush1.bf16.msra.mxu0 0
        %664 = vmatprep.subr.bf16.mxu0 0
        %665 = vmatpush1.bf16.msra.mxu0 0
        %666 = vmatprep.subr.bf16.mxu0 0
        %667 = vmatpush1.bf16.msra.mxu0 0
        %668 = vmatprep.subr.bf16.mxu0 0
        %669 = vmatpush1.bf16.msra.mxu0 0
        %670 = vmatprep.subr.bf16.mxu0 0
        %671 = vmatpush1.bf16.msra.mxu0 0
        %672 = vmatprep.subr.bf16.mxu0 0
        %673 = vmatpush1.bf16.msra.mxu0 0
        %674 = vmatprep.subr.bf16.mxu0 0
        %675 = vmatpush1.bf16.msra.mxu0 0
        %676 = vmatprep.subr.bf16.mxu0 0
        %677 = vmatpush1.bf16.msra.mxu0 0
        %678 = vmatprep.subr.bf16.mxu0 0
        %679 = vmatpush1.bf16.msra.mxu0 0
        %680 = vmatprep.subr.bf16.mxu0 0
        %681 = vmatpush1.bf16.msra.mxu0 0
        %682 = vmatprep.mubr.bf16.mxu0 0
        %683 = vmatmul.mubr.bf16.gmra.mrb[0].mxu0 %v648
        %v684 = vpop.f32.mrb[0].mxu0
        %v685 = vadd.f32 %v628, %v684
        %v686 = vpop.f32.mrb[0].mxu0
        %v687 = vpop.f32.mrb[0].mxu0
        %v688 = vpop.f32.mrb[0].mxu0
        %689 = vdwg.mxu0
        %v690 = vadd.f32 %v685, %v377
        %v691 = vmax.f32 %v690, 0.0
        %v692 = vpack.c.bf16 %v691, %v691
        %vm693 = vcmask 125952
        %694 = vst.msk [vmem:[%s374] sm:$0xf] %vm693, %v692
        %s695 = sand.u32 %s187, 1
        %s696 = scalar_lea.sflag [#allocation4], %s695
        %s697 = sand.u32 %s187, 1
        %s698 = smul.addr %s697, 4
        %s699 = scalar_lea.vmem [#allocation14], %s698
        // Predicated region
        $region77: #{_lambda_.13} parent=47 // pred_check
          %p700 = pneg %p197
        $region78: #{_lambda_.13} parent=47 // pred_check_branch
          %702 = sbr.rel (%p700) target = $region80
        $region79: #{_lambda_.13} parent=47 // pred_region
          %s704 = ssub.s32 64, 64
          %705 = vsyncadd %s696, %s704
          %s706 = smul.addr %s27, 64
          %s707 = scalar_lea.hbm %s7, %s706
          %s709 = sshll.u32 %s699, 4
          %s710 = int_to_ptr.vmem [resolvable:$true] %s709
          %712 = dma.vmem_to_hbm [thread:$0]  %s710, 64, %s707, %s696
        $region80: #{_lambda_.13} parent=47 // pred_fallthru
          _
      $region48: #{_lambda_.13} parent=5 // pred_fallthru
        _
      %p713 = scmp.le.s32.totalorder 2, %s22
      // Predicated region
      $region81: #{_lambda_.13} parent=5 // pred_check
        %p714 = pneg %p713
      $region82: #{_lambda_.13} parent=5 // pred_check_branch
        %716 = sbr.rel (%p714) target = $region84
      $region83: #{_lambda_.13} parent=5 // pred_region
        %s717 = ssub.s32 %s22, 2
        // Predicated region
        $region85: #{_lambda_.13} parent=83 // pred_check
          %p718 = pneg %p203
        $region86: #{_lambda_.13} parent=83 // pred_check_branch
          %720 = sbr.rel (%p718) target = $region88
        $region87: #{_lambda_.13} parent=83 // pred_region
          %s721 = sand.u32 %s188, 1
          %s722 = scalar_lea.sflag [#allocation4], %s721
          %s723 = sand.u32 %s188, 1
          %s724 = smul.addr %s723, 4
          %s725 = scalar_lea.vmem [#allocation14], %s724
          %726 = dma.done %s722, 64
        $region88: #{_lambda_.13} parent=83 // pred_fallthru
          _
      $region84: #{_lambda_.13} parent=5 // pred_fallthru
        _
    $region6: #{_lambda_.13} parent=1 // loop_footer
      %s26 = sadd.s32 1, %s22
    $region7: #{_lambda_.13} parent=1 // loop_footer_branch
      %21 = sbr.rel target = $region3
    $region8: #{_lambda_.13} parent=1 // loop_exit
      _
    %727 = vsyncpa [#allocation3], 1
    %s728 = scalar_lea.sflag [#allocation3], 1
    %729 = vsyncpa %s728, 1
    %730 = vsyncpa [#allocation6], 1
    %731 = vsyncpa [#allocation9], 1
    %732 = vsyncpa [#allocation12], 1
    %733 = vsyncpa [#allocation4], 1
    %s734 = scalar_lea.sflag [#allocation4], 1
    %735 = vsyncpa %s734, 1

// kernel: _lambda_.14
$region0: #{_lambda_.14}
  #allocation0 [shape = 'u32[]', space=smem, size = 0x4, offset = 0x4, fixed_abs, tag = 'smem constant byte address 0x4 - core index']
  #allocation1 [shape = 'u32[144,128]{1,0:T(1,128)}', space=vmem, size = 0x12000, scoped, tag = 'internal scratch']
  %s0 = inlined_call_operand.hbm [shape: bf16[2,8,16], index: 0, kind: input, shape index: {}]
  %s1 = inlined_call_operand.hbm [shape: bf16[48,16], index: 1, kind: input, shape index: {}]
  %s2 = inlined_call_operand.hbm [shape: f32[1,16], index: 2, kind: input, shape index: {}]
  %s3 = inlined_call_operand.hbm [shape: bf16[2,8,16], index: 3, kind: output, shape index: {}]
  %s4 = sld [smem:[#allocation0]]
  $region57: #{_lambda_.14} parent=0
    _
  %s6 = ssub.s32 1, %s4
  %s7 = scalar_select 0, %s6, %s4
  $region1: #{_lambda_.14} parent=0
    #allocation2 [shape = 'u8[4096]{0}', space=vmem, size = 0x1000, scoped, tag = 'input window, operand 0']
    #allocation3 [shape = 's32[2]{0}', space=sflag, size = 0x8, scoped, tag = 'scoped memory for _lambda_.14']
    #allocation4 [shape = 's32[2]{0}', space=sflag, size = 0x8, scoped, tag = 'scoped memory for _lambda_.14']
    #allocation5 [shape = 'u8[12288]{0}', space=vmem, size = 0x3000, scoped, tag = 'input window, operand 1, single buffered']
    #allocation6 [shape = 's32[1]{0}', space=sflag, size = 0x4, scoped, tag = 'scoped memory for _lambda_.14']
    #allocation7 [shape = 'u8[512]{0}', space=vmem, size = 0x400, scoped, tag = 'input window, operand 2, single buffered']
    #allocation8 [shape = 'u8[4096]{0}', space=vmem, size = 0x1000, scoped, tag = 'output window, operand 0']
    %8 = vsyncpa [#allocation3], 0
    %s9 = scalar_lea.sflag [#allocation3], 1
    %10 = vsyncpa %s9, 0
    %11 = vsyncpa [#allocation6], 0
    %12 = vsyncpa [#allocation4], 0
    %s13 = scalar_lea.sflag [#allocation4], 1
    %14 = vsyncpa %s13, 0
    loop: start=0, step=1, limit=4
    $region2: #{_lambda_.14} parent=1 // loop_pre_header
      _
    $region3: #{_lambda_.14} parent=1 // loop_header
      %s16 = sphi 0, %s20
      %p17 = scmp.ge.s32.totalorder %s16, 4
      %s26 = sphi 0, %s28
      %s29 = sphi 0, %s26
      %s30 = sphi 0, %s29
      %s46 = sphi 0, %s30
      %s50 = sphi 0, %s50
      %s52 = sphi 0, %s50
      %s53 = sphi 0, %s52
      %s67 = sphi 0, %s53
      %s71 = sphi 0, %s71
      %s73 = sphi 0, %s71
      %s74 = sphi 0, %s73
      %s88 = sphi 0, %s74
      %s94 = sphi 0, %s96
      %s97 = sphi 0, %s94
      %s98 = sphi 0, %s97
      %s114 = sphi 0, %s98
    $region4: #{_lambda_.14} parent=1 // loop_header_branch
      %19 = sbr.rel (%p17) target = $region8
    $region5: #{_lambda_.14} parent=1 // loop_body
      %s21 = ssub.s32 %s16, 1
      %s22 = ssub.s32 %s16, 2
      %s23 = sadd.s32 %s16, 1
      %s24 = ssub.s32 %s16, %s23
      %p25 = scmp.eq.s32.totalorder %s24, 0
      %s27 = sadd.s32 %s26, 1
      %s28 = scalar_select %p25, %s26, %s27
      %p31 = pneg %p25
      %p32 = scmp.eq.s32.totalorder %s16, 1
      %p33 = por %p31, %p32
      %p34 = scmp.ne.s32.totalorder %s26, %s29
      %p35 = scmp.eq.s32.totalorder %s16, 0
      %p36 = por %p34, %p35
      %p37 = scmp.ne.s32.totalorder %s26, %s29
      %p38 = scmp.eq.s32.totalorder %s21, 1
      %p39 = por %p37, %p38
      %p40 = scmp.ne.s32.totalorder %s29, %s30
      %p41 = scmp.eq.s32.totalorder %s21, 0
      %p42 = por %p40, %p41
      %p43 = scmp.ne.s32.totalorder %s29, %s30
      %p44 = scmp.eq.s32.totalorder %s22, 1
      %p45 = por %p43, %p44
      %p47 = scmp.ne.s32.totalorder %s30, %s46
      %p48 = scmp.eq.s32.totalorder %s22, 0
      %p49 = por %p47, %p48
      %s51 = sadd.s32 %s50, 1
      %p54 = scmp.eq.s32.totalorder %s16, 1
      %p55 = scmp.ne.s32.totalorder %s50, %s52
      %p56 = scmp.eq.s32.totalorder %s16, 0
      %p57 = por %p55, %p56
      %p58 = scmp.ne.s32.totalorder %s50, %s52
      %p59 = scmp.eq.s32.totalorder %s21, 1
      %p60 = por %p58, %p59
      %p61 = scmp.ne.s32.totalorder %s52, %s53
      %p62 = scmp.eq.s32.totalorder %s21, 0
      %p63 = por %p61, %p62
      %p64 = scmp.ne.s32.totalorder %s52, %s53
      %p65 = scmp.eq.s32.totalorder %s22, 1
      %p66 = por %p64, %p65
      %p68 = scmp.ne.s32.totalorder %s53, %s67
      %p69 = scmp.eq.s32.totalorder %s22, 0
      %p70 = por %p68, %p69
      %s72 = sadd.s32 %s71, 1
      %p75 = scmp.eq.s32.totalorder %s16, 1
      %p76 = scmp.ne.s32.totalorder %s71, %s73
      %p77 = scmp.eq.s32.totalorder %s16, 0
      %p78 = por %p76, %p77
      %p79 = scmp.ne.s32.totalorder %s71, %s73
      %p80 = scmp.eq.s32.totalorder %s21, 1
      %p81 = por %p79, %p80
      %p82 = scmp.ne.s32.totalorder %s73, %s74
      %p83 = scmp.eq.s32.totalorder %s21, 0
      %p84 = por %p82, %p83
      %p85 = scmp.ne.s32.totalorder %s73, %s74
      %p86 = scmp.eq.s32.totalorder %s22, 1
      %p87 = por %p85, %p86
      %p89 = scmp.ne.s32.totalorder %s74, %s88
      %p90 = scmp.eq.s32.totalorder %s22, 0
      %p91 = por %p89, %p90
      %s92 = ssub.s32 %s16, %s23
      %p93 = scmp.eq.s32.totalorder %s92, 0
      %s95 = sadd.s32 %s94, 1
      %s96 = scalar_select %p93, %s94, %s95
      %p99 = pneg %p93
      %p100 = scmp.eq.s32.totalorder %s16, 1
      %p101 = por %p99, %p100
      %p102 = scmp.ne.s32.totalorder %s94, %s97
      %p103 = scmp.eq.s32.totalorder %s16, 0
      %p104 = por %p102, %p103
      %p105 = scmp.ne.s32.totalorder %s94, %s97
      %p106 = scmp.eq.s32.totalorder %s21, 1
      %p107 = por %p105, %p106
      %p108 = scmp.ne.s32.totalorder %s97, %s98
      %p109 = scmp.eq.s32.totalorder %s21, 0
      %p110 = por %p108, %p109
      %p111 = scmp.ne.s32.totalorder %s97, %s98
      %p112 = scmp.eq.s32.totalorder %s22, 1
      %p113 = por %p111, %p112
      %p115 = scmp.ne.s32.totalorder %s98, %s114
      %p116 = scmp.eq.s32.totalorder %s22, 0
      %p117 = por %p115, %p116
      %p118 = scmp.le.s32.totalorder 1, %s16
      %p119 = scmp.lt.s32.totalorder %s16, 3
      %p120 = pnand %p118, %p119
      %p121 = pneg %p120
      // Predicated region
      $region9: #{_lambda_.14} parent=5 // pred_check
        _
      $region10: #{_lambda_.14} parent=5 // pred_check_branch
        %123 = sbr.rel (%p120) target = $region12
      $region11: #{_lambda_.14} parent=5 // pred_region
        %s124 = ssub.s32 %s16, 1
        // Predicated region
        $region13: #{_lambda_.14} parent=11 // pred_check
          %p125 = pneg %p63
        $region14: #{_lambda_.14} parent=11 // pred_check_branch
          %127 = sbr.rel (%p125) target = $region16
        $region15: #{_lambda_.14} parent=11 // pred_region
          %s129 = ssub.s32 384, 384
          %130 = vsyncadd [#allocation6], %s129
          %s131 = sshll.u32 [#allocation5], 4
          %s132 = int_to_ptr.vmem [resolvable:$true] %s131
          %137 = dma.hbm_to_vmem [thread:$0]  %s1, 384, %s132, [#allocation6], 64, 64, 4
        $region16: #{_lambda_.14} parent=11 // pred_fallthru
          _
        // Predicated region
        $region17: #{_lambda_.14} parent=11 // pred_check
          %p138 = pneg %p84
        $region18: #{_lambda_.14} parent=11 // pred_check_branch
          %140 = sbr.rel (%p138) target = $region20
        $region19: #{_lambda_.14} parent=11 // pred_region
          %s142 = ssub.s32 16, 16
          %143 = vsyncadd [#allocation6], %s142
          %s145 = sshll.u32 [#allocation7], 4
          %s146 = int_to_ptr.vmem [resolvable:$true] %s145
          %148 = dma.hbm_to_vmem [thread:$0]  %s2, 16, %s146, [#allocation6]
        $region20: #{_lambda_.14} parent=11 // pred_fallthru
          _
      $region12: #{_lambda_.14} parent=5 // pred_fallthru
        _
      %p149 = scmp.lt.s32.totalorder %s16, 2
      // Predicated region
      $region21: #{_lambda_.14} parent=5 // pred_check
        %p150 = pneg %p149
      $region22: #{_lambda_.14} parent=5 // pred_check_branch
        %152 = sbr.rel (%p150) target = $region24
      $region23: #{_lambda_.14} parent=5 // pred_region
        // Predicated region
        $region25: #{_lambda_.14} parent=23 // pred_check
          %p153 = pneg %p36
        $region26: #{_lambda_.14} parent=23 // pred_check_branch
          %155 = sbr.rel (%p153) target = $region28
        $region27: #{_lambda_.14} parent=23 // pred_region
          %s156 = sand.u32 %s26, 1
          %s157 = scalar_lea.sflag [#allocation3], %s156
          %s158 = sand.u32 %s26, 1
          %s159 = smul.addr %s158, 4
          %s160 = scalar_lea.vmem [#allocation2], %s159
          %s162 = ssub.s32 64, 64
          %163 = vsyncadd %s157, %s162
          %s164 = smul.addr %s16, 64
          %s165 = scalar_lea.hbm %s0, %s164
          %s167 = sshll.u32 %s160, 4
          %s168 = int_to_ptr.vmem [resolvable:$true] %s167
          %170 = dma.hbm_to_vmem [thread:$0]  %s165, 64, %s168, %s157
        $region28: #{_lambda_.14} parent=23 // pred_fallthru
          _
      $region24: #{_lambda_.14} parent=5 // pred_fallthru
        _
      %p171 = scmp.le.s32.totalorder 1, %s16
      %p172 = scmp.lt.s32.totalorder %s16, 3
      %p173 = pnand %p171, %p172
      %p174 = pneg %p173
      // Predicated region
      $region29: #{_lambda_.14} parent=5 // pred_check
        _
      $region30: #{_lambda_.14} parent=5 // pred_check_branch
        %176 = sbr.rel (%p173) target = $region32
      $region31: #{_lambda_.14} parent=5 // pred_region
        %s177 = ssub.s32 %s16, 1
        %s178 = sand.u32 %s29, 1
        %s179 = scalar_lea.sflag [#allocation3], %s178
        %s180 = sand.u32 %s29, 1
        %s181 = smul.addr %s180, 4
        %s182 = scalar_lea.vmem [#allocation2], %s181
        // Predicated region
        $region33: #{_lambda_.14} parent=31 // pred_check
          %p183 = pneg %p42
        $region34: #{_lambda_.14} parent=31 // pred_check_branch
          %185 = sbr.rel (%p183) target = $region36
        $region35: #{_lambda_.14} parent=31 // pred_region
          %186 = dma.done %s179, 64
        $region36: #{_lambda_.14} parent=31 // pred_fallthru
          _
        // Predicated region
        $region37: #{_lambda_.14} parent=31 // pred_check
          %p187 = pneg %p63
        $region38: #{_lambda_.14} parent=31 // pred_check_branch
          %189 = sbr.rel (%p187) target = $region40
        $region39: #{_lambda_.14} parent=31 // pred_region
          %190 = dma.done [#allocation6], 384
        $region40: #{_lambda_.14} parent=31 // pred_fallthru
          _
        // Predicated region
        $region41: #{_lambda_.14} parent=31 // pred_check
          %p191 = pneg %p84
        $region42: #{_lambda_.14} parent=31 // pred_check_branch
          %193 = sbr.rel (%p191) target = $region44
        $region43: #{_lambda_.14} parent=31 // pred_region
          %194 = dma.done [#allocation6], 16
        $region44: #{_lambda_.14} parent=31 // pred_fallthru
          _
        %s195 = sand.u32 %s29, 1
        %s196 = scalar_lea.sflag [#allocation3], %s195
        %s197 = sand.u32 %s29, 1
        %s198 = smul.addr %s197, 4
        %s199 = scalar_lea.vmem [#allocation2], %s198
        %p200 = pneg %p42
        %p201 = pneg %p39
        %p202 = pneg %p63
        %p203 = pneg %p60
        %p204 = pneg %p84
        %p205 = pneg %p81
        %p206 = pneg %p110
        %p207 = pneg %p107
        %s208 = sand.u32 %s97, 1
        %s209 = scalar_lea.sflag [#allocation4], %s208
        %s210 = sand.u32 %s97, 1
        %s211 = smul.addr %s210, 4
        %s212 = scalar_lea.vmem [#allocation8], %s211
        %v214 = vld [vmem:[%s182] sm:$0xf]
        %v215 = vld [vmem:[#allocation5] sm:$0xf]
        %v216 = vld [vmem:[#allocation5 + $0x4] sm:$0xf]
        %v217 = vld [vmem:[#allocation5 + $0x8] sm:$0xf]
        %v218 = vld [vmem:[#allocation5 + $0xc] sm:$0xf]
        %v219 = vld [vmem:[#allocation5 + $0x10] sm:$0xf]
        %v220 = vld [vmem:[#allocation5 + $0x14] sm:$0xf]
        %v221 = vld [vmem:[#allocation7] sm:$0x1]
        %v223 = vunpack.c.l.b16 %v214
        %v224 = vpack.c.b16 %v223, %v223
        %v226 = vshrl.u32 %v224, 16
        %v228 = vrot.slane %v226, 7
        %v229 = vshll.u32 %v224, 16
        %v231 = vor.u32 %v228, %v229
        %vm233 = vcmask 1040384
        %vm234 = vsmask.f32 256
        %vm235 = vmand %vm233, %vm234
        %v236 = vsel %vm235, 0, %v231
        %v237 = vrot.slane %v229, 1
        %v238 = vor.u32 %v226, %v237
        %vm240 = vcmask 1043456
        %vm241 = vsmask.f32 3328
        %vm242 = vmand %vm240, %vm241
        %v243 = vsel %vm242, %v238, 0
        %244 = vrot.lane.b32.xlu0 %v224, 16
        %v245 = vpop.permute.xlu0 %244
        %247 = vrot.lane.b32.xlu0 %v243, 32
        %v248 = vpop.permute.xlu0 %247
        %vm249 = vcmask 130048
        %v252 = vsel %vm249, %v236, %v245
        %vm253 = vcmask 261120
        %v255 = vsel %vm253, %v252, %v248
        %v257 = vlaneseq
        %v258 = vshrl.u32 %v257, 7
        %v259 = vsub.s32 0, %v258
        %v260 = vrot.slane %v221, %v259
        %v268 = vunpack.c.l.b16 %v215
        %v269 = vunpack.c.l.b16 %v216
        %v270 = vunpack.c.l.b16 %v217
        %v271 = vunpack.c.l.b16 %v218
        %v272 = vunpack.c.l.b16 %v219
        %v273 = vunpack.c.l.b16 %v220
        %v274 = vpack.c.b16 %v269, %v268
        %v275 = vpack.c.b16 %v271, %v270
        %v276 = vpack.c.b16 %v273, %v272
        %vm280 = vcmask 392192
        %v281 = vsel %vm280, %v255, 0
        %283 = vmatprep.subr.bf16.mxu0 0
        %284 = vmatpush1.bf16.msra.mxu0 %v274
        %285 = vmatprep.subr.bf16.mxu0 0
        %286 = vmatpush1.bf16.msra.mxu0 %v275
        %287 = vmatprep.subr.bf16.mxu0 0
        %288 = vmatpush1.bf16.msra.mxu0 %v276
        %289 = vmatprep.subr.bf16.mxu0 0
        %290 = vmatpush1.bf16.msra.mxu0 0
        %291 = vmatprep.subr.bf16.mxu0 0
        %292 = vmatpush1.bf16.msra.mxu0 0
        %293 = vmatprep.subr.bf16.mxu0 0
        %294 = vmatpush1.bf16.msra.mxu0 0
        %295 = vmatprep.subr.bf16.mxu0 0
        %296 = vmatpush1.bf16.msra.mxu0 0
        %297 = vmatprep.subr.bf16.mxu0 0
        %298 = vmatpush1.bf16.msra.mxu0 0
        %299 = vmatprep.subr.bf16.mxu0 0
        %300 = vmatpush1.bf16.msra.mxu0 0
        %301 = vmatprep.subr.bf16.mxu0 0
        %302 = vmatpush1.bf16.msra.mxu0 0
        %303 = vmatprep.subr.bf16.mxu0 0
        %304 = vmatpush1.bf16.msra.mxu0 0
        %305 = vmatprep.subr.bf16.mxu0 0
        %306 = vmatpush1.bf16.msra.mxu0 0
        %307 = vmatprep.subr.bf16.mxu0 0
        %308 = vmatpush1.bf16.msra.mxu0 0
        %309 = vmatprep.subr.bf16.mxu0 0
        %310 = vmatpush1.bf16.msra.mxu0 0
        %311 = vmatprep.subr.bf16.mxu0 0
        %312 = vmatpush1.bf16.msra.mxu0 0
        %313 = vmatprep.subr.bf16.mxu0 0
        %314 = vmatpush1.bf16.msra.mxu0 0
        %315 = vmatprep.mubr.bf16.mxu0 0
        %316 = vmatmul.mubr.bf16.gmra.mrb[0].mxu0 %v281
        %v317 = vpop.f32.mrb[0].mxu0
        %v318 = vadd.f32 %v260, %v317
        %v319 = vpop.f32.mrb[0].mxu0
        %v320 = vpop.f32.mrb[0].mxu0
        %v321 = vpop.f32.mrb[0].mxu0
        %322 = vdwg.mxu0
        %vm323 = vcmp.gt.f32.partialorder %v318, 0.0
        %v324 = vmul.f32 %v318, 0.2
        %v325 = vsel %vm323, %v318, %v324
        %v326 = vpack.c.bf16 %v325, %v325
        %vm327 = vcmask 125952
        %328 = vst.msk [vmem:[%s212] sm:$0xf] %vm327, %v326
        %s329 = sand.u32 %s97, 1
        %s330 = scalar_lea.sflag [#allocation4], %s329
        %s331 = sand.u32 %s97, 1
        %s332 = smul.addr %s331, 4
        %s333 = scalar_lea.vmem [#allocation8], %s332
        // Predicated region
        $region45: #{_lambda_.14} parent=31 // pred_check
          %p334 = pneg %p107
        $region46: #{_lambda_.14} parent=31 // pred_check_branch
          %336 = sbr.rel (%p334) target = $region48
        $region47: #{_lambda_.14} parent=31 // pred_region
          %s338 = ssub.s32 64, 64
          %339 = vsyncadd %s330, %s338
          %s340 = smul.addr %s21, 64
          %s341 = scalar_lea.hbm %s3, %s340
          %s343 = sshll.u32 %s333, 4
          %s344 = int_to_ptr.vmem [resolvable:$true] %s343
          %346 = dma.vmem_to_hbm [thread:$0]  %s344, 64, %s341, %s330
        $region48: #{_lambda_.14} parent=31 // pred_fallthru
          _
      $region32: #{_lambda_.14} parent=5 // pred_fallthru
        _
      %p347 = scmp.le.s32.totalorder 2, %s16
      // Predicated region
      $region49: #{_lambda_.14} parent=5 // pred_check
        %p348 = pneg %p347
      $region50: #{_lambda_.14} parent=5 // pred_check_branch
        %350 = sbr.rel (%p348) target = $region52
      $region51: #{_lambda_.14} parent=5 // pred_region
        %s351 = ssub.s32 %s16, 2
        // Predicated region
        $region53: #{_lambda_.14} parent=51 // pred_check
          %p352 = pneg %p113
        $region54: #{_lambda_.14} parent=51 // pred_check_branch
          %354 = sbr.rel (%p352) target = $region56
        $region55: #{_lambda_.14} parent=51 // pred_region
          %s355 = sand.u32 %s98, 1
          %s356 = scalar_lea.sflag [#allocation4], %s355
          %s357 = sand.u32 %s98, 1
          %s358 = smul.addr %s357, 4
          %s359 = scalar_lea.vmem [#allocation8], %s358
          %360 = dma.done %s356, 64
        $region56: #{_lambda_.14} parent=51 // pred_fallthru
          _
      $region52: #{_lambda_.14} parent=5 // pred_fallthru
        _
    $region6: #{_lambda_.14} parent=1 // loop_footer
      %s20 = sadd.s32 1, %s16
    $region7: #{_lambda_.14} parent=1 // loop_footer_branch
      %15 = sbr.rel target = $region3
    $region8: #{_lambda_.14} parent=1 // loop_exit
      _
    %361 = vsyncpa [#allocation3], 1
    %s362 = scalar_lea.sflag [#allocation3], 1
    %363 = vsyncpa %s362, 1
    %364 = vsyncpa [#allocation6], 1
    %365 = vsyncpa [#allocation4], 1
    %s366 = scalar_lea.sflag [#allocation4], 1
    %367 = vsyncpa %s366, 1

// kernel: _lambda_.15
$region0: #{_lambda_.15}
  #allocation0 [shape = 'u32[]', space=smem, size = 0x4, offset = 0x4, fixed_abs, tag = 'smem constant byte address 0x4 - core index']
  #allocation1 [shape = 'u32[144,128]{1,0:T(1,128)}', space=vmem, size = 0x12000, scoped, tag = 'internal scratch']
  %s0 = inlined_call_operand.hbm [shape: bf16[2,16,8], index: 0, kind: input, shape index: {}]
  %s1 = inlined_call_operand.hbm [shape: bf16[24,8], index: 1, kind: input, shape index: {}]
  %s2 = inlined_call_operand.hbm [shape: f32[1,8], index: 2, kind: input, shape index: {}]
  %s3 = inlined_call_operand.hbm [shape: bf16[24,8], index: 3, kind: input, shape index: {}]
  %s4 = inlined_call_operand.hbm [shape: f32[1,8], index: 4, kind: input, shape index: {}]
  %s5 = inlined_call_operand.hbm [shape: bf16[24,8], index: 5, kind: input, shape index: {}]
  %s6 = inlined_call_operand.hbm [shape: f32[1,8], index: 6, kind: input, shape index: {}]
  %s7 = inlined_call_operand.hbm [shape: bf16[8,6], index: 7, kind: input, shape index: {}]
  %s8 = inlined_call_operand.hbm [shape: f32[1,6], index: 8, kind: input, shape index: {}]
  %s9 = inlined_call_operand.hbm [shape: f32[2,16,6], index: 9, kind: output, shape index: {}]
  %s10 = sld [smem:[#allocation0]]
  $region105: #{_lambda_.15} parent=0
    _
  %s12 = ssub.s32 1, %s10
  %s13 = scalar_select 0, %s12, %s10
  $region1: #{_lambda_.15} parent=0
    #allocation2 [shape = 'u8[8192]{0}', space=vmem, size = 0x2000, scoped, tag = 'input window, operand 0']
    #allocation3 [shape = 's32[2]{0}', space=sflag, size = 0x8, scoped, tag = 'scoped memory for _lambda_.15']
    #allocation4 [shape = 's32[2]{0}', space=sflag, size = 0x8, scoped, tag = 'scoped memory for _lambda_.15']
    #allocation5 [shape = 'u8[6144]{0}', space=vmem, size = 0x1800, scoped, tag = 'input window, operand 1, single buffered']
    #allocation6 [shape = 's32[1]{0}', space=sflag, size = 0x4, scoped, tag = 'scoped memory for _lambda_.15']
    #allocation7 [shape = 'u8[512]{0}', space=vmem, size = 0x400, scoped, tag = 'input window, operand 2, single buffered']
    #allocation8 [shape = 'u8[6144]{0}', space=vmem, size = 0x1800, scoped, tag = 'input window, operand 3, single buffered']
    #allocation9 [shape = 's32[1]{0}', space=sflag, size = 0x4, scoped, tag = 'scoped memory for _lambda_.15']
    #allocation10 [shape = 'u8[512]{0}', space=vmem, size = 0x400, scoped, tag = 'input window, operand 4, single buffered']
    #allocation11 [shape = 'u8[6144]{0}', space=vmem, size = 0x1800, scoped, tag = 'input window, operand 5, single buffered']
    #allocation12 [shape = 's32[1]{0}', space=sflag, size = 0x4, scoped, tag = 'scoped memory for _lambda_.15']
    #allocation13 [shape = 'u8[512]{0}', space=vmem, size = 0x400, scoped, tag = 'input window, operand 6, single buffered']
    #allocation14 [shape = 'u8[2048]{0}', space=vmem, size = 0x800, scoped, tag = 'input window, operand 7, single buffered']
    #allocation15 [shape = 's32[1]{0}', space=sflag, size = 0x4, scoped, tag = 'scoped memory for _lambda_.15']
    #allocation16 [shape = 'u8[512]{0}', space=vmem, size = 0x400, scoped, tag = 'input window, operand 8, single buffered']
    #allocation17 [shape = 'u8[16384]{0}', space=vmem, size = 0x4000, scoped, tag = 'output window, operand 0']
    %14 = vsyncpa [#allocation3], 0
    %s15 = scalar_lea.sflag [#allocation3], 1
    %16 = vsyncpa %s15, 0
    %17 = vsyncpa [#allocation6], 0
    %18 = vsyncpa [#allocation9], 0
    %19 = vsyncpa [#allocation12], 0
    %20 = vsyncpa [#allocation15], 0
    %21 = vsyncpa [#allocation4], 0
    %s22 = scalar_lea.sflag [#allocation4], 1
    %23 = vsyncpa %s22, 0
    loop: start=0, step=1, limit=4
    $region2: #{_lambda_.15} parent=1 // loop_pre_header
      _
    $region3: #{_lambda_.15} parent=1 // loop_header
      %s25 = sphi 0, %s29
      %p26 = scmp.ge.s32.totalorder %s25, 4
      %s35 = sphi 0, %s37
      %s38 = sphi 0, %s35
      %s39 = sphi 0, %s38
      %s55 = sphi 0, %s39
      %s59 = sphi 0, %s59
      %s61 = sphi 0, %s59
      %s62 = sphi 0, %s61
      %s76 = sphi 0, %s62
      %s80 = sphi 0, %s80
      %s82 = sphi 0, %s80
      %s83 = sphi 0, %s82
      %s97 = sphi 0, %s83
      %s101 = sphi 0, %s101
      %s103 = sphi 0, %s101
      %s104 = sphi 0, %s103
      %s118 = sphi 0, %s104
      %s122 = sphi 0, %s122
      %s124 = sphi 0, %s122
      %s125 = sphi 0, %s124
      %s139 = sphi 0, %s125
      %s143 = sphi 0, %s143
      %s145 = sphi 0, %s143
      %s146 = sphi 0, %s145
      %s160 = sphi 0, %s146
      %s164 = sphi 0, %s164
      %s166 = sphi 0, %s164
      %s167 = sphi 0, %s166
      %s181 = sphi 0, %s167
      %s185 = sphi 0, %s185
      %s187 = sphi 0, %s185
      %s188 = sphi 0, %s187
      %s202 = sphi 0, %s188
      %s206 = sphi 0, %s206
      %s208 = sphi 0, %s206
      %s209 = sphi 0, %s208
      %s223 = sphi 0, %s209
      %s229 = sphi 0, %s231
      %s232 = sphi 0, %s229
      %s233 = sphi 0, %s232
      %s249 = sphi 0, %s233
    $region4: #{_lambda_.15} parent=1 // loop_header_branch
      %28 = sbr.rel (%p26) target = $region8
    $region5: #{_lambda_.15} parent=1 // loop_body
      %s30 = ssub.s32 %s25, 1
      %s31 = ssub.s32 %s25, 2
      %s32 = sadd.s32 %s25, 1
      %s33 = ssub.s32 %s25, %s32
      %p34 = scmp.eq.s32.totalorder %s33, 0
      %s36 = sadd.s32 %s35, 1
      %s37 = scalar_select %p34, %s35, %s36
      %p40 = pneg %p34
      %p41 = scmp.eq.s32.totalorder %s25, 1
      %p42 = por %p40, %p41
      %p43 = scmp.ne.s32.totalorder %s35, %s38
      %p44 = scmp.eq.s32.totalorder %s25, 0
      %p45 = por %p43, %p44
      %p46 = scmp.ne.s32.totalorder %s35, %s38
      %p47 = scmp.eq.s32.totalorder %s30, 1
      %p48 = por %p46, %p47
      %p49 = scmp.ne.s32.totalorder %s38, %s39
      %p50 = scmp.eq.s32.totalorder %s30, 0
      %p51 = por %p49, %p50
      %p52 = scmp.ne.s32.totalorder %s38, %s39
      %p53 = scmp.eq.s32.totalorder %s31, 1
      %p54 = por %p52, %p53
      %p56 = scmp.ne.s32.totalorder %s39, %s55
      %p57 = scmp.eq.s32.totalorder %s31, 0
      %p58 = por %p56, %p57
      %s60 = sadd.s32 %s59, 1
      %p63 = scmp.eq.s32.totalorder %s25, 1
      %p64 = scmp.ne.s32.totalorder %s59, %s61
      %p65 = scmp.eq.s32.totalorder %s25, 0
      %p66 = por %p64, %p65
      %p67 = scmp.ne.s32.totalorder %s59, %s61
      %p68 = scmp.eq.s32.totalorder %s30, 1
      %p69 = por %p67, %p68
      %p70 = scmp.ne.s32.totalorder %s61, %s62
      %p71 = scmp.eq.s32.totalorder %s30, 0
      %p72 = por %p70, %p71
      %p73 = scmp.ne.s32.totalorder %s61, %s62
      %p74 = scmp.eq.s32.totalorder %s31, 1
      %p75 = por %p73, %p74
      %p77 = scmp.ne.s32.totalorder %s62, %s76
      %p78 = scmp.eq.s32.totalorder %s31, 0
      %p79 = por %p77, %p78
      %s81 = sadd.s32 %s80, 1
      %p84 = scmp.eq.s32.totalorder %s25, 1
      %p85 = scmp.ne.s32.totalorder %s80, %s82
      %p86 = scmp.eq.s32.totalorder %s25, 0
      %p87 = por %p85, %p86
      %p88 = scmp.ne.s32.totalorder %s80, %s82
      %p89 = scmp.eq.s32.totalorder %s30, 1
      %p90 = por %p88, %p89
      %p91 = scmp.ne.s32.totalorder %s82, %s83
      %p92 = scmp.eq.s32.totalorder %s30, 0
      %p93 = por %p91, %p92
      %p94 = scmp.ne.s32.totalorder %s82, %s83
      %p95 = scmp.eq.s32.totalorder %s31, 1
      %p96 = por %p94, %p95
      %p98 = scmp.ne.s32.totalorder %s83, %s97
      %p99 = scmp.eq.s32.totalorder %s31, 0
      %p100 = por %p98, %p99
      %s102 = sadd.s32 %s101, 1
      %p105 = scmp.eq.s32.totalorder %s25, 1
      %p106 = scmp.ne.s32.totalorder %s101, %s103
      %p107 = scmp.eq.s32.totalorder %s25, 0
      %p108 = por %p106, %p107
      %p109 = scmp.ne.s32.totalorder %s101, %s103
      %p110 = scmp.eq.s32.totalorder %s30, 1
      %p111 = por %p109, %p110
      %p112 = scmp.ne.s32.totalorder %s103, %s104
      %p113 = scmp.eq.s32.totalorder %s30, 0
      %p114 = por %p112, %p113
      %p115 = scmp.ne.s32.totalorder %s103, %s104
      %p116 = scmp.eq.s32.totalorder %s31, 1
      %p117 = por %p115, %p116
      %p119 = scmp.ne.s32.totalorder %s104, %s118
      %p120 = scmp.eq.s32.totalorder %s31, 0
      %p121 = por %p119, %p120
      %s123 = sadd.s32 %s122, 1
      %p126 = scmp.eq.s32.totalorder %s25, 1
      %p127 = scmp.ne.s32.totalorder %s122, %s124
      %p128 = scmp.eq.s32.totalorder %s25, 0
      %p129 = por %p127, %p128
      %p130 = scmp.ne.s32.totalorder %s122, %s124
      %p131 = scmp.eq.s32.totalorder %s30, 1
      %p132 = por %p130, %p131
      %p133 = scmp.ne.s32.totalorder %s124, %s125
      %p134 = scmp.eq.s32.totalorder %s30, 0
      %p135 = por %p133, %p134
      %p136 = scmp.ne.s32.totalorder %s124, %s125
      %p137 = scmp.eq.s32.totalorder %s31, 1
      %p138 = por %p136, %p137
      %p140 = scmp.ne.s32.totalorder %s125, %s139
      %p141 = scmp.eq.s32.totalorder %s31, 0
      %p142 = por %p140, %p141
      %s144 = sadd.s32 %s143, 1
      %p147 = scmp.eq.s32.totalorder %s25, 1
      %p148 = scmp.ne.s32.totalorder %s143, %s145
      %p149 = scmp.eq.s32.totalorder %s25, 0
      %p150 = por %p148, %p149
      %p151 = scmp.ne.s32.totalorder %s143, %s145
      %p152 = scmp.eq.s32.totalorder %s30, 1
      %p153 = por %p151, %p152
      %p154 = scmp.ne.s32.totalorder %s145, %s146
      %p155 = scmp.eq.s32.totalorder %s30, 0
      %p156 = por %p154, %p155
      %p157 = scmp.ne.s32.totalorder %s145, %s146
      %p158 = scmp.eq.s32.totalorder %s31, 1
      %p159 = por %p157, %p158
      %p161 = scmp.ne.s32.totalorder %s146, %s160
      %p162 = scmp.eq.s32.totalorder %s31, 0
      %p163 = por %p161, %p162
      %s165 = sadd.s32 %s164, 1
      %p168 = scmp.eq.s32.totalorder %s25, 1
      %p169 = scmp.ne.s32.totalorder %s164, %s166
      %p170 = scmp.eq.s32.totalorder %s25, 0
      %p171 = por %p169, %p170
      %p172 = scmp.ne.s32.totalorder %s164, %s166
      %p173 = scmp.eq.s32.totalorder %s30, 1
      %p174 = por %p172, %p173
      %p175 = scmp.ne.s32.totalorder %s166, %s167
      %p176 = scmp.eq.s32.totalorder %s30, 0
      %p177 = por %p175, %p176
      %p178 = scmp.ne.s32.totalorder %s166, %s167
      %p179 = scmp.eq.s32.totalorder %s31, 1
      %p180 = por %p178, %p179
      %p182 = scmp.ne.s32.totalorder %s167, %s181
      %p183 = scmp.eq.s32.totalorder %s31, 0
      %p184 = por %p182, %p183
      %s186 = sadd.s32 %s185, 1
      %p189 = scmp.eq.s32.totalorder %s25, 1
      %p190 = scmp.ne.s32.totalorder %s185, %s187
      %p191 = scmp.eq.s32.totalorder %s25, 0
      %p192 = por %p190, %p191
      %p193 = scmp.ne.s32.totalorder %s185, %s187
      %p194 = scmp.eq.s32.totalorder %s30, 1
      %p195 = por %p193, %p194
      %p196 = scmp.ne.s32.totalorder %s187, %s188
      %p197 = scmp.eq.s32.totalorder %s30, 0
      %p198 = por %p196, %p197
      %p199 = scmp.ne.s32.totalorder %s187, %s188
      %p200 = scmp.eq.s32.totalorder %s31, 1
      %p201 = por %p199, %p200
      %p203 = scmp.ne.s32.totalorder %s188, %s202
      %p204 = scmp.eq.s32.totalorder %s31, 0
      %p205 = por %p203, %p204
      %s207 = sadd.s32 %s206, 1
      %p210 = scmp.eq.s32.totalorder %s25, 1
      %p211 = scmp.ne.s32.totalorder %s206, %s208
      %p212 = scmp.eq.s32.totalorder %s25, 0
      %p213 = por %p211, %p212
      %p214 = scmp.ne.s32.totalorder %s206, %s208
      %p215 = scmp.eq.s32.totalorder %s30, 1
      %p216 = por %p214, %p215
      %p217 = scmp.ne.s32.totalorder %s208, %s209
      %p218 = scmp.eq.s32.totalorder %s30, 0
      %p219 = por %p217, %p218
      %p220 = scmp.ne.s32.totalorder %s208, %s209
      %p221 = scmp.eq.s32.totalorder %s31, 1
      %p222 = por %p220, %p221
      %p224 = scmp.ne.s32.totalorder %s209, %s223
      %p225 = scmp.eq.s32.totalorder %s31, 0
      %p226 = por %p224, %p225
      %s227 = ssub.s32 %s25, %s32
      %p228 = scmp.eq.s32.totalorder %s227, 0
      %s230 = sadd.s32 %s229, 1
      %s231 = scalar_select %p228, %s229, %s230
      %p234 = pneg %p228
      %p235 = scmp.eq.s32.totalorder %s25, 1
      %p236 = por %p234, %p235
      %p237 = scmp.ne.s32.totalorder %s229, %s232
      %p238 = scmp.eq.s32.totalorder %s25, 0
      %p239 = por %p237, %p238
      %p240 = scmp.ne.s32.totalorder %s229, %s232
      %p241 = scmp.eq.s32.totalorder %s30, 1
      %p242 = por %p240, %p241
      %p243 = scmp.ne.s32.totalorder %s232, %s233
      %p244 = scmp.eq.s32.totalorder %s30, 0
      %p245 = por %p243, %p244
      %p246 = scmp.ne.s32.totalorder %s232, %s233
      %p247 = scmp.eq.s32.totalorder %s31, 1
      %p248 = por %p246, %p247
      %p250 = scmp.ne.s32.totalorder %s233, %s249
      %p251 = scmp.eq.s32.totalorder %s31, 0
      %p252 = por %p250, %p251
      %p253 = scmp.le.s32.totalorder 1, %s25
      %p254 = scmp.lt.s32.totalorder %s25, 3
      %p255 = pnand %p253, %p254
      %p256 = pneg %p255
      // Predicated region
      $region9: #{_lambda_.15} parent=5 // pred_check
        _
      $region10: #{_lambda_.15} parent=5 // pred_check_branch
        %258 = sbr.rel (%p255) target = $region12
      $region11: #{_lambda_.15} parent=5 // pred_region
        %s259 = ssub.s32 %s25, 1
        // Predicated region
        $region13: #{_lambda_.15} parent=11 // pred_check
          %p260 = pneg %p72
        $region14: #{_lambda_.15} parent=11 // pred_check_branch
          %262 = sbr.rel (%p260) target = $region16
        $region15: #{_lambda_.15} parent=11 // pred_region
          %s264 = ssub.s32 192, 192
          %265 = vsyncadd [#allocation6], %s264
          %s266 = sshll.u32 [#allocation5], 4
          %s267 = int_to_ptr.vmem [resolvable:$true] %s266
          %272 = dma.hbm_to_vmem [thread:$0]  %s1, 192, %s267, [#allocation6], 64, 64, 4
        $region16: #{_lambda_.15} parent=11 // pred_fallthru
          _
        // Predicated region
        $region17: #{_lambda_.15} parent=11 // pred_check
          %p273 = pneg %p93
        $region18: #{_lambda_.15} parent=11 // pred_check_branch
          %275 = sbr.rel (%p273) target = $region20
        $region19: #{_lambda_.15} parent=11 // pred_region
          %s277 = ssub.s32 16, 16
          %278 = vsyncadd [#allocation6], %s277
          %s280 = sshll.u32 [#allocation7], 4
          %s281 = int_to_ptr.vmem [resolvable:$true] %s280
          %283 = dma.hbm_to_vmem [thread:$0]  %s2, 16, %s281, [#allocation6]
        $region20: #{_lambda_.15} parent=11 // pred_fallthru
          _
        // Predicated region
        $region21: #{_lambda_.15} parent=11 // pred_check
          %p284 = pneg %p114
        $region22: #{_lambda_.15} parent=11 // pred_check_branch
          %286 = sbr.rel (%p284) target = $region24
        $region23: #{_lambda_.15} parent=11 // pred_region
          %s288 = ssub.s32 192, 192
          %289 = vsyncadd [#allocation9], %s288
          %s290 = sshll.u32 [#allocation8], 4
          %s291 = int_to_ptr.vmem [resolvable:$true] %s290
          %296 = dma.hbm_to_vmem [thread:$0]  %s3, 192, %s291, [#allocation9], 64, 64, 4
        $region24: #{_lambda_.15} parent=11 // pred_fallthru
          _
        // Predicated region
        $region25: #{_lambda_.15} parent=11 // pred_check
          %p297 = pneg %p135
        $region26: #{_lambda_.15} parent=11 // pred_check_branch
          %299 = sbr.rel (%p297) target = $region28
        $region27: #{_lambda_.15} parent=11 // pred_region
          %s301 = ssub.s32 16, 16
          %302 = vsyncadd [#allocation9], %s301
          %s304 = sshll.u32 [#allocation10], 4
          %s305 = int_to_ptr.vmem [resolvable:$true] %s304
          %307 = dma.hbm_to_vmem [thread:$0]  %s4, 16, %s305, [#allocation9]
        $region28: #{_lambda_.15} parent=11 // pred_fallthru
          _
        // Predicated region
        $region29: #{_lambda_.15} parent=11 // pred_check
          %p308 = pneg %p156
        $region30: #{_lambda_.15} parent=11 // pred_check_branch
          %310 = sbr.rel (%p308) target = $region32
        $region31: #{_lambda_.15} parent=11 // pred_region
          %s312 = ssub.s32 192, 192
          %313 = vsyncadd [#allocation12], %s312
          %s314 = sshll.u32 [#allocation11], 4
          %s315 = int_to_ptr.vmem [resolvable:$true] %s314
          %320 = dma.hbm_to_vmem [thread:$0]  %s5, 192, %s315, [#allocation12], 64, 64, 4
        $region32: #{_lambda_.15} parent=11 // pred_fallthru
          _
        // Predicated region
        $region33: #{_lambda_.15} parent=11 // pred_check
          %p321 = pneg %p177
        $region34: #{_lambda_.15} parent=11 // pred_check_branch
          %323 = sbr.rel (%p321) target = $region36
        $region35: #{_lambda_.15} parent=11 // pred_region
          %s325 = ssub.s32 16, 16
          %326 = vsyncadd [#allocation12], %s325
          %s328 = sshll.u32 [#allocation13], 4
          %s329 = int_to_ptr.vmem [resolvable:$true] %s328
          %331 = dma.hbm_to_vmem [thread:$0]  %s6, 16, %s329, [#allocation12]
        $region36: #{_lambda_.15} parent=11 // pred_fallthru
          _
        // Predicated region
        $region37: #{_lambda_.15} parent=11 // pred_check
          %p332 = pneg %p198
        $region38: #{_lambda_.15} parent=11 // pred_check_branch
          %334 = sbr.rel (%p332) target = $region40
        $region39: #{_lambda_.15} parent=11 // pred_region
          %s336 = ssub.s32 64, 64
          %337 = vsyncadd [#allocation15], %s336
          %s339 = sshll.u32 [#allocation14], 4
          %s340 = int_to_ptr.vmem [resolvable:$true] %s339
          %342 = dma.hbm_to_vmem [thread:$0]  %s7, 64, %s340, [#allocation15]
        $region40: #{_lambda_.15} parent=11 // pred_fallthru
          _
        // Predicated region
        $region41: #{_lambda_.15} parent=11 // pred_check
          %p343 = pneg %p219
        $region42: #{_lambda_.15} parent=11 // pred_check_branch
          %345 = sbr.rel (%p343) target = $region44
        $region43: #{_lambda_.15} parent=11 // pred_region
          %s347 = ssub.s32 16, 16
          %348 = vsyncadd [#allocation15], %s347
          %s350 = sshll.u32 [#allocation16], 4
          %s351 = int_to_ptr.vmem [resolvable:$true] %s350
          %353 = dma.hbm_to_vmem [thread:$0]  %s8, 16, %s351, [#allocation15]
        $region44: #{_lambda_.15} parent=11 // pred_fallthru
          _
      $region12: #{_lambda_.15} parent=5 // pred_fallthru
        _
      %p354 = scmp.lt.s32.totalorder %s25, 2
      // Predicated region
      $region45: #{_lambda_.15} parent=5 // pred_check
        %p355 = pneg %p354
      $region46: #{_lambda_.15} parent=5 // pred_check_branch
        %357 = sbr.rel (%p355) target = $region48
      $region47: #{_lambda_.15} parent=5 // pred_region
        // Predicated region
        $region49: #{_lambda_.15} parent=47 // pred_check
          %p358 = pneg %p45
        $region50: #{_lambda_.15} parent=47 // pred_check_branch
          %360 = sbr.rel (%p358) target = $region52
        $region51: #{_lambda_.15} parent=47 // pred_region
          %s361 = sand.u32 %s35, 1
          %s362 = scalar_lea.sflag [#allocation3], %s361
          %s363 = sand.u32 %s35, 1
          %s364 = smul.addr %s363, 8
          %s365 = scalar_lea.vmem [#allocation2], %s364
          %s367 = ssub.s32 128, 128
          %368 = vsyncadd %s362, %s367
          %s369 = smul.addr %s25, 2
          %s370 = smul.addr %s369, 64
          %s371 = scalar_lea.hbm %s0, %s370
          %s372 = sshll.u32 %s365, 4
          %s373 = int_to_ptr.vmem [resolvable:$true] %s372
          %378 = dma.hbm_to_vmem [thread:$0]  %s371, 128, %s373, %s362, 64, 64, 4
        $region52: #{_lambda_.15} parent=47 // pred_fallthru
          _
      $region48: #{_lambda_.15} parent=5 // pred_fallthru
        _
      %p379 = scmp.le.s32.totalorder 1, %s25
      %p380 = scmp.lt.s32.totalorder %s25, 3
      %p381 = pnand %p379, %p380
      %p382 = pneg %p381
      // Predicated region
      $region53: #{_lambda_.15} parent=5 // pred_check
        _
      $region54: #{_lambda_.15} parent=5 // pred_check_branch
        %384 = sbr.rel (%p381) target = $region56
      $region55: #{_lambda_.15} parent=5 // pred_region
        %s385 = ssub.s32 %s25, 1
        %s386 = sand.u32 %s38, 1
        %s387 = scalar_lea.sflag [#allocation3], %s386
        %s388 = sand.u32 %s38, 1
        %s389 = smul.addr %s388, 8
        %s390 = scalar_lea.vmem [#allocation2], %s389
        // Predicated region
        $region57: #{_lambda_.15} parent=55 // pred_check
          %p391 = pneg %p51
        $region58: #{_lambda_.15} parent=55 // pred_check_branch
          %393 = sbr.rel (%p391) target = $region60
        $region59: #{_lambda_.15} parent=55 // pred_region
          %394 = dma.done %s387, 128
        $region60: #{_lambda_.15} parent=55 // pred_fallthru
          _
        // Predicated region
        $region61: #{_lambda_.15} parent=55 // pred_check
          %p395 = pneg %p72
        $region62: #{_lambda_.15} parent=55 // pred_check_branch
          %397 = sbr.rel (%p395) target = $region64
        $region63: #{_lambda_.15} parent=55 // pred_region
          %398 = dma.done [#allocation6], 192
        $region64: #{_lambda_.15} parent=55 // pred_fallthru
          _
        // Predicated region
        $region65: #{_lambda_.15} parent=55 // pred_check
          %p399 = pneg %p93
        $region66: #{_lambda_.15} parent=55 // pred_check_branch
          %401 = sbr.rel (%p399) target = $region68
        $region67: #{_lambda_.15} parent=55 // pred_region
          %402 = dma.done [#allocation6], 16
        $region68: #{_lambda_.15} parent=55 // pred_fallthru
          _
        // Predicated region
        $region69: #{_lambda_.15} parent=55 // pred_check
          %p403 = pneg %p114
        $region70: #{_lambda_.15} parent=55 // pred_check_branch
          %405 = sbr.rel (%p403) target = $region72
        $region71: #{_lambda_.15} parent=55 // pred_region
          %406 = dma.done [#allocation9], 192
        $region72: #{_lambda_.15} parent=55 // pred_fallthru
          _
        // Predicated region
        $region73: #{_lambda_.15} parent=55 // pred_check
          %p407 = pneg %p135
        $region74: #{_lambda_.15} parent=55 // pred_check_branch
          %409 = sbr.rel (%p407) target = $region76
        $region75: #{_lambda_.15} parent=55 // pred_region
          %410 = dma.done [#allocation9], 16
        $region76: #{_lambda_.15} parent=55 // pred_fallthru
          _
        // Predicated region
        $region77: #{_lambda_.15} parent=55 // pred_check
          %p411 = pneg %p156
        $region78: #{_lambda_.15} parent=55 // pred_check_branch
          %413 = sbr.rel (%p411) target = $region80
        $region79: #{_lambda_.15} parent=55 // pred_region
          %414 = dma.done [#allocation12], 192
        $region80: #{_lambda_.15} parent=55 // pred_fallthru
          _
        // Predicated region
        $region81: #{_lambda_.15} parent=55 // pred_check
          %p415 = pneg %p177
        $region82: #{_lambda_.15} parent=55 // pred_check_branch
          %417 = sbr.rel (%p415) target = $region84
        $region83: #{_lambda_.15} parent=55 // pred_region
          %418 = dma.done [#allocation12], 16
        $region84: #{_lambda_.15} parent=55 // pred_fallthru
          _
        // Predicated region
        $region85: #{_lambda_.15} parent=55 // pred_check
          %p419 = pneg %p198
        $region86: #{_lambda_.15} parent=55 // pred_check_branch
          %421 = sbr.rel (%p419) target = $region88
        $region87: #{_lambda_.15} parent=55 // pred_region
          %422 = dma.done [#allocation15], 64
        $region88: #{_lambda_.15} parent=55 // pred_fallthru
          _
        // Predicated region
        $region89: #{_lambda_.15} parent=55 // pred_check
          %p423 = pneg %p219
        $region90: #{_lambda_.15} parent=55 // pred_check_branch
          %425 = sbr.rel (%p423) target = $region92
        $region91: #{_lambda_.15} parent=55 // pred_region
          %426 = dma.done [#allocation15], 16
        $region92: #{_lambda_.15} parent=55 // pred_fallthru
          _
        %s427 = sand.u32 %s38, 1
        %s428 = scalar_lea.sflag [#allocation3], %s427
        %s429 = sand.u32 %s38, 1
        %s430 = smul.addr %s429, 8
        %s431 = scalar_lea.vmem [#allocation2], %s430
        %p432 = pneg %p51
        %p433 = pneg %p48
        %p434 = pneg %p72
        %p435 = pneg %p69
        %p436 = pneg %p93
        %p437 = pneg %p90
        %p438 = pneg %p114
        %p439 = pneg %p111
        %p440 = pneg %p135
        %p441 = pneg %p132
        %p442 = pneg %p156
        %p443 = pneg %p153
        %p444 = pneg %p177
        %p445 = pneg %p174
        %p446 = pneg %p198
        %p447 = pneg %p195
        %p448 = pneg %p219
        %p449 = pneg %p216
        %p450 = pneg %p245
        %p451 = pneg %p242
        %s452 = sand.u32 %s232, 1
        %s453 = scalar_lea.sflag [#allocation4], %s452
        %s454 = sand.u32 %s232, 1
        %s455 = smul.addr %s454, 16
        %s456 = scalar_lea.vmem [#allocation17], %s455
        %v458 = vld [vmem:[%s390] sm:$0xf]
        %v459 = vld [vmem:[%s390 + $0x4] sm:$0xf]
        %v460 = vunpack.c.l.bf16 %v458
        %v461 = vunpack.c.l.bf16 %v459
        %v462 = vld [vmem:[#allocation5] sm:$0xf]
        %v463 = vld [vmem:[#allocation5 + $0x4] sm:$0xf]
        %v464 = vld [vmem:[#allocation5 + $0x8] sm:$0xf]
        %v465 = vld [vmem:[#allocation7] sm:$0x1]
        %v468 = vunpack.c.l.b16 %v458
        %v469 = vunpack.c.l.b16 %v459
        %v470 = vpack.c.b16 %v469, %v468
        %v472 = vshrl.u32 %v470, 16
        %v474 = vrot.slane %v472, 7
        %v475 = vshll.u32 %v470, 16
        %v477 = vor.u32 %v474, %v475
        %vm479 = vcmask 1040384
        %vm480 = vsmask.f32 256
        %vm481 = vmand %vm479, %vm480
        %v482 = vsel %vm481, 0, %v477
        %v483 = vrot.slane %v475, 1
        %v484 = vor.u32 %v472, %v483
        %vm486 = vcmask 1047552
        %vm487 = vsmask.f32 7424
        %vm488 = vmand %vm486, %vm487
        %v489 = vsel %vm488, %v484, 0
        %490 = vrot.lane.b32.xlu0 %v470, 8
        %v491 = vpop.permute.xlu0 %490
        %493 = vrot.lane.b32.xlu0 %v489, 16
        %v494 = vpop.permute.xlu0 %493
        %vm495 = vcmask 64512
        %v498 = vsel %vm495, %v482, %v491
        %vm499 = vcmask 130048
        %v501 = vsel %vm499, %v498, %v494
        %v503 = vlaneseq
        %v504 = vshrl.u32 %v503, 7
        %v505 = vsub.s32 0, %v504
        %v506 = vrot.slane %v465, %v505
        %v511 = vunpack.c.l.b16 %v462
        %v512 = vunpack.c.l.b16 %v463
        %v513 = vunpack.c.l.b16 %v464
        %v514 = vpack.c.b16 %v512, %v511
        %v515 = vpack.c.b16 %v513, %v513
        %vm517 = vcmask 195584
        %v518 = vsel %vm517, %v501, 0
        %vm520 = vcmask 1043456
        %v522 = vsel %vm520, %v515, 0
        %524 = vmatprep.subr.bf16.mxu0 0
        %525 = vmatpush1.bf16.msra.mxu0 %v514
        %526 = vmatprep.subr.bf16.mxu0 0
        %527 = vmatpush1.bf16.msra.mxu0 %v522
        %528 = vmatprep.subr.bf16.mxu0 0
        %529 = vmatpush1.bf16.msra.mxu0 0
        %530 = vmatprep.subr.bf16.mxu0 0
        %531 = vmatpush1.bf16.msra.mxu0 0
        %532 = vmatprep.subr.bf16.mxu0 0
        %533 = vmatpush1.bf16.msra.mxu0 0
        %534 = vmatprep.subr.bf16.mxu0 0
        %535 = vmatpush1.bf16.msra.mxu0 0
        %536 = vmatprep.subr.bf16.mxu0 0
        %537 = vmatpush1.bf16.msra.mxu0 0
        %538 = vmatprep.subr.bf16.mxu0 0
        %539 = vmatpush1.bf16.msra.mxu0 0
        %540 = vmatprep.subr.bf16.mxu0 0
        %541 = vmatpush1.bf16.msra.mxu0 0
        %542 = vmatprep.subr.bf16.mxu0 0
        %543 = vmatpush1.bf16.msra.mxu0 0
        %544 = vmatprep.subr.bf16.mxu0 0
        %545 = vmatpush1.bf16.msra.mxu0 0
        %546 = vmatprep.subr.bf16.mxu0 0
        %547 = vmatpush1.bf16.msra.mxu0 0
        %548 = vmatprep.subr.bf16.mxu0 0
        %549 = vmatpush1.bf16.msra.mxu0 0
        %550 = vmatprep.subr.bf16.mxu0 0
        %551 = vmatpush1.bf16.msra.mxu0 0
        %552 = vmatprep.subr.bf16.mxu0 0
        %553 = vmatpush1.bf16.msra.mxu0 0
        %554 = vmatprep.subr.bf16.mxu0 0
        %555 = vmatpush1.bf16.msra.mxu0 0
        %556 = vmatprep.mubr.bf16.mxu0 0
        %557 = vmatmul.mubr.bf16.gmra.mrb[0].mxu0 %v518
        %v558 = vpop.f32.mrb[0].mxu0
        %v559 = vadd.f32 %v506, %v558
        %v560 = vpop.f32.mrb[0].mxu0
        %v561 = vpop.f32.mrb[0].mxu0
        %v562 = vadd.f32 %v506, %v561
        %v563 = vpop.f32.mrb[0].mxu0
        %564 = vdwg.mxu0
        %v565 = vadd.f32 %v559, %v460
        %v566 = vadd.f32 %v562, %v461
        %vm567 = vcmp.gt.f32.partialorder %v565, 0.0
        %vm568 = vcmp.gt.f32.partialorder %v566, 0.0
        %v569 = vmul.f32 %v565, 0.2
        %v570 = vmul.f32 %v566, 0.2
        %v571 = vsel %vm567, %v565, %v569
        %v572 = vsel %vm568, %v566, %v570
        %v573 = vld [vmem:[#allocation8] sm:$0xf]
        %v574 = vld [vmem:[#allocation8 + $0x4] sm:$0xf]
        %v575 = vld [vmem:[#allocation8 + $0x8] sm:$0xf]
        %v576 = vld [vmem:[#allocation10] sm:$0x1]
        %v577 = vpack.c.bf16 %v572, %v571
        %v579 = vshrl.u32 %v577, 16
        %v581 = vrot.slane %v579, 7
        %v582 = vshll.u32 %v577, 16
        %v584 = vor.u32 %v581, %v582
        %v586 = vsel %vm481, 0, %v584
        %v587 = vrot.slane %v582, 1
        %v588 = vor.u32 %v579, %v587
        %v590 = vsel %vm488, %v588, 0
        %592 = vrot.lane.b32.xlu0 %v577, 8
        %v593 = vpop.permute.xlu0 %592
        %595 = vrot.lane.b32.xlu0 %v590, 16
        %v596 = vpop.permute.xlu0 %595
        %v599 = vsel %vm495, %v586, %v593
        %v601 = vsel %vm499, %v599, %v596
        %v603 = vlaneseq
        %v604 = vshrl.u32 %v603, 7
        %v605 = vsub.s32 0, %v604
        %v606 = vrot.slane %v576, %v605
        %v611 = vunpack.c.l.b16 %v573
        %v612 = vunpack.c.l.b16 %v574
        %v613 = vunpack.c.l.b16 %v575
        %v614 = vpack.c.b16 %v612, %v611
        %v615 = vpack.c.b16 %v613, %v613
        %v617 = vsel %vm517, %v601, 0
        %v620 = vsel %vm520, %v615, 0
        %622 = vmatprep.subr.bf16.mxu0 0
        %623 = vmatpush1.bf16.msra.mxu0 %v614
        %624 = vmatprep.subr.bf16.mxu0 0
        %625 = vmatpush1.bf16.msra.mxu0 %v620
        %626 = vmatprep.subr.bf16.mxu0 0
        %627 = vmatpush1.bf16.msra.mxu0 0
        %628 = vmatprep.subr.bf16.mxu0 0
        %629 = vmatpush1.bf16.msra.mxu0 0
        %630 = vmatprep.subr.bf16.mxu0 0
        %631 = vmatpush1.bf16.msra.mxu0 0
        %632 = vmatprep.subr.bf16.mxu0 0
        %633 = vmatpush1.bf16.msra.mxu0 0
        %634 = vmatprep.subr.bf16.mxu0 0
        %635 = vmatpush1.bf16.msra.mxu0 0
        %636 = vmatprep.subr.bf16.mxu0 0
        %637 = vmatpush1.bf16.msra.mxu0 0
        %638 = vmatprep.subr.bf16.mxu0 0
        %639 = vmatpush1.bf16.msra.mxu0 0
        %640 = vmatprep.subr.bf16.mxu0 0
        %641 = vmatpush1.bf16.msra.mxu0 0
        %642 = vmatprep.subr.bf16.mxu0 0
        %643 = vmatpush1.bf16.msra.mxu0 0
        %644 = vmatprep.subr.bf16.mxu0 0
        %645 = vmatpush1.bf16.msra.mxu0 0
        %646 = vmatprep.subr.bf16.mxu0 0
        %647 = vmatpush1.bf16.msra.mxu0 0
        %648 = vmatprep.subr.bf16.mxu0 0
        %649 = vmatpush1.bf16.msra.mxu0 0
        %650 = vmatprep.subr.bf16.mxu0 0
        %651 = vmatpush1.bf16.msra.mxu0 0
        %652 = vmatprep.subr.bf16.mxu0 0
        %653 = vmatpush1.bf16.msra.mxu0 0
        %654 = vmatprep.mubr.bf16.mxu0 0
        %655 = vmatmul.mubr.bf16.gmra.mrb[0].mxu0 %v617
        %v656 = vpop.f32.mrb[0].mxu0
        %v657 = vadd.f32 %v606, %v656
        %v658 = vpop.f32.mrb[0].mxu0
        %v659 = vpop.f32.mrb[0].mxu0
        %v660 = vadd.f32 %v606, %v659
        %v661 = vpop.f32.mrb[0].mxu0
        %662 = vdwg.mxu0
        %v663 = vadd.f32 %v657, %v571
        %v664 = vadd.f32 %v660, %v572
        %vm665 = vcmp.gt.f32.partialorder %v663, 0.0
        %vm666 = vcmp.gt.f32.partialorder %v664, 0.0
        %v667 = vmul.f32 %v663, 0.2
        %v668 = vmul.f32 %v664, 0.2
        %v669 = vsel %vm665, %v663, %v667
        %v670 = vsel %vm666, %v664, %v668
        %v671 = vld [vmem:[#allocation11] sm:$0xf]
        %v672 = vld [vmem:[#allocation11 + $0x4] sm:$0xf]
        %v673 = vld [vmem:[#allocation11 + $0x8] sm:$0xf]
        %v674 = vld [vmem:[#allocation13] sm:$0x1]
        %v675 = vpack.c.bf16 %v670, %v669
        %v677 = vshrl.u32 %v675, 16
        %v679 = vrot.slane %v677, 7
        %v680 = vshll.u32 %v675, 16
        %v682 = vor.u32 %v679, %v680
        %v684 = vsel %vm481, 0, %v682
        %v685 = vrot.slane %v680, 1
        %v686 = vor.u32 %v677, %v685
        %v688 = vsel %vm488, %v686, 0
        %690 = vrot.lane.b32.xlu0 %v675, 8
        %v691 = vpop.permute.xlu0 %690
        %693 = vrot.lane.b32.xlu0 %v688, 16
        %v694 = vpop.permute.xlu0 %693
        %v697 = vsel %vm495, %v684, %v691
        %v699 = vsel %vm499, %v697, %v694
        %v701 = vlaneseq
        %v702 = vshrl.u32 %v701, 7
        %v703 = vsub.s32 0, %v702
        %v704 = vrot.slane %v674, %v703
        %v709 = vunpack.c.l.b16 %v671
        %v710 = vunpack.c.l.b16 %v672
        %v711 = vunpack.c.l.b16 %v673
        %v712 = vpack.c.b16 %v710, %v709
        %v713 = vpack.c.b16 %v711, %v711
        %v715 = vsel %vm517, %v699, 0
        %v718 = vsel %vm520, %v713, 0
        %720 = vmatprep.subr.bf16.mxu0 0
        %721 = vmatpush1.bf16.msra.mxu0 %v712
        %722 = vmatprep.subr.bf16.mxu0 0
        %723 = vmatpush1.bf16.msra.mxu0 %v718
        %724 = vmatprep.subr.bf16.mxu0 0
        %725 = vmatpush1.bf16.msra.mxu0 0
        %726 = vmatprep.subr.bf16.mxu0 0
        %727 = vmatpush1.bf16.msra.mxu0 0
        %728 = vmatprep.subr.bf16.mxu0 0
        %729 = vmatpush1.bf16.msra.mxu0 0
        %730 = vmatprep.subr.bf16.mxu0 0
        %731 = vmatpush1.bf16.msra.mxu0 0
        %732 = vmatprep.subr.bf16.mxu0 0
        %733 = vmatpush1.bf16.msra.mxu0 0
        %734 = vmatprep.subr.bf16.mxu0 0
        %735 = vmatpush1.bf16.msra.mxu0 0
        %736 = vmatprep.subr.bf16.mxu0 0
        %737 = vmatpush1.bf16.msra.mxu0 0
        %738 = vmatprep.subr.bf16.mxu0 0
        %739 = vmatpush1.bf16.msra.mxu0 0
        %740 = vmatprep.subr.bf16.mxu0 0
        %741 = vmatpush1.bf16.msra.mxu0 0
        %742 = vmatprep.subr.bf16.mxu0 0
        %743 = vmatpush1.bf16.msra.mxu0 0
        %744 = vmatprep.subr.bf16.mxu0 0
        %745 = vmatpush1.bf16.msra.mxu0 0
        %746 = vmatprep.subr.bf16.mxu0 0
        %747 = vmatpush1.bf16.msra.mxu0 0
        %748 = vmatprep.subr.bf16.mxu0 0
        %749 = vmatpush1.bf16.msra.mxu0 0
        %750 = vmatprep.subr.bf16.mxu0 0
        %751 = vmatpush1.bf16.msra.mxu0 0
        %752 = vmatprep.mubr.bf16.mxu0 0
        %753 = vmatmul.mubr.bf16.gmra.mrb[0].mxu0 %v715
        %v754 = vpop.f32.mrb[0].mxu0
        %v755 = vadd.f32 %v704, %v754
        %v756 = vpop.f32.mrb[0].mxu0
        %v757 = vpop.f32.mrb[0].mxu0
        %v758 = vadd.f32 %v704, %v757
        %v759 = vpop.f32.mrb[0].mxu0
        %760 = vdwg.mxu0
        %v761 = vadd.f32 %v755, %v460
        %v762 = vadd.f32 %v758, %v461
        %v763 = vmax.f32 %v761, 0.0
        %v764 = vmax.f32 %v762, 0.0
        %v765 = vld [vmem:[#allocation14] sm:$0xf]
        %v766 = vld [vmem:[#allocation16] sm:$0x1]
        %v767 = vpack.c.bf16 %v764, %v763
        %v769 = vlaneseq
        %v770 = vshrl.u32 %v769, 7
        %v771 = vsub.s32 0, %v770
        %v772 = vrot.slane %v766, %v771
        %v775 = vsel %vm495, %v767, 0
        %v778 = vsel %vm520, %v765, 0
        %780 = vmatprep.subr.bf16.mxu0 0
        %781 = vmatpush1.bf16.msra.mxu0 %v778
        %782 = vmatprep.subr.bf16.mxu0 0
        %783 = vmatpush1.bf16.msra.mxu0 0
        %784 = vmatprep.subr.bf16.mxu0 0
        %785 = vmatpush1.bf16.msra.mxu0 0
        %786 = vmatprep.subr.bf16.mxu0 0
        %787 = vmatpush1.bf16.msra.mxu0 0
        %788 = vmatprep.subr.bf16.mxu0 0
        %789 = vmatpush1.bf16.msra.mxu0 0
        %790 = vmatprep.subr.bf16.mxu0 0
        %791 = vmatpush1.bf16.msra.mxu0 0
        %792 = vmatprep.subr.bf16.mxu0 0
        %793 = vmatpush1.bf16.msra.mxu0 0
        %794 = vmatprep.subr.bf16.mxu0 0
        %795 = vmatpush1.bf16.msra.mxu0 0
        %796 = vmatprep.subr.bf16.mxu0 0
        %797 = vmatpush1.bf16.msra.mxu0 0
        %798 = vmatprep.subr.bf16.mxu0 0
        %799 = vmatpush1.bf16.msra.mxu0 0
        %800 = vmatprep.subr.bf16.mxu0 0
        %801 = vmatpush1.bf16.msra.mxu0 0
        %802 = vmatprep.subr.bf16.mxu0 0
        %803 = vmatpush1.bf16.msra.mxu0 0
        %804 = vmatprep.subr.bf16.mxu0 0
        %805 = vmatpush1.bf16.msra.mxu0 0
        %806 = vmatprep.subr.bf16.mxu0 0
        %807 = vmatpush1.bf16.msra.mxu0 0
        %808 = vmatprep.subr.bf16.mxu0 0
        %809 = vmatpush1.bf16.msra.mxu0 0
        %810 = vmatprep.subr.bf16.mxu0 0
        %811 = vmatpush1.bf16.msra.mxu0 0
        %812 = vmatprep.mubr.bf16.mxu0 0
        %813 = vmatmul.mubr.bf16.gmra.mrb[0].mxu0 %v775
        %v814 = vpop.f32.mrb[0].mxu0
        %v815 = vadd.f32 %v772, %v814
        %v816 = vpop.f32.mrb[0].mxu0
        %v817 = vpop.f32.mrb[0].mxu0
        %v818 = vadd.f32 %v772, %v817
        %v819 = vpop.f32.mrb[0].mxu0
        %820 = vdwg.mxu0
        %vm821 = vcmask 48128
        %822 = vst.msk [vmem:[%s456] sm:$0xff] %vm821, %v815
        %823 = vst.msk [vmem:[%s456 + $0x8] sm:$0xff] %vm821, %v818
        %s824 = sand.u32 %s232, 1
        %s825 = scalar_lea.sflag [#allocation4], %s824
        %s826 = sand.u32 %s232, 1
        %s827 = smul.addr %s826, 16
        %s828 = scalar_lea.vmem [#allocation17], %s827
        // Predicated region
        $region93: #{_lambda_.15} parent=55 // pred_check
          %p829 = pneg %p242
        $region94: #{_lambda_.15} parent=55 // pred_check_branch
          %831 = sbr.rel (%p829) target = $region96
        $region95: #{_lambda_.15} parent=55 // pred_region
          %s833 = ssub.s32 256, 256
          %834 = vsyncadd %s825, %s833
          %s835 = smul.addr %s30, 2
          %s836 = smul.addr %s835, 128
          %s837 = scalar_lea.hbm %s9, %s836
          %s838 = sshll.u32 %s828, 4
          %s839 = int_to_ptr.vmem [resolvable:$true] %s838
          %844 = dma.vmem_to_hbm [thread:$0]  %s839, 256, %s837, %s825, 128, 128, 8
        $region96: #{_lambda_.15} parent=55 // pred_fallthru
          _
      $region56: #{_lambda_.15} parent=5 // pred_fallthru
        _
      %p845 = scmp.le.s32.totalorder 2, %s25
      // Predicated region
      $region97: #{_lambda_.15} parent=5 // pred_check
        %p846 = pneg %p845
      $region98: #{_lambda_.15} parent=5 // pred_check_branch
        %848 = sbr.rel (%p846) target = $region100
      $region99: #{_lambda_.15} parent=5 // pred_region
        %s849 = ssub.s32 %s25, 2
        // Predicated region
        $region101: #{_lambda_.15} parent=99 // pred_check
          %p850 = pneg %p248
        $region102: #{_lambda_.15} parent=99 // pred_check_branch
          %852 = sbr.rel (%p850) target = $region104
        $region103: #{_lambda_.15} parent=99 // pred_region
          %s853 = sand.u32 %s233, 1
          %s854 = scalar_lea.sflag [#allocation4], %s853
          %s855 = sand.u32 %s233, 1
          %s856 = smul.addr %s855, 16
          %s857 = scalar_lea.vmem [#allocation17], %s856
          %858 = dma.done %s854, 256
        $region104: #{_lambda_.15} parent=99 // pred_fallthru
          _
      $region100: #{_lambda_.15} parent=5 // pred_fallthru
        _
    $region6: #{_lambda_.15} parent=1 // loop_footer
      %s29 = sadd.s32 1, %s25
    $region7: #{_lambda_.15} parent=1 // loop_footer_branch
      %24 = sbr.rel target = $region3
    $region8: #{_lambda_.15} parent=1 // loop_exit
      _
    %859 = vsyncpa [#allocation3], 1
    %s860 = scalar_lea.sflag [#allocation3], 1
    %861 = vsyncpa %s860, 1
    %862 = vsyncpa [#allocation6], 1
    %863 = vsyncpa [#allocation9], 1
    %864 = vsyncpa [#allocation12], 1
    %865 = vsyncpa [#allocation15], 1
    %866 = vsyncpa [#allocation4], 1
    %s867 = scalar_lea.sflag [#allocation4], 1
    %868 = vsyncpa %s867, 1

</llo_original>
